<compile_context>
chip_gen: v7x
topology: tpu7x:2x2x1
jax: 0.10.0
libtpu: 0.0.40
codegen_flags: <defaults>
</compile_context>

<pallas_src>
import functools

import numpy as np
import jax
import jax.numpy as jnp
from jax import lax
from jax.experimental import pallas as pl
from jax.experimental.pallas import tpu as pltpu


# ----------------------------- Pallas kernels ---------------------------------
def _conv_block(x_ref, w_ref, s, *, G, K, Ho, Wo, KCin):
    """Tap-stacked conv for G output depth planes: one MXU matmul.

    x_ref: (Dp, Hp, Wo, K*Cin) bf16 -- kw-pre-stacked padded input, one sample
    w_ref: (K*K*K*Cin, Cp)     bf16 -- flipped weight, rows ordered (kd,kh,kw,cin)
    returns (G*Ho*Wo, Cp) f32
    """
    R = G * Ho * Wo
    base = pl.multiple_of(s * G, G)
    pieces = []
    for kd in range(K):                       # leading-axis slices: cheap, no XLU
        for kh in range(K):
            blk = x_ref[pl.ds(base + kd, G), pl.ds(kh, Ho), :, :]   # (G,Ho,Wo,KCin)
            pieces.append(blk.reshape(R, KCin))
    lhs = jnp.concatenate(pieces, axis=-1)    # (R, K*K*K*Cin)
    return jnp.dot(lhs, w_ref[...], preferred_element_type=jnp.float32)


def _make_stats_kernel(G, K, Ho, Wo, KCin, Cp):
    """Pass A: conv recompute -> per-tile mean + centered sum-of-squares."""

    def kernel(x_ref, w_ref, stats_ref):
        s = pl.program_id(1)
        acc = _conv_block(x_ref, w_ref, s, G=G, K=K, Ho=Ho, Wo=Wo, KCin=KCin)
        tmean = jnp.mean(acc, axis=0, keepdims=True)                     # (1, Cp)
        m2 = jnp.sum(jnp.square(acc - tmean), axis=0, keepdims=True)     # (1, Cp)
        stats_ref[...] = jnp.concatenate(
            [tmean, m2, jnp.zeros((6, Cp), jnp.float32)], axis=0)

    return kernel


def _make_bn_relu_kernel(G, K, Ho, Wo, KCin, Cout):
    """Pass B: conv recompute + folded BN + ReLU + channel slice + transpose."""

    def kernel(x_ref, w_ref, scale_ref, shift_ref, o_ref):
        s = pl.program_id(1)
        acc = _conv_block(x_ref, w_ref, s, G=G, K=K, Ho=Ho, Wo=Wo, KCin=KCin)
        z = jnp.maximum(acc * scale_ref[...] + shift_ref[...], 0.0)      # (R, Cp)
        # Full-tile (R, Cp) -> (Cp, R) transpose, then sublane slice to Cout:
        # the final store is lane-dense (R lanes) and already channel-major,
        # so no trailing XLA slice/transpose passes are needed.
        zt = jnp.transpose(z, (1, 0))
        o_ref[...] = zt[:Cout, :].astype(o_ref.dtype)

    return kernel


# ------------------------------ JAX wrapper -----------------------------------
@functools.partial(jax.jit, static_argnames=("kernel_size", "padding"))
def upconv_bn_layer(x_ncdhw, weight, bias, gamma, beta, *, kernel_size, padding):
    """Forward of UpConvBNLayer (stride=1 only).

    x_ncdhw: (N, Cin, D, H, W)
    weight : (Cin, Cout, K, K, K)   -- PyTorch ConvTranspose3d layout
    bias   : (Cout,)                -- exact no-op under training-mode BN
    gamma, beta: (Cout,)            -- BatchNorm3d affine params
    returns: (N, Cout, Do, Ho, Wo) with Do = D + K - 1 - 2*padding (stride=1)
    """
    del bias  # cancels exactly under training-mode BatchNorm (mean subtraction)

    K, p = kernel_size, padding
    N, Cin, D, H, W = x_ncdhw.shape
    Cout = weight.shape[1]

    pad_eq = K - 1 - p
    Do, Ho, Wo = D + K - 1 - 2 * p, H + K - 1 - 2 * p, W + K - 1 - 2 * p
    Dp, Hp = D + 2 * pad_eq, H + 2 * pad_eq
    HW = Ho * Wo
    M = N * Do * HW
    KCin = K * Cin
    F = K * K * KCin                           # full tap-stacked contraction dim
    Cp = ((Cout + 127) // 128) * 128           # lane-dense padded channel count

    # -- choose G output depth planes per grid step ------------------------------
    # Largest divisor of Do whose row count is a multiple of 128 lanes (for the
    # channel-major output store) and fits comfortably in VMEM.
    G = Do
    for g in range(Do, 0, -1):
        if Do % g == 0 and (g * HW) % 128 == 0 and g * HW <= 4096:
            G = g
            break
    R = G * HW                # rows per grid step
    S = Do // G               # depth slabs per sample
    T = N * S                 # total grid steps / stat tiles

    # -- glue: NCDHW -> NDHWC bf16, pad spatially, pre-stack the kw taps ---------
    x = jnp.transpose(x_ncdhw.astype(jnp.bfloat16), (0, 2, 3, 4, 1))
    x_pad = jnp.pad(x, ((0, 0), (pad_eq, pad_eq), (pad_eq, pad_eq),
                        (pad_eq, pad_eq), (0, 0)))
    x_kw = jnp.concatenate(
        [x_pad[:, :, :, kw:kw + Wo, :] for kw in range(K)], axis=-1)
    # x_kw: (N, Dp, Hp, Wo, K*Cin) bf16

    # -- glue: flipped weight -> (K*K*K*Cin, Cp), rows ordered (kd, kh, kw, cin) --
    w_flip = jnp.flip(weight.astype(jnp.bfloat16), axis=(2, 3, 4))  # (Cin,Cout,K,K,K)
    w_t = jnp.transpose(w_flip, (2, 3, 4, 0, 1))                    # (kd,kh,kw,ci,co)
    w_t = jnp.pad(w_t, ((0, 0),) * 4 + ((0, Cp - Cout),))
    w_full = w_t.reshape(F, Cp)

    x_spec = pl.BlockSpec((None, Dp, Hp, Wo, KCin), lambda n, s: (n, 0, 0, 0, 0))
    w_spec = pl.BlockSpec((F, Cp), lambda n, s: (0, 0))
    cparams = pltpu.CompilerParams(
        dimension_semantics=("parallel", "parallel"),
        vmem_limit_bytes=32 * 1024 * 1024)
    conv_flops = 2 * M * F * Cp

    # ---- pass A: conv + per-tile BN partial stats (no intermediate in HBM) -----
    stats = pl.pallas_call(
        _make_stats_kernel(G, K, Ho, Wo, KCin, Cp),
        out_shape=jax.ShapeDtypeStruct((T * 8, Cp), jnp.float32),
        grid=(N, S),
        in_specs=[x_spec, w_spec],
        out_specs=pl.BlockSpec((8, Cp), lambda n, s: (n * S + s, 0)),
        compiler_params=cparams,
        cost_estimate=pl.CostEstimate(
            flops=conv_flops, transcendentals=0,
            bytes_accessed=x_kw.size * 2 + w_full.size * 2 + T * 8 * Cp * 4),
    )(x_kw, w_full)

    # ---- tiny global combine (Chan's parallel variance), fold BN into an FMA ---
    st = stats.reshape(T, 8, Cp)
    tmeans, tm2 = st[:, 0, :], st[:, 1, :]
    mean = jnp.mean(tmeans, axis=0)
    var = (jnp.sum(tm2, axis=0)
           + R * jnp.sum(jnp.square(tmeans - mean), axis=0)) / M
    gamma_p = jnp.pad(gamma.astype(jnp.float32), (0, Cp - Cout))
    beta_p = jnp.pad(beta.astype(jnp.float32), (0, Cp - Cout))
    scale = gamma_p * lax.rsqrt(var + 1e-5)
    shift = beta_p - mean * scale
    scale2, shift2 = scale.reshape(1, Cp), shift.reshape(1, Cp)

    # ---- pass B: conv recompute + folded BN + ReLU, channel-major output -------
    out = pl.pallas_call(
        _make_bn_relu_kernel(G, K, Ho, Wo, KCin, Cout),
        out_shape=jax.ShapeDtypeStruct((N, Cout, Do * HW), jnp.float32),
        grid=(N, S),
        in_specs=[x_spec, w_spec,
                  pl.BlockSpec((1, Cp), lambda n, s: (0, 0)),
                  pl.BlockSpec((1, Cp), lambda n, s: (0, 0))],
        out_specs=pl.BlockSpec((None, Cout, R), lambda n, s: (n, 0, s)),
        compiler_params=cparams,
        cost_estimate=pl.CostEstimate(
            flops=conv_flops, transcendentals=0,
            bytes_accessed=x_kw.size * 2 + w_full.size * 2 + M * Cout * 4),
    )(x_kw, w_full, scale2, shift2)

    # Free, layout-preserving reshape: output is already NCDHW.
    return out.reshape(N, Cout, Do, Ho, Wo)


# ------------------------- pure-JAX reference (for check) ---------------------
def _ref_forward(x, weight, bias, gamma, beta, K, p):
    # Matches the kernel's numerics: matmul operands rounded to bf16,
    # all accumulation / BN math in f32.
    xb = x.astype(jnp.bfloat16).astype(jnp.float32)
    wb = weight.astype(jnp.bfloat16).astype(jnp.float32)
    N, Cin, D, H, W = x.shape
    Cout = weight.shape[1]
    Df, Hf, Wf = D + K - 1, H + K - 1, W + K - 1
    y = jnp.zeros((N, Cout, Df, Hf, Wf), jnp.float32)
    for kd in range(K):
        for kh in range(K):
            for kw in range(K):
                contrib = jnp.einsum("ncdhw,ck->nkdhw", xb, wb[:, :, kd, kh, kw])
                y = y.at[:, :, kd:kd + D, kh:kh + H, kw:kw + W].add(contrib)
    y = y[:, :, p:Df - p, p:Hf - p, p:Wf - p] + bias[None, :, None, None, None]
    mean = jnp.mean(y, axis=(0, 2, 3, 4), keepdims=True)
    var = jnp.mean(jnp.square(y - mean), axis=(0, 2, 3, 4), keepdims=True)
    yn = (y - mean) * lax.rsqrt(var + 1e-5)
    yn = yn * gamma[None, :, None, None, None] + beta[None, :, None, None, None]
    return jnp.maximum(yn, 0.0)


# ----------------------------------- main --------------------------------------
if __name__ == "__main__":
    N, Cin, Cout = 2, 4, 8
    D = H = W = 8
    K, stride, padding = 3, 1, 1  # stride=1 only (see TODO above)

    key = jax.random.PRNGKey(0)
    k_x, k_w, k_b, k_g, k_bt = jax.random.split(key, 5)

    x = jax.random.normal(k_x, (N, Cin, D, H, W), jnp.float32)
    # PyTorch ConvTranspose3d weight layout: (Cin, Cout, K, K, K)
    weight = jax.random.normal(k_w, (Cin, Cout, K, K, K), jnp.float32) * 0.1
    bias = jax.random.normal(k_b, (Cout,), jnp.float32) * 0.1
    gamma = 1.0 + 0.1 * jax.random.normal(k_g, (Cout,), jnp.float32)
    beta = 0.1 * jax.random.normal(k_bt, (Cout,), jnp.float32)

    out = upconv_bn_layer(x, weight, bias, gamma, beta,
                          kernel_size=K, padding=padding)
    out = jax.block_until_ready(out)

    ref = _ref_forward(x, weight, bias, gamma, beta, K, padding)
    # bf16 matmul operands in both kernel and reference; all intermediates stay
    # f32 in both, so the residual diff is f32 accumulation-order noise.
    np.testing.assert_allclose(np.asarray(out), np.asarray(ref),
                               rtol=1e-3, atol=1e-3)

    print("KERNEL_OK")
</pallas_src>

<mosaic_0001>
module attributes {stable_mosaic.version = 11 : i64} {
  func.func @kernel(%arg0: i32, %arg1: i32, %arg2: memref<1x10x10x8x12xbf16, #tpu.memory_space<vmem>>, %arg3: memref<108x128xbf16, #tpu.memory_space<vmem>>, %arg4: memref<8x128xf32, #tpu.memory_space<vmem>>) attributes {dimension_semantics = [#tpu.dimension_semantics<parallel>, #tpu.dimension_semantics<parallel>], iteration_bounds = array<i64: 2, 1>, scalar_prefetch = 0 : i64, scratch_operands = 0 : i64, tpu.core_type = #tpu.core_type<tc>, window_params = [{transform_indices = @transform_0, window_bounds = array<i64: 1, 10, 10, 8, 12>}, {pipeline_mode = #tpu.pipeline_mode<synchronous>, transform_indices = @transform_1, window_bounds = array<i64: 108, 128>}, {transform_indices = @transform_2, window_bounds = array<i64: 8, 128>}]} {
    %c8_i32 = arith.constant 8 : i32
    %0 = arith.muli %arg1, %c8_i32 : i32
    %1 = tpu.assume_multiple %0, 8 : i32
    %c0_i32 = arith.constant 0 : i32
    %2 = arith.addi %1, %c0_i32 : i32
    %c0 = arith.constant 0 : index
    %3 = arith.index_cast %2 : i32 to index
    %c0_0 = arith.constant 0 : index
    %c0_1 = arith.constant 0 : index
    %c0_2 = arith.constant 0 : index
    %4 = vector.load %arg2[%c0, %3, %c0_0, %c0_1, %c0_2] : memref<1x10x10x8x12xbf16, #tpu.memory_space<vmem>>, vector<1x8x8x8x12xbf16>
    %5 = vector.shape_cast %4 : vector<1x8x8x8x12xbf16> to vector<8x8x8x12xbf16>
    %6 = vector.shape_cast %5 : vector<8x8x8x12xbf16> to vector<512x12xbf16>
    %c0_i32_3 = arith.constant 0 : i32
    %7 = arith.addi %1, %c0_i32_3 : i32
    %c0_4 = arith.constant 0 : index
    %8 = arith.index_cast %7 : i32 to index
    %c1 = arith.constant 1 : index
    %c0_5 = arith.constant 0 : index
    %c0_6 = arith.constant 0 : index
    %9 = vector.load %arg2[%c0_4, %8, %c1, %c0_5, %c0_6] : memref<1x10x10x8x12xbf16, #tpu.memory_space<vmem>>, vector<1x8x8x8x12xbf16>
    %10 = vector.shape_cast %9 : vector<1x8x8x8x12xbf16> to vector<8x8x8x12xbf16>
    %11 = vector.shape_cast %10 : vector<8x8x8x12xbf16> to vector<512x12xbf16>
    %c0_i32_7 = arith.constant 0 : i32
    %12 = arith.addi %1, %c0_i32_7 : i32
    %c0_8 = arith.constant 0 : index
    %13 = arith.index_cast %12 : i32 to index
    %c2 = arith.constant 2 : index
    %c0_9 = arith.constant 0 : index
    %c0_10 = arith.constant 0 : index
    %14 = vector.load %arg2[%c0_8, %13, %c2, %c0_9, %c0_10] : memref<1x10x10x8x12xbf16, #tpu.memory_space<vmem>>, vector<1x8x8x8x12xbf16>
    %15 = vector.shape_cast %14 : vector<1x8x8x8x12xbf16> to vector<8x8x8x12xbf16>
    %16 = vector.shape_cast %15 : vector<8x8x8x12xbf16> to vector<512x12xbf16>
    %c1_i32 = arith.constant 1 : i32
    %17 = arith.addi %1, %c1_i32 : i32
    %c0_11 = arith.constant 0 : index
    %18 = arith.index_cast %17 : i32 to index
    %c0_12 = arith.constant 0 : index
    %c0_13 = arith.constant 0 : index
    %c0_14 = arith.constant 0 : index
    %19 = vector.load %arg2[%c0_11, %18, %c0_12, %c0_13, %c0_14] : memref<1x10x10x8x12xbf16, #tpu.memory_space<vmem>>, vector<1x8x8x8x12xbf16>
    %20 = vector.shape_cast %19 : vector<1x8x8x8x12xbf16> to vector<8x8x8x12xbf16>
    %21 = vector.shape_cast %20 : vector<8x8x8x12xbf16> to vector<512x12xbf16>
    %c1_i32_15 = arith.constant 1 : i32
    %22 = arith.addi %1, %c1_i32_15 : i32
    %c0_16 = arith.constant 0 : index
    %23 = arith.index_cast %22 : i32 to index
    %c1_17 = arith.constant 1 : index
    %c0_18 = arith.constant 0 : index
    %c0_19 = arith.constant 0 : index
    %24 = vector.load %arg2[%c0_16, %23, %c1_17, %c0_18, %c0_19] : memref<1x10x10x8x12xbf16, #tpu.memory_space<vmem>>, vector<1x8x8x8x12xbf16>
    %25 = vector.shape_cast %24 : vector<1x8x8x8x12xbf16> to vector<8x8x8x12xbf16>
    %26 = vector.shape_cast %25 : vector<8x8x8x12xbf16> to vector<512x12xbf16>
    %c1_i32_20 = arith.constant 1 : i32
    %27 = arith.addi %1, %c1_i32_20 : i32
    %c0_21 = arith.constant 0 : index
    %28 = arith.index_cast %27 : i32 to index
    %c2_22 = arith.constant 2 : index
    %c0_23 = arith.constant 0 : index
    %c0_24 = arith.constant 0 : index
    %29 = vector.load %arg2[%c0_21, %28, %c2_22, %c0_23, %c0_24] : memref<1x10x10x8x12xbf16, #tpu.memory_space<vmem>>, vector<1x8x8x8x12xbf16>
    %30 = vector.shape_cast %29 : vector<1x8x8x8x12xbf16> to vector<8x8x8x12xbf16>
    %31 = vector.shape_cast %30 : vector<8x8x8x12xbf16> to vector<512x12xbf16>
    %c2_i32 = arith.constant 2 : i32
    %32 = arith.addi %1, %c2_i32 : i32
    %c0_25 = arith.constant 0 : index
    %33 = arith.index_cast %32 : i32 to index
    %c0_26 = arith.constant 0 : index
    %c0_27 = arith.constant 0 : index
    %c0_28 = arith.constant 0 : index
    %34 = vector.load %arg2[%c0_25, %33, %c0_26, %c0_27, %c0_28] : memref<1x10x10x8x12xbf16, #tpu.memory_space<vmem>>, vector<1x8x8x8x12xbf16>
    %35 = vector.shape_cast %34 : vector<1x8x8x8x12xbf16> to vector<8x8x8x12xbf16>
    %36 = vector.shape_cast %35 : vector<8x8x8x12xbf16> to vector<512x12xbf16>
    %c2_i32_29 = arith.constant 2 : i32
    %37 = arith.addi %1, %c2_i32_29 : i32
    %c0_30 = arith.constant 0 : index
    %38 = arith.index_cast %37 : i32 to index
    %c1_31 = arith.constant 1 : index
    %c0_32 = arith.constant 0 : index
    %c0_33 = arith.constant 0 : index
    %39 = vector.load %arg2[%c0_30, %38, %c1_31, %c0_32, %c0_33] : memref<1x10x10x8x12xbf16, #tpu.memory_space<vmem>>, vector<1x8x8x8x12xbf16>
    %40 = vector.shape_cast %39 : vector<1x8x8x8x12xbf16> to vector<8x8x8x12xbf16>
    %41 = vector.shape_cast %40 : vector<8x8x8x12xbf16> to vector<512x12xbf16>
    %c2_i32_34 = arith.constant 2 : i32
    %42 = arith.addi %1, %c2_i32_34 : i32
    %c0_35 = arith.constant 0 : index
    %43 = arith.index_cast %42 : i32 to index
    %c2_36 = arith.constant 2 : index
    %c0_37 = arith.constant 0 : index
    %c0_38 = arith.constant 0 : index
    %44 = vector.load %arg2[%c0_35, %43, %c2_36, %c0_37, %c0_38] : memref<1x10x10x8x12xbf16, #tpu.memory_space<vmem>>, vector<1x8x8x8x12xbf16>
    %45 = vector.shape_cast %44 : vector<1x8x8x8x12xbf16> to vector<8x8x8x12xbf16>
    %46 = vector.shape_cast %45 : vector<8x8x8x12xbf16> to vector<512x12xbf16>
    %47 = tpu.concatenate %6, %11, %16, %21, %26, %31, %36, %41, %46 in 1 : vector<512x12xbf16>, vector<512x12xbf16>, vector<512x12xbf16>, vector<512x12xbf16>, vector<512x12xbf16>, vector<512x12xbf16>, vector<512x12xbf16>, vector<512x12xbf16>, vector<512x12xbf16> -> vector<512x108xbf16>
    %c0_39 = arith.constant 0 : index
    %c0_40 = arith.constant 0 : index
    %48 = vector.load %arg3[%c0_39, %c0_40] : memref<108x128xbf16, #tpu.memory_space<vmem>>, vector<108x128xbf16>
    %cst = arith.constant dense<0.000000e+00> : vector<512x128xf32>
    %49 = tpu.matmul %47, %48, %cst {dimension_numbers = #tpu.dot_dimension_numbers<[1], [0], [0], [1], [0, 0, 1, 1], [], []>} : vector<512x108xbf16>, vector<108x128xbf16>, vector<512x128xf32> -> vector<512x128xf32>
    %cst_41 = arith.constant dense<0.000000e+00> : vector<128xf32>
    %50 = vector.multi_reduction <add>, %49, %cst_41 [0] : vector<512x128xf32> to vector<128xf32>
    %51 = vector.shape_cast %50 : vector<128xf32> to vector<1x128xf32>
    %cst_42 = arith.constant 5.120000e+02 : f32
    %52 = vector.broadcast %cst_42 : f32 to vector<1x128xf32>
    %53 = arith.divf %51, %52 : vector<1x128xf32>
    %54 = vector.broadcast %53 : vector<1x128xf32> to vector<512x128xf32>
    %55 = arith.subf %49, %54 : vector<512x128xf32>
    %56 = arith.mulf %55, %55 : vector<512x128xf32>
    %cst_43 = arith.constant dense<0.000000e+00> : vector<128xf32>
    %57 = vector.multi_reduction <add>, %56, %cst_43 [0] : vector<512x128xf32> to vector<128xf32>
    %58 = vector.shape_cast %57 : vector<128xf32> to vector<1x128xf32>
    %cst_44 = arith.constant 0.000000e+00 : f32
    %59 = vector.broadcast %cst_44 : f32 to vector<6x128xf32>
    %60 = tpu.concatenate %53, %58, %59 in 0 : vector<1x128xf32>, vector<1x128xf32>, vector<6x128xf32> -> vector<8x128xf32>
    %c0_45 = arith.constant 0 : index
    %c0_46 = arith.constant 0 : index
    %61 = vector.load %arg4[%c0_45, %c0_46] : memref<8x128xf32, #tpu.memory_space<vmem>>, vector<8x128xf32>
    tpu.vector_store %arg4[%c0_45, %c0_46], %60 {strides = array<i32>} : memref<8x128xf32, #tpu.memory_space<vmem>>, vector<8x128xf32>,
    return
  }
  func.func @transform_0(%arg0: i32, %arg1: i32) -> (i32, i32, i32, i32, i32) {
    %c0_i32 = arith.constant 0 : i32
    %c0_i32_0 = arith.constant 0 : i32
    %c0_i32_1 = arith.constant 0 : i32
    %c0_i32_2 = arith.constant 0 : i32
    %c0_i32_3 = arith.constant 0 : i32
    return %arg0, %c0_i32, %c0_i32_0, %c0_i32_1, %c0_i32_2 : i32, i32, i32, i32, i32
  }
  func.func @transform_1(%arg0: i32, %arg1: i32) -> (i32, i32) {
    %c0_i32 = arith.constant 0 : i32
    %c0_i32_0 = arith.constant 0 : i32
    %c0_i32_1 = arith.constant 0 : i32
    return %c0_i32, %c0_i32_0 : i32, i32
  }
  func.func @transform_2(%arg0: i32, %arg1: i32) -> (i32, i32) {
    %c1_i32 = arith.constant 1 : i32
    %0 = arith.muli %arg0, %c1_i32 : i32
    %1 = arith.addi %0, %arg1 : i32
    %c0_i32 = arith.constant 0 : i32
    %c0_i32_0 = arith.constant 0 : i32
    return %1, %c0_i32 : i32, i32
  }
}

module attributes {stable_mosaic.version = 11 : i64} {
  func.func @kernel(%arg0: i32, %arg1: i32, %arg2: memref<1x10x10x8x12xbf16, #tpu.memory_space<vmem>>, %arg3: memref<108x128xbf16, #tpu.memory_space<vmem>>, %arg4: memref<1x128xf32, #tpu.memory_space<vmem>>, %arg5: memref<1x128xf32, #tpu.memory_space<vmem>>, %arg6: memref<1x8x512xf32, #tpu.memory_space<vmem>>) attributes {dimension_semantics = [#tpu.dimension_semantics<parallel>, #tpu.dimension_semantics<parallel>], iteration_bounds = array<i64: 2, 1>, scalar_prefetch = 0 : i64, scratch_operands = 0 : i64, tpu.core_type = #tpu.core_type<tc>, window_params = [{transform_indices = @transform_0, window_bounds = array<i64: 1, 10, 10, 8, 12>}, {pipeline_mode = #tpu.pipeline_mode<synchronous>, transform_indices = @transform_1, window_bounds = array<i64: 108, 128>}, {pipeline_mode = #tpu.pipeline_mode<synchronous>, transform_indices = @transform_2, window_bounds = array<i64: 1, 128>}, {pipeline_mode = #tpu.pipeline_mode<synchronous>, transform_indices = @transform_3, window_bounds = array<i64: 1, 128>}, {transform_indices = @transform_4, window_bounds = array<i64: 1, 8, 512>}]} {
    %c8_i32 = arith.constant 8 : i32
    %0 = arith.muli %arg1, %c8_i32 : i32
    %1 = tpu.assume_multiple %0, 8 : i32
    %c0_i32 = arith.constant 0 : i32
    %2 = arith.addi %1, %c0_i32 : i32
    %c0 = arith.constant 0 : index
    %3 = arith.index_cast %2 : i32 to index
    %c0_0 = arith.constant 0 : index
    %c0_1 = arith.constant 0 : index
    %c0_2 = arith.constant 0 : index
    %4 = vector.load %arg2[%c0, %3, %c0_0, %c0_1, %c0_2] : memref<1x10x10x8x12xbf16, #tpu.memory_space<vmem>>, vector<1x8x8x8x12xbf16>
    %5 = vector.shape_cast %4 : vector<1x8x8x8x12xbf16> to vector<8x8x8x12xbf16>
    %6 = vector.shape_cast %5 : vector<8x8x8x12xbf16> to vector<512x12xbf16>
    %c0_i32_3 = arith.constant 0 : i32
    %7 = arith.addi %1, %c0_i32_3 : i32
    %c0_4 = arith.constant 0 : index
    %8 = arith.index_cast %7 : i32 to index
    %c1 = arith.constant 1 : index
    %c0_5 = arith.constant 0 : index
    %c0_6 = arith.constant 0 : index
    %9 = vector.load %arg2[%c0_4, %8, %c1, %c0_5, %c0_6] : memref<1x10x10x8x12xbf16, #tpu.memory_space<vmem>>, vector<1x8x8x8x12xbf16>
    %10 = vector.shape_cast %9 : vector<1x8x8x8x12xbf16> to vector<8x8x8x12xbf16>
    %11 = vector.shape_cast %10 : vector<8x8x8x12xbf16> to vector<512x12xbf16>
    %c0_i32_7 = arith.constant 0 : i32
    %12 = arith.addi %1, %c0_i32_7 : i32
    %c0_8 = arith.constant 0 : index
    %13 = arith.index_cast %12 : i32 to index
    %c2 = arith.constant 2 : index
    %c0_9 = arith.constant 0 : index
    %c0_10 = arith.constant 0 : index
    %14 = vector.load %arg2[%c0_8, %13, %c2, %c0_9, %c0_10] : memref<1x10x10x8x12xbf16, #tpu.memory_space<vmem>>, vector<1x8x8x8x12xbf16>
    %15 = vector.shape_cast %14 : vector<1x8x8x8x12xbf16> to vector<8x8x8x12xbf16>
    %16 = vector.shape_cast %15 : vector<8x8x8x12xbf16> to vector<512x12xbf16>
    %c1_i32 = arith.constant 1 : i32
    %17 = arith.addi %1, %c1_i32 : i32
    %c0_11 = arith.constant 0 : index
    %18 = arith.index_cast %17 : i32 to index
    %c0_12 = arith.constant 0 : index
    %c0_13 = arith.constant 0 : index
    %c0_14 = arith.constant 0 : index
    %19 = vector.load %arg2[%c0_11, %18, %c0_12, %c0_13, %c0_14] : memref<1x10x10x8x12xbf16, #tpu.memory_space<vmem>>, vector<1x8x8x8x12xbf16>
    %20 = vector.shape_cast %19 : vector<1x8x8x8x12xbf16> to vector<8x8x8x12xbf16>
    %21 = vector.shape_cast %20 : vector<8x8x8x12xbf16> to vector<512x12xbf16>
    %c1_i32_15 = arith.constant 1 : i32
    %22 = arith.addi %1, %c1_i32_15 : i32
    %c0_16 = arith.constant 0 : index
    %23 = arith.index_cast %22 : i32 to index
    %c1_17 = arith.constant 1 : index
    %c0_18 = arith.constant 0 : index
    %c0_19 = arith.constant 0 : index
    %24 = vector.load %arg2[%c0_16, %23, %c1_17, %c0_18, %c0_19] : memref<1x10x10x8x12xbf16, #tpu.memory_space<vmem>>, vector<1x8x8x8x12xbf16>
    %25 = vector.shape_cast %24 : vector<1x8x8x8x12xbf16> to vector<8x8x8x12xbf16>
    %26 = vector.shape_cast %25 : vector<8x8x8x12xbf16> to vector<512x12xbf16>
    %c1_i32_20 = arith.constant 1 : i32
    %27 = arith.addi %1, %c1_i32_20 : i32
    %c0_21 = arith.constant 0 : index
    %28 = arith.index_cast %27 : i32 to index
    %c2_22 = arith.constant 2 : index
    %c0_23 = arith.constant 0 : index
    %c0_24 = arith.constant 0 : index
    %29 = vector.load %arg2[%c0_21, %28, %c2_22, %c0_23, %c0_24] : memref<1x10x10x8x12xbf16, #tpu.memory_space<vmem>>, vector<1x8x8x8x12xbf16>
    %30 = vector.shape_cast %29 : vector<1x8x8x8x12xbf16> to vector<8x8x8x12xbf16>
    %31 = vector.shape_cast %30 : vector<8x8x8x12xbf16> to vector<512x12xbf16>
    %c2_i32 = arith.constant 2 : i32
    %32 = arith.addi %1, %c2_i32 : i32
    %c0_25 = arith.constant 0 : index
    %33 = arith.index_cast %32 : i32 to index
    %c0_26 = arith.constant 0 : index
    %c0_27 = arith.constant 0 : index
    %c0_28 = arith.constant 0 : index
    %34 = vector.load %arg2[%c0_25, %33, %c0_26, %c0_27, %c0_28] : memref<1x10x10x8x12xbf16, #tpu.memory_space<vmem>>, vector<1x8x8x8x12xbf16>
    %35 = vector.shape_cast %34 : vector<1x8x8x8x12xbf16> to vector<8x8x8x12xbf16>
    %36 = vector.shape_cast %35 : vector<8x8x8x12xbf16> to vector<512x12xbf16>
    %c2_i32_29 = arith.constant 2 : i32
    %37 = arith.addi %1, %c2_i32_29 : i32
    %c0_30 = arith.constant 0 : index
    %38 = arith.index_cast %37 : i32 to index
    %c1_31 = arith.constant 1 : index
    %c0_32 = arith.constant 0 : index
    %c0_33 = arith.constant 0 : index
    %39 = vector.load %arg2[%c0_30, %38, %c1_31, %c0_32, %c0_33] : memref<1x10x10x8x12xbf16, #tpu.memory_space<vmem>>, vector<1x8x8x8x12xbf16>
    %40 = vector.shape_cast %39 : vector<1x8x8x8x12xbf16> to vector<8x8x8x12xbf16>
    %41 = vector.shape_cast %40 : vector<8x8x8x12xbf16> to vector<512x12xbf16>
    %c2_i32_34 = arith.constant 2 : i32
    %42 = arith.addi %1, %c2_i32_34 : i32
    %c0_35 = arith.constant 0 : index
    %43 = arith.index_cast %42 : i32 to index
    %c2_36 = arith.constant 2 : index
    %c0_37 = arith.constant 0 : index
    %c0_38 = arith.constant 0 : index
    %44 = vector.load %arg2[%c0_35, %43, %c2_36, %c0_37, %c0_38] : memref<1x10x10x8x12xbf16, #tpu.memory_space<vmem>>, vector<1x8x8x8x12xbf16>
    %45 = vector.shape_cast %44 : vector<1x8x8x8x12xbf16> to vector<8x8x8x12xbf16>
    %46 = vector.shape_cast %45 : vector<8x8x8x12xbf16> to vector<512x12xbf16>
    %47 = tpu.concatenate %6, %11, %16, %21, %26, %31, %36, %41, %46 in 1 : vector<512x12xbf16>, vector<512x12xbf16>, vector<512x12xbf16>, vector<512x12xbf16>, vector<512x12xbf16>, vector<512x12xbf16>, vector<512x12xbf16>, vector<512x12xbf16>, vector<512x12xbf16> -> vector<512x108xbf16>
    %c0_39 = arith.constant 0 : index
    %c0_40 = arith.constant 0 : index
    %48 = vector.load %arg3[%c0_39, %c0_40] : memref<108x128xbf16, #tpu.memory_space<vmem>>, vector<108x128xbf16>
    %cst = arith.constant dense<0.000000e+00> : vector<512x128xf32>
    %49 = tpu.matmul %47, %48, %cst {dimension_numbers = #tpu.dot_dimension_numbers<[1], [0], [0], [1], [0, 0, 1, 1], [], []>} : vector<512x108xbf16>, vector<108x128xbf16>, vector<512x128xf32> -> vector<512x128xf32>
    %c0_41 = arith.constant 0 : index
    %c0_42 = arith.constant 0 : index
    %50 = vector.load %arg4[%c0_41, %c0_42] : memref<1x128xf32, #tpu.memory_space<vmem>>, vector<1x128xf32>
    %51 = vector.broadcast %50 : vector<1x128xf32> to vector<512x128xf32>
    %52 = arith.mulf %49, %51 : vector<512x128xf32>
    %c0_43 = arith.constant 0 : index
    %c0_44 = arith.constant 0 : index
    %53 = vector.load %arg5[%c0_43, %c0_44] : memref<1x128xf32, #tpu.memory_space<vmem>>, vector<1x128xf32>
    %54 = vector.broadcast %53 : vector<1x128xf32> to vector<512x128xf32>
    %55 = arith.addf %52, %54 : vector<512x128xf32>
    %cst_45 = arith.constant 0.000000e+00 : f32
    %56 = vector.broadcast %cst_45 : f32 to vector<512x128xf32>
    %57 = arith.maximumf %55, %56 : vector<512x128xf32>
    %58 = tpu.transpose %57, [1, 0] : vector<512x128xf32> -> vector<128x512xf32>
    %59 = vector.extract_strided_slice %58 {offsets = [0, 0], sizes = [8, 512], strides = [1, 1]} : vector<128x512xf32> to vector<8x512xf32>
    %c0_46 = arith.constant 0 : index
    %c0_47 = arith.constant 0 : index
    %c0_48 = arith.constant 0 : index
    %60 = vector.load %arg6[%c0_46, %c0_47, %c0_48] : memref<1x8x512xf32, #tpu.memory_space<vmem>>, vector<1x8x512xf32>
    %61 = vector.shape_cast %60 : vector<1x8x512xf32> to vector<8x512xf32>
    %62 = vector.shape_cast %59 : vector<8x512xf32> to vector<1x8x512xf32>
    tpu.vector_store %arg6[%c0_46, %c0_47, %c0_48], %62 {strides = array<i32>} : memref<1x8x512xf32, #tpu.memory_space<vmem>>, vector<1x8x512xf32>,
    return
  }
  func.func @transform_0(%arg0: i32, %arg1: i32) -> (i32, i32, i32, i32, i32) {
    %c0_i32 = arith.constant 0 : i32
    %c0_i32_0 = arith.constant 0 : i32
    %c0_i32_1 = arith.constant 0 : i32
    %c0_i32_2 = arith.constant 0 : i32
    %c0_i32_3 = arith.constant 0 : i32
    return %arg0, %c0_i32, %c0_i32_0, %c0_i32_1, %c0_i32_2 : i32, i32, i32, i32, i32
  }
  func.func @transform_1(%arg0: i32, %arg1: i32) -> (i32, i32) {
    %c0_i32 = arith.constant 0 : i32
    %c0_i32_0 = arith.constant 0 : i32
    %c0_i32_1 = arith.constant 0 : i32
    return %c0_i32, %c0_i32_0 : i32, i32
  }
  func.func @transform_2(%arg0: i32, %arg1: i32) -> (i32, i32) {
    %c0_i32 = arith.constant 0 : i32
    %c0_i32_0 = arith.constant 0 : i32
    %c0_i32_1 = arith.constant 0 : i32
    return %c0_i32, %c0_i32_0 : i32, i32
  }
  func.func @transform_3(%arg0: i32, %arg1: i32) -> (i32, i32) {
    %c0_i32 = arith.constant 0 : i32
    %c0_i32_0 = arith.constant 0 : i32
    %c0_i32_1 = arith.constant 0 : i32
    return %c0_i32, %c0_i32_0 : i32, i32
  }
  func.func @transform_4(%arg0: i32, %arg1: i32) -> (i32, i32, i32) {
    %c0_i32 = arith.constant 0 : i32
    %c0_i32_0 = arith.constant 0 : i32
    return %arg0, %c0_i32, %arg1 : i32, i32, i32
  }
}

</mosaic_0001>

<llo_original>
// kernel: upconv_bn_layer.2
$region0: #{upconv_bn_layer.2}
  #allocation0 [shape = 'u32[]', space=smem, size = 0x4, offset = 0x4, fixed_abs, tag = 'smem constant byte address 0x4 - core index']
  #allocation1 [shape = 'u32[144,128]{1,0:T(1,128)}', space=vmem, size = 0x12000, scoped, tag = 'internal scratch']
  %s0 = inlined_call_operand.vmem [shape: bf16[2,10,10,8,12], index: 0, kind: input, shape index: {}]
  %s1 = inlined_call_operand.vmem [shape: bf16[108,128], index: 1, kind: input, shape index: {}]
  %s2 = inlined_call_operand.vmem [shape: f32[16,128], index: 2, kind: output, shape index: {}]
  %s3 = sld [smem:[#allocation0]]
  $region41: #{upconv_bn_layer.2} parent=0
    _
  %s5 = ssub.s32 1, %s3
  %s6 = scalar_select 0, %s5, %s3
  loop: start=0, step=1, limit=4
  $region2: #{upconv_bn_layer.2} parent=0 // loop_pre_header
    _
  $region3: #{upconv_bn_layer.2} parent=0 // loop_header
    %s8 = sphi 0, %s12
    %p9 = scmp.ge.s32.totalorder %s8, 4
    %s15 = sphi 0, %s27
    %s16 = sphi 0, %s23
    %s17 = sphi 0, %s15
    %s18 = sphi 0, %s16
    %s19 = sphi 0, %s17
    %s20 = sphi 0, %s18
    %s30 = sphi 0, %s32
    %s33 = sphi 0, %s30
    %s34 = sphi 0, %s33
    %s50 = sphi 0, %s34
    %s54 = sphi 0, %s54
    %s56 = sphi 0, %s54
    %s57 = sphi 0, %s56
    %s71 = sphi 0, %s57
    %s79 = sphi 0, %s81
    %s82 = sphi 0, %s79
    %s83 = sphi 0, %s82
    %s99 = sphi 0, %s83
  $region4: #{upconv_bn_layer.2} parent=0 // loop_header_branch
    %11 = sbr.rel (%p9) target = $region8
  $region5: #{upconv_bn_layer.2} parent=0 // loop_body
    %s13 = ssub.s32 %s8, 1
    %s14 = ssub.s32 %s8, 2
    %s21 = sadd.s32 1, %s16
    %p22 = scmp.ge.s32.totalorder %s21, 1
    %s23 = scalar_select %p22, 0, %s21
    %s24 = sadd.s32 1, %s15
    %s25 = scalar_select %p22, %s24, %s15
    %p26 = scmp.ge.s32.totalorder %s25, 2
    %s27 = scalar_select %p26, 0, %s25
    %s28 = ssub.s32 %s15, %s27
    %p29 = scmp.eq.s32.totalorder %s28, 0
    %s31 = sadd.s32 %s30, 1
    %s32 = scalar_select %p29, %s30, %s31
    %p35 = pneg %p29
    %p36 = scmp.eq.s32.totalorder %s8, 1
    %p37 = por %p35, %p36
    %p38 = scmp.ne.s32.totalorder %s30, %s33
    %p39 = scmp.eq.s32.totalorder %s8, 0
    %p40 = por %p38, %p39
    %p41 = scmp.ne.s32.totalorder %s30, %s33
    %p42 = scmp.eq.s32.totalorder %s13, 1
    %p43 = por %p41, %p42
    %p44 = scmp.ne.s32.totalorder %s33, %s34
    %p45 = scmp.eq.s32.totalorder %s13, 0
    %p46 = por %p44, %p45
    %p47 = scmp.ne.s32.totalorder %s33, %s34
    %p48 = scmp.eq.s32.totalorder %s14, 1
    %p49 = por %p47, %p48
    %p51 = scmp.ne.s32.totalorder %s34, %s50
    %p52 = scmp.eq.s32.totalorder %s14, 0
    %p53 = por %p51, %p52
    %s55 = sadd.s32 %s54, 1
    %p58 = scmp.eq.s32.totalorder %s8, 1
    %p59 = scmp.ne.s32.totalorder %s54, %s56
    %p60 = scmp.eq.s32.totalorder %s8, 0
    %p61 = por %p59, %p60
    %p62 = scmp.ne.s32.totalorder %s54, %s56
    %p63 = scmp.eq.s32.totalorder %s13, 1
    %p64 = por %p62, %p63
    %p65 = scmp.ne.s32.totalorder %s56, %s57
    %p66 = scmp.eq.s32.totalorder %s13, 0
    %p67 = por %p65, %p66
    %p68 = scmp.ne.s32.totalorder %s56, %s57
    %p69 = scmp.eq.s32.totalorder %s14, 1
    %p70 = por %p68, %p69
    %p72 = scmp.ne.s32.totalorder %s57, %s71
    %p73 = scmp.eq.s32.totalorder %s14, 0
    %p74 = por %p72, %p73
    %s75 = sadd.s32 %s15, %s16
    %s76 = sadd.s32 %s27, %s23
    %s77 = ssub.s32 %s75, %s76
    %p78 = scmp.eq.s32.totalorder %s77, 0
    %s80 = sadd.s32 %s79, 1
    %s81 = scalar_select %p78, %s79, %s80
    %p84 = pneg %p78
    %p85 = scmp.eq.s32.totalorder %s8, 1
    %p86 = por %p84, %p85
    %p87 = scmp.ne.s32.totalorder %s79, %s82
    %p88 = scmp.eq.s32.totalorder %s8, 0
    %p89 = por %p87, %p88
    %p90 = scmp.ne.s32.totalorder %s79, %s82
    %p91 = scmp.eq.s32.totalorder %s13, 1
    %p92 = por %p90, %p91
    %p93 = scmp.ne.s32.totalorder %s82, %s83
    %p94 = scmp.eq.s32.totalorder %s13, 0
    %p95 = por %p93, %p94
    %p96 = scmp.ne.s32.totalorder %s82, %s83
    %p97 = scmp.eq.s32.totalorder %s14, 1
    %p98 = por %p96, %p97
    %p100 = scmp.ne.s32.totalorder %s83, %s99
    %p101 = scmp.eq.s32.totalorder %s14, 0
    %p102 = por %p100, %p101
    %p103 = scmp.le.s32.totalorder 1, %s8
    %p104 = scmp.lt.s32.totalorder %s8, 3
    %p105 = pnand %p103, %p104
    %p106 = pneg %p105
    // Predicated region
    $region9: #{upconv_bn_layer.2} parent=5 // pred_check
      _
    $region10: #{upconv_bn_layer.2} parent=5 // pred_check_branch
      %108 = sbr.rel (%p105) target = $region12
    $region11: #{upconv_bn_layer.2} parent=5 // pred_region
      %s109 = ssub.s32 %s8, 1
      // Predicated region
      $region13: #{upconv_bn_layer.2} parent=11 // pred_check
        %p110 = pneg %p67
      $region14: #{upconv_bn_layer.2} parent=11 // pred_check_branch
        %112 = sbr.rel (%p110) target = $region16
      $region15: #{upconv_bn_layer.2} parent=11 // pred_region
        _
      $region16: #{upconv_bn_layer.2} parent=11 // pred_fallthru
        _
    $region12: #{upconv_bn_layer.2} parent=5 // pred_fallthru
      _
    %p113 = scmp.lt.s32.totalorder %s8, 2
    // Predicated region
    $region17: #{upconv_bn_layer.2} parent=5 // pred_check
      %p114 = pneg %p113
    $region18: #{upconv_bn_layer.2} parent=5 // pred_check_branch
      %116 = sbr.rel (%p114) target = $region20
    $region19: #{upconv_bn_layer.2} parent=5 // pred_region
      // Predicated region
      $region21: #{upconv_bn_layer.2} parent=19 // pred_check
        %p117 = pneg %p40
      $region22: #{upconv_bn_layer.2} parent=19 // pred_check_branch
        %119 = sbr.rel (%p117) target = $region24
      $region23: #{upconv_bn_layer.2} parent=19 // pred_region
        %p120 = scmp.lt.s32.totalorder %s15, 1
        %s121 = scalar_select %p120, %s15, 1
        %s122 = smul.addr %s121, 100
        %s123 = smul.addr %s122, 4
        %s124 = scalar_lea.vmem %s0, %s123
      $region24: #{upconv_bn_layer.2} parent=19 // pred_fallthru
        _
    $region20: #{upconv_bn_layer.2} parent=5 // pred_fallthru
      _
    %p125 = scmp.le.s32.totalorder 1, %s8
    %p126 = scmp.lt.s32.totalorder %s8, 3
    %p127 = pnand %p125, %p126
    %p128 = pneg %p127
    // Predicated region
    $region25: #{upconv_bn_layer.2} parent=5 // pred_check
      _
    $region26: #{upconv_bn_layer.2} parent=5 // pred_check_branch
      %130 = sbr.rel (%p127) target = $region28
    $region27: #{upconv_bn_layer.2} parent=5 // pred_region
      %s131 = ssub.s32 %s8, 1
      %p132 = scmp.lt.s32.totalorder %s17, 1
      %s133 = scalar_select %p132, %s17, 1
      %s134 = smul.addr %s133, 100
      %s135 = smul.addr %s134, 4
      %s136 = scalar_lea.vmem %s0, %s135
      %p137 = pneg %p46
      %p138 = pneg %p43
      %p139 = pneg %p67
      %p140 = pneg %p64
      %p141 = pneg %p95
      %p142 = pneg %p92
      %s143 = sadd.s32 %s17, %s18
      %p144 = scmp.lt.s32.totalorder %s143, 1
      %s145 = scalar_select %p144, %s143, 1
      %s146 = smul.addr %s145, 8
      %s147 = scalar_lea.vmem %s2, %s146
      %p148 = scmp.lt.s32.totalorder %s17, 1
      %s149 = scalar_select %p148, %s17, 1
      %s150 = smul.addr %s149, 100
      %s151 = smul.addr %s150, 4
      %s152 = scalar_lea.vmem %s0, %s151
      %s153 = sadd.s32 %s17, %s18
      %p154 = scmp.lt.s32.totalorder %s153, 1
      %s155 = scalar_select %p154, %s153, 1
      %s156 = smul.addr %s155, 8
      %s157 = scalar_lea.vmem %s2, %s156
      %s158 = sadd.s32 %s17, %s18
      %s160 = smul.u32 %s18, 8
      %s161 = smul.u32 %s160, 10
      %s162 = smul.addr %s161, 4
      %s163 = scalar_lea.vmem %s152, %s162
      %v164 = vld [vmem:[%s163] sm:$0xf]
      %v165 = vld [vmem:[%s163 + $0x4] sm:$0xf]
      %v166 = vld [vmem:[%s163 + $0x8] sm:$0xf]
      %v167 = vld [vmem:[%s163 + $0xc] sm:$0xf]
      %v168 = vld [vmem:[%s163 + $0x10] sm:$0xf]
      %v169 = vld [vmem:[%s163 + $0x14] sm:$0xf]
      %v170 = vld [vmem:[%s163 + $0x18] sm:$0xf]
      %v171 = vld [vmem:[%s163 + $0x1c] sm:$0xf]
      %v172 = vld [vmem:[%s163 + $0x28] sm:$0xf]
      %v173 = vld [vmem:[%s163 + $0x2c] sm:$0xf]
      %v174 = vld [vmem:[%s163 + $0x30] sm:$0xf]
      %v175 = vld [vmem:[%s163 + $0x34] sm:$0xf]
      %v176 = vld [vmem:[%s163 + $0x38] sm:$0xf]
      %v177 = vld [vmem:[%s163 + $0x3c] sm:$0xf]
      %v178 = vld [vmem:[%s163 + $0x40] sm:$0xf]
      %v179 = vld [vmem:[%s163 + $0x44] sm:$0xf]
      %v180 = vld [vmem:[%s163 + $0x50] sm:$0xf]
      %v181 = vld [vmem:[%s163 + $0x54] sm:$0xf]
      %v182 = vld [vmem:[%s163 + $0x58] sm:$0xf]
      %v183 = vld [vmem:[%s163 + $0x5c] sm:$0xf]
      %v184 = vld [vmem:[%s163 + $0x60] sm:$0xf]
      %v185 = vld [vmem:[%s163 + $0x64] sm:$0xf]
      %v186 = vld [vmem:[%s163 + $0x68] sm:$0xf]
      %v187 = vld [vmem:[%s163 + $0x6c] sm:$0xf]
      %v188 = vld [vmem:[%s163 + $0x78] sm:$0xf]
      %v189 = vld [vmem:[%s163 + $0x7c] sm:$0xf]
      %v190 = vld [vmem:[%s163 + $0x80] sm:$0xf]
      %v191 = vld [vmem:[%s163 + $0x84] sm:$0xf]
      %v192 = vld [vmem:[%s163 + $0x88] sm:$0xf]
      %v193 = vld [vmem:[%s163 + $0x8c] sm:$0xf]
      %v194 = vld [vmem:[%s163 + $0x90] sm:$0xf]
      %v195 = vld [vmem:[%s163 + $0x94] sm:$0xf]
      %v196 = vld [vmem:[%s163 + $0xa0] sm:$0xf]
      %v197 = vld [vmem:[%s163 + $0xa4] sm:$0xf]
      %v198 = vld [vmem:[%s163 + $0xa8] sm:$0xf]
      %v199 = vld [vmem:[%s163 + $0xac] sm:$0xf]
      %v200 = vld [vmem:[%s163 + $0xb0] sm:$0xf]
      %v201 = vld [vmem:[%s163 + $0xb4] sm:$0xf]
      %v202 = vld [vmem:[%s163 + $0xb8] sm:$0xf]
      %v203 = vld [vmem:[%s163 + $0xbc] sm:$0xf]
      %v204 = vld [vmem:[%s163 + $0xc8] sm:$0xf]
      %v205 = vld [vmem:[%s163 + $0xcc] sm:$0xf]
      %v206 = vld [vmem:[%s163 + $0xd0] sm:$0xf]
      %v207 = vld [vmem:[%s163 + $0xd4] sm:$0xf]
      %v208 = vld [vmem:[%s163 + $0xd8] sm:$0xf]
      %v209 = vld [vmem:[%s163 + $0xdc] sm:$0xf]
      %v210 = vld [vmem:[%s163 + $0xe0] sm:$0xf]
      %v211 = vld [vmem:[%s163 + $0xe4] sm:$0xf]
      %v212 = vld [vmem:[%s163 + $0xf0] sm:$0xf]
      %v213 = vld [vmem:[%s163 + $0xf4] sm:$0xf]
      %v214 = vld [vmem:[%s163 + $0xf8] sm:$0xf]
      %v215 = vld [vmem:[%s163 + $0xfc] sm:$0xf]
      %v216 = vld [vmem:[%s163 + $0x100] sm:$0xf]
      %v217 = vld [vmem:[%s163 + $0x104] sm:$0xf]
      %v218 = vld [vmem:[%s163 + $0x108] sm:$0xf]
      %v219 = vld [vmem:[%s163 + $0x10c] sm:$0xf]
      %v220 = vld [vmem:[%s163 + $0x118] sm:$0xf]
      %v221 = vld [vmem:[%s163 + $0x11c] sm:$0xf]
      %v222 = vld [vmem:[%s163 + $0x120] sm:$0xf]
      %v223 = vld [vmem:[%s163 + $0x124] sm:$0xf]
      %v224 = vld [vmem:[%s163 + $0x128] sm:$0xf]
      %v225 = vld [vmem:[%s163 + $0x12c] sm:$0xf]
      %v226 = vld [vmem:[%s163 + $0x130] sm:$0xf]
      %v227 = vld [vmem:[%s163 + $0x134] sm:$0xf]
      %s228 = sadd.s32 1, %s161
      %s229 = smul.addr %s228, 4
      %s230 = scalar_lea.vmem %s152, %s229
      %v231 = vld [vmem:[%s230] sm:$0xf]
      %v232 = vld [vmem:[%s230 + $0x4] sm:$0xf]
      %v233 = vld [vmem:[%s230 + $0x8] sm:$0xf]
      %v234 = vld [vmem:[%s230 + $0xc] sm:$0xf]
      %v235 = vld [vmem:[%s230 + $0x10] sm:$0xf]
      %v236 = vld [vmem:[%s230 + $0x14] sm:$0xf]
      %v237 = vld [vmem:[%s230 + $0x18] sm:$0xf]
      %v238 = vld [vmem:[%s230 + $0x1c] sm:$0xf]
      %v239 = vld [vmem:[%s230 + $0x28] sm:$0xf]
      %v240 = vld [vmem:[%s230 + $0x2c] sm:$0xf]
      %v241 = vld [vmem:[%s230 + $0x30] sm:$0xf]
      %v242 = vld [vmem:[%s230 + $0x34] sm:$0xf]
      %v243 = vld [vmem:[%s230 + $0x38] sm:$0xf]
      %v244 = vld [vmem:[%s230 + $0x3c] sm:$0xf]
      %v245 = vld [vmem:[%s230 + $0x40] sm:$0xf]
      %v246 = vld [vmem:[%s230 + $0x44] sm:$0xf]
      %v247 = vld [vmem:[%s230 + $0x50] sm:$0xf]
      %v248 = vld [vmem:[%s230 + $0x54] sm:$0xf]
      %v249 = vld [vmem:[%s230 + $0x58] sm:$0xf]
      %v250 = vld [vmem:[%s230 + $0x5c] sm:$0xf]
      %v251 = vld [vmem:[%s230 + $0x60] sm:$0xf]
      %v252 = vld [vmem:[%s230 + $0x64] sm:$0xf]
      %v253 = vld [vmem:[%s230 + $0x68] sm:$0xf]
      %v254 = vld [vmem:[%s230 + $0x6c] sm:$0xf]
      %v255 = vld [vmem:[%s230 + $0x78] sm:$0xf]
      %v256 = vld [vmem:[%s230 + $0x7c] sm:$0xf]
      %v257 = vld [vmem:[%s230 + $0x80] sm:$0xf]
      %v258 = vld [vmem:[%s230 + $0x84] sm:$0xf]
      %v259 = vld [vmem:[%s230 + $0x88] sm:$0xf]
      %v260 = vld [vmem:[%s230 + $0x8c] sm:$0xf]
      %v261 = vld [vmem:[%s230 + $0x90] sm:$0xf]
      %v262 = vld [vmem:[%s230 + $0x94] sm:$0xf]
      %v263 = vld [vmem:[%s230 + $0xa0] sm:$0xf]
      %v264 = vld [vmem:[%s230 + $0xa4] sm:$0xf]
      %v265 = vld [vmem:[%s230 + $0xa8] sm:$0xf]
      %v266 = vld [vmem:[%s230 + $0xac] sm:$0xf]
      %v267 = vld [vmem:[%s230 + $0xb0] sm:$0xf]
      %v268 = vld [vmem:[%s230 + $0xb4] sm:$0xf]
      %v269 = vld [vmem:[%s230 + $0xb8] sm:$0xf]
      %v270 = vld [vmem:[%s230 + $0xbc] sm:$0xf]
      %v271 = vld [vmem:[%s230 + $0xc8] sm:$0xf]
      %v272 = vld [vmem:[%s230 + $0xcc] sm:$0xf]
      %v273 = vld [vmem:[%s230 + $0xd0] sm:$0xf]
      %v274 = vld [vmem:[%s230 + $0xd4] sm:$0xf]
      %v275 = vld [vmem:[%s230 + $0xd8] sm:$0xf]
      %v276 = vld [vmem:[%s230 + $0xdc] sm:$0xf]
      %v277 = vld [vmem:[%s230 + $0xe0] sm:$0xf]
      %v278 = vld [vmem:[%s230 + $0xe4] sm:$0xf]
      %v279 = vld [vmem:[%s230 + $0xf0] sm:$0xf]
      %v280 = vld [vmem:[%s230 + $0xf4] sm:$0xf]
      %v281 = vld [vmem:[%s230 + $0xf8] sm:$0xf]
      %v282 = vld [vmem:[%s230 + $0xfc] sm:$0xf]
      %v283 = vld [vmem:[%s230 + $0x100] sm:$0xf]
      %v284 = vld [vmem:[%s230 + $0x104] sm:$0xf]
      %v285 = vld [vmem:[%s230 + $0x108] sm:$0xf]
      %v286 = vld [vmem:[%s230 + $0x10c] sm:$0xf]
      %v287 = vld [vmem:[%s230 + $0x118] sm:$0xf]
      %v288 = vld [vmem:[%s230 + $0x11c] sm:$0xf]
      %v289 = vld [vmem:[%s230 + $0x120] sm:$0xf]
      %v290 = vld [vmem:[%s230 + $0x124] sm:$0xf]
      %v291 = vld [vmem:[%s230 + $0x128] sm:$0xf]
      %v292 = vld [vmem:[%s230 + $0x12c] sm:$0xf]
      %v293 = vld [vmem:[%s230 + $0x130] sm:$0xf]
      %v294 = vld [vmem:[%s230 + $0x134] sm:$0xf]
      %s295 = sadd.s32 2, %s161
      %s296 = smul.addr %s295, 4
      %s297 = scalar_lea.vmem %s152, %s296
      %v298 = vld [vmem:[%s297] sm:$0xf]
      %v299 = vld [vmem:[%s297 + $0x4] sm:$0xf]
      %v300 = vld [vmem:[%s297 + $0x8] sm:$0xf]
      %v301 = vld [vmem:[%s297 + $0xc] sm:$0xf]
      %v302 = vld [vmem:[%s297 + $0x10] sm:$0xf]
      %v303 = vld [vmem:[%s297 + $0x14] sm:$0xf]
      %v304 = vld [vmem:[%s297 + $0x18] sm:$0xf]
      %v305 = vld [vmem:[%s297 + $0x1c] sm:$0xf]
      %v306 = vld [vmem:[%s297 + $0x28] sm:$0xf]
      %v307 = vld [vmem:[%s297 + $0x2c] sm:$0xf]
      %v308 = vld [vmem:[%s297 + $0x30] sm:$0xf]
      %v309 = vld [vmem:[%s297 + $0x34] sm:$0xf]
      %v310 = vld [vmem:[%s297 + $0x38] sm:$0xf]
      %v311 = vld [vmem:[%s297 + $0x3c] sm:$0xf]
      %v312 = vld [vmem:[%s297 + $0x40] sm:$0xf]
      %v313 = vld [vmem:[%s297 + $0x44] sm:$0xf]
      %v314 = vld [vmem:[%s297 + $0x50] sm:$0xf]
      %v315 = vld [vmem:[%s297 + $0x54] sm:$0xf]
      %v316 = vld [vmem:[%s297 + $0x58] sm:$0xf]
      %v317 = vld [vmem:[%s297 + $0x5c] sm:$0xf]
      %v318 = vld [vmem:[%s297 + $0x60] sm:$0xf]
      %v319 = vld [vmem:[%s297 + $0x64] sm:$0xf]
      %v320 = vld [vmem:[%s297 + $0x68] sm:$0xf]
      %v321 = vld [vmem:[%s297 + $0x6c] sm:$0xf]
      %v322 = vld [vmem:[%s297 + $0x78] sm:$0xf]
      %v323 = vld [vmem:[%s297 + $0x7c] sm:$0xf]
      %v324 = vld [vmem:[%s297 + $0x80] sm:$0xf]
      %v325 = vld [vmem:[%s297 + $0x84] sm:$0xf]
      %v326 = vld [vmem:[%s297 + $0x88] sm:$0xf]
      %v327 = vld [vmem:[%s297 + $0x8c] sm:$0xf]
      %v328 = vld [vmem:[%s297 + $0x90] sm:$0xf]
      %v329 = vld [vmem:[%s297 + $0x94] sm:$0xf]
      %v330 = vld [vmem:[%s297 + $0xa0] sm:$0xf]
      %v331 = vld [vmem:[%s297 + $0xa4] sm:$0xf]
      %v332 = vld [vmem:[%s297 + $0xa8] sm:$0xf]
      %v333 = vld [vmem:[%s297 + $0xac] sm:$0xf]
      %v334 = vld [vmem:[%s297 + $0xb0] sm:$0xf]
      %v335 = vld [vmem:[%s297 + $0xb4] sm:$0xf]
      %v336 = vld [vmem:[%s297 + $0xb8] sm:$0xf]
      %v337 = vld [vmem:[%s297 + $0xbc] sm:$0xf]
      %v338 = vld [vmem:[%s297 + $0xc8] sm:$0xf]
      %v339 = vld [vmem:[%s297 + $0xcc] sm:$0xf]
      %v340 = vld [vmem:[%s297 + $0xd0] sm:$0xf]
      %v341 = vld [vmem:[%s297 + $0xd4] sm:$0xf]
      %v342 = vld [vmem:[%s297 + $0xd8] sm:$0xf]
      %v343 = vld [vmem:[%s297 + $0xdc] sm:$0xf]
      %v344 = vld [vmem:[%s297 + $0xe0] sm:$0xf]
      %v345 = vld [vmem:[%s297 + $0xe4] sm:$0xf]
      %v346 = vld [vmem:[%s297 + $0xf0] sm:$0xf]
      %v347 = vld [vmem:[%s297 + $0xf4] sm:$0xf]
      %v348 = vld [vmem:[%s297 + $0xf8] sm:$0xf]
      %v349 = vld [vmem:[%s297 + $0xfc] sm:$0xf]
      %v350 = vld [vmem:[%s297 + $0x100] sm:$0xf]
      %v351 = vld [vmem:[%s297 + $0x104] sm:$0xf]
      %v352 = vld [vmem:[%s297 + $0x108] sm:$0xf]
      %v353 = vld [vmem:[%s297 + $0x10c] sm:$0xf]
      %v354 = vld [vmem:[%s297 + $0x118] sm:$0xf]
      %v355 = vld [vmem:[%s297 + $0x11c] sm:$0xf]
      %v356 = vld [vmem:[%s297 + $0x120] sm:$0xf]
      %v357 = vld [vmem:[%s297 + $0x124] sm:$0xf]
      %v358 = vld [vmem:[%s297 + $0x128] sm:$0xf]
      %v359 = vld [vmem:[%s297 + $0x12c] sm:$0xf]
      %v360 = vld [vmem:[%s297 + $0x130] sm:$0xf]
      %v361 = vld [vmem:[%s297 + $0x134] sm:$0xf]
      %s362 = sadd.s32 %s160, 1
      %s363 = smul.u32 %s362, 10
      %s364 = smul.addr %s363, 4
      %s365 = scalar_lea.vmem %s152, %s364
      %v366 = vld [vmem:[%s365] sm:$0xf]
      %v367 = vld [vmem:[%s365 + $0x4] sm:$0xf]
      %v368 = vld [vmem:[%s365 + $0x8] sm:$0xf]
      %v369 = vld [vmem:[%s365 + $0xc] sm:$0xf]
      %v370 = vld [vmem:[%s365 + $0x10] sm:$0xf]
      %v371 = vld [vmem:[%s365 + $0x14] sm:$0xf]
      %v372 = vld [vmem:[%s365 + $0x18] sm:$0xf]
      %v373 = vld [vmem:[%s365 + $0x1c] sm:$0xf]
      %v374 = vld [vmem:[%s365 + $0x28] sm:$0xf]
      %v375 = vld [vmem:[%s365 + $0x2c] sm:$0xf]
      %v376 = vld [vmem:[%s365 + $0x30] sm:$0xf]
      %v377 = vld [vmem:[%s365 + $0x34] sm:$0xf]
      %v378 = vld [vmem:[%s365 + $0x38] sm:$0xf]
      %v379 = vld [vmem:[%s365 + $0x3c] sm:$0xf]
      %v380 = vld [vmem:[%s365 + $0x40] sm:$0xf]
      %v381 = vld [vmem:[%s365 + $0x44] sm:$0xf]
      %v382 = vld [vmem:[%s365 + $0x50] sm:$0xf]
      %v383 = vld [vmem:[%s365 + $0x54] sm:$0xf]
      %v384 = vld [vmem:[%s365 + $0x58] sm:$0xf]
      %v385 = vld [vmem:[%s365 + $0x5c] sm:$0xf]
      %v386 = vld [vmem:[%s365 + $0x60] sm:$0xf]
      %v387 = vld [vmem:[%s365 + $0x64] sm:$0xf]
      %v388 = vld [vmem:[%s365 + $0x68] sm:$0xf]
      %v389 = vld [vmem:[%s365 + $0x6c] sm:$0xf]
      %v390 = vld [vmem:[%s365 + $0x78] sm:$0xf]
      %v391 = vld [vmem:[%s365 + $0x7c] sm:$0xf]
      %v392 = vld [vmem:[%s365 + $0x80] sm:$0xf]
      %v393 = vld [vmem:[%s365 + $0x84] sm:$0xf]
      %v394 = vld [vmem:[%s365 + $0x88] sm:$0xf]
      %v395 = vld [vmem:[%s365 + $0x8c] sm:$0xf]
      %v396 = vld [vmem:[%s365 + $0x90] sm:$0xf]
      %v397 = vld [vmem:[%s365 + $0x94] sm:$0xf]
      %v398 = vld [vmem:[%s365 + $0xa0] sm:$0xf]
      %v399 = vld [vmem:[%s365 + $0xa4] sm:$0xf]
      %v400 = vld [vmem:[%s365 + $0xa8] sm:$0xf]
      %v401 = vld [vmem:[%s365 + $0xac] sm:$0xf]
      %v402 = vld [vmem:[%s365 + $0xb0] sm:$0xf]
      %v403 = vld [vmem:[%s365 + $0xb4] sm:$0xf]
      %v404 = vld [vmem:[%s365 + $0xb8] sm:$0xf]
      %v405 = vld [vmem:[%s365 + $0xbc] sm:$0xf]
      %v406 = vld [vmem:[%s365 + $0xc8] sm:$0xf]
      %v407 = vld [vmem:[%s365 + $0xcc] sm:$0xf]
      %v408 = vld [vmem:[%s365 + $0xd0] sm:$0xf]
      %v409 = vld [vmem:[%s365 + $0xd4] sm:$0xf]
      %v410 = vld [vmem:[%s365 + $0xd8] sm:$0xf]
      %v411 = vld [vmem:[%s365 + $0xdc] sm:$0xf]
      %v412 = vld [vmem:[%s365 + $0xe0] sm:$0xf]
      %v413 = vld [vmem:[%s365 + $0xe4] sm:$0xf]
      %v414 = vld [vmem:[%s365 + $0xf0] sm:$0xf]
      %v415 = vld [vmem:[%s365 + $0xf4] sm:$0xf]
      %v416 = vld [vmem:[%s365 + $0xf8] sm:$0xf]
      %v417 = vld [vmem:[%s365 + $0xfc] sm:$0xf]
      %v418 = vld [vmem:[%s365 + $0x100] sm:$0xf]
      %v419 = vld [vmem:[%s365 + $0x104] sm:$0xf]
      %v420 = vld [vmem:[%s365 + $0x108] sm:$0xf]
      %v421 = vld [vmem:[%s365 + $0x10c] sm:$0xf]
      %v422 = vld [vmem:[%s365 + $0x118] sm:$0xf]
      %v423 = vld [vmem:[%s365 + $0x11c] sm:$0xf]
      %v424 = vld [vmem:[%s365 + $0x120] sm:$0xf]
      %v425 = vld [vmem:[%s365 + $0x124] sm:$0xf]
      %v426 = vld [vmem:[%s365 + $0x128] sm:$0xf]
      %v427 = vld [vmem:[%s365 + $0x12c] sm:$0xf]
      %v428 = vld [vmem:[%s365 + $0x130] sm:$0xf]
      %v429 = vld [vmem:[%s365 + $0x134] sm:$0xf]
      %s430 = sadd.s32 1, %s363
      %s431 = smul.addr %s430, 4
      %s432 = scalar_lea.vmem %s152, %s431
      %v433 = vld [vmem:[%s432] sm:$0xf]
      %v434 = vld [vmem:[%s432 + $0x4] sm:$0xf]
      %v435 = vld [vmem:[%s432 + $0x8] sm:$0xf]
      %v436 = vld [vmem:[%s432 + $0xc] sm:$0xf]
      %v437 = vld [vmem:[%s432 + $0x10] sm:$0xf]
      %v438 = vld [vmem:[%s432 + $0x14] sm:$0xf]
      %v439 = vld [vmem:[%s432 + $0x18] sm:$0xf]
      %v440 = vld [vmem:[%s432 + $0x1c] sm:$0xf]
      %v441 = vld [vmem:[%s432 + $0x28] sm:$0xf]
      %v442 = vld [vmem:[%s432 + $0x2c] sm:$0xf]
      %v443 = vld [vmem:[%s432 + $0x30] sm:$0xf]
      %v444 = vld [vmem:[%s432 + $0x34] sm:$0xf]
      %v445 = vld [vmem:[%s432 + $0x38] sm:$0xf]
      %v446 = vld [vmem:[%s432 + $0x3c] sm:$0xf]
      %v447 = vld [vmem:[%s432 + $0x40] sm:$0xf]
      %v448 = vld [vmem:[%s432 + $0x44] sm:$0xf]
      %v449 = vld [vmem:[%s432 + $0x50] sm:$0xf]
      %v450 = vld [vmem:[%s432 + $0x54] sm:$0xf]
      %v451 = vld [vmem:[%s432 + $0x58] sm:$0xf]
      %v452 = vld [vmem:[%s432 + $0x5c] sm:$0xf]
      %v453 = vld [vmem:[%s432 + $0x60] sm:$0xf]
      %v454 = vld [vmem:[%s432 + $0x64] sm:$0xf]
      %v455 = vld [vmem:[%s432 + $0x68] sm:$0xf]
      %v456 = vld [vmem:[%s432 + $0x6c] sm:$0xf]
      %v457 = vld [vmem:[%s432 + $0x78] sm:$0xf]
      %v458 = vld [vmem:[%s432 + $0x7c] sm:$0xf]
      %v459 = vld [vmem:[%s432 + $0x80] sm:$0xf]
      %v460 = vld [vmem:[%s432 + $0x84] sm:$0xf]
      %v461 = vld [vmem:[%s432 + $0x88] sm:$0xf]
      %v462 = vld [vmem:[%s432 + $0x8c] sm:$0xf]
      %v463 = vld [vmem:[%s432 + $0x90] sm:$0xf]
      %v464 = vld [vmem:[%s432 + $0x94] sm:$0xf]
      %v465 = vld [vmem:[%s432 + $0xa0] sm:$0xf]
      %v466 = vld [vmem:[%s432 + $0xa4] sm:$0xf]
      %v467 = vld [vmem:[%s432 + $0xa8] sm:$0xf]
      %v468 = vld [vmem:[%s432 + $0xac] sm:$0xf]
      %v469 = vld [vmem:[%s432 + $0xb0] sm:$0xf]
      %v470 = vld [vmem:[%s432 + $0xb4] sm:$0xf]
      %v471 = vld [vmem:[%s432 + $0xb8] sm:$0xf]
      %v472 = vld [vmem:[%s432 + $0xbc] sm:$0xf]
      %v473 = vld [vmem:[%s432 + $0xc8] sm:$0xf]
      %v474 = vld [vmem:[%s432 + $0xcc] sm:$0xf]
      %v475 = vld [vmem:[%s432 + $0xd0] sm:$0xf]
      %v476 = vld [vmem:[%s432 + $0xd4] sm:$0xf]
      %v477 = vld [vmem:[%s432 + $0xd8] sm:$0xf]
      %v478 = vld [vmem:[%s432 + $0xdc] sm:$0xf]
      %v479 = vld [vmem:[%s432 + $0xe0] sm:$0xf]
      %v480 = vld [vmem:[%s432 + $0xe4] sm:$0xf]
      %v481 = vld [vmem:[%s432 + $0xf0] sm:$0xf]
      %v482 = vld [vmem:[%s432 + $0xf4] sm:$0xf]
      %v483 = vld [vmem:[%s432 + $0xf8] sm:$0xf]
      %v484 = vld [vmem:[%s432 + $0xfc] sm:$0xf]
      %v485 = vld [vmem:[%s432 + $0x100] sm:$0xf]
      %v486 = vld [vmem:[%s432 + $0x104] sm:$0xf]
      %v487 = vld [vmem:[%s432 + $0x108] sm:$0xf]
      %v488 = vld [vmem:[%s432 + $0x10c] sm:$0xf]
      %v489 = vld [vmem:[%s432 + $0x118] sm:$0xf]
      %v490 = vld [vmem:[%s432 + $0x11c] sm:$0xf]
      %v491 = vld [vmem:[%s432 + $0x120] sm:$0xf]
      %v492 = vld [vmem:[%s432 + $0x124] sm:$0xf]
      %v493 = vld [vmem:[%s432 + $0x128] sm:$0xf]
      %v494 = vld [vmem:[%s432 + $0x12c] sm:$0xf]
      %v495 = vld [vmem:[%s432 + $0x130] sm:$0xf]
      %v496 = vld [vmem:[%s432 + $0x134] sm:$0xf]
      %s497 = sadd.s32 2, %s363
      %s498 = smul.addr %s497, 4
      %s499 = scalar_lea.vmem %s152, %s498
      %v500 = vld [vmem:[%s499] sm:$0xf]
      %v501 = vld [vmem:[%s499 + $0x4] sm:$0xf]
      %v502 = vld [vmem:[%s499 + $0x8] sm:$0xf]
      %v503 = vld [vmem:[%s499 + $0xc] sm:$0xf]
      %v504 = vld [vmem:[%s499 + $0x10] sm:$0xf]
      %v505 = vld [vmem:[%s499 + $0x14] sm:$0xf]
      %v506 = vld [vmem:[%s499 + $0x18] sm:$0xf]
      %v507 = vld [vmem:[%s499 + $0x1c] sm:$0xf]
      %v508 = vld [vmem:[%s499 + $0x28] sm:$0xf]
      %v509 = vld [vmem:[%s499 + $0x2c] sm:$0xf]
      %v510 = vld [vmem:[%s499 + $0x30] sm:$0xf]
      %v511 = vld [vmem:[%s499 + $0x34] sm:$0xf]
      %v512 = vld [vmem:[%s499 + $0x38] sm:$0xf]
      %v513 = vld [vmem:[%s499 + $0x3c] sm:$0xf]
      %v514 = vld [vmem:[%s499 + $0x40] sm:$0xf]
      %v515 = vld [vmem:[%s499 + $0x44] sm:$0xf]
      %v516 = vld [vmem:[%s499 + $0x50] sm:$0xf]
      %v517 = vld [vmem:[%s499 + $0x54] sm:$0xf]
      %v518 = vld [vmem:[%s499 + $0x58] sm:$0xf]
      %v519 = vld [vmem:[%s499 + $0x5c] sm:$0xf]
      %v520 = vld [vmem:[%s499 + $0x60] sm:$0xf]
      %v521 = vld [vmem:[%s499 + $0x64] sm:$0xf]
      %v522 = vld [vmem:[%s499 + $0x68] sm:$0xf]
      %v523 = vld [vmem:[%s499 + $0x6c] sm:$0xf]
      %v524 = vld [vmem:[%s499 + $0x78] sm:$0xf]
      %v525 = vld [vmem:[%s499 + $0x7c] sm:$0xf]
      %v526 = vld [vmem:[%s499 + $0x80] sm:$0xf]
      %v527 = vld [vmem:[%s499 + $0x84] sm:$0xf]
      %v528 = vld [vmem:[%s499 + $0x88] sm:$0xf]
      %v529 = vld [vmem:[%s499 + $0x8c] sm:$0xf]
      %v530 = vld [vmem:[%s499 + $0x90] sm:$0xf]
      %v531 = vld [vmem:[%s499 + $0x94] sm:$0xf]
      %v532 = vld [vmem:[%s499 + $0xa0] sm:$0xf]
      %v533 = vld [vmem:[%s499 + $0xa4] sm:$0xf]
      %v534 = vld [vmem:[%s499 + $0xa8] sm:$0xf]
      %v535 = vld [vmem:[%s499 + $0xac] sm:$0xf]
      %v536 = vld [vmem:[%s499 + $0xb0] sm:$0xf]
      %v537 = vld [vmem:[%s499 + $0xb4] sm:$0xf]
      %v538 = vld [vmem:[%s499 + $0xb8] sm:$0xf]
      %v539 = vld [vmem:[%s499 + $0xbc] sm:$0xf]
      %v540 = vld [vmem:[%s499 + $0xc8] sm:$0xf]
      %v541 = vld [vmem:[%s499 + $0xcc] sm:$0xf]
      %v542 = vld [vmem:[%s499 + $0xd0] sm:$0xf]
      %v543 = vld [vmem:[%s499 + $0xd4] sm:$0xf]
      %v544 = vld [vmem:[%s499 + $0xd8] sm:$0xf]
      %v545 = vld [vmem:[%s499 + $0xdc] sm:$0xf]
      %v546 = vld [vmem:[%s499 + $0xe0] sm:$0xf]
      %v547 = vld [vmem:[%s499 + $0xe4] sm:$0xf]
      %v548 = vld [vmem:[%s499 + $0xf0] sm:$0xf]
      %v549 = vld [vmem:[%s499 + $0xf4] sm:$0xf]
      %v550 = vld [vmem:[%s499 + $0xf8] sm:$0xf]
      %v551 = vld [vmem:[%s499 + $0xfc] sm:$0xf]
      %v552 = vld [vmem:[%s499 + $0x100] sm:$0xf]
      %v553 = vld [vmem:[%s499 + $0x104] sm:$0xf]
      %v554 = vld [vmem:[%s499 + $0x108] sm:$0xf]
      %v555 = vld [vmem:[%s499 + $0x10c] sm:$0xf]
      %v556 = vld [vmem:[%s499 + $0x118] sm:$0xf]
      %v557 = vld [vmem:[%s499 + $0x11c] sm:$0xf]
      %v558 = vld [vmem:[%s499 + $0x120] sm:$0xf]
      %v559 = vld [vmem:[%s499 + $0x124] sm:$0xf]
      %v560 = vld [vmem:[%s499 + $0x128] sm:$0xf]
      %v561 = vld [vmem:[%s499 + $0x12c] sm:$0xf]
      %v562 = vld [vmem:[%s499 + $0x130] sm:$0xf]
      %v563 = vld [vmem:[%s499 + $0x134] sm:$0xf]
      %s564 = sadd.s32 %s160, 2
      %s565 = smul.u32 %s564, 10
      %s566 = smul.addr %s565, 4
      %s567 = scalar_lea.vmem %s152, %s566
      %v568 = vld [vmem:[%s567] sm:$0xf]
      %v569 = vld [vmem:[%s567 + $0x4] sm:$0xf]
      %v570 = vld [vmem:[%s567 + $0x8] sm:$0xf]
      %v571 = vld [vmem:[%s567 + $0xc] sm:$0xf]
      %v572 = vld [vmem:[%s567 + $0x10] sm:$0xf]
      %v573 = vld [vmem:[%s567 + $0x14] sm:$0xf]
      %v574 = vld [vmem:[%s567 + $0x18] sm:$0xf]
      %v575 = vld [vmem:[%s567 + $0x1c] sm:$0xf]
      %v576 = vld [vmem:[%s567 + $0x28] sm:$0xf]
      %v577 = vld [vmem:[%s567 + $0x2c] sm:$0xf]
      %v578 = vld [vmem:[%s567 + $0x30] sm:$0xf]
      %v579 = vld [vmem:[%s567 + $0x34] sm:$0xf]
      %v580 = vld [vmem:[%s567 + $0x38] sm:$0xf]
      %v581 = vld [vmem:[%s567 + $0x3c] sm:$0xf]
      %v582 = vld [vmem:[%s567 + $0x40] sm:$0xf]
      %v583 = vld [vmem:[%s567 + $0x44] sm:$0xf]
      %v584 = vld [vmem:[%s567 + $0x50] sm:$0xf]
      %v585 = vld [vmem:[%s567 + $0x54] sm:$0xf]
      %v586 = vld [vmem:[%s567 + $0x58] sm:$0xf]
      %v587 = vld [vmem:[%s567 + $0x5c] sm:$0xf]
      %v588 = vld [vmem:[%s567 + $0x60] sm:$0xf]
      %v589 = vld [vmem:[%s567 + $0x64] sm:$0xf]
      %v590 = vld [vmem:[%s567 + $0x68] sm:$0xf]
      %v591 = vld [vmem:[%s567 + $0x6c] sm:$0xf]
      %v592 = vld [vmem:[%s567 + $0x78] sm:$0xf]
      %v593 = vld [vmem:[%s567 + $0x7c] sm:$0xf]
      %v594 = vld [vmem:[%s567 + $0x80] sm:$0xf]
      %v595 = vld [vmem:[%s567 + $0x84] sm:$0xf]
      %v596 = vld [vmem:[%s567 + $0x88] sm:$0xf]
      %v597 = vld [vmem:[%s567 + $0x8c] sm:$0xf]
      %v598 = vld [vmem:[%s567 + $0x90] sm:$0xf]
      %v599 = vld [vmem:[%s567 + $0x94] sm:$0xf]
      %v600 = vld [vmem:[%s567 + $0xa0] sm:$0xf]
      %v601 = vld [vmem:[%s567 + $0xa4] sm:$0xf]
      %v602 = vld [vmem:[%s567 + $0xa8] sm:$0xf]
      %v603 = vld [vmem:[%s567 + $0xac] sm:$0xf]
      %v604 = vld [vmem:[%s567 + $0xb0] sm:$0xf]
      %v605 = vld [vmem:[%s567 + $0xb4] sm:$0xf]
      %v606 = vld [vmem:[%s567 + $0xb8] sm:$0xf]
      %v607 = vld [vmem:[%s567 + $0xbc] sm:$0xf]
      %v608 = vld [vmem:[%s567 + $0xc8] sm:$0xf]
      %v609 = vld [vmem:[%s567 + $0xcc] sm:$0xf]
      %v610 = vld [vmem:[%s567 + $0xd0] sm:$0xf]
      %v611 = vld [vmem:[%s567 + $0xd4] sm:$0xf]
      %v612 = vld [vmem:[%s567 + $0xd8] sm:$0xf]
      %v613 = vld [vmem:[%s567 + $0xdc] sm:$0xf]
      %v614 = vld [vmem:[%s567 + $0xe0] sm:$0xf]
      %v615 = vld [vmem:[%s567 + $0xe4] sm:$0xf]
      %v616 = vld [vmem:[%s567 + $0xf0] sm:$0xf]
      %v617 = vld [vmem:[%s567 + $0xf4] sm:$0xf]
      %v618 = vld [vmem:[%s567 + $0xf8] sm:$0xf]
      %v619 = vld [vmem:[%s567 + $0xfc] sm:$0xf]
      %v620 = vld [vmem:[%s567 + $0x100] sm:$0xf]
      %v621 = vld [vmem:[%s567 + $0x104] sm:$0xf]
      %v622 = vld [vmem:[%s567 + $0x108] sm:$0xf]
      %v623 = vld [vmem:[%s567 + $0x10c] sm:$0xf]
      %v624 = vld [vmem:[%s567 + $0x118] sm:$0xf]
      %v625 = vld [vmem:[%s567 + $0x11c] sm:$0xf]
      %v626 = vld [vmem:[%s567 + $0x120] sm:$0xf]
      %v627 = vld [vmem:[%s567 + $0x124] sm:$0xf]
      %v628 = vld [vmem:[%s567 + $0x128] sm:$0xf]
      %v629 = vld [vmem:[%s567 + $0x12c] sm:$0xf]
      %v630 = vld [vmem:[%s567 + $0x130] sm:$0xf]
      %v631 = vld [vmem:[%s567 + $0x134] sm:$0xf]
      %s632 = sadd.s32 1, %s565
      %s633 = smul.addr %s632, 4
      %s634 = scalar_lea.vmem %s152, %s633
      %v635 = vld [vmem:[%s634] sm:$0xf]
      %v636 = vld [vmem:[%s634 + $0x4] sm:$0xf]
      %v637 = vld [vmem:[%s634 + $0x8] sm:$0xf]
      %v638 = vld [vmem:[%s634 + $0xc] sm:$0xf]
      %v639 = vld [vmem:[%s634 + $0x10] sm:$0xf]
      %v640 = vld [vmem:[%s634 + $0x14] sm:$0xf]
      %v641 = vld [vmem:[%s634 + $0x18] sm:$0xf]
      %v642 = vld [vmem:[%s634 + $0x1c] sm:$0xf]
      %v643 = vld [vmem:[%s634 + $0x28] sm:$0xf]
      %v644 = vld [vmem:[%s634 + $0x2c] sm:$0xf]
      %v645 = vld [vmem:[%s634 + $0x30] sm:$0xf]
      %v646 = vld [vmem:[%s634 + $0x34] sm:$0xf]
      %v647 = vld [vmem:[%s634 + $0x38] sm:$0xf]
      %v648 = vld [vmem:[%s634 + $0x3c] sm:$0xf]
      %v649 = vld [vmem:[%s634 + $0x40] sm:$0xf]
      %v650 = vld [vmem:[%s634 + $0x44] sm:$0xf]
      %v651 = vld [vmem:[%s634 + $0x50] sm:$0xf]
      %v652 = vld [vmem:[%s634 + $0x54] sm:$0xf]
      %v653 = vld [vmem:[%s634 + $0x58] sm:$0xf]
      %v654 = vld [vmem:[%s634 + $0x5c] sm:$0xf]
      %v655 = vld [vmem:[%s634 + $0x60] sm:$0xf]
      %v656 = vld [vmem:[%s634 + $0x64] sm:$0xf]
      %v657 = vld [vmem:[%s634 + $0x68] sm:$0xf]
      %v658 = vld [vmem:[%s634 + $0x6c] sm:$0xf]
      %v659 = vld [vmem:[%s634 + $0x78] sm:$0xf]
      %v660 = vld [vmem:[%s634 + $0x7c] sm:$0xf]
      %v661 = vld [vmem:[%s634 + $0x80] sm:$0xf]
      %v662 = vld [vmem:[%s634 + $0x84] sm:$0xf]
      %v663 = vld [vmem:[%s634 + $0x88] sm:$0xf]
      %v664 = vld [vmem:[%s634 + $0x8c] sm:$0xf]
      %v665 = vld [vmem:[%s634 + $0x90] sm:$0xf]
      %v666 = vld [vmem:[%s634 + $0x94] sm:$0xf]
      %v667 = vld [vmem:[%s634 + $0xa0] sm:$0xf]
      %v668 = vld [vmem:[%s634 + $0xa4] sm:$0xf]
      %v669 = vld [vmem:[%s634 + $0xa8] sm:$0xf]
      %v670 = vld [vmem:[%s634 + $0xac] sm:$0xf]
      %v671 = vld [vmem:[%s634 + $0xb0] sm:$0xf]
      %v672 = vld [vmem:[%s634 + $0xb4] sm:$0xf]
      %v673 = vld [vmem:[%s634 + $0xb8] sm:$0xf]
      %v674 = vld [vmem:[%s634 + $0xbc] sm:$0xf]
      %v675 = vld [vmem:[%s634 + $0xc8] sm:$0xf]
      %v676 = vld [vmem:[%s634 + $0xcc] sm:$0xf]
      %v677 = vld [vmem:[%s634 + $0xd0] sm:$0xf]
      %v678 = vld [vmem:[%s634 + $0xd4] sm:$0xf]
      %v679 = vld [vmem:[%s634 + $0xd8] sm:$0xf]
      %v680 = vld [vmem:[%s634 + $0xdc] sm:$0xf]
      %v681 = vld [vmem:[%s634 + $0xe0] sm:$0xf]
      %v682 = vld [vmem:[%s634 + $0xe4] sm:$0xf]
      %v683 = vld [vmem:[%s634 + $0xf0] sm:$0xf]
      %v684 = vld [vmem:[%s634 + $0xf4] sm:$0xf]
      %v685 = vld [vmem:[%s634 + $0xf8] sm:$0xf]
      %v686 = vld [vmem:[%s634 + $0xfc] sm:$0xf]
      %v687 = vld [vmem:[%s634 + $0x100] sm:$0xf]
      %v688 = vld [vmem:[%s634 + $0x104] sm:$0xf]
      %v689 = vld [vmem:[%s634 + $0x108] sm:$0xf]
      %v690 = vld [vmem:[%s634 + $0x10c] sm:$0xf]
      %v691 = vld [vmem:[%s634 + $0x118] sm:$0xf]
      %v692 = vld [vmem:[%s634 + $0x11c] sm:$0xf]
      %v693 = vld [vmem:[%s634 + $0x120] sm:$0xf]
      %v694 = vld [vmem:[%s634 + $0x124] sm:$0xf]
      %v695 = vld [vmem:[%s634 + $0x128] sm:$0xf]
      %v696 = vld [vmem:[%s634 + $0x12c] sm:$0xf]
      %v697 = vld [vmem:[%s634 + $0x130] sm:$0xf]
      %v698 = vld [vmem:[%s634 + $0x134] sm:$0xf]
      %s699 = sadd.s32 2, %s565
      %s700 = smul.addr %s699, 4
      %s701 = scalar_lea.vmem %s152, %s700
      %v702 = vld [vmem:[%s701] sm:$0xf]
      %v703 = vld [vmem:[%s701 + $0x4] sm:$0xf]
      %v704 = vld [vmem:[%s701 + $0x8] sm:$0xf]
      %v705 = vld [vmem:[%s701 + $0xc] sm:$0xf]
      %v706 = vld [vmem:[%s701 + $0x10] sm:$0xf]
      %v707 = vld [vmem:[%s701 + $0x14] sm:$0xf]
      %v708 = vld [vmem:[%s701 + $0x18] sm:$0xf]
      %v709 = vld [vmem:[%s701 + $0x1c] sm:$0xf]
      %v710 = vld [vmem:[%s701 + $0x28] sm:$0xf]
      %v711 = vld [vmem:[%s701 + $0x2c] sm:$0xf]
      %v712 = vld [vmem:[%s701 + $0x30] sm:$0xf]
      %v713 = vld [vmem:[%s701 + $0x34] sm:$0xf]
      %v714 = vld [vmem:[%s701 + $0x38] sm:$0xf]
      %v715 = vld [vmem:[%s701 + $0x3c] sm:$0xf]
      %v716 = vld [vmem:[%s701 + $0x40] sm:$0xf]
      %v717 = vld [vmem:[%s701 + $0x44] sm:$0xf]
      %v718 = vld [vmem:[%s701 + $0x50] sm:$0xf]
      %v719 = vld [vmem:[%s701 + $0x54] sm:$0xf]
      %v720 = vld [vmem:[%s701 + $0x58] sm:$0xf]
      %v721 = vld [vmem:[%s701 + $0x5c] sm:$0xf]
      %v722 = vld [vmem:[%s701 + $0x60] sm:$0xf]
      %v723 = vld [vmem:[%s701 + $0x64] sm:$0xf]
      %v724 = vld [vmem:[%s701 + $0x68] sm:$0xf]
      %v725 = vld [vmem:[%s701 + $0x6c] sm:$0xf]
      %v726 = vld [vmem:[%s701 + $0x78] sm:$0xf]
      %v727 = vld [vmem:[%s701 + $0x7c] sm:$0xf]
      %v728 = vld [vmem:[%s701 + $0x80] sm:$0xf]
      %v729 = vld [vmem:[%s701 + $0x84] sm:$0xf]
      %v730 = vld [vmem:[%s701 + $0x88] sm:$0xf]
      %v731 = vld [vmem:[%s701 + $0x8c] sm:$0xf]
      %v732 = vld [vmem:[%s701 + $0x90] sm:$0xf]
      %v733 = vld [vmem:[%s701 + $0x94] sm:$0xf]
      %v734 = vld [vmem:[%s701 + $0xa0] sm:$0xf]
      %v735 = vld [vmem:[%s701 + $0xa4] sm:$0xf]
      %v736 = vld [vmem:[%s701 + $0xa8] sm:$0xf]
      %v737 = vld [vmem:[%s701 + $0xac] sm:$0xf]
      %v738 = vld [vmem:[%s701 + $0xb0] sm:$0xf]
      %v739 = vld [vmem:[%s701 + $0xb4] sm:$0xf]
      %v740 = vld [vmem:[%s701 + $0xb8] sm:$0xf]
      %v741 = vld [vmem:[%s701 + $0xbc] sm:$0xf]
      %v742 = vld [vmem:[%s701 + $0xc8] sm:$0xf]
      %v743 = vld [vmem:[%s701 + $0xcc] sm:$0xf]
      %v744 = vld [vmem:[%s701 + $0xd0] sm:$0xf]
      %v745 = vld [vmem:[%s701 + $0xd4] sm:$0xf]
      %v746 = vld [vmem:[%s701 + $0xd8] sm:$0xf]
      %v747 = vld [vmem:[%s701 + $0xdc] sm:$0xf]
      %v748 = vld [vmem:[%s701 + $0xe0] sm:$0xf]
      %v749 = vld [vmem:[%s701 + $0xe4] sm:$0xf]
      %v750 = vld [vmem:[%s701 + $0xf0] sm:$0xf]
      %v751 = vld [vmem:[%s701 + $0xf4] sm:$0xf]
      %v752 = vld [vmem:[%s701 + $0xf8] sm:$0xf]
      %v753 = vld [vmem:[%s701 + $0xfc] sm:$0xf]
      %v754 = vld [vmem:[%s701 + $0x100] sm:$0xf]
      %v755 = vld [vmem:[%s701 + $0x104] sm:$0xf]
      %v756 = vld [vmem:[%s701 + $0x108] sm:$0xf]
      %v757 = vld [vmem:[%s701 + $0x10c] sm:$0xf]
      %v758 = vld [vmem:[%s701 + $0x118] sm:$0xf]
      %v759 = vld [vmem:[%s701 + $0x11c] sm:$0xf]
      %v760 = vld [vmem:[%s701 + $0x120] sm:$0xf]
      %v761 = vld [vmem:[%s701 + $0x124] sm:$0xf]
      %v762 = vld [vmem:[%s701 + $0x128] sm:$0xf]
      %v763 = vld [vmem:[%s701 + $0x12c] sm:$0xf]
      %v764 = vld [vmem:[%s701 + $0x130] sm:$0xf]
      %v765 = vld [vmem:[%s701 + $0x134] sm:$0xf]
      %v830 = vunpack.c.l.b16 %v164
      %v831 = vunpack.c.l.b16 %v165
      %v832 = vunpack.c.l.b16 %v166
      %v833 = vunpack.c.l.b16 %v167
      %v834 = vunpack.c.l.b16 %v168
      %v835 = vunpack.c.l.b16 %v169
      %v836 = vunpack.c.l.b16 %v170
      %v837 = vunpack.c.l.b16 %v171
      %v838 = vunpack.c.l.b16 %v172
      %v839 = vunpack.c.l.b16 %v173
      %v840 = vunpack.c.l.b16 %v174
      %v841 = vunpack.c.l.b16 %v175
      %v842 = vunpack.c.l.b16 %v176
      %v843 = vunpack.c.l.b16 %v177
      %v844 = vunpack.c.l.b16 %v178
      %v845 = vunpack.c.l.b16 %v179
      %v846 = vunpack.c.l.b16 %v180
      %v847 = vunpack.c.l.b16 %v181
      %v848 = vunpack.c.l.b16 %v182
      %v849 = vunpack.c.l.b16 %v183
      %v850 = vunpack.c.l.b16 %v184
      %v851 = vunpack.c.l.b16 %v185
      %v852 = vunpack.c.l.b16 %v186
      %v853 = vunpack.c.l.b16 %v187
      %v854 = vunpack.c.l.b16 %v188
      %v855 = vunpack.c.l.b16 %v189
      %v856 = vunpack.c.l.b16 %v190
      %v857 = vunpack.c.l.b16 %v191
      %v858 = vunpack.c.l.b16 %v192
      %v859 = vunpack.c.l.b16 %v193
      %v860 = vunpack.c.l.b16 %v194
      %v861 = vunpack.c.l.b16 %v195
      %v862 = vunpack.c.l.b16 %v196
      %v863 = vunpack.c.l.b16 %v197
      %v864 = vunpack.c.l.b16 %v198
      %v865 = vunpack.c.l.b16 %v199
      %v866 = vunpack.c.l.b16 %v200
      %v867 = vunpack.c.l.b16 %v201
      %v868 = vunpack.c.l.b16 %v202
      %v869 = vunpack.c.l.b16 %v203
      %v870 = vunpack.c.l.b16 %v204
      %v871 = vunpack.c.l.b16 %v205
      %v872 = vunpack.c.l.b16 %v206
      %v873 = vunpack.c.l.b16 %v207
      %v874 = vunpack.c.l.b16 %v208
      %v875 = vunpack.c.l.b16 %v209
      %v876 = vunpack.c.l.b16 %v210
      %v877 = vunpack.c.l.b16 %v211
      %v878 = vunpack.c.l.b16 %v212
      %v879 = vunpack.c.l.b16 %v213
      %v880 = vunpack.c.l.b16 %v214
      %v881 = vunpack.c.l.b16 %v215
      %v882 = vunpack.c.l.b16 %v216
      %v883 = vunpack.c.l.b16 %v217
      %v884 = vunpack.c.l.b16 %v218
      %v885 = vunpack.c.l.b16 %v219
      %v886 = vunpack.c.l.b16 %v220
      %v887 = vunpack.c.l.b16 %v221
      %v888 = vunpack.c.l.b16 %v222
      %v889 = vunpack.c.l.b16 %v223
      %v890 = vunpack.c.l.b16 %v224
      %v891 = vunpack.c.l.b16 %v225
      %v892 = vunpack.c.l.b16 %v226
      %v893 = vunpack.c.l.b16 %v227
      %v894 = vpack.c.b16 %v831, %v830
      %v895 = vpack.c.b16 %v833, %v832
      %v896 = vpack.c.b16 %v835, %v834
      %v897 = vpack.c.b16 %v837, %v836
      %v898 = vpack.c.b16 %v839, %v838
      %v899 = vpack.c.b16 %v841, %v840
      %v900 = vpack.c.b16 %v843, %v842
      %v901 = vpack.c.b16 %v845, %v844
      %v902 = vpack.c.b16 %v847, %v846
      %v903 = vpack.c.b16 %v849, %v848
      %v904 = vpack.c.b16 %v851, %v850
      %v905 = vpack.c.b16 %v853, %v852
      %v906 = vpack.c.b16 %v855, %v854
      %v907 = vpack.c.b16 %v857, %v856
      %v908 = vpack.c.b16 %v859, %v858
      %v909 = vpack.c.b16 %v861, %v860
      %v910 = vpack.c.b16 %v863, %v862
      %v911 = vpack.c.b16 %v865, %v864
      %v912 = vpack.c.b16 %v867, %v866
      %v913 = vpack.c.b16 %v869, %v868
      %v914 = vpack.c.b16 %v871, %v870
      %v915 = vpack.c.b16 %v873, %v872
      %v916 = vpack.c.b16 %v875, %v874
      %v917 = vpack.c.b16 %v877, %v876
      %v918 = vpack.c.b16 %v879, %v878
      %v919 = vpack.c.b16 %v881, %v880
      %v920 = vpack.c.b16 %v883, %v882
      %v921 = vpack.c.b16 %v885, %v884
      %v922 = vpack.c.b16 %v887, %v886
      %v923 = vpack.c.b16 %v889, %v888
      %v924 = vpack.c.b16 %v891, %v890
      %v925 = vpack.c.b16 %v893, %v892
      %v990 = vunpack.c.l.b16 %v231
      %v991 = vunpack.c.l.b16 %v232
      %v992 = vunpack.c.l.b16 %v233
      %v993 = vunpack.c.l.b16 %v234
      %v994 = vunpack.c.l.b16 %v235
      %v995 = vunpack.c.l.b16 %v236
      %v996 = vunpack.c.l.b16 %v237
      %v997 = vunpack.c.l.b16 %v238
      %v998 = vunpack.c.l.b16 %v239
      %v999 = vunpack.c.l.b16 %v240
      %v1000 = vunpack.c.l.b16 %v241
      %v1001 = vunpack.c.l.b16 %v242
      %v1002 = vunpack.c.l.b16 %v243
      %v1003 = vunpack.c.l.b16 %v244
      %v1004 = vunpack.c.l.b16 %v245
      %v1005 = vunpack.c.l.b16 %v246
      %v1006 = vunpack.c.l.b16 %v247
      %v1007 = vunpack.c.l.b16 %v248
      %v1008 = vunpack.c.l.b16 %v249
      %v1009 = vunpack.c.l.b16 %v250
      %v1010 = vunpack.c.l.b16 %v251
      %v1011 = vunpack.c.l.b16 %v252
      %v1012 = vunpack.c.l.b16 %v253
      %v1013 = vunpack.c.l.b16 %v254
      %v1014 = vunpack.c.l.b16 %v255
      %v1015 = vunpack.c.l.b16 %v256
      %v1016 = vunpack.c.l.b16 %v257
      %v1017 = vunpack.c.l.b16 %v258
      %v1018 = vunpack.c.l.b16 %v259
      %v1019 = vunpack.c.l.b16 %v260
      %v1020 = vunpack.c.l.b16 %v261
      %v1021 = vunpack.c.l.b16 %v262
      %v1022 = vunpack.c.l.b16 %v263
      %v1023 = vunpack.c.l.b16 %v264
      %v1024 = vunpack.c.l.b16 %v265
      %v1025 = vunpack.c.l.b16 %v266
      %v1026 = vunpack.c.l.b16 %v267
      %v1027 = vunpack.c.l.b16 %v268
      %v1028 = vunpack.c.l.b16 %v269
      %v1029 = vunpack.c.l.b16 %v270
      %v1030 = vunpack.c.l.b16 %v271
      %v1031 = vunpack.c.l.b16 %v272
      %v1032 = vunpack.c.l.b16 %v273
      %v1033 = vunpack.c.l.b16 %v274
      %v1034 = vunpack.c.l.b16 %v275
      %v1035 = vunpack.c.l.b16 %v276
      %v1036 = vunpack.c.l.b16 %v277
      %v1037 = vunpack.c.l.b16 %v278
      %v1038 = vunpack.c.l.b16 %v279
      %v1039 = vunpack.c.l.b16 %v280
      %v1040 = vunpack.c.l.b16 %v281
      %v1041 = vunpack.c.l.b16 %v282
      %v1042 = vunpack.c.l.b16 %v283
      %v1043 = vunpack.c.l.b16 %v284
      %v1044 = vunpack.c.l.b16 %v285
      %v1045 = vunpack.c.l.b16 %v286
      %v1046 = vunpack.c.l.b16 %v287
      %v1047 = vunpack.c.l.b16 %v288
      %v1048 = vunpack.c.l.b16 %v289
      %v1049 = vunpack.c.l.b16 %v290
      %v1050 = vunpack.c.l.b16 %v291
      %v1051 = vunpack.c.l.b16 %v292
      %v1052 = vunpack.c.l.b16 %v293
      %v1053 = vunpack.c.l.b16 %v294
      %v1054 = vpack.c.b16 %v991, %v990
      %v1055 = vpack.c.b16 %v993, %v992
      %v1056 = vpack.c.b16 %v995, %v994
      %v1057 = vpack.c.b16 %v997, %v996
      %v1058 = vpack.c.b16 %v999, %v998
      %v1059 = vpack.c.b16 %v1001, %v1000
      %v1060 = vpack.c.b16 %v1003, %v1002
      %v1061 = vpack.c.b16 %v1005, %v1004
      %v1062 = vpack.c.b16 %v1007, %v1006
      %v1063 = vpack.c.b16 %v1009, %v1008
      %v1064 = vpack.c.b16 %v1011, %v1010
      %v1065 = vpack.c.b16 %v1013, %v1012
      %v1066 = vpack.c.b16 %v1015, %v1014
      %v1067 = vpack.c.b16 %v1017, %v1016
      %v1068 = vpack.c.b16 %v1019, %v1018
      %v1069 = vpack.c.b16 %v1021, %v1020
      %v1070 = vpack.c.b16 %v1023, %v1022
      %v1071 = vpack.c.b16 %v1025, %v1024
      %v1072 = vpack.c.b16 %v1027, %v1026
      %v1073 = vpack.c.b16 %v1029, %v1028
      %v1074 = vpack.c.b16 %v1031, %v1030
      %v1075 = vpack.c.b16 %v1033, %v1032
      %v1076 = vpack.c.b16 %v1035, %v1034
      %v1077 = vpack.c.b16 %v1037, %v1036
      %v1078 = vpack.c.b16 %v1039, %v1038
      %v1079 = vpack.c.b16 %v1041, %v1040
      %v1080 = vpack.c.b16 %v1043, %v1042
      %v1081 = vpack.c.b16 %v1045, %v1044
      %v1082 = vpack.c.b16 %v1047, %v1046
      %v1083 = vpack.c.b16 %v1049, %v1048
      %v1084 = vpack.c.b16 %v1051, %v1050
      %v1085 = vpack.c.b16 %v1053, %v1052
      %1086 = vrot.lane.b32.xlu0 %v1054, 12
      %v1087 = vpop.permute.xlu0 %1086
      %1088 = vrot.lane.b32.xlu0 %v1055, 12
      %v1089 = vpop.permute.xlu0 %1088
      %1090 = vrot.lane.b32.xlu0 %v1056, 12
      %v1091 = vpop.permute.xlu0 %1090
      %1092 = vrot.lane.b32.xlu0 %v1057, 12
      %v1093 = vpop.permute.xlu0 %1092
      %1094 = vrot.lane.b32.xlu0 %v1058, 12
      %v1095 = vpop.permute.xlu0 %1094
      %1096 = vrot.lane.b32.xlu0 %v1059, 12
      %v1097 = vpop.permute.xlu0 %1096
      %1098 = vrot.lane.b32.xlu0 %v1060, 12
      %v1099 = vpop.permute.xlu0 %1098
      %1100 = vrot.lane.b32.xlu0 %v1061, 12
      %v1101 = vpop.permute.xlu0 %1100
      %1102 = vrot.lane.b32.xlu0 %v1062, 12
      %v1103 = vpop.permute.xlu0 %1102
      %1104 = vrot.lane.b32.xlu0 %v1063, 12
      %v1105 = vpop.permute.xlu0 %1104
      %1106 = vrot.lane.b32.xlu0 %v1064, 12
      %v1107 = vpop.permute.xlu0 %1106
      %1108 = vrot.lane.b32.xlu0 %v1065, 12
      %v1109 = vpop.permute.xlu0 %1108
      %1110 = vrot.lane.b32.xlu0 %v1066, 12
      %v1111 = vpop.permute.xlu0 %1110
      %1112 = vrot.lane.b32.xlu0 %v1067, 12
      %v1113 = vpop.permute.xlu0 %1112
      %1114 = vrot.lane.b32.xlu0 %v1068, 12
      %v1115 = vpop.permute.xlu0 %1114
      %1116 = vrot.lane.b32.xlu0 %v1069, 12
      %v1117 = vpop.permute.xlu0 %1116
      %1118 = vrot.lane.b32.xlu0 %v1070, 12
      %v1119 = vpop.permute.xlu0 %1118
      %1120 = vrot.lane.b32.xlu0 %v1071, 12
      %v1121 = vpop.permute.xlu0 %1120
      %1122 = vrot.lane.b32.xlu0 %v1072, 12
      %v1123 = vpop.permute.xlu0 %1122
      %1124 = vrot.lane.b32.xlu0 %v1073, 12
      %v1125 = vpop.permute.xlu0 %1124
      %1126 = vrot.lane.b32.xlu0 %v1074, 12
      %v1127 = vpop.permute.xlu0 %1126
      %1128 = vrot.lane.b32.xlu0 %v1075, 12
      %v1129 = vpop.permute.xlu0 %1128
      %1130 = vrot.lane.b32.xlu0 %v1076, 12
      %v1131 = vpop.permute.xlu0 %1130
      %1132 = vrot.lane.b32.xlu0 %v1077, 12
      %v1133 = vpop.permute.xlu0 %1132
      %1134 = vrot.lane.b32.xlu0 %v1078, 12
      %v1135 = vpop.permute.xlu0 %1134
      %1136 = vrot.lane.b32.xlu0 %v1079, 12
      %v1137 = vpop.permute.xlu0 %1136
      %1138 = vrot.lane.b32.xlu0 %v1080, 12
      %v1139 = vpop.permute.xlu0 %1138
      %1140 = vrot.lane.b32.xlu0 %v1081, 12
      %v1141 = vpop.permute.xlu0 %1140
      %1142 = vrot.lane.b32.xlu0 %v1082, 12
      %v1143 = vpop.permute.xlu0 %1142
      %1144 = vrot.lane.b32.xlu0 %v1083, 12
      %v1145 = vpop.permute.xlu0 %1144
      %1146 = vrot.lane.b32.xlu0 %v1084, 12
      %v1147 = vpop.permute.xlu0 %1146
      %1148 = vrot.lane.b32.xlu0 %v1085, 12
      %v1149 = vpop.permute.xlu0 %1148
      %v1214 = vunpack.c.l.b16 %v298
      %v1215 = vunpack.c.l.b16 %v299
      %v1216 = vunpack.c.l.b16 %v300
      %v1217 = vunpack.c.l.b16 %v301
      %v1218 = vunpack.c.l.b16 %v302
      %v1219 = vunpack.c.l.b16 %v303
      %v1220 = vunpack.c.l.b16 %v304
      %v1221 = vunpack.c.l.b16 %v305
      %v1222 = vunpack.c.l.b16 %v306
      %v1223 = vunpack.c.l.b16 %v307
      %v1224 = vunpack.c.l.b16 %v308
      %v1225 = vunpack.c.l.b16 %v309
      %v1226 = vunpack.c.l.b16 %v310
      %v1227 = vunpack.c.l.b16 %v311
      %v1228 = vunpack.c.l.b16 %v312
      %v1229 = vunpack.c.l.b16 %v313
      %v1230 = vunpack.c.l.b16 %v314
      %v1231 = vunpack.c.l.b16 %v315
      %v1232 = vunpack.c.l.b16 %v316
      %v1233 = vunpack.c.l.b16 %v317
      %v1234 = vunpack.c.l.b16 %v318
      %v1235 = vunpack.c.l.b16 %v319
      %v1236 = vunpack.c.l.b16 %v320
      %v1237 = vunpack.c.l.b16 %v321
      %v1238 = vunpack.c.l.b16 %v322
      %v1239 = vunpack.c.l.b16 %v323
      %v1240 = vunpack.c.l.b16 %v324
      %v1241 = vunpack.c.l.b16 %v325
      %v1242 = vunpack.c.l.b16 %v326
      %v1243 = vunpack.c.l.b16 %v327
      %v1244 = vunpack.c.l.b16 %v328
      %v1245 = vunpack.c.l.b16 %v329
      %v1246 = vunpack.c.l.b16 %v330
      %v1247 = vunpack.c.l.b16 %v331
      %v1248 = vunpack.c.l.b16 %v332
      %v1249 = vunpack.c.l.b16 %v333
      %v1250 = vunpack.c.l.b16 %v334
      %v1251 = vunpack.c.l.b16 %v335
      %v1252 = vunpack.c.l.b16 %v336
      %v1253 = vunpack.c.l.b16 %v337
      %v1254 = vunpack.c.l.b16 %v338
      %v1255 = vunpack.c.l.b16 %v339
      %v1256 = vunpack.c.l.b16 %v340
      %v1257 = vunpack.c.l.b16 %v341
      %v1258 = vunpack.c.l.b16 %v342
      %v1259 = vunpack.c.l.b16 %v343
      %v1260 = vunpack.c.l.b16 %v344
      %v1261 = vunpack.c.l.b16 %v345
      %v1262 = vunpack.c.l.b16 %v346
      %v1263 = vunpack.c.l.b16 %v347
      %v1264 = vunpack.c.l.b16 %v348
      %v1265 = vunpack.c.l.b16 %v349
      %v1266 = vunpack.c.l.b16 %v350
      %v1267 = vunpack.c.l.b16 %v351
      %v1268 = vunpack.c.l.b16 %v352
      %v1269 = vunpack.c.l.b16 %v353
      %v1270 = vunpack.c.l.b16 %v354
      %v1271 = vunpack.c.l.b16 %v355
      %v1272 = vunpack.c.l.b16 %v356
      %v1273 = vunpack.c.l.b16 %v357
      %v1274 = vunpack.c.l.b16 %v358
      %v1275 = vunpack.c.l.b16 %v359
      %v1276 = vunpack.c.l.b16 %v360
      %v1277 = vunpack.c.l.b16 %v361
      %v1278 = vpack.c.b16 %v1215, %v1214
      %v1279 = vpack.c.b16 %v1217, %v1216
      %v1280 = vpack.c.b16 %v1219, %v1218
      %v1281 = vpack.c.b16 %v1221, %v1220
      %v1282 = vpack.c.b16 %v1223, %v1222
      %v1283 = vpack.c.b16 %v1225, %v1224
      %v1284 = vpack.c.b16 %v1227, %v1226
      %v1285 = vpack.c.b16 %v1229, %v1228
      %v1286 = vpack.c.b16 %v1231, %v1230
      %v1287 = vpack.c.b16 %v1233, %v1232
      %v1288 = vpack.c.b16 %v1235, %v1234
      %v1289 = vpack.c.b16 %v1237, %v1236
      %v1290 = vpack.c.b16 %v1239, %v1238
      %v1291 = vpack.c.b16 %v1241, %v1240
      %v1292 = vpack.c.b16 %v1243, %v1242
      %v1293 = vpack.c.b16 %v1245, %v1244
      %v1294 = vpack.c.b16 %v1247, %v1246
      %v1295 = vpack.c.b16 %v1249, %v1248
      %v1296 = vpack.c.b16 %v1251, %v1250
      %v1297 = vpack.c.b16 %v1253, %v1252
      %v1298 = vpack.c.b16 %v1255, %v1254
      %v1299 = vpack.c.b16 %v1257, %v1256
      %v1300 = vpack.c.b16 %v1259, %v1258
      %v1301 = vpack.c.b16 %v1261, %v1260
      %v1302 = vpack.c.b16 %v1263, %v1262
      %v1303 = vpack.c.b16 %v1265, %v1264
      %v1304 = vpack.c.b16 %v1267, %v1266
      %v1305 = vpack.c.b16 %v1269, %v1268
      %v1306 = vpack.c.b16 %v1271, %v1270
      %v1307 = vpack.c.b16 %v1273, %v1272
      %v1308 = vpack.c.b16 %v1275, %v1274
      %v1309 = vpack.c.b16 %v1277, %v1276
      %1310 = vrot.lane.b32.xlu0 %v1278, 24
      %v1311 = vpop.permute.xlu0 %1310
      %1312 = vrot.lane.b32.xlu0 %v1279, 24
      %v1313 = vpop.permute.xlu0 %1312
      %1314 = vrot.lane.b32.xlu0 %v1280, 24
      %v1315 = vpop.permute.xlu0 %1314
      %1316 = vrot.lane.b32.xlu0 %v1281, 24
      %v1317 = vpop.permute.xlu0 %1316
      %1318 = vrot.lane.b32.xlu0 %v1282, 24
      %v1319 = vpop.permute.xlu0 %1318
      %1320 = vrot.lane.b32.xlu0 %v1283, 24
      %v1321 = vpop.permute.xlu0 %1320
      %1322 = vrot.lane.b32.xlu0 %v1284, 24
      %v1323 = vpop.permute.xlu0 %1322
      %1324 = vrot.lane.b32.xlu0 %v1285, 24
      %v1325 = vpop.permute.xlu0 %1324
      %1326 = vrot.lane.b32.xlu0 %v1286, 24
      %v1327 = vpop.permute.xlu0 %1326
      %1328 = vrot.lane.b32.xlu0 %v1287, 24
      %v1329 = vpop.permute.xlu0 %1328
      %1330 = vrot.lane.b32.xlu0 %v1288, 24
      %v1331 = vpop.permute.xlu0 %1330
      %1332 = vrot.lane.b32.xlu0 %v1289, 24
      %v1333 = vpop.permute.xlu0 %1332
      %1334 = vrot.lane.b32.xlu0 %v1290, 24
      %v1335 = vpop.permute.xlu0 %1334
      %1336 = vrot.lane.b32.xlu0 %v1291, 24
      %v1337 = vpop.permute.xlu0 %1336
      %1338 = vrot.lane.b32.xlu0 %v1292, 24
      %v1339 = vpop.permute.xlu0 %1338
      %1340 = vrot.lane.b32.xlu0 %v1293, 24
      %v1341 = vpop.permute.xlu0 %1340
      %1342 = vrot.lane.b32.xlu0 %v1294, 24
      %v1343 = vpop.permute.xlu0 %1342
      %1344 = vrot.lane.b32.xlu0 %v1295, 24
      %v1345 = vpop.permute.xlu0 %1344
      %1346 = vrot.lane.b32.xlu0 %v1296, 24
      %v1347 = vpop.permute.xlu0 %1346
      %1348 = vrot.lane.b32.xlu0 %v1297, 24
      %v1349 = vpop.permute.xlu0 %1348
      %1350 = vrot.lane.b32.xlu0 %v1298, 24
      %v1351 = vpop.permute.xlu0 %1350
      %1352 = vrot.lane.b32.xlu0 %v1299, 24
      %v1353 = vpop.permute.xlu0 %1352
      %1354 = vrot.lane.b32.xlu0 %v1300, 24
      %v1355 = vpop.permute.xlu0 %1354
      %1356 = vrot.lane.b32.xlu0 %v1301, 24
      %v1357 = vpop.permute.xlu0 %1356
      %1358 = vrot.lane.b32.xlu0 %v1302, 24
      %v1359 = vpop.permute.xlu0 %1358
      %1360 = vrot.lane.b32.xlu0 %v1303, 24
      %v1361 = vpop.permute.xlu0 %1360
      %1362 = vrot.lane.b32.xlu0 %v1304, 24
      %v1363 = vpop.permute.xlu0 %1362
      %1364 = vrot.lane.b32.xlu0 %v1305, 24
      %v1365 = vpop.permute.xlu0 %1364
      %1366 = vrot.lane.b32.xlu0 %v1306, 24
      %v1367 = vpop.permute.xlu0 %1366
      %1368 = vrot.lane.b32.xlu0 %v1307, 24
      %v1369 = vpop.permute.xlu0 %1368
      %1370 = vrot.lane.b32.xlu0 %v1308, 24
      %v1371 = vpop.permute.xlu0 %1370
      %1372 = vrot.lane.b32.xlu0 %v1309, 24
      %v1373 = vpop.permute.xlu0 %1372
      %v1438 = vunpack.c.l.b16 %v366
      %v1439 = vunpack.c.l.b16 %v367
      %v1440 = vunpack.c.l.b16 %v368
      %v1441 = vunpack.c.l.b16 %v369
      %v1442 = vunpack.c.l.b16 %v370
      %v1443 = vunpack.c.l.b16 %v371
      %v1444 = vunpack.c.l.b16 %v372
      %v1445 = vunpack.c.l.b16 %v373
      %v1446 = vunpack.c.l.b16 %v374
      %v1447 = vunpack.c.l.b16 %v375
      %v1448 = vunpack.c.l.b16 %v376
      %v1449 = vunpack.c.l.b16 %v377
      %v1450 = vunpack.c.l.b16 %v378
      %v1451 = vunpack.c.l.b16 %v379
      %v1452 = vunpack.c.l.b16 %v380
      %v1453 = vunpack.c.l.b16 %v381
      %v1454 = vunpack.c.l.b16 %v382
      %v1455 = vunpack.c.l.b16 %v383
      %v1456 = vunpack.c.l.b16 %v384
      %v1457 = vunpack.c.l.b16 %v385
      %v1458 = vunpack.c.l.b16 %v386
      %v1459 = vunpack.c.l.b16 %v387
      %v1460 = vunpack.c.l.b16 %v388
      %v1461 = vunpack.c.l.b16 %v389
      %v1462 = vunpack.c.l.b16 %v390
      %v1463 = vunpack.c.l.b16 %v391
      %v1464 = vunpack.c.l.b16 %v392
      %v1465 = vunpack.c.l.b16 %v393
      %v1466 = vunpack.c.l.b16 %v394
      %v1467 = vunpack.c.l.b16 %v395
      %v1468 = vunpack.c.l.b16 %v396
      %v1469 = vunpack.c.l.b16 %v397
      %v1470 = vunpack.c.l.b16 %v398
      %v1471 = vunpack.c.l.b16 %v399
      %v1472 = vunpack.c.l.b16 %v400
      %v1473 = vunpack.c.l.b16 %v401
      %v1474 = vunpack.c.l.b16 %v402
      %v1475 = vunpack.c.l.b16 %v403
      %v1476 = vunpack.c.l.b16 %v404
      %v1477 = vunpack.c.l.b16 %v405
      %v1478 = vunpack.c.l.b16 %v406
      %v1479 = vunpack.c.l.b16 %v407
      %v1480 = vunpack.c.l.b16 %v408
      %v1481 = vunpack.c.l.b16 %v409
      %v1482 = vunpack.c.l.b16 %v410
      %v1483 = vunpack.c.l.b16 %v411
      %v1484 = vunpack.c.l.b16 %v412
      %v1485 = vunpack.c.l.b16 %v413
      %v1486 = vunpack.c.l.b16 %v414
      %v1487 = vunpack.c.l.b16 %v415
      %v1488 = vunpack.c.l.b16 %v416
      %v1489 = vunpack.c.l.b16 %v417
      %v1490 = vunpack.c.l.b16 %v418
      %v1491 = vunpack.c.l.b16 %v419
      %v1492 = vunpack.c.l.b16 %v420
      %v1493 = vunpack.c.l.b16 %v421
      %v1494 = vunpack.c.l.b16 %v422
      %v1495 = vunpack.c.l.b16 %v423
      %v1496 = vunpack.c.l.b16 %v424
      %v1497 = vunpack.c.l.b16 %v425
      %v1498 = vunpack.c.l.b16 %v426
      %v1499 = vunpack.c.l.b16 %v427
      %v1500 = vunpack.c.l.b16 %v428
      %v1501 = vunpack.c.l.b16 %v429
      %v1502 = vpack.c.b16 %v1439, %v1438
      %v1503 = vpack.c.b16 %v1441, %v1440
      %v1504 = vpack.c.b16 %v1443, %v1442
      %v1505 = vpack.c.b16 %v1445, %v1444
      %v1506 = vpack.c.b16 %v1447, %v1446
      %v1507 = vpack.c.b16 %v1449, %v1448
      %v1508 = vpack.c.b16 %v1451, %v1450
      %v1509 = vpack.c.b16 %v1453, %v1452
      %v1510 = vpack.c.b16 %v1455, %v1454
      %v1511 = vpack.c.b16 %v1457, %v1456
      %v1512 = vpack.c.b16 %v1459, %v1458
      %v1513 = vpack.c.b16 %v1461, %v1460
      %v1514 = vpack.c.b16 %v1463, %v1462
      %v1515 = vpack.c.b16 %v1465, %v1464
      %v1516 = vpack.c.b16 %v1467, %v1466
      %v1517 = vpack.c.b16 %v1469, %v1468
      %v1518 = vpack.c.b16 %v1471, %v1470
      %v1519 = vpack.c.b16 %v1473, %v1472
      %v1520 = vpack.c.b16 %v1475, %v1474
      %v1521 = vpack.c.b16 %v1477, %v1476
      %v1522 = vpack.c.b16 %v1479, %v1478
      %v1523 = vpack.c.b16 %v1481, %v1480
      %v1524 = vpack.c.b16 %v1483, %v1482
      %v1525 = vpack.c.b16 %v1485, %v1484
      %v1526 = vpack.c.b16 %v1487, %v1486
      %v1527 = vpack.c.b16 %v1489, %v1488
      %v1528 = vpack.c.b16 %v1491, %v1490
      %v1529 = vpack.c.b16 %v1493, %v1492
      %v1530 = vpack.c.b16 %v1495, %v1494
      %v1531 = vpack.c.b16 %v1497, %v1496
      %v1532 = vpack.c.b16 %v1499, %v1498
      %v1533 = vpack.c.b16 %v1501, %v1500
      %1534 = vrot.lane.b32.xlu0 %v1502, 36
      %v1535 = vpop.permute.xlu0 %1534
      %1536 = vrot.lane.b32.xlu0 %v1503, 36
      %v1537 = vpop.permute.xlu0 %1536
      %1538 = vrot.lane.b32.xlu0 %v1504, 36
      %v1539 = vpop.permute.xlu0 %1538
      %1540 = vrot.lane.b32.xlu0 %v1505, 36
      %v1541 = vpop.permute.xlu0 %1540
      %1542 = vrot.lane.b32.xlu0 %v1506, 36
      %v1543 = vpop.permute.xlu0 %1542
      %1544 = vrot.lane.b32.xlu0 %v1507, 36
      %v1545 = vpop.permute.xlu0 %1544
      %1546 = vrot.lane.b32.xlu0 %v1508, 36
      %v1547 = vpop.permute.xlu0 %1546
      %1548 = vrot.lane.b32.xlu0 %v1509, 36
      %v1549 = vpop.permute.xlu0 %1548
      %1550 = vrot.lane.b32.xlu0 %v1510, 36
      %v1551 = vpop.permute.xlu0 %1550
      %1552 = vrot.lane.b32.xlu0 %v1511, 36
      %v1553 = vpop.permute.xlu0 %1552
      %1554 = vrot.lane.b32.xlu0 %v1512, 36
      %v1555 = vpop.permute.xlu0 %1554
      %1556 = vrot.lane.b32.xlu0 %v1513, 36
      %v1557 = vpop.permute.xlu0 %1556
      %1558 = vrot.lane.b32.xlu0 %v1514, 36
      %v1559 = vpop.permute.xlu0 %1558
      %1560 = vrot.lane.b32.xlu0 %v1515, 36
      %v1561 = vpop.permute.xlu0 %1560
      %1562 = vrot.lane.b32.xlu0 %v1516, 36
      %v1563 = vpop.permute.xlu0 %1562
      %1564 = vrot.lane.b32.xlu0 %v1517, 36
      %v1565 = vpop.permute.xlu0 %1564
      %1566 = vrot.lane.b32.xlu0 %v1518, 36
      %v1567 = vpop.permute.xlu0 %1566
      %1568 = vrot.lane.b32.xlu0 %v1519, 36
      %v1569 = vpop.permute.xlu0 %1568
      %1570 = vrot.lane.b32.xlu0 %v1520, 36
      %v1571 = vpop.permute.xlu0 %1570
      %1572 = vrot.lane.b32.xlu0 %v1521, 36
      %v1573 = vpop.permute.xlu0 %1572
      %1574 = vrot.lane.b32.xlu0 %v1522, 36
      %v1575 = vpop.permute.xlu0 %1574
      %1576 = vrot.lane.b32.xlu0 %v1523, 36
      %v1577 = vpop.permute.xlu0 %1576
      %1578 = vrot.lane.b32.xlu0 %v1524, 36
      %v1579 = vpop.permute.xlu0 %1578
      %1580 = vrot.lane.b32.xlu0 %v1525, 36
      %v1581 = vpop.permute.xlu0 %1580
      %1582 = vrot.lane.b32.xlu0 %v1526, 36
      %v1583 = vpop.permute.xlu0 %1582
      %1584 = vrot.lane.b32.xlu0 %v1527, 36
      %v1585 = vpop.permute.xlu0 %1584
      %1586 = vrot.lane.b32.xlu0 %v1528, 36
      %v1587 = vpop.permute.xlu0 %1586
      %1588 = vrot.lane.b32.xlu0 %v1529, 36
      %v1589 = vpop.permute.xlu0 %1588
      %1590 = vrot.lane.b32.xlu0 %v1530, 36
      %v1591 = vpop.permute.xlu0 %1590
      %1592 = vrot.lane.b32.xlu0 %v1531, 36
      %v1593 = vpop.permute.xlu0 %1592
      %1594 = vrot.lane.b32.xlu0 %v1532, 36
      %v1595 = vpop.permute.xlu0 %1594
      %1596 = vrot.lane.b32.xlu0 %v1533, 36
      %v1597 = vpop.permute.xlu0 %1596
      %v1662 = vunpack.c.l.b16 %v433
      %v1663 = vunpack.c.l.b16 %v434
      %v1664 = vunpack.c.l.b16 %v435
      %v1665 = vunpack.c.l.b16 %v436
      %v1666 = vunpack.c.l.b16 %v437
      %v1667 = vunpack.c.l.b16 %v438
      %v1668 = vunpack.c.l.b16 %v439
      %v1669 = vunpack.c.l.b16 %v440
      %v1670 = vunpack.c.l.b16 %v441
      %v1671 = vunpack.c.l.b16 %v442
      %v1672 = vunpack.c.l.b16 %v443
      %v1673 = vunpack.c.l.b16 %v444
      %v1674 = vunpack.c.l.b16 %v445
      %v1675 = vunpack.c.l.b16 %v446
      %v1676 = vunpack.c.l.b16 %v447
      %v1677 = vunpack.c.l.b16 %v448
      %v1678 = vunpack.c.l.b16 %v449
      %v1679 = vunpack.c.l.b16 %v450
      %v1680 = vunpack.c.l.b16 %v451
      %v1681 = vunpack.c.l.b16 %v452
      %v1682 = vunpack.c.l.b16 %v453
      %v1683 = vunpack.c.l.b16 %v454
      %v1684 = vunpack.c.l.b16 %v455
      %v1685 = vunpack.c.l.b16 %v456
      %v1686 = vunpack.c.l.b16 %v457
      %v1687 = vunpack.c.l.b16 %v458
      %v1688 = vunpack.c.l.b16 %v459
      %v1689 = vunpack.c.l.b16 %v460
      %v1690 = vunpack.c.l.b16 %v461
      %v1691 = vunpack.c.l.b16 %v462
      %v1692 = vunpack.c.l.b16 %v463
      %v1693 = vunpack.c.l.b16 %v464
      %v1694 = vunpack.c.l.b16 %v465
      %v1695 = vunpack.c.l.b16 %v466
      %v1696 = vunpack.c.l.b16 %v467
      %v1697 = vunpack.c.l.b16 %v468
      %v1698 = vunpack.c.l.b16 %v469
      %v1699 = vunpack.c.l.b16 %v470
      %v1700 = vunpack.c.l.b16 %v471
      %v1701 = vunpack.c.l.b16 %v472
      %v1702 = vunpack.c.l.b16 %v473
      %v1703 = vunpack.c.l.b16 %v474
      %v1704 = vunpack.c.l.b16 %v475
      %v1705 = vunpack.c.l.b16 %v476
      %v1706 = vunpack.c.l.b16 %v477
      %v1707 = vunpack.c.l.b16 %v478
      %v1708 = vunpack.c.l.b16 %v479
      %v1709 = vunpack.c.l.b16 %v480
      %v1710 = vunpack.c.l.b16 %v481
      %v1711 = vunpack.c.l.b16 %v482
      %v1712 = vunpack.c.l.b16 %v483
      %v1713 = vunpack.c.l.b16 %v484
      %v1714 = vunpack.c.l.b16 %v485
      %v1715 = vunpack.c.l.b16 %v486
      %v1716 = vunpack.c.l.b16 %v487
      %v1717 = vunpack.c.l.b16 %v488
      %v1718 = vunpack.c.l.b16 %v489
      %v1719 = vunpack.c.l.b16 %v490
      %v1720 = vunpack.c.l.b16 %v491
      %v1721 = vunpack.c.l.b16 %v492
      %v1722 = vunpack.c.l.b16 %v493
      %v1723 = vunpack.c.l.b16 %v494
      %v1724 = vunpack.c.l.b16 %v495
      %v1725 = vunpack.c.l.b16 %v496
      %v1726 = vpack.c.b16 %v1663, %v1662
      %v1727 = vpack.c.b16 %v1665, %v1664
      %v1728 = vpack.c.b16 %v1667, %v1666
      %v1729 = vpack.c.b16 %v1669, %v1668
      %v1730 = vpack.c.b16 %v1671, %v1670
      %v1731 = vpack.c.b16 %v1673, %v1672
      %v1732 = vpack.c.b16 %v1675, %v1674
      %v1733 = vpack.c.b16 %v1677, %v1676
      %v1734 = vpack.c.b16 %v1679, %v1678
      %v1735 = vpack.c.b16 %v1681, %v1680
      %v1736 = vpack.c.b16 %v1683, %v1682
      %v1737 = vpack.c.b16 %v1685, %v1684
      %v1738 = vpack.c.b16 %v1687, %v1686
      %v1739 = vpack.c.b16 %v1689, %v1688
      %v1740 = vpack.c.b16 %v1691, %v1690
      %v1741 = vpack.c.b16 %v1693, %v1692
      %v1742 = vpack.c.b16 %v1695, %v1694
      %v1743 = vpack.c.b16 %v1697, %v1696
      %v1744 = vpack.c.b16 %v1699, %v1698
      %v1745 = vpack.c.b16 %v1701, %v1700
      %v1746 = vpack.c.b16 %v1703, %v1702
      %v1747 = vpack.c.b16 %v1705, %v1704
      %v1748 = vpack.c.b16 %v1707, %v1706
      %v1749 = vpack.c.b16 %v1709, %v1708
      %v1750 = vpack.c.b16 %v1711, %v1710
      %v1751 = vpack.c.b16 %v1713, %v1712
      %v1752 = vpack.c.b16 %v1715, %v1714
      %v1753 = vpack.c.b16 %v1717, %v1716
      %v1754 = vpack.c.b16 %v1719, %v1718
      %v1755 = vpack.c.b16 %v1721, %v1720
      %v1756 = vpack.c.b16 %v1723, %v1722
      %v1757 = vpack.c.b16 %v1725, %v1724
      %1758 = vrot.lane.b32.xlu0 %v1726, 48
      %v1759 = vpop.permute.xlu0 %1758
      %1760 = vrot.lane.b32.xlu0 %v1727, 48
      %v1761 = vpop.permute.xlu0 %1760
      %1762 = vrot.lane.b32.xlu0 %v1728, 48
      %v1763 = vpop.permute.xlu0 %1762
      %1764 = vrot.lane.b32.xlu0 %v1729, 48
      %v1765 = vpop.permute.xlu0 %1764
      %1766 = vrot.lane.b32.xlu0 %v1730, 48
      %v1767 = vpop.permute.xlu0 %1766
      %1768 = vrot.lane.b32.xlu0 %v1731, 48
      %v1769 = vpop.permute.xlu0 %1768
      %1770 = vrot.lane.b32.xlu0 %v1732, 48
      %v1771 = vpop.permute.xlu0 %1770
      %1772 = vrot.lane.b32.xlu0 %v1733, 48
      %v1773 = vpop.permute.xlu0 %1772
      %1774 = vrot.lane.b32.xlu0 %v1734, 48
      %v1775 = vpop.permute.xlu0 %1774
      %1776 = vrot.lane.b32.xlu0 %v1735, 48
      %v1777 = vpop.permute.xlu0 %1776
      %1778 = vrot.lane.b32.xlu0 %v1736, 48
      %v1779 = vpop.permute.xlu0 %1778
      %1780 = vrot.lane.b32.xlu0 %v1737, 48
      %v1781 = vpop.permute.xlu0 %1780
      %1782 = vrot.lane.b32.xlu0 %v1738, 48
      %v1783 = vpop.permute.xlu0 %1782
      %1784 = vrot.lane.b32.xlu0 %v1739, 48
      %v1785 = vpop.permute.xlu0 %1784
      %1786 = vrot.lane.b32.xlu0 %v1740, 48
      %v1787 = vpop.permute.xlu0 %1786
      %1788 = vrot.lane.b32.xlu0 %v1741, 48
      %v1789 = vpop.permute.xlu0 %1788
      %1790 = vrot.lane.b32.xlu0 %v1742, 48
      %v1791 = vpop.permute.xlu0 %1790
      %1792 = vrot.lane.b32.xlu0 %v1743, 48
      %v1793 = vpop.permute.xlu0 %1792
      %1794 = vrot.lane.b32.xlu0 %v1744, 48
      %v1795 = vpop.permute.xlu0 %1794
      %1796 = vrot.lane.b32.xlu0 %v1745, 48
      %v1797 = vpop.permute.xlu0 %1796
      %1798 = vrot.lane.b32.xlu0 %v1746, 48
      %v1799 = vpop.permute.xlu0 %1798
      %1800 = vrot.lane.b32.xlu0 %v1747, 48
      %v1801 = vpop.permute.xlu0 %1800
      %1802 = vrot.lane.b32.xlu0 %v1748, 48
      %v1803 = vpop.permute.xlu0 %1802
      %1804 = vrot.lane.b32.xlu0 %v1749, 48
      %v1805 = vpop.permute.xlu0 %1804
      %1806 = vrot.lane.b32.xlu0 %v1750, 48
      %v1807 = vpop.permute.xlu0 %1806
      %1808 = vrot.lane.b32.xlu0 %v1751, 48
      %v1809 = vpop.permute.xlu0 %1808
      %1810 = vrot.lane.b32.xlu0 %v1752, 48
      %v1811 = vpop.permute.xlu0 %1810
      %1812 = vrot.lane.b32.xlu0 %v1753, 48
      %v1813 = vpop.permute.xlu0 %1812
      %1814 = vrot.lane.b32.xlu0 %v1754, 48
      %v1815 = vpop.permute.xlu0 %1814
      %1816 = vrot.lane.b32.xlu0 %v1755, 48
      %v1817 = vpop.permute.xlu0 %1816
      %1818 = vrot.lane.b32.xlu0 %v1756, 48
      %v1819 = vpop.permute.xlu0 %1818
      %1820 = vrot.lane.b32.xlu0 %v1757, 48
      %v1821 = vpop.permute.xlu0 %1820
      %v1886 = vunpack.c.l.b16 %v500
      %v1887 = vunpack.c.l.b16 %v501
      %v1888 = vunpack.c.l.b16 %v502
      %v1889 = vunpack.c.l.b16 %v503
      %v1890 = vunpack.c.l.b16 %v504
      %v1891 = vunpack.c.l.b16 %v505
      %v1892 = vunpack.c.l.b16 %v506
      %v1893 = vunpack.c.l.b16 %v507
      %v1894 = vunpack.c.l.b16 %v508
      %v1895 = vunpack.c.l.b16 %v509
      %v1896 = vunpack.c.l.b16 %v510
      %v1897 = vunpack.c.l.b16 %v511
      %v1898 = vunpack.c.l.b16 %v512
      %v1899 = vunpack.c.l.b16 %v513
      %v1900 = vunpack.c.l.b16 %v514
      %v1901 = vunpack.c.l.b16 %v515
      %v1902 = vunpack.c.l.b16 %v516
      %v1903 = vunpack.c.l.b16 %v517
      %v1904 = vunpack.c.l.b16 %v518
      %v1905 = vunpack.c.l.b16 %v519
      %v1906 = vunpack.c.l.b16 %v520
      %v1907 = vunpack.c.l.b16 %v521
      %v1908 = vunpack.c.l.b16 %v522
      %v1909 = vunpack.c.l.b16 %v523
      %v1910 = vunpack.c.l.b16 %v524
      %v1911 = vunpack.c.l.b16 %v525
      %v1912 = vunpack.c.l.b16 %v526
      %v1913 = vunpack.c.l.b16 %v527
      %v1914 = vunpack.c.l.b16 %v528
      %v1915 = vunpack.c.l.b16 %v529
      %v1916 = vunpack.c.l.b16 %v530
      %v1917 = vunpack.c.l.b16 %v531
      %v1918 = vunpack.c.l.b16 %v532
      %v1919 = vunpack.c.l.b16 %v533
      %v1920 = vunpack.c.l.b16 %v534
      %v1921 = vunpack.c.l.b16 %v535
      %v1922 = vunpack.c.l.b16 %v536
      %v1923 = vunpack.c.l.b16 %v537
      %v1924 = vunpack.c.l.b16 %v538
      %v1925 = vunpack.c.l.b16 %v539
      %v1926 = vunpack.c.l.b16 %v540
      %v1927 = vunpack.c.l.b16 %v541
      %v1928 = vunpack.c.l.b16 %v542
      %v1929 = vunpack.c.l.b16 %v543
      %v1930 = vunpack.c.l.b16 %v544
      %v1931 = vunpack.c.l.b16 %v545
      %v1932 = vunpack.c.l.b16 %v546
      %v1933 = vunpack.c.l.b16 %v547
      %v1934 = vunpack.c.l.b16 %v548
      %v1935 = vunpack.c.l.b16 %v549
      %v1936 = vunpack.c.l.b16 %v550
      %v1937 = vunpack.c.l.b16 %v551
      %v1938 = vunpack.c.l.b16 %v552
      %v1939 = vunpack.c.l.b16 %v553
      %v1940 = vunpack.c.l.b16 %v554
      %v1941 = vunpack.c.l.b16 %v555
      %v1942 = vunpack.c.l.b16 %v556
      %v1943 = vunpack.c.l.b16 %v557
      %v1944 = vunpack.c.l.b16 %v558
      %v1945 = vunpack.c.l.b16 %v559
      %v1946 = vunpack.c.l.b16 %v560
      %v1947 = vunpack.c.l.b16 %v561
      %v1948 = vunpack.c.l.b16 %v562
      %v1949 = vunpack.c.l.b16 %v563
      %v1950 = vpack.c.b16 %v1887, %v1886
      %v1951 = vpack.c.b16 %v1889, %v1888
      %v1952 = vpack.c.b16 %v1891, %v1890
      %v1953 = vpack.c.b16 %v1893, %v1892
      %v1954 = vpack.c.b16 %v1895, %v1894
      %v1955 = vpack.c.b16 %v1897, %v1896
      %v1956 = vpack.c.b16 %v1899, %v1898
      %v1957 = vpack.c.b16 %v1901, %v1900
      %v1958 = vpack.c.b16 %v1903, %v1902
      %v1959 = vpack.c.b16 %v1905, %v1904
      %v1960 = vpack.c.b16 %v1907, %v1906
      %v1961 = vpack.c.b16 %v1909, %v1908
      %v1962 = vpack.c.b16 %v1911, %v1910
      %v1963 = vpack.c.b16 %v1913, %v1912
      %v1964 = vpack.c.b16 %v1915, %v1914
      %v1965 = vpack.c.b16 %v1917, %v1916
      %v1966 = vpack.c.b16 %v1919, %v1918
      %v1967 = vpack.c.b16 %v1921, %v1920
      %v1968 = vpack.c.b16 %v1923, %v1922
      %v1969 = vpack.c.b16 %v1925, %v1924
      %v1970 = vpack.c.b16 %v1927, %v1926
      %v1971 = vpack.c.b16 %v1929, %v1928
      %v1972 = vpack.c.b16 %v1931, %v1930
      %v1973 = vpack.c.b16 %v1933, %v1932
      %v1974 = vpack.c.b16 %v1935, %v1934
      %v1975 = vpack.c.b16 %v1937, %v1936
      %v1976 = vpack.c.b16 %v1939, %v1938
      %v1977 = vpack.c.b16 %v1941, %v1940
      %v1978 = vpack.c.b16 %v1943, %v1942
      %v1979 = vpack.c.b16 %v1945, %v1944
      %v1980 = vpack.c.b16 %v1947, %v1946
      %v1981 = vpack.c.b16 %v1949, %v1948
      %1982 = vrot.lane.b32.xlu0 %v1950, 60
      %v1983 = vpop.permute.xlu0 %1982
      %1984 = vrot.lane.b32.xlu0 %v1951, 60
      %v1985 = vpop.permute.xlu0 %1984
      %1986 = vrot.lane.b32.xlu0 %v1952, 60
      %v1987 = vpop.permute.xlu0 %1986
      %1988 = vrot.lane.b32.xlu0 %v1953, 60
      %v1989 = vpop.permute.xlu0 %1988
      %1990 = vrot.lane.b32.xlu0 %v1954, 60
      %v1991 = vpop.permute.xlu0 %1990
      %1992 = vrot.lane.b32.xlu0 %v1955, 60
      %v1993 = vpop.permute.xlu0 %1992
      %1994 = vrot.lane.b32.xlu0 %v1956, 60
      %v1995 = vpop.permute.xlu0 %1994
      %1996 = vrot.lane.b32.xlu0 %v1957, 60
      %v1997 = vpop.permute.xlu0 %1996
      %1998 = vrot.lane.b32.xlu0 %v1958, 60
      %v1999 = vpop.permute.xlu0 %1998
      %2000 = vrot.lane.b32.xlu0 %v1959, 60
      %v2001 = vpop.permute.xlu0 %2000
      %2002 = vrot.lane.b32.xlu0 %v1960, 60
      %v2003 = vpop.permute.xlu0 %2002
      %2004 = vrot.lane.b32.xlu0 %v1961, 60
      %v2005 = vpop.permute.xlu0 %2004
      %2006 = vrot.lane.b32.xlu0 %v1962, 60
      %v2007 = vpop.permute.xlu0 %2006
      %2008 = vrot.lane.b32.xlu0 %v1963, 60
      %v2009 = vpop.permute.xlu0 %2008
      %2010 = vrot.lane.b32.xlu0 %v1964, 60
      %v2011 = vpop.permute.xlu0 %2010
      %2012 = vrot.lane.b32.xlu0 %v1965, 60
      %v2013 = vpop.permute.xlu0 %2012
      %2014 = vrot.lane.b32.xlu0 %v1966, 60
      %v2015 = vpop.permute.xlu0 %2014
      %2016 = vrot.lane.b32.xlu0 %v1967, 60
      %v2017 = vpop.permute.xlu0 %2016
      %2018 = vrot.lane.b32.xlu0 %v1968, 60
      %v2019 = vpop.permute.xlu0 %2018
      %2020 = vrot.lane.b32.xlu0 %v1969, 60
      %v2021 = vpop.permute.xlu0 %2020
      %2022 = vrot.lane.b32.xlu0 %v1970, 60
      %v2023 = vpop.permute.xlu0 %2022
      %2024 = vrot.lane.b32.xlu0 %v1971, 60
      %v2025 = vpop.permute.xlu0 %2024
      %2026 = vrot.lane.b32.xlu0 %v1972, 60
      %v2027 = vpop.permute.xlu0 %2026
      %2028 = vrot.lane.b32.xlu0 %v1973, 60
      %v2029 = vpop.permute.xlu0 %2028
      %2030 = vrot.lane.b32.xlu0 %v1974, 60
      %v2031 = vpop.permute.xlu0 %2030
      %2032 = vrot.lane.b32.xlu0 %v1975, 60
      %v2033 = vpop.permute.xlu0 %2032
      %2034 = vrot.lane.b32.xlu0 %v1976, 60
      %v2035 = vpop.permute.xlu0 %2034
      %2036 = vrot.lane.b32.xlu0 %v1977, 60
      %v2037 = vpop.permute.xlu0 %2036
      %2038 = vrot.lane.b32.xlu0 %v1978, 60
      %v2039 = vpop.permute.xlu0 %2038
      %2040 = vrot.lane.b32.xlu0 %v1979, 60
      %v2041 = vpop.permute.xlu0 %2040
      %2042 = vrot.lane.b32.xlu0 %v1980, 60
      %v2043 = vpop.permute.xlu0 %2042
      %2044 = vrot.lane.b32.xlu0 %v1981, 60
      %v2045 = vpop.permute.xlu0 %2044
      %v2110 = vunpack.c.l.b16 %v568
      %v2111 = vunpack.c.l.b16 %v569
      %v2112 = vunpack.c.l.b16 %v570
      %v2113 = vunpack.c.l.b16 %v571
      %v2114 = vunpack.c.l.b16 %v572
      %v2115 = vunpack.c.l.b16 %v573
      %v2116 = vunpack.c.l.b16 %v574
      %v2117 = vunpack.c.l.b16 %v575
      %v2118 = vunpack.c.l.b16 %v576
      %v2119 = vunpack.c.l.b16 %v577
      %v2120 = vunpack.c.l.b16 %v578
      %v2121 = vunpack.c.l.b16 %v579
      %v2122 = vunpack.c.l.b16 %v580
      %v2123 = vunpack.c.l.b16 %v581
      %v2124 = vunpack.c.l.b16 %v582
      %v2125 = vunpack.c.l.b16 %v583
      %v2126 = vunpack.c.l.b16 %v584
      %v2127 = vunpack.c.l.b16 %v585
      %v2128 = vunpack.c.l.b16 %v586
      %v2129 = vunpack.c.l.b16 %v587
      %v2130 = vunpack.c.l.b16 %v588
      %v2131 = vunpack.c.l.b16 %v589
      %v2132 = vunpack.c.l.b16 %v590
      %v2133 = vunpack.c.l.b16 %v591
      %v2134 = vunpack.c.l.b16 %v592
      %v2135 = vunpack.c.l.b16 %v593
      %v2136 = vunpack.c.l.b16 %v594
      %v2137 = vunpack.c.l.b16 %v595
      %v2138 = vunpack.c.l.b16 %v596
      %v2139 = vunpack.c.l.b16 %v597
      %v2140 = vunpack.c.l.b16 %v598
      %v2141 = vunpack.c.l.b16 %v599
      %v2142 = vunpack.c.l.b16 %v600
      %v2143 = vunpack.c.l.b16 %v601
      %v2144 = vunpack.c.l.b16 %v602
      %v2145 = vunpack.c.l.b16 %v603
      %v2146 = vunpack.c.l.b16 %v604
      %v2147 = vunpack.c.l.b16 %v605
      %v2148 = vunpack.c.l.b16 %v606
      %v2149 = vunpack.c.l.b16 %v607
      %v2150 = vunpack.c.l.b16 %v608
      %v2151 = vunpack.c.l.b16 %v609
      %v2152 = vunpack.c.l.b16 %v610
      %v2153 = vunpack.c.l.b16 %v611
      %v2154 = vunpack.c.l.b16 %v612
      %v2155 = vunpack.c.l.b16 %v613
      %v2156 = vunpack.c.l.b16 %v614
      %v2157 = vunpack.c.l.b16 %v615
      %v2158 = vunpack.c.l.b16 %v616
      %v2159 = vunpack.c.l.b16 %v617
      %v2160 = vunpack.c.l.b16 %v618
      %v2161 = vunpack.c.l.b16 %v619
      %v2162 = vunpack.c.l.b16 %v620
      %v2163 = vunpack.c.l.b16 %v621
      %v2164 = vunpack.c.l.b16 %v622
      %v2165 = vunpack.c.l.b16 %v623
      %v2166 = vunpack.c.l.b16 %v624
      %v2167 = vunpack.c.l.b16 %v625
      %v2168 = vunpack.c.l.b16 %v626
      %v2169 = vunpack.c.l.b16 %v627
      %v2170 = vunpack.c.l.b16 %v628
      %v2171 = vunpack.c.l.b16 %v629
      %v2172 = vunpack.c.l.b16 %v630
      %v2173 = vunpack.c.l.b16 %v631
      %v2174 = vpack.c.b16 %v2111, %v2110
      %v2175 = vpack.c.b16 %v2113, %v2112
      %v2176 = vpack.c.b16 %v2115, %v2114
      %v2177 = vpack.c.b16 %v2117, %v2116
      %v2178 = vpack.c.b16 %v2119, %v2118
      %v2179 = vpack.c.b16 %v2121, %v2120
      %v2180 = vpack.c.b16 %v2123, %v2122
      %v2181 = vpack.c.b16 %v2125, %v2124
      %v2182 = vpack.c.b16 %v2127, %v2126
      %v2183 = vpack.c.b16 %v2129, %v2128
      %v2184 = vpack.c.b16 %v2131, %v2130
      %v2185 = vpack.c.b16 %v2133, %v2132
      %v2186 = vpack.c.b16 %v2135, %v2134
      %v2187 = vpack.c.b16 %v2137, %v2136
      %v2188 = vpack.c.b16 %v2139, %v2138
      %v2189 = vpack.c.b16 %v2141, %v2140
      %v2190 = vpack.c.b16 %v2143, %v2142
      %v2191 = vpack.c.b16 %v2145, %v2144
      %v2192 = vpack.c.b16 %v2147, %v2146
      %v2193 = vpack.c.b16 %v2149, %v2148
      %v2194 = vpack.c.b16 %v2151, %v2150
      %v2195 = vpack.c.b16 %v2153, %v2152
      %v2196 = vpack.c.b16 %v2155, %v2154
      %v2197 = vpack.c.b16 %v2157, %v2156
      %v2198 = vpack.c.b16 %v2159, %v2158
      %v2199 = vpack.c.b16 %v2161, %v2160
      %v2200 = vpack.c.b16 %v2163, %v2162
      %v2201 = vpack.c.b16 %v2165, %v2164
      %v2202 = vpack.c.b16 %v2167, %v2166
      %v2203 = vpack.c.b16 %v2169, %v2168
      %v2204 = vpack.c.b16 %v2171, %v2170
      %v2205 = vpack.c.b16 %v2173, %v2172
      %2206 = vrot.lane.b32.xlu0 %v2174, 72
      %v2207 = vpop.permute.xlu0 %2206
      %2208 = vrot.lane.b32.xlu0 %v2175, 72
      %v2209 = vpop.permute.xlu0 %2208
      %2210 = vrot.lane.b32.xlu0 %v2176, 72
      %v2211 = vpop.permute.xlu0 %2210
      %2212 = vrot.lane.b32.xlu0 %v2177, 72
      %v2213 = vpop.permute.xlu0 %2212
      %2214 = vrot.lane.b32.xlu0 %v2178, 72
      %v2215 = vpop.permute.xlu0 %2214
      %2216 = vrot.lane.b32.xlu0 %v2179, 72
      %v2217 = vpop.permute.xlu0 %2216
      %2218 = vrot.lane.b32.xlu0 %v2180, 72
      %v2219 = vpop.permute.xlu0 %2218
      %2220 = vrot.lane.b32.xlu0 %v2181, 72
      %v2221 = vpop.permute.xlu0 %2220
      %2222 = vrot.lane.b32.xlu0 %v2182, 72
      %v2223 = vpop.permute.xlu0 %2222
      %2224 = vrot.lane.b32.xlu0 %v2183, 72
      %v2225 = vpop.permute.xlu0 %2224
      %2226 = vrot.lane.b32.xlu0 %v2184, 72
      %v2227 = vpop.permute.xlu0 %2226
      %2228 = vrot.lane.b32.xlu0 %v2185, 72
      %v2229 = vpop.permute.xlu0 %2228
      %2230 = vrot.lane.b32.xlu0 %v2186, 72
      %v2231 = vpop.permute.xlu0 %2230
      %2232 = vrot.lane.b32.xlu0 %v2187, 72
      %v2233 = vpop.permute.xlu0 %2232
      %2234 = vrot.lane.b32.xlu0 %v2188, 72
      %v2235 = vpop.permute.xlu0 %2234
      %2236 = vrot.lane.b32.xlu0 %v2189, 72
      %v2237 = vpop.permute.xlu0 %2236
      %2238 = vrot.lane.b32.xlu0 %v2190, 72
      %v2239 = vpop.permute.xlu0 %2238
      %2240 = vrot.lane.b32.xlu0 %v2191, 72
      %v2241 = vpop.permute.xlu0 %2240
      %2242 = vrot.lane.b32.xlu0 %v2192, 72
      %v2243 = vpop.permute.xlu0 %2242
      %2244 = vrot.lane.b32.xlu0 %v2193, 72
      %v2245 = vpop.permute.xlu0 %2244
      %2246 = vrot.lane.b32.xlu0 %v2194, 72
      %v2247 = vpop.permute.xlu0 %2246
      %2248 = vrot.lane.b32.xlu0 %v2195, 72
      %v2249 = vpop.permute.xlu0 %2248
      %2250 = vrot.lane.b32.xlu0 %v2196, 72
      %v2251 = vpop.permute.xlu0 %2250
      %2252 = vrot.lane.b32.xlu0 %v2197, 72
      %v2253 = vpop.permute.xlu0 %2252
      %2254 = vrot.lane.b32.xlu0 %v2198, 72
      %v2255 = vpop.permute.xlu0 %2254
      %2256 = vrot.lane.b32.xlu0 %v2199, 72
      %v2257 = vpop.permute.xlu0 %2256
      %2258 = vrot.lane.b32.xlu0 %v2200, 72
      %v2259 = vpop.permute.xlu0 %2258
      %2260 = vrot.lane.b32.xlu0 %v2201, 72
      %v2261 = vpop.permute.xlu0 %2260
      %2262 = vrot.lane.b32.xlu0 %v2202, 72
      %v2263 = vpop.permute.xlu0 %2262
      %2264 = vrot.lane.b32.xlu0 %v2203, 72
      %v2265 = vpop.permute.xlu0 %2264
      %2266 = vrot.lane.b32.xlu0 %v2204, 72
      %v2267 = vpop.permute.xlu0 %2266
      %2268 = vrot.lane.b32.xlu0 %v2205, 72
      %v2269 = vpop.permute.xlu0 %2268
      %v2334 = vunpack.c.l.b16 %v635
      %v2335 = vunpack.c.l.b16 %v636
      %v2336 = vunpack.c.l.b16 %v637
      %v2337 = vunpack.c.l.b16 %v638
      %v2338 = vunpack.c.l.b16 %v639
      %v2339 = vunpack.c.l.b16 %v640
      %v2340 = vunpack.c.l.b16 %v641
      %v2341 = vunpack.c.l.b16 %v642
      %v2342 = vunpack.c.l.b16 %v643
      %v2343 = vunpack.c.l.b16 %v644
      %v2344 = vunpack.c.l.b16 %v645
      %v2345 = vunpack.c.l.b16 %v646
      %v2346 = vunpack.c.l.b16 %v647
      %v2347 = vunpack.c.l.b16 %v648
      %v2348 = vunpack.c.l.b16 %v649
      %v2349 = vunpack.c.l.b16 %v650
      %v2350 = vunpack.c.l.b16 %v651
      %v2351 = vunpack.c.l.b16 %v652
      %v2352 = vunpack.c.l.b16 %v653
      %v2353 = vunpack.c.l.b16 %v654
      %v2354 = vunpack.c.l.b16 %v655
      %v2355 = vunpack.c.l.b16 %v656
      %v2356 = vunpack.c.l.b16 %v657
      %v2357 = vunpack.c.l.b16 %v658
      %v2358 = vunpack.c.l.b16 %v659
      %v2359 = vunpack.c.l.b16 %v660
      %v2360 = vunpack.c.l.b16 %v661
      %v2361 = vunpack.c.l.b16 %v662
      %v2362 = vunpack.c.l.b16 %v663
      %v2363 = vunpack.c.l.b16 %v664
      %v2364 = vunpack.c.l.b16 %v665
      %v2365 = vunpack.c.l.b16 %v666
      %v2366 = vunpack.c.l.b16 %v667
      %v2367 = vunpack.c.l.b16 %v668
      %v2368 = vunpack.c.l.b16 %v669
      %v2369 = vunpack.c.l.b16 %v670
      %v2370 = vunpack.c.l.b16 %v671
      %v2371 = vunpack.c.l.b16 %v672
      %v2372 = vunpack.c.l.b16 %v673
      %v2373 = vunpack.c.l.b16 %v674
      %v2374 = vunpack.c.l.b16 %v675
      %v2375 = vunpack.c.l.b16 %v676
      %v2376 = vunpack.c.l.b16 %v677
      %v2377 = vunpack.c.l.b16 %v678
      %v2378 = vunpack.c.l.b16 %v679
      %v2379 = vunpack.c.l.b16 %v680
      %v2380 = vunpack.c.l.b16 %v681
      %v2381 = vunpack.c.l.b16 %v682
      %v2382 = vunpack.c.l.b16 %v683
      %v2383 = vunpack.c.l.b16 %v684
      %v2384 = vunpack.c.l.b16 %v685
      %v2385 = vunpack.c.l.b16 %v686
      %v2386 = vunpack.c.l.b16 %v687
      %v2387 = vunpack.c.l.b16 %v688
      %v2388 = vunpack.c.l.b16 %v689
      %v2389 = vunpack.c.l.b16 %v690
      %v2390 = vunpack.c.l.b16 %v691
      %v2391 = vunpack.c.l.b16 %v692
      %v2392 = vunpack.c.l.b16 %v693
      %v2393 = vunpack.c.l.b16 %v694
      %v2394 = vunpack.c.l.b16 %v695
      %v2395 = vunpack.c.l.b16 %v696
      %v2396 = vunpack.c.l.b16 %v697
      %v2397 = vunpack.c.l.b16 %v698
      %v2398 = vpack.c.b16 %v2335, %v2334
      %v2399 = vpack.c.b16 %v2337, %v2336
      %v2400 = vpack.c.b16 %v2339, %v2338
      %v2401 = vpack.c.b16 %v2341, %v2340
      %v2402 = vpack.c.b16 %v2343, %v2342
      %v2403 = vpack.c.b16 %v2345, %v2344
      %v2404 = vpack.c.b16 %v2347, %v2346
      %v2405 = vpack.c.b16 %v2349, %v2348
      %v2406 = vpack.c.b16 %v2351, %v2350
      %v2407 = vpack.c.b16 %v2353, %v2352
      %v2408 = vpack.c.b16 %v2355, %v2354
      %v2409 = vpack.c.b16 %v2357, %v2356
      %v2410 = vpack.c.b16 %v2359, %v2358
      %v2411 = vpack.c.b16 %v2361, %v2360
      %v2412 = vpack.c.b16 %v2363, %v2362
      %v2413 = vpack.c.b16 %v2365, %v2364
      %v2414 = vpack.c.b16 %v2367, %v2366
      %v2415 = vpack.c.b16 %v2369, %v2368
      %v2416 = vpack.c.b16 %v2371, %v2370
      %v2417 = vpack.c.b16 %v2373, %v2372
      %v2418 = vpack.c.b16 %v2375, %v2374
      %v2419 = vpack.c.b16 %v2377, %v2376
      %v2420 = vpack.c.b16 %v2379, %v2378
      %v2421 = vpack.c.b16 %v2381, %v2380
      %v2422 = vpack.c.b16 %v2383, %v2382
      %v2423 = vpack.c.b16 %v2385, %v2384
      %v2424 = vpack.c.b16 %v2387, %v2386
      %v2425 = vpack.c.b16 %v2389, %v2388
      %v2426 = vpack.c.b16 %v2391, %v2390
      %v2427 = vpack.c.b16 %v2393, %v2392
      %v2428 = vpack.c.b16 %v2395, %v2394
      %v2429 = vpack.c.b16 %v2397, %v2396
      %2430 = vrot.lane.b32.xlu0 %v2398, 84
      %v2431 = vpop.permute.xlu0 %2430
      %2432 = vrot.lane.b32.xlu0 %v2399, 84
      %v2433 = vpop.permute.xlu0 %2432
      %2434 = vrot.lane.b32.xlu0 %v2400, 84
      %v2435 = vpop.permute.xlu0 %2434
      %2436 = vrot.lane.b32.xlu0 %v2401, 84
      %v2437 = vpop.permute.xlu0 %2436
      %2438 = vrot.lane.b32.xlu0 %v2402, 84
      %v2439 = vpop.permute.xlu0 %2438
      %2440 = vrot.lane.b32.xlu0 %v2403, 84
      %v2441 = vpop.permute.xlu0 %2440
      %2442 = vrot.lane.b32.xlu0 %v2404, 84
      %v2443 = vpop.permute.xlu0 %2442
      %2444 = vrot.lane.b32.xlu0 %v2405, 84
      %v2445 = vpop.permute.xlu0 %2444
      %2446 = vrot.lane.b32.xlu0 %v2406, 84
      %v2447 = vpop.permute.xlu0 %2446
      %2448 = vrot.lane.b32.xlu0 %v2407, 84
      %v2449 = vpop.permute.xlu0 %2448
      %2450 = vrot.lane.b32.xlu0 %v2408, 84
      %v2451 = vpop.permute.xlu0 %2450
      %2452 = vrot.lane.b32.xlu0 %v2409, 84
      %v2453 = vpop.permute.xlu0 %2452
      %2454 = vrot.lane.b32.xlu0 %v2410, 84
      %v2455 = vpop.permute.xlu0 %2454
      %2456 = vrot.lane.b32.xlu0 %v2411, 84
      %v2457 = vpop.permute.xlu0 %2456
      %2458 = vrot.lane.b32.xlu0 %v2412, 84
      %v2459 = vpop.permute.xlu0 %2458
      %2460 = vrot.lane.b32.xlu0 %v2413, 84
      %v2461 = vpop.permute.xlu0 %2460
      %2462 = vrot.lane.b32.xlu0 %v2414, 84
      %v2463 = vpop.permute.xlu0 %2462
      %2464 = vrot.lane.b32.xlu0 %v2415, 84
      %v2465 = vpop.permute.xlu0 %2464
      %2466 = vrot.lane.b32.xlu0 %v2416, 84
      %v2467 = vpop.permute.xlu0 %2466
      %2468 = vrot.lane.b32.xlu0 %v2417, 84
      %v2469 = vpop.permute.xlu0 %2468
      %2470 = vrot.lane.b32.xlu0 %v2418, 84
      %v2471 = vpop.permute.xlu0 %2470
      %2472 = vrot.lane.b32.xlu0 %v2419, 84
      %v2473 = vpop.permute.xlu0 %2472
      %2474 = vrot.lane.b32.xlu0 %v2420, 84
      %v2475 = vpop.permute.xlu0 %2474
      %2476 = vrot.lane.b32.xlu0 %v2421, 84
      %v2477 = vpop.permute.xlu0 %2476
      %2478 = vrot.lane.b32.xlu0 %v2422, 84
      %v2479 = vpop.permute.xlu0 %2478
      %2480 = vrot.lane.b32.xlu0 %v2423, 84
      %v2481 = vpop.permute.xlu0 %2480
      %2482 = vrot.lane.b32.xlu0 %v2424, 84
      %v2483 = vpop.permute.xlu0 %2482
      %2484 = vrot.lane.b32.xlu0 %v2425, 84
      %v2485 = vpop.permute.xlu0 %2484
      %2486 = vrot.lane.b32.xlu0 %v2426, 84
      %v2487 = vpop.permute.xlu0 %2486
      %2488 = vrot.lane.b32.xlu0 %v2427, 84
      %v2489 = vpop.permute.xlu0 %2488
      %2490 = vrot.lane.b32.xlu0 %v2428, 84
      %v2491 = vpop.permute.xlu0 %2490
      %2492 = vrot.lane.b32.xlu0 %v2429, 84
      %v2493 = vpop.permute.xlu0 %2492
      %v2558 = vunpack.c.l.b16 %v702
      %v2559 = vunpack.c.l.b16 %v703
      %v2560 = vunpack.c.l.b16 %v704
      %v2561 = vunpack.c.l.b16 %v705
      %v2562 = vunpack.c.l.b16 %v706
      %v2563 = vunpack.c.l.b16 %v707
      %v2564 = vunpack.c.l.b16 %v708
      %v2565 = vunpack.c.l.b16 %v709
      %v2566 = vunpack.c.l.b16 %v710
      %v2567 = vunpack.c.l.b16 %v711
      %v2568 = vunpack.c.l.b16 %v712
      %v2569 = vunpack.c.l.b16 %v713
      %v2570 = vunpack.c.l.b16 %v714
      %v2571 = vunpack.c.l.b16 %v715
      %v2572 = vunpack.c.l.b16 %v716
      %v2573 = vunpack.c.l.b16 %v717
      %v2574 = vunpack.c.l.b16 %v718
      %v2575 = vunpack.c.l.b16 %v719
      %v2576 = vunpack.c.l.b16 %v720
      %v2577 = vunpack.c.l.b16 %v721
      %v2578 = vunpack.c.l.b16 %v722
      %v2579 = vunpack.c.l.b16 %v723
      %v2580 = vunpack.c.l.b16 %v724
      %v2581 = vunpack.c.l.b16 %v725
      %v2582 = vunpack.c.l.b16 %v726
      %v2583 = vunpack.c.l.b16 %v727
      %v2584 = vunpack.c.l.b16 %v728
      %v2585 = vunpack.c.l.b16 %v729
      %v2586 = vunpack.c.l.b16 %v730
      %v2587 = vunpack.c.l.b16 %v731
      %v2588 = vunpack.c.l.b16 %v732
      %v2589 = vunpack.c.l.b16 %v733
      %v2590 = vunpack.c.l.b16 %v734
      %v2591 = vunpack.c.l.b16 %v735
      %v2592 = vunpack.c.l.b16 %v736
      %v2593 = vunpack.c.l.b16 %v737
      %v2594 = vunpack.c.l.b16 %v738
      %v2595 = vunpack.c.l.b16 %v739
      %v2596 = vunpack.c.l.b16 %v740
      %v2597 = vunpack.c.l.b16 %v741
      %v2598 = vunpack.c.l.b16 %v742
      %v2599 = vunpack.c.l.b16 %v743
      %v2600 = vunpack.c.l.b16 %v744
      %v2601 = vunpack.c.l.b16 %v745
      %v2602 = vunpack.c.l.b16 %v746
      %v2603 = vunpack.c.l.b16 %v747
      %v2604 = vunpack.c.l.b16 %v748
      %v2605 = vunpack.c.l.b16 %v749
      %v2606 = vunpack.c.l.b16 %v750
      %v2607 = vunpack.c.l.b16 %v751
      %v2608 = vunpack.c.l.b16 %v752
      %v2609 = vunpack.c.l.b16 %v753
      %v2610 = vunpack.c.l.b16 %v754
      %v2611 = vunpack.c.l.b16 %v755
      %v2612 = vunpack.c.l.b16 %v756
      %v2613 = vunpack.c.l.b16 %v757
      %v2614 = vunpack.c.l.b16 %v758
      %v2615 = vunpack.c.l.b16 %v759
      %v2616 = vunpack.c.l.b16 %v760
      %v2617 = vunpack.c.l.b16 %v761
      %v2618 = vunpack.c.l.b16 %v762
      %v2619 = vunpack.c.l.b16 %v763
      %v2620 = vunpack.c.l.b16 %v764
      %v2621 = vunpack.c.l.b16 %v765
      %v2622 = vpack.c.b16 %v2559, %v2558
      %v2623 = vpack.c.b16 %v2561, %v2560
      %v2624 = vpack.c.b16 %v2563, %v2562
      %v2625 = vpack.c.b16 %v2565, %v2564
      %v2626 = vpack.c.b16 %v2567, %v2566
      %v2627 = vpack.c.b16 %v2569, %v2568
      %v2628 = vpack.c.b16 %v2571, %v2570
      %v2629 = vpack.c.b16 %v2573, %v2572
      %v2630 = vpack.c.b16 %v2575, %v2574
      %v2631 = vpack.c.b16 %v2577, %v2576
      %v2632 = vpack.c.b16 %v2579, %v2578
      %v2633 = vpack.c.b16 %v2581, %v2580
      %v2634 = vpack.c.b16 %v2583, %v2582
      %v2635 = vpack.c.b16 %v2585, %v2584
      %v2636 = vpack.c.b16 %v2587, %v2586
      %v2637 = vpack.c.b16 %v2589, %v2588
      %v2638 = vpack.c.b16 %v2591, %v2590
      %v2639 = vpack.c.b16 %v2593, %v2592
      %v2640 = vpack.c.b16 %v2595, %v2594
      %v2641 = vpack.c.b16 %v2597, %v2596
      %v2642 = vpack.c.b16 %v2599, %v2598
      %v2643 = vpack.c.b16 %v2601, %v2600
      %v2644 = vpack.c.b16 %v2603, %v2602
      %v2645 = vpack.c.b16 %v2605, %v2604
      %v2646 = vpack.c.b16 %v2607, %v2606
      %v2647 = vpack.c.b16 %v2609, %v2608
      %v2648 = vpack.c.b16 %v2611, %v2610
      %v2649 = vpack.c.b16 %v2613, %v2612
      %v2650 = vpack.c.b16 %v2615, %v2614
      %v2651 = vpack.c.b16 %v2617, %v2616
      %v2652 = vpack.c.b16 %v2619, %v2618
      %v2653 = vpack.c.b16 %v2621, %v2620
      %2654 = vrot.lane.b32.xlu0 %v2622, 96
      %v2655 = vpop.permute.xlu0 %2654
      %2656 = vrot.lane.b32.xlu0 %v2623, 96
      %v2657 = vpop.permute.xlu0 %2656
      %2658 = vrot.lane.b32.xlu0 %v2624, 96
      %v2659 = vpop.permute.xlu0 %2658
      %2660 = vrot.lane.b32.xlu0 %v2625, 96
      %v2661 = vpop.permute.xlu0 %2660
      %2662 = vrot.lane.b32.xlu0 %v2626, 96
      %v2663 = vpop.permute.xlu0 %2662
      %2664 = vrot.lane.b32.xlu0 %v2627, 96
      %v2665 = vpop.permute.xlu0 %2664
      %2666 = vrot.lane.b32.xlu0 %v2628, 96
      %v2667 = vpop.permute.xlu0 %2666
      %2668 = vrot.lane.b32.xlu0 %v2629, 96
      %v2669 = vpop.permute.xlu0 %2668
      %2670 = vrot.lane.b32.xlu0 %v2630, 96
      %v2671 = vpop.permute.xlu0 %2670
      %2672 = vrot.lane.b32.xlu0 %v2631, 96
      %v2673 = vpop.permute.xlu0 %2672
      %2674 = vrot.lane.b32.xlu0 %v2632, 96
      %v2675 = vpop.permute.xlu0 %2674
      %2676 = vrot.lane.b32.xlu0 %v2633, 96
      %v2677 = vpop.permute.xlu0 %2676
      %2678 = vrot.lane.b32.xlu0 %v2634, 96
      %v2679 = vpop.permute.xlu0 %2678
      %2680 = vrot.lane.b32.xlu0 %v2635, 96
      %v2681 = vpop.permute.xlu0 %2680
      %2682 = vrot.lane.b32.xlu0 %v2636, 96
      %v2683 = vpop.permute.xlu0 %2682
      %2684 = vrot.lane.b32.xlu0 %v2637, 96
      %v2685 = vpop.permute.xlu0 %2684
      %2686 = vrot.lane.b32.xlu0 %v2638, 96
      %v2687 = vpop.permute.xlu0 %2686
      %2688 = vrot.lane.b32.xlu0 %v2639, 96
      %v2689 = vpop.permute.xlu0 %2688
      %2690 = vrot.lane.b32.xlu0 %v2640, 96
      %v2691 = vpop.permute.xlu0 %2690
      %2692 = vrot.lane.b32.xlu0 %v2641, 96
      %v2693 = vpop.permute.xlu0 %2692
      %2694 = vrot.lane.b32.xlu0 %v2642, 96
      %v2695 = vpop.permute.xlu0 %2694
      %2696 = vrot.lane.b32.xlu0 %v2643, 96
      %v2697 = vpop.permute.xlu0 %2696
      %2698 = vrot.lane.b32.xlu0 %v2644, 96
      %v2699 = vpop.permute.xlu0 %2698
      %2700 = vrot.lane.b32.xlu0 %v2645, 96
      %v2701 = vpop.permute.xlu0 %2700
      %2702 = vrot.lane.b32.xlu0 %v2646, 96
      %v2703 = vpop.permute.xlu0 %2702
      %2704 = vrot.lane.b32.xlu0 %v2647, 96
      %v2705 = vpop.permute.xlu0 %2704
      %2706 = vrot.lane.b32.xlu0 %v2648, 96
      %v2707 = vpop.permute.xlu0 %2706
      %2708 = vrot.lane.b32.xlu0 %v2649, 96
      %v2709 = vpop.permute.xlu0 %2708
      %2710 = vrot.lane.b32.xlu0 %v2650, 96
      %v2711 = vpop.permute.xlu0 %2710
      %2712 = vrot.lane.b32.xlu0 %v2651, 96
      %v2713 = vpop.permute.xlu0 %2712
      %2714 = vrot.lane.b32.xlu0 %v2652, 96
      %v2715 = vpop.permute.xlu0 %2714
      %2716 = vrot.lane.b32.xlu0 %v2653, 96
      %v2717 = vpop.permute.xlu0 %2716
      %vm2718 = vcmask 97280
      %v2721 = vsel %vm2718, %v894, %v1087
      %v2724 = vsel %vm2718, %v895, %v1089
      %v2727 = vsel %vm2718, %v896, %v1091
      %v2730 = vsel %vm2718, %v897, %v1093
      %v2733 = vsel %vm2718, %v898, %v1095
      %v2736 = vsel %vm2718, %v899, %v1097
      %v2739 = vsel %vm2718, %v900, %v1099
      %v2742 = vsel %vm2718, %v901, %v1101
      %v2745 = vsel %vm2718, %v902, %v1103
      %v2748 = vsel %vm2718, %v903, %v1105
      %v2751 = vsel %vm2718, %v904, %v1107
      %v2754 = vsel %vm2718, %v905, %v1109
      %v2757 = vsel %vm2718, %v906, %v1111
      %v2760 = vsel %vm2718, %v907, %v1113
      %v2763 = vsel %vm2718, %v908, %v1115
      %v2766 = vsel %vm2718, %v909, %v1117
      %v2769 = vsel %vm2718, %v910, %v1119
      %v2772 = vsel %vm2718, %v911, %v1121
      %v2775 = vsel %vm2718, %v912, %v1123
      %v2778 = vsel %vm2718, %v913, %v1125
      %v2781 = vsel %vm2718, %v914, %v1127
      %v2784 = vsel %vm2718, %v915, %v1129
      %v2787 = vsel %vm2718, %v916, %v1131
      %v2790 = vsel %vm2718, %v917, %v1133
      %v2793 = vsel %vm2718, %v918, %v1135
      %v2796 = vsel %vm2718, %v919, %v1137
      %v2799 = vsel %vm2718, %v920, %v1139
      %v2802 = vsel %vm2718, %v921, %v1141
      %v2805 = vsel %vm2718, %v922, %v1143
      %v2808 = vsel %vm2718, %v923, %v1145
      %v2811 = vsel %vm2718, %v924, %v1147
      %v2814 = vsel %vm2718, %v925, %v1149
      %vm2815 = vcmask 195584
      %v2817 = vsel %vm2815, %v2721, %v1311
      %v2819 = vsel %vm2815, %v2724, %v1313
      %v2821 = vsel %vm2815, %v2727, %v1315
      %v2823 = vsel %vm2815, %v2730, %v1317
      %v2825 = vsel %vm2815, %v2733, %v1319
      %v2827 = vsel %vm2815, %v2736, %v1321
      %v2829 = vsel %vm2815, %v2739, %v1323
      %v2831 = vsel %vm2815, %v2742, %v1325
      %v2833 = vsel %vm2815, %v2745, %v1327
      %v2835 = vsel %vm2815, %v2748, %v1329
      %v2837 = vsel %vm2815, %v2751, %v1331
      %v2839 = vsel %vm2815, %v2754, %v1333
      %v2841 = vsel %vm2815, %v2757, %v1335
      %v2843 = vsel %vm2815, %v2760, %v1337
      %v2845 = vsel %vm2815, %v2763, %v1339
      %v2847 = vsel %vm2815, %v2766, %v1341
      %v2849 = vsel %vm2815, %v2769, %v1343
      %v2851 = vsel %vm2815, %v2772, %v1345
      %v2853 = vsel %vm2815, %v2775, %v1347
      %v2855 = vsel %vm2815, %v2778, %v1349
      %v2857 = vsel %vm2815, %v2781, %v1351
      %v2859 = vsel %vm2815, %v2784, %v1353
      %v2861 = vsel %vm2815, %v2787, %v1355
      %v2863 = vsel %vm2815, %v2790, %v1357
      %v2865 = vsel %vm2815, %v2793, %v1359
      %v2867 = vsel %vm2815, %v2796, %v1361
      %v2869 = vsel %vm2815, %v2799, %v1363
      %v2871 = vsel %vm2815, %v2802, %v1365
      %v2873 = vsel %vm2815, %v2805, %v1367
      %v2875 = vsel %vm2815, %v2808, %v1369
      %v2877 = vsel %vm2815, %v2811, %v1371
      %v2879 = vsel %vm2815, %v2814, %v1373
      %vm2880 = vcmask 293888
      %v2882 = vsel %vm2880, %v2817, %v1535
      %v2884 = vsel %vm2880, %v2819, %v1537
      %v2886 = vsel %vm2880, %v2821, %v1539
      %v2888 = vsel %vm2880, %v2823, %v1541
      %v2890 = vsel %vm2880, %v2825, %v1543
      %v2892 = vsel %vm2880, %v2827, %v1545
      %v2894 = vsel %vm2880, %v2829, %v1547
      %v2896 = vsel %vm2880, %v2831, %v1549
      %v2898 = vsel %vm2880, %v2833, %v1551
      %v2900 = vsel %vm2880, %v2835, %v1553
      %v2902 = vsel %vm2880, %v2837, %v1555
      %v2904 = vsel %vm2880, %v2839, %v1557
      %v2906 = vsel %vm2880, %v2841, %v1559
      %v2908 = vsel %vm2880, %v2843, %v1561
      %v2910 = vsel %vm2880, %v2845, %v1563
      %v2912 = vsel %vm2880, %v2847, %v1565
      %v2914 = vsel %vm2880, %v2849, %v1567
      %v2916 = vsel %vm2880, %v2851, %v1569
      %v2918 = vsel %vm2880, %v2853, %v1571
      %v2920 = vsel %vm2880, %v2855, %v1573
      %v2922 = vsel %vm2880, %v2857, %v1575
      %v2924 = vsel %vm2880, %v2859, %v1577
      %v2926 = vsel %vm2880, %v2861, %v1579
      %v2928 = vsel %vm2880, %v2863, %v1581
      %v2930 = vsel %vm2880, %v2865, %v1583
      %v2932 = vsel %vm2880, %v2867, %v1585
      %v2934 = vsel %vm2880, %v2869, %v1587
      %v2936 = vsel %vm2880, %v2871, %v1589
      %v2938 = vsel %vm2880, %v2873, %v1591
      %v2940 = vsel %vm2880, %v2875, %v1593
      %v2942 = vsel %vm2880, %v2877, %v1595
      %v2944 = vsel %vm2880, %v2879, %v1597
      %vm2945 = vcmask 392192
      %v2947 = vsel %vm2945, %v2882, %v1759
      %v2949 = vsel %vm2945, %v2884, %v1761
      %v2951 = vsel %vm2945, %v2886, %v1763
      %v2953 = vsel %vm2945, %v2888, %v1765
      %v2955 = vsel %vm2945, %v2890, %v1767
      %v2957 = vsel %vm2945, %v2892, %v1769
      %v2959 = vsel %vm2945, %v2894, %v1771
      %v2961 = vsel %vm2945, %v2896, %v1773
      %v2963 = vsel %vm2945, %v2898, %v1775
      %v2965 = vsel %vm2945, %v2900, %v1777
      %v2967 = vsel %vm2945, %v2902, %v1779
      %v2969 = vsel %vm2945, %v2904, %v1781
      %v2971 = vsel %vm2945, %v2906, %v1783
      %v2973 = vsel %vm2945, %v2908, %v1785
      %v2975 = vsel %vm2945, %v2910, %v1787
      %v2977 = vsel %vm2945, %v2912, %v1789
      %v2979 = vsel %vm2945, %v2914, %v1791
      %v2981 = vsel %vm2945, %v2916, %v1793
      %v2983 = vsel %vm2945, %v2918, %v1795
      %v2985 = vsel %vm2945, %v2920, %v1797
      %v2987 = vsel %vm2945, %v2922, %v1799
      %v2989 = vsel %vm2945, %v2924, %v1801
      %v2991 = vsel %vm2945, %v2926, %v1803
      %v2993 = vsel %vm2945, %v2928, %v1805
      %v2995 = vsel %vm2945, %v2930, %v1807
      %v2997 = vsel %vm2945, %v2932, %v1809
      %v2999 = vsel %vm2945, %v2934, %v1811
      %v3001 = vsel %vm2945, %v2936, %v1813
      %v3003 = vsel %vm2945, %v2938, %v1815
      %v3005 = vsel %vm2945, %v2940, %v1817
      %v3007 = vsel %vm2945, %v2942, %v1819
      %v3009 = vsel %vm2945, %v2944, %v1821
      %vm3010 = vcmask 490496
      %v3012 = vsel %vm3010, %v2947, %v1983
      %v3014 = vsel %vm3010, %v2949, %v1985
      %v3016 = vsel %vm3010, %v2951, %v1987
      %v3018 = vsel %vm3010, %v2953, %v1989
      %v3020 = vsel %vm3010, %v2955, %v1991
      %v3022 = vsel %vm3010, %v2957, %v1993
      %v3024 = vsel %vm3010, %v2959, %v1995
      %v3026 = vsel %vm3010, %v2961, %v1997
      %v3028 = vsel %vm3010, %v2963, %v1999
      %v3030 = vsel %vm3010, %v2965, %v2001
      %v3032 = vsel %vm3010, %v2967, %v2003
      %v3034 = vsel %vm3010, %v2969, %v2005
      %v3036 = vsel %vm3010, %v2971, %v2007
      %v3038 = vsel %vm3010, %v2973, %v2009
      %v3040 = vsel %vm3010, %v2975, %v2011
      %v3042 = vsel %vm3010, %v2977, %v2013
      %v3044 = vsel %vm3010, %v2979, %v2015
      %v3046 = vsel %vm3010, %v2981, %v2017
      %v3048 = vsel %vm3010, %v2983, %v2019
      %v3050 = vsel %vm3010, %v2985, %v2021
      %v3052 = vsel %vm3010, %v2987, %v2023
      %v3054 = vsel %vm3010, %v2989, %v2025
      %v3056 = vsel %vm3010, %v2991, %v2027
      %v3058 = vsel %vm3010, %v2993, %v2029
      %v3060 = vsel %vm3010, %v2995, %v2031
      %v3062 = vsel %vm3010, %v2997, %v2033
      %v3064 = vsel %vm3010, %v2999, %v2035
      %v3066 = vsel %vm3010, %v3001, %v2037
      %v3068 = vsel %vm3010, %v3003, %v2039
      %v3070 = vsel %vm3010, %v3005, %v2041
      %v3072 = vsel %vm3010, %v3007, %v2043
      %v3074 = vsel %vm3010, %v3009, %v2045
      %vm3075 = vcmask 588800
      %v3077 = vsel %vm3075, %v3012, %v2207
      %v3079 = vsel %vm3075, %v3014, %v2209
      %v3081 = vsel %vm3075, %v3016, %v2211
      %v3083 = vsel %vm3075, %v3018, %v2213
      %v3085 = vsel %vm3075, %v3020, %v2215
      %v3087 = vsel %vm3075, %v3022, %v2217
      %v3089 = vsel %vm3075, %v3024, %v2219
      %v3091 = vsel %vm3075, %v3026, %v2221
      %v3093 = vsel %vm3075, %v3028, %v2223
      %v3095 = vsel %vm3075, %v3030, %v2225
      %v3097 = vsel %vm3075, %v3032, %v2227
      %v3099 = vsel %vm3075, %v3034, %v2229
      %v3101 = vsel %vm3075, %v3036, %v2231
      %v3103 = vsel %vm3075, %v3038, %v2233
      %v3105 = vsel %vm3075, %v3040, %v2235
      %v3107 = vsel %vm3075, %v3042, %v2237
      %v3109 = vsel %vm3075, %v3044, %v2239
      %v3111 = vsel %vm3075, %v3046, %v2241
      %v3113 = vsel %vm3075, %v3048, %v2243
      %v3115 = vsel %vm3075, %v3050, %v2245
      %v3117 = vsel %vm3075, %v3052, %v2247
      %v3119 = vsel %vm3075, %v3054, %v2249
      %v3121 = vsel %vm3075, %v3056, %v2251
      %v3123 = vsel %vm3075, %v3058, %v2253
      %v3125 = vsel %vm3075, %v3060, %v2255
      %v3127 = vsel %vm3075, %v3062, %v2257
      %v3129 = vsel %vm3075, %v3064, %v2259
      %v3131 = vsel %vm3075, %v3066, %v2261
      %v3133 = vsel %vm3075, %v3068, %v2263
      %v3135 = vsel %vm3075, %v3070, %v2265
      %v3137 = vsel %vm3075, %v3072, %v2267
      %v3139 = vsel %vm3075, %v3074, %v2269
      %vm3140 = vcmask 687104
      %v3142 = vsel %vm3140, %v3077, %v2431
      %v3144 = vsel %vm3140, %v3079, %v2433
      %v3146 = vsel %vm3140, %v3081, %v2435
      %v3148 = vsel %vm3140, %v3083, %v2437
      %v3150 = vsel %vm3140, %v3085, %v2439
      %v3152 = vsel %vm3140, %v3087, %v2441
      %v3154 = vsel %vm3140, %v3089, %v2443
      %v3156 = vsel %vm3140, %v3091, %v2445
      %v3158 = vsel %vm3140, %v3093, %v2447
      %v3160 = vsel %vm3140, %v3095, %v2449
      %v3162 = vsel %vm3140, %v3097, %v2451
      %v3164 = vsel %vm3140, %v3099, %v2453
      %v3166 = vsel %vm3140, %v3101, %v2455
      %v3168 = vsel %vm3140, %v3103, %v2457
      %v3170 = vsel %vm3140, %v3105, %v2459
      %v3172 = vsel %vm3140, %v3107, %v2461
      %v3174 = vsel %vm3140, %v3109, %v2463
      %v3176 = vsel %vm3140, %v3111, %v2465
      %v3178 = vsel %vm3140, %v3113, %v2467
      %v3180 = vsel %vm3140, %v3115, %v2469
      %v3182 = vsel %vm3140, %v3117, %v2471
      %v3184 = vsel %vm3140, %v3119, %v2473
      %v3186 = vsel %vm3140, %v3121, %v2475
      %v3188 = vsel %vm3140, %v3123, %v2477
      %v3190 = vsel %vm3140, %v3125, %v2479
      %v3192 = vsel %vm3140, %v3127, %v2481
      %v3194 = vsel %vm3140, %v3129, %v2483
      %v3196 = vsel %vm3140, %v3131, %v2485
      %v3198 = vsel %vm3140, %v3133, %v2487
      %v3200 = vsel %vm3140, %v3135, %v2489
      %v3202 = vsel %vm3140, %v3137, %v2491
      %v3204 = vsel %vm3140, %v3139, %v2493
      %vm3205 = vcmask 785408
      %v3207 = vsel %vm3205, %v3142, %v2655
      %v3209 = vsel %vm3205, %v3144, %v2657
      %v3211 = vsel %vm3205, %v3146, %v2659
      %v3213 = vsel %vm3205, %v3148, %v2661
      %v3215 = vsel %vm3205, %v3150, %v2663
      %v3217 = vsel %vm3205, %v3152, %v2665
      %v3219 = vsel %vm3205, %v3154, %v2667
      %v3221 = vsel %vm3205, %v3156, %v2669
      %v3223 = vsel %vm3205, %v3158, %v2671
      %v3225 = vsel %vm3205, %v3160, %v2673
      %v3227 = vsel %vm3205, %v3162, %v2675
      %v3229 = vsel %vm3205, %v3164, %v2677
      %v3231 = vsel %vm3205, %v3166, %v2679
      %v3233 = vsel %vm3205, %v3168, %v2681
      %v3235 = vsel %vm3205, %v3170, %v2683
      %v3237 = vsel %vm3205, %v3172, %v2685
      %v3239 = vsel %vm3205, %v3174, %v2687
      %v3241 = vsel %vm3205, %v3176, %v2689
      %v3243 = vsel %vm3205, %v3178, %v2691
      %v3245 = vsel %vm3205, %v3180, %v2693
      %v3247 = vsel %vm3205, %v3182, %v2695
      %v3249 = vsel %vm3205, %v3184, %v2697
      %v3251 = vsel %vm3205, %v3186, %v2699
      %v3253 = vsel %vm3205, %v3188, %v2701
      %v3255 = vsel %vm3205, %v3190, %v2703
      %v3257 = vsel %vm3205, %v3192, %v2705
      %v3259 = vsel %vm3205, %v3194, %v2707
      %v3261 = vsel %vm3205, %v3196, %v2709
      %v3263 = vsel %vm3205, %v3198, %v2711
      %v3265 = vsel %vm3205, %v3200, %v2713
      %v3267 = vsel %vm3205, %v3202, %v2715
      %v3269 = vsel %vm3205, %v3204, %v2717
      %v3270 = vld [vmem:[%s1] sm:$0xf]
      %v3271 = vld [vmem:[%s1 + $0x4] sm:$0xf]
      %v3272 = vld [vmem:[%s1 + $0x8] sm:$0xf]
      %v3273 = vld [vmem:[%s1 + $0xc] sm:$0xf]
      %v3274 = vld [vmem:[%s1 + $0x10] sm:$0xf]
      %v3275 = vld [vmem:[%s1 + $0x14] sm:$0xf]
      %v3276 = vld [vmem:[%s1 + $0x18] sm:$0xf]
      %v3277 = vld [vmem:[%s1 + $0x1c] sm:$0xf]
      %v3278 = vld [vmem:[%s1 + $0x20] sm:$0xf]
      %v3279 = vld [vmem:[%s1 + $0x24] sm:$0xf]
      %v3280 = vld [vmem:[%s1 + $0x28] sm:$0xf]
      %v3281 = vld [vmem:[%s1 + $0x2c] sm:$0xf]
      %v3282 = vld [vmem:[%s1 + $0x30] sm:$0xf]
      %v3283 = vld [vmem:[%s1 + $0x34] sm:$0x3]
      %v3298 = vunpack.c.l.b16 %v3270
      %v3299 = vunpack.c.l.b16 %v3271
      %v3300 = vunpack.c.l.b16 %v3272
      %v3301 = vunpack.c.l.b16 %v3273
      %v3302 = vunpack.c.l.b16 %v3274
      %v3303 = vunpack.c.l.b16 %v3275
      %v3304 = vunpack.c.l.b16 %v3276
      %v3305 = vunpack.c.l.b16 %v3277
      %v3306 = vunpack.c.l.b16 %v3278
      %v3307 = vunpack.c.l.b16 %v3279
      %v3308 = vunpack.c.l.b16 %v3280
      %v3309 = vunpack.c.l.b16 %v3281
      %v3310 = vunpack.c.l.b16 %v3282
      %v3311 = vunpack.c.l.b16 %v3283
      %v3312 = vpack.c.b16 %v3299, %v3298
      %v3313 = vpack.c.b16 %v3301, %v3300
      %v3314 = vpack.c.b16 %v3303, %v3302
      %v3315 = vpack.c.b16 %v3305, %v3304
      %v3316 = vpack.c.b16 %v3307, %v3306
      %v3317 = vpack.c.b16 %v3309, %v3308
      %v3318 = vpack.c.b16 %v3311, %v3310
      %vm3325 = vcmask 883712
      %v3326 = vsel %vm3325, %v3207, 0
      %v3328 = vsel %vm3325, %v3209, 0
      %v3330 = vsel %vm3325, %v3211, 0
      %v3332 = vsel %vm3325, %v3213, 0
      %v3334 = vsel %vm3325, %v3215, 0
      %v3336 = vsel %vm3325, %v3217, 0
      %v3338 = vsel %vm3325, %v3219, 0
      %v3340 = vsel %vm3325, %v3221, 0
      %v3342 = vsel %vm3325, %v3223, 0
      %v3344 = vsel %vm3325, %v3225, 0
      %v3346 = vsel %vm3325, %v3227, 0
      %v3348 = vsel %vm3325, %v3229, 0
      %v3350 = vsel %vm3325, %v3231, 0
      %v3352 = vsel %vm3325, %v3233, 0
      %v3354 = vsel %vm3325, %v3235, 0
      %v3356 = vsel %vm3325, %v3237, 0
      %v3358 = vsel %vm3325, %v3239, 0
      %v3360 = vsel %vm3325, %v3241, 0
      %v3362 = vsel %vm3325, %v3243, 0
      %v3364 = vsel %vm3325, %v3245, 0
      %v3366 = vsel %vm3325, %v3247, 0
      %v3368 = vsel %vm3325, %v3249, 0
      %v3370 = vsel %vm3325, %v3251, 0
      %v3372 = vsel %vm3325, %v3253, 0
      %v3374 = vsel %vm3325, %v3255, 0
      %v3376 = vsel %vm3325, %v3257, 0
      %v3378 = vsel %vm3325, %v3259, 0
      %v3380 = vsel %vm3325, %v3261, 0
      %v3382 = vsel %vm3325, %v3263, 0
      %v3384 = vsel %vm3325, %v3265, 0
      %v3386 = vsel %vm3325, %v3267, 0
      %v3388 = vsel %vm3325, %v3269, 0
      %vm3390 = vcmask 1045504
      %v3392 = vsel %vm3390, %v3318, 0
      %3394 = vmatprep.subr.bf16.mxu0 0
      %3395 = vmatpush1.bf16.msra.mxu0 %v3312
      %3396 = vmatprep.subr.bf16.mxu0 0
      %3397 = vmatpush1.bf16.msra.mxu0 %v3313
      %3398 = vmatprep.subr.bf16.mxu0 0
      %3399 = vmatpush1.bf16.msra.mxu0 %v3314
      %3400 = vmatprep.subr.bf16.mxu0 0
      %3401 = vmatpush1.bf16.msra.mxu0 %v3315
      %3402 = vmatprep.subr.bf16.mxu0 0
      %3403 = vmatpush1.bf16.msra.mxu0 %v3316
      %3404 = vmatprep.subr.bf16.mxu0 0
      %3405 = vmatpush1.bf16.msra.mxu0 %v3317
      %3406 = vmatprep.subr.bf16.mxu0 0
      %3407 = vmatpush1.bf16.msra.mxu0 %v3392
      %3408 = vmatprep.subr.bf16.mxu0 0
      %3409 = vmatpush1.bf16.msra.mxu0 0
      %3410 = vmatprep.subr.bf16.mxu0 0
      %3411 = vmatpush1.bf16.msra.mxu0 0
      %3412 = vmatprep.subr.bf16.mxu0 0
      %3413 = vmatpush1.bf16.msra.mxu0 0
      %3414 = vmatprep.subr.bf16.mxu0 0
      %3415 = vmatpush1.bf16.msra.mxu0 0
      %3416 = vmatprep.subr.bf16.mxu0 0
      %3417 = vmatpush1.bf16.msra.mxu0 0
      %3418 = vmatprep.subr.bf16.mxu0 0
      %3419 = vmatpush1.bf16.msra.mxu0 0
      %3420 = vmatprep.subr.bf16.mxu0 0
      %3421 = vmatpush1.bf16.msra.mxu0 0
      %3422 = vmatprep.subr.bf16.mxu0 0
      %3423 = vmatpush1.bf16.msra.mxu0 0
      %3424 = vmatprep.subr.bf16.mxu0 0
      %3425 = vmatpush1.bf16.msra.mxu0 0
      %3426 = vmatprep.mubr.bf16.mxu0 0
      %3427 = vmatmul.mubr.bf16.gmra.mrb[0].mxu0 %v3326
      %v3428 = vpop.f32.mrb[0].mxu0
      %v3429 = vadd.f32 0.0, %v3428
      %v3430 = vpop.f32.mrb[0].mxu0
      %v3431 = vpop.f32.mrb[0].mxu0
      %v3432 = vadd.f32 0.0, %v3431
      %v3433 = vpop.f32.mrb[0].mxu0
      %3434 = vmatprep.mubr.bf16.mxu0 0
      %3435 = vmatmul.mubr.bf16.gmra.mrb[0].mxu0 %v3328
      %v3436 = vpop.f32.mrb[0].mxu0
      %v3437 = vadd.f32 0.0, %v3436
      %v3438 = vpop.f32.mrb[0].mxu0
      %v3439 = vpop.f32.mrb[0].mxu0
      %v3440 = vadd.f32 0.0, %v3439
      %v3441 = vpop.f32.mrb[0].mxu0
      %3442 = vmatprep.mubr.bf16.mxu0 0
      %3443 = vmatmul.mubr.bf16.gmra.mrb[0].mxu0 %v3330
      %v3444 = vpop.f32.mrb[0].mxu0
      %v3445 = vadd.f32 0.0, %v3444
      %v3446 = vpop.f32.mrb[0].mxu0
      %v3447 = vpop.f32.mrb[0].mxu0
      %v3448 = vadd.f32 0.0, %v3447
      %v3449 = vpop.f32.mrb[0].mxu0
      %3450 = vmatprep.mubr.bf16.mxu0 0
      %3451 = vmatmul.mubr.bf16.gmra.mrb[0].mxu0 %v3332
      %v3452 = vpop.f32.mrb[0].mxu0
      %v3453 = vadd.f32 0.0, %v3452
      %v3454 = vpop.f32.mrb[0].mxu0
      %v3455 = vpop.f32.mrb[0].mxu0
      %v3456 = vadd.f32 0.0, %v3455
      %v3457 = vpop.f32.mrb[0].mxu0
      %3458 = vmatprep.mubr.bf16.mxu0 0
      %3459 = vmatmul.mubr.bf16.gmra.mrb[0].mxu0 %v3334
      %v3460 = vpop.f32.mrb[0].mxu0
      %v3461 = vadd.f32 0.0, %v3460
      %v3462 = vpop.f32.mrb[0].mxu0
      %v3463 = vpop.f32.mrb[0].mxu0
      %v3464 = vadd.f32 0.0, %v3463
      %v3465 = vpop.f32.mrb[0].mxu0
      %3466 = vmatprep.mubr.bf16.mxu0 0
      %3467 = vmatmul.mubr.bf16.gmra.mrb[0].mxu0 %v3336
      %v3468 = vpop.f32.mrb[0].mxu0
      %v3469 = vadd.f32 0.0, %v3468
      %v3470 = vpop.f32.mrb[0].mxu0
      %v3471 = vpop.f32.mrb[0].mxu0
      %v3472 = vadd.f32 0.0, %v3471
      %v3473 = vpop.f32.mrb[0].mxu0
      %3474 = vmatprep.mubr.bf16.mxu0 0
      %3475 = vmatmul.mubr.bf16.gmra.mrb[0].mxu0 %v3338
      %v3476 = vpop.f32.mrb[0].mxu0
      %v3477 = vadd.f32 0.0, %v3476
      %v3478 = vpop.f32.mrb[0].mxu0
      %v3479 = vpop.f32.mrb[0].mxu0
      %v3480 = vadd.f32 0.0, %v3479
      %v3481 = vpop.f32.mrb[0].mxu0
      %3482 = vmatprep.mubr.bf16.mxu0 0
      %3483 = vmatmul.mubr.bf16.gmra.mrb[0].mxu0 %v3340
      %v3484 = vpop.f32.mrb[0].mxu0
      %v3485 = vadd.f32 0.0, %v3484
      %v3486 = vpop.f32.mrb[0].mxu0
      %v3487 = vpop.f32.mrb[0].mxu0
      %v3488 = vadd.f32 0.0, %v3487
      %v3489 = vpop.f32.mrb[0].mxu0
      %3490 = vmatprep.mubr.bf16.mxu0 0
      %3491 = vmatmul.mubr.bf16.gmra.mrb[0].mxu0 %v3342
      %v3492 = vpop.f32.mrb[0].mxu0
      %v3493 = vadd.f32 0.0, %v3492
      %v3494 = vpop.f32.mrb[0].mxu0
      %v3495 = vpop.f32.mrb[0].mxu0
      %v3496 = vadd.f32 0.0, %v3495
      %v3497 = vpop.f32.mrb[0].mxu0
      %3498 = vmatprep.mubr.bf16.mxu0 0
      %3499 = vmatmul.mubr.bf16.gmra.mrb[0].mxu0 %v3344
      %v3500 = vpop.f32.mrb[0].mxu0
      %v3501 = vadd.f32 0.0, %v3500
      %v3502 = vpop.f32.mrb[0].mxu0
      %v3503 = vpop.f32.mrb[0].mxu0
      %v3504 = vadd.f32 0.0, %v3503
      %v3505 = vpop.f32.mrb[0].mxu0
      %3506 = vmatprep.mubr.bf16.mxu0 0
      %3507 = vmatmul.mubr.bf16.gmra.mrb[0].mxu0 %v3346
      %v3508 = vpop.f32.mrb[0].mxu0
      %v3509 = vadd.f32 0.0, %v3508
      %v3510 = vpop.f32.mrb[0].mxu0
      %v3511 = vpop.f32.mrb[0].mxu0
      %v3512 = vadd.f32 0.0, %v3511
      %v3513 = vpop.f32.mrb[0].mxu0
      %3514 = vmatprep.mubr.bf16.mxu0 0
      %3515 = vmatmul.mubr.bf16.gmra.mrb[0].mxu0 %v3348
      %v3516 = vpop.f32.mrb[0].mxu0
      %v3517 = vadd.f32 0.0, %v3516
      %v3518 = vpop.f32.mrb[0].mxu0
      %v3519 = vpop.f32.mrb[0].mxu0
      %v3520 = vadd.f32 0.0, %v3519
      %v3521 = vpop.f32.mrb[0].mxu0
      %3522 = vmatprep.mubr.bf16.mxu0 0
      %3523 = vmatmul.mubr.bf16.gmra.mrb[0].mxu0 %v3350
      %v3524 = vpop.f32.mrb[0].mxu0
      %v3525 = vadd.f32 0.0, %v3524
      %v3526 = vpop.f32.mrb[0].mxu0
      %v3527 = vpop.f32.mrb[0].mxu0
      %v3528 = vadd.f32 0.0, %v3527
      %v3529 = vpop.f32.mrb[0].mxu0
      %3530 = vmatprep.mubr.bf16.mxu0 0
      %3531 = vmatmul.mubr.bf16.gmra.mrb[0].mxu0 %v3352
      %v3532 = vpop.f32.mrb[0].mxu0
      %v3533 = vadd.f32 0.0, %v3532
      %v3534 = vpop.f32.mrb[0].mxu0
      %v3535 = vpop.f32.mrb[0].mxu0
      %v3536 = vadd.f32 0.0, %v3535
      %v3537 = vpop.f32.mrb[0].mxu0
      %3538 = vmatprep.mubr.bf16.mxu0 0
      %3539 = vmatmul.mubr.bf16.gmra.mrb[0].mxu0 %v3354
      %v3540 = vpop.f32.mrb[0].mxu0
      %v3541 = vadd.f32 0.0, %v3540
      %v3542 = vpop.f32.mrb[0].mxu0
      %v3543 = vpop.f32.mrb[0].mxu0
      %v3544 = vadd.f32 0.0, %v3543
      %v3545 = vpop.f32.mrb[0].mxu0
      %3546 = vmatprep.mubr.bf16.mxu0 0
      %3547 = vmatmul.mubr.bf16.gmra.mrb[0].mxu0 %v3356
      %v3548 = vpop.f32.mrb[0].mxu0
      %v3549 = vadd.f32 0.0, %v3548
      %v3550 = vpop.f32.mrb[0].mxu0
      %v3551 = vpop.f32.mrb[0].mxu0
      %v3552 = vadd.f32 0.0, %v3551
      %v3553 = vpop.f32.mrb[0].mxu0
      %3554 = vmatprep.mubr.bf16.mxu0 0
      %3555 = vmatmul.mubr.bf16.gmra.mrb[0].mxu0 %v3358
      %v3556 = vpop.f32.mrb[0].mxu0
      %v3557 = vadd.f32 0.0, %v3556
      %v3558 = vpop.f32.mrb[0].mxu0
      %v3559 = vpop.f32.mrb[0].mxu0
      %v3560 = vadd.f32 0.0, %v3559
      %v3561 = vpop.f32.mrb[0].mxu0
      %3562 = vmatprep.mubr.bf16.mxu0 0
      %3563 = vmatmul.mubr.bf16.gmra.mrb[0].mxu0 %v3360
      %v3564 = vpop.f32.mrb[0].mxu0
      %v3565 = vadd.f32 0.0, %v3564
      %v3566 = vpop.f32.mrb[0].mxu0
      %v3567 = vpop.f32.mrb[0].mxu0
      %v3568 = vadd.f32 0.0, %v3567
      %v3569 = vpop.f32.mrb[0].mxu0
      %3570 = vmatprep.mubr.bf16.mxu0 0
      %3571 = vmatmul.mubr.bf16.gmra.mrb[0].mxu0 %v3362
      %v3572 = vpop.f32.mrb[0].mxu0
      %v3573 = vadd.f32 0.0, %v3572
      %v3574 = vpop.f32.mrb[0].mxu0
      %v3575 = vpop.f32.mrb[0].mxu0
      %v3576 = vadd.f32 0.0, %v3575
      %v3577 = vpop.f32.mrb[0].mxu0
      %3578 = vmatprep.mubr.bf16.mxu0 0
      %3579 = vmatmul.mubr.bf16.gmra.mrb[0].mxu0 %v3364
      %v3580 = vpop.f32.mrb[0].mxu0
      %v3581 = vadd.f32 0.0, %v3580
      %v3582 = vpop.f32.mrb[0].mxu0
      %v3583 = vpop.f32.mrb[0].mxu0
      %v3584 = vadd.f32 0.0, %v3583
      %v3585 = vpop.f32.mrb[0].mxu0
      %3586 = vmatprep.mubr.bf16.mxu0 0
      %3587 = vmatmul.mubr.bf16.gmra.mrb[0].mxu0 %v3366
      %v3588 = vpop.f32.mrb[0].mxu0
      %v3589 = vadd.f32 0.0, %v3588
      %v3590 = vpop.f32.mrb[0].mxu0
      %v3591 = vpop.f32.mrb[0].mxu0
      %v3592 = vadd.f32 0.0, %v3591
      %v3593 = vpop.f32.mrb[0].mxu0
      %3594 = vmatprep.mubr.bf16.mxu0 0
      %3595 = vmatmul.mubr.bf16.gmra.mrb[0].mxu0 %v3368
      %v3596 = vpop.f32.mrb[0].mxu0
      %v3597 = vadd.f32 0.0, %v3596
      %v3598 = vpop.f32.mrb[0].mxu0
      %v3599 = vpop.f32.mrb[0].mxu0
      %v3600 = vadd.f32 0.0, %v3599
      %v3601 = vpop.f32.mrb[0].mxu0
      %3602 = vmatprep.mubr.bf16.mxu0 0
      %3603 = vmatmul.mubr.bf16.gmra.mrb[0].mxu0 %v3370
      %v3604 = vpop.f32.mrb[0].mxu0
      %v3605 = vadd.f32 0.0, %v3604
      %v3606 = vpop.f32.mrb[0].mxu0
      %v3607 = vpop.f32.mrb[0].mxu0
      %v3608 = vadd.f32 0.0, %v3607
      %v3609 = vpop.f32.mrb[0].mxu0
      %3610 = vmatprep.mubr.bf16.mxu0 0
      %3611 = vmatmul.mubr.bf16.gmra.mrb[0].mxu0 %v3372
      %v3612 = vpop.f32.mrb[0].mxu0
      %v3613 = vadd.f32 0.0, %v3612
      %v3614 = vpop.f32.mrb[0].mxu0
      %v3615 = vpop.f32.mrb[0].mxu0
      %v3616 = vadd.f32 0.0, %v3615
      %v3617 = vpop.f32.mrb[0].mxu0
      %3618 = vmatprep.mubr.bf16.mxu0 0
      %3619 = vmatmul.mubr.bf16.gmra.mrb[0].mxu0 %v3374
      %v3620 = vpop.f32.mrb[0].mxu0
      %v3621 = vadd.f32 0.0, %v3620
      %v3622 = vpop.f32.mrb[0].mxu0
      %v3623 = vpop.f32.mrb[0].mxu0
      %v3624 = vadd.f32 0.0, %v3623
      %v3625 = vpop.f32.mrb[0].mxu0
      %3626 = vmatprep.mubr.bf16.mxu0 0
      %3627 = vmatmul.mubr.bf16.gmra.mrb[0].mxu0 %v3376
      %v3628 = vpop.f32.mrb[0].mxu0
      %v3629 = vadd.f32 0.0, %v3628
      %v3630 = vpop.f32.mrb[0].mxu0
      %v3631 = vpop.f32.mrb[0].mxu0
      %v3632 = vadd.f32 0.0, %v3631
      %v3633 = vpop.f32.mrb[0].mxu0
      %3634 = vmatprep.mubr.bf16.mxu0 0
      %3635 = vmatmul.mubr.bf16.gmra.mrb[0].mxu0 %v3378
      %v3636 = vpop.f32.mrb[0].mxu0
      %v3637 = vadd.f32 0.0, %v3636
      %v3638 = vpop.f32.mrb[0].mxu0
      %v3639 = vpop.f32.mrb[0].mxu0
      %v3640 = vadd.f32 0.0, %v3639
      %v3641 = vpop.f32.mrb[0].mxu0
      %3642 = vmatprep.mubr.bf16.mxu0 0
      %3643 = vmatmul.mubr.bf16.gmra.mrb[0].mxu0 %v3380
      %v3644 = vpop.f32.mrb[0].mxu0
      %v3645 = vadd.f32 0.0, %v3644
      %v3646 = vpop.f32.mrb[0].mxu0
      %v3647 = vpop.f32.mrb[0].mxu0
      %v3648 = vadd.f32 0.0, %v3647
      %v3649 = vpop.f32.mrb[0].mxu0
      %3650 = vmatprep.mubr.bf16.mxu0 0
      %3651 = vmatmul.mubr.bf16.gmra.mrb[0].mxu0 %v3382
      %v3652 = vpop.f32.mrb[0].mxu0
      %v3653 = vadd.f32 0.0, %v3652
      %v3654 = vpop.f32.mrb[0].mxu0
      %v3655 = vpop.f32.mrb[0].mxu0
      %v3656 = vadd.f32 0.0, %v3655
      %v3657 = vpop.f32.mrb[0].mxu0
      %3658 = vmatprep.mubr.bf16.mxu0 0
      %3659 = vmatmul.mubr.bf16.gmra.mrb[0].mxu0 %v3384
      %v3660 = vpop.f32.mrb[0].mxu0
      %v3661 = vadd.f32 0.0, %v3660
      %v3662 = vpop.f32.mrb[0].mxu0
      %v3663 = vpop.f32.mrb[0].mxu0
      %v3664 = vadd.f32 0.0, %v3663
      %v3665 = vpop.f32.mrb[0].mxu0
      %3666 = vmatprep.mubr.bf16.mxu0 0
      %3667 = vmatmul.mubr.bf16.gmra.mrb[0].mxu0 %v3386
      %v3668 = vpop.f32.mrb[0].mxu0
      %v3669 = vadd.f32 0.0, %v3668
      %v3670 = vpop.f32.mrb[0].mxu0
      %v3671 = vpop.f32.mrb[0].mxu0
      %v3672 = vadd.f32 0.0, %v3671
      %v3673 = vpop.f32.mrb[0].mxu0
      %3674 = vmatprep.mubr.bf16.mxu0 0
      %3675 = vmatmul.mubr.bf16.gmra.mrb[0].mxu0 %v3388
      %v3676 = vpop.f32.mrb[0].mxu0
      %v3677 = vadd.f32 0.0, %v3676
      %v3678 = vpop.f32.mrb[0].mxu0
      %v3679 = vpop.f32.mrb[0].mxu0
      %v3680 = vadd.f32 0.0, %v3679
      %v3681 = vpop.f32.mrb[0].mxu0
      %3682 = vdwg.mxu0
      %v3683 = vadd.f32 %v3429, %v3432
      %v3684 = vadd.f32 %v3683, %v3437
      %v3685 = vadd.f32 %v3684, %v3440
      %v3686 = vadd.f32 %v3685, %v3445
      %v3687 = vadd.f32 %v3686, %v3448
      %v3688 = vadd.f32 %v3687, %v3453
      %v3689 = vadd.f32 %v3688, %v3456
      %v3690 = vadd.f32 %v3689, %v3461
      %v3691 = vadd.f32 %v3690, %v3464
      %v3692 = vadd.f32 %v3691, %v3469
      %v3693 = vadd.f32 %v3692, %v3472
      %v3694 = vadd.f32 %v3693, %v3477
      %v3695 = vadd.f32 %v3694, %v3480
      %v3696 = vadd.f32 %v3695, %v3485
      %v3697 = vadd.f32 %v3696, %v3488
      %v3698 = vadd.f32 %v3697, %v3493
      %v3699 = vadd.f32 %v3698, %v3496
      %v3700 = vadd.f32 %v3699, %v3501
      %v3701 = vadd.f32 %v3700, %v3504
      %v3702 = vadd.f32 %v3701, %v3509
      %v3703 = vadd.f32 %v3702, %v3512
      %v3704 = vadd.f32 %v3703, %v3517
      %v3705 = vadd.f32 %v3704, %v3520
      %v3706 = vadd.f32 %v3705, %v3525
      %v3707 = vadd.f32 %v3706, %v3528
      %v3708 = vadd.f32 %v3707, %v3533
      %v3709 = vadd.f32 %v3708, %v3536
      %v3710 = vadd.f32 %v3709, %v3541
      %v3711 = vadd.f32 %v3710, %v3544
      %v3712 = vadd.f32 %v3711, %v3549
      %v3713 = vadd.f32 %v3712, %v3552
      %v3714 = vadd.f32 %v3713, %v3557
      %v3715 = vadd.f32 %v3714, %v3560
      %v3716 = vadd.f32 %v3715, %v3565
      %v3717 = vadd.f32 %v3716, %v3568
      %v3718 = vadd.f32 %v3717, %v3573
      %v3719 = vadd.f32 %v3718, %v3576
      %v3720 = vadd.f32 %v3719, %v3581
      %v3721 = vadd.f32 %v3720, %v3584
      %v3722 = vadd.f32 %v3721, %v3589
      %v3723 = vadd.f32 %v3722, %v3592
      %v3724 = vadd.f32 %v3723, %v3597
      %v3725 = vadd.f32 %v3724, %v3600
      %v3726 = vadd.f32 %v3725, %v3605
      %v3727 = vadd.f32 %v3726, %v3608
      %v3728 = vadd.f32 %v3727, %v3613
      %v3729 = vadd.f32 %v3728, %v3616
      %v3730 = vadd.f32 %v3729, %v3621
      %v3731 = vadd.f32 %v3730, %v3624
      %v3732 = vadd.f32 %v3731, %v3629
      %v3733 = vadd.f32 %v3732, %v3632
      %v3734 = vadd.f32 %v3733, %v3637
      %v3735 = vadd.f32 %v3734, %v3640
      %v3736 = vadd.f32 %v3735, %v3645
      %v3737 = vadd.f32 %v3736, %v3648
      %v3738 = vadd.f32 %v3737, %v3653
      %v3739 = vadd.f32 %v3738, %v3656
      %v3740 = vadd.f32 %v3739, %v3661
      %v3741 = vadd.f32 %v3740, %v3664
      %v3742 = vadd.f32 %v3741, %v3669
      %v3743 = vadd.f32 %v3742, %v3672
      %v3744 = vadd.f32 %v3743, %v3677
      %v3745 = vadd.f32 %v3744, %v3680
      %v3746 = vrot.slane %v3745, 4
      %v3747 = vadd.f32 %v3745, %v3746
      %v3748 = vrot.slane %v3747, 2
      %v3749 = vadd.f32 %v3747, %v3748
      %v3750 = vrot.slane %v3749, 1
      %v3751 = vadd.f32 %v3749, %v3750
      %v3752 = vrcp.pop 512.0
      %v3753 = vmul.f32 %v3751, %v3752
      %v3754 = vsub.f32 %v3429, %v3753
      %v3755 = vsub.f32 %v3432, %v3753
      %v3756 = vsub.f32 %v3437, %v3753
      %v3757 = vsub.f32 %v3440, %v3753
      %v3758 = vsub.f32 %v3445, %v3753
      %v3759 = vsub.f32 %v3448, %v3753
      %v3760 = vsub.f32 %v3453, %v3753
      %v3761 = vsub.f32 %v3456, %v3753
      %v3762 = vsub.f32 %v3461, %v3753
      %v3763 = vsub.f32 %v3464, %v3753
      %v3764 = vsub.f32 %v3469, %v3753
      %v3765 = vsub.f32 %v3472, %v3753
      %v3766 = vsub.f32 %v3477, %v3753
      %v3767 = vsub.f32 %v3480, %v3753
      %v3768 = vsub.f32 %v3485, %v3753
      %v3769 = vsub.f32 %v3488, %v3753
      %v3770 = vsub.f32 %v3493, %v3753
      %v3771 = vsub.f32 %v3496, %v3753
      %v3772 = vsub.f32 %v3501, %v3753
      %v3773 = vsub.f32 %v3504, %v3753
      %v3774 = vsub.f32 %v3509, %v3753
      %v3775 = vsub.f32 %v3512, %v3753
      %v3776 = vsub.f32 %v3517, %v3753
      %v3777 = vsub.f32 %v3520, %v3753
      %v3778 = vsub.f32 %v3525, %v3753
      %v3779 = vsub.f32 %v3528, %v3753
      %v3780 = vsub.f32 %v3533, %v3753
      %v3781 = vsub.f32 %v3536, %v3753
      %v3782 = vsub.f32 %v3541, %v3753
      %v3783 = vsub.f32 %v3544, %v3753
      %v3784 = vsub.f32 %v3549, %v3753
      %v3785 = vsub.f32 %v3552, %v3753
      %v3786 = vsub.f32 %v3557, %v3753
      %v3787 = vsub.f32 %v3560, %v3753
      %v3788 = vsub.f32 %v3565, %v3753
      %v3789 = vsub.f32 %v3568, %v3753
      %v3790 = vsub.f32 %v3573, %v3753
      %v3791 = vsub.f32 %v3576, %v3753
      %v3792 = vsub.f32 %v3581, %v3753
      %v3793 = vsub.f32 %v3584, %v3753
      %v3794 = vsub.f32 %v3589, %v3753
      %v3795 = vsub.f32 %v3592, %v3753
      %v3796 = vsub.f32 %v3597, %v3753
      %v3797 = vsub.f32 %v3600, %v3753
      %v3798 = vsub.f32 %v3605, %v3753
      %v3799 = vsub.f32 %v3608, %v3753
      %v3800 = vsub.f32 %v3613, %v3753
      %v3801 = vsub.f32 %v3616, %v3753
      %v3802 = vsub.f32 %v3621, %v3753
      %v3803 = vsub.f32 %v3624, %v3753
      %v3804 = vsub.f32 %v3629, %v3753
      %v3805 = vsub.f32 %v3632, %v3753
      %v3806 = vsub.f32 %v3637, %v3753
      %v3807 = vsub.f32 %v3640, %v3753
      %v3808 = vsub.f32 %v3645, %v3753
      %v3809 = vsub.f32 %v3648, %v3753
      %v3810 = vsub.f32 %v3653, %v3753
      %v3811 = vsub.f32 %v3656, %v3753
      %v3812 = vsub.f32 %v3661, %v3753
      %v3813 = vsub.f32 %v3664, %v3753
      %v3814 = vsub.f32 %v3669, %v3753
      %v3815 = vsub.f32 %v3672, %v3753
      %v3816 = vsub.f32 %v3677, %v3753
      %v3817 = vsub.f32 %v3680, %v3753
      %v3818 = vmul.f32 %v3754, %v3754
      %v3819 = vmul.f32 %v3755, %v3755
      %v3820 = vmul.f32 %v3756, %v3756
      %v3821 = vmul.f32 %v3757, %v3757
      %v3822 = vmul.f32 %v3758, %v3758
      %v3823 = vmul.f32 %v3759, %v3759
      %v3824 = vmul.f32 %v3760, %v3760
      %v3825 = vmul.f32 %v3761, %v3761
      %v3826 = vmul.f32 %v3762, %v3762
      %v3827 = vmul.f32 %v3763, %v3763
      %v3828 = vmul.f32 %v3764, %v3764
      %v3829 = vmul.f32 %v3765, %v3765
      %v3830 = vmul.f32 %v3766, %v3766
      %v3831 = vmul.f32 %v3767, %v3767
      %v3832 = vmul.f32 %v3768, %v3768
      %v3833 = vmul.f32 %v3769, %v3769
      %v3834 = vmul.f32 %v3770, %v3770
      %v3835 = vmul.f32 %v3771, %v3771
      %v3836 = vmul.f32 %v3772, %v3772
      %v3837 = vmul.f32 %v3773, %v3773
      %v3838 = vmul.f32 %v3774, %v3774
      %v3839 = vmul.f32 %v3775, %v3775
      %v3840 = vmul.f32 %v3776, %v3776
      %v3841 = vmul.f32 %v3777, %v3777
      %v3842 = vmul.f32 %v3778, %v3778
      %v3843 = vmul.f32 %v3779, %v3779
      %v3844 = vmul.f32 %v3780, %v3780
      %v3845 = vmul.f32 %v3781, %v3781
      %v3846 = vmul.f32 %v3782, %v3782
      %v3847 = vmul.f32 %v3783, %v3783
      %v3848 = vmul.f32 %v3784, %v3784
      %v3849 = vmul.f32 %v3785, %v3785
      %v3850 = vmul.f32 %v3786, %v3786
      %v3851 = vmul.f32 %v3787, %v3787
      %v3852 = vmul.f32 %v3788, %v3788
      %v3853 = vmul.f32 %v3789, %v3789
      %v3854 = vmul.f32 %v3790, %v3790
      %v3855 = vmul.f32 %v3791, %v3791
      %v3856 = vmul.f32 %v3792, %v3792
      %v3857 = vmul.f32 %v3793, %v3793
      %v3858 = vmul.f32 %v3794, %v3794
      %v3859 = vmul.f32 %v3795, %v3795
      %v3860 = vmul.f32 %v3796, %v3796
      %v3861 = vmul.f32 %v3797, %v3797
      %v3862 = vmul.f32 %v3798, %v3798
      %v3863 = vmul.f32 %v3799, %v3799
      %v3864 = vmul.f32 %v3800, %v3800
      %v3865 = vmul.f32 %v3801, %v3801
      %v3866 = vmul.f32 %v3802, %v3802
      %v3867 = vmul.f32 %v3803, %v3803
      %v3868 = vmul.f32 %v3804, %v3804
      %v3869 = vmul.f32 %v3805, %v3805
      %v3870 = vmul.f32 %v3806, %v3806
      %v3871 = vmul.f32 %v3807, %v3807
      %v3872 = vmul.f32 %v3808, %v3808
      %v3873 = vmul.f32 %v3809, %v3809
      %v3874 = vmul.f32 %v3810, %v3810
      %v3875 = vmul.f32 %v3811, %v3811
      %v3876 = vmul.f32 %v3812, %v3812
      %v3877 = vmul.f32 %v3813, %v3813
      %v3878 = vmul.f32 %v3814, %v3814
      %v3879 = vmul.f32 %v3815, %v3815
      %v3880 = vmul.f32 %v3816, %v3816
      %v3881 = vmul.f32 %v3817, %v3817
      %v3882 = vadd.f32 %v3818, %v3819
      %v3883 = vadd.f32 %v3882, %v3820
      %v3884 = vadd.f32 %v3883, %v3821
      %v3885 = vadd.f32 %v3884, %v3822
      %v3886 = vadd.f32 %v3885, %v3823
      %v3887 = vadd.f32 %v3886, %v3824
      %v3888 = vadd.f32 %v3887, %v3825
      %v3889 = vadd.f32 %v3888, %v3826
      %v3890 = vadd.f32 %v3889, %v3827
      %v3891 = vadd.f32 %v3890, %v3828
      %v3892 = vadd.f32 %v3891, %v3829
      %v3893 = vadd.f32 %v3892, %v3830
      %v3894 = vadd.f32 %v3893, %v3831
      %v3895 = vadd.f32 %v3894, %v3832
      %v3896 = vadd.f32 %v3895, %v3833
      %v3897 = vadd.f32 %v3896, %v3834
      %v3898 = vadd.f32 %v3897, %v3835
      %v3899 = vadd.f32 %v3898, %v3836
      %v3900 = vadd.f32 %v3899, %v3837
      %v3901 = vadd.f32 %v3900, %v3838
      %v3902 = vadd.f32 %v3901, %v3839
      %v3903 = vadd.f32 %v3902, %v3840
      %v3904 = vadd.f32 %v3903, %v3841
      %v3905 = vadd.f32 %v3904, %v3842
      %v3906 = vadd.f32 %v3905, %v3843
      %v3907 = vadd.f32 %v3906, %v3844
      %v3908 = vadd.f32 %v3907, %v3845
      %v3909 = vadd.f32 %v3908, %v3846
      %v3910 = vadd.f32 %v3909, %v3847
      %v3911 = vadd.f32 %v3910, %v3848
      %v3912 = vadd.f32 %v3911, %v3849
      %v3913 = vadd.f32 %v3912, %v3850
      %v3914 = vadd.f32 %v3913, %v3851
      %v3915 = vadd.f32 %v3914, %v3852
      %v3916 = vadd.f32 %v3915, %v3853
      %v3917 = vadd.f32 %v3916, %v3854
      %v3918 = vadd.f32 %v3917, %v3855
      %v3919 = vadd.f32 %v3918, %v3856
      %v3920 = vadd.f32 %v3919, %v3857
      %v3921 = vadd.f32 %v3920, %v3858
      %v3922 = vadd.f32 %v3921, %v3859
      %v3923 = vadd.f32 %v3922, %v3860
      %v3924 = vadd.f32 %v3923, %v3861
      %v3925 = vadd.f32 %v3924, %v3862
      %v3926 = vadd.f32 %v3925, %v3863
      %v3927 = vadd.f32 %v3926, %v3864
      %v3928 = vadd.f32 %v3927, %v3865
      %v3929 = vadd.f32 %v3928, %v3866
      %v3930 = vadd.f32 %v3929, %v3867
      %v3931 = vadd.f32 %v3930, %v3868
      %v3932 = vadd.f32 %v3931, %v3869
      %v3933 = vadd.f32 %v3932, %v3870
      %v3934 = vadd.f32 %v3933, %v3871
      %v3935 = vadd.f32 %v3934, %v3872
      %v3936 = vadd.f32 %v3935, %v3873
      %v3937 = vadd.f32 %v3936, %v3874
      %v3938 = vadd.f32 %v3937, %v3875
      %v3939 = vadd.f32 %v3938, %v3876
      %v3940 = vadd.f32 %v3939, %v3877
      %v3941 = vadd.f32 %v3940, %v3878
      %v3942 = vadd.f32 %v3941, %v3879
      %v3943 = vadd.f32 %v3942, %v3880
      %v3944 = vadd.f32 %v3943, %v3881
      %v3945 = vrot.slane %v3944, 4
      %v3946 = vadd.f32 %v3944, %v3945
      %v3947 = vrot.slane %v3946, 2
      %v3948 = vadd.f32 %v3946, %v3947
      %v3949 = vrot.slane %v3948, 1
      %v3950 = vadd.f32 %v3948, %v3949
      %vm3951 = vcmask 1040384
      %v3952 = vsel %vm3951, %v3753, %v3950
      %vm3953 = vcmask 1041408
      %v3954 = vsel %vm3953, %v3952, 0.0
      %3955 = vst [vmem:[%s157] sm:$0xff] %v3954
      %s3956 = sadd.s32 %s17, %s18
      %p3957 = scmp.lt.s32.totalorder %s3956, 1
      %s3958 = scalar_select %p3957, %s3956, 1
      %s3959 = smul.addr %s3958, 8
      %s3960 = scalar_lea.vmem %s2, %s3959
      // Predicated region
      $region29: #{upconv_bn_layer.2} parent=27 // pred_check
        %p3961 = pneg %p92
      $region30: #{upconv_bn_layer.2} parent=27 // pred_check_branch
        %3963 = sbr.rel (%p3961) target = $region32
      $region31: #{upconv_bn_layer.2} parent=27 // pred_region
        %s3964 = sadd.s32 %s17, %s18
      $region32: #{upconv_bn_layer.2} parent=27 // pred_fallthru
        _
    $region28: #{upconv_bn_layer.2} parent=5 // pred_fallthru
      _
    %p3965 = scmp.le.s32.totalorder 2, %s8
    // Predicated region
    $region33: #{upconv_bn_layer.2} parent=5 // pred_check
      %p3966 = pneg %p3965
    $region34: #{upconv_bn_layer.2} parent=5 // pred_check_branch
      %3968 = sbr.rel (%p3966) target = $region36
    $region35: #{upconv_bn_layer.2} parent=5 // pred_region
      %s3969 = ssub.s32 %s8, 2
      // Predicated region
      $region37: #{upconv_bn_layer.2} parent=35 // pred_check
        %p3970 = pneg %p98
      $region38: #{upconv_bn_layer.2} parent=35 // pred_check_branch
        %3972 = sbr.rel (%p3970) target = $region40
      $region39: #{upconv_bn_layer.2} parent=35 // pred_region
        %s3973 = sadd.s32 %s19, %s20
        %p3974 = scmp.lt.s32.totalorder %s3973, 1
        %s3975 = scalar_select %p3974, %s3973, 1
        %s3976 = smul.addr %s3975, 8
        %s3977 = scalar_lea.vmem %s2, %s3976
      $region40: #{upconv_bn_layer.2} parent=35 // pred_fallthru
        _
    $region36: #{upconv_bn_layer.2} parent=5 // pred_fallthru
      _
  $region6: #{upconv_bn_layer.2} parent=0 // loop_footer
    %s12 = sadd.s32 1, %s8
  $region7: #{upconv_bn_layer.2} parent=0 // loop_footer_branch
    %7 = sbr.rel target = $region3
  $region8: #{upconv_bn_layer.2} parent=0 // loop_exit
    _

// kernel: upconv_bn_layer.3
$region0: #{upconv_bn_layer.3}
  #allocation0 [shape = 'u32[]', space=smem, size = 0x4, offset = 0x4, fixed_abs, tag = 'smem constant byte address 0x4 - core index']
  #allocation1 [shape = 'u32[144,128]{1,0:T(1,128)}', space=vmem, size = 0x12000, scoped, tag = 'internal scratch']
  %s0 = inlined_call_operand.vmem [shape: bf16[2,10,10,8,12], index: 0, kind: input, shape index: {}]
  %s1 = inlined_call_operand.vmem [shape: bf16[108,128], index: 1, kind: input, shape index: {}]
  %s2 = inlined_call_operand.vmem [shape: f32[1,128], index: 2, kind: input, shape index: {}]
  %s3 = inlined_call_operand.vmem [shape: f32[1,128], index: 3, kind: input, shape index: {}]
  %s4 = inlined_call_operand.vmem [shape: f32[2,8,512], index: 4, kind: output, shape index: {}]
  %s5 = sld [smem:[#allocation0]]
  $region49: #{upconv_bn_layer.3} parent=0
    _
  %s7 = ssub.s32 1, %s5
  %s8 = scalar_select 0, %s7, %s5
  loop: start=0, step=1, limit=4
  $region2: #{upconv_bn_layer.3} parent=0 // loop_pre_header
    _
  $region3: #{upconv_bn_layer.3} parent=0 // loop_header
    %s10 = sphi 0, %s14
    %p11 = scmp.ge.s32.totalorder %s10, 4
    %s17 = sphi 0, %s29
    %s18 = sphi 0, %s25
    %s19 = sphi 0, %s17
    %s20 = sphi 0, %s18
    %s21 = sphi 0, %s19
    %s22 = sphi 0, %s20
    %s32 = sphi 0, %s34
    %s35 = sphi 0, %s32
    %s36 = sphi 0, %s35
    %s52 = sphi 0, %s36
    %s56 = sphi 0, %s56
    %s58 = sphi 0, %s56
    %s59 = sphi 0, %s58
    %s73 = sphi 0, %s59
    %s77 = sphi 0, %s77
    %s79 = sphi 0, %s77
    %s80 = sphi 0, %s79
    %s94 = sphi 0, %s80
    %s98 = sphi 0, %s98
    %s100 = sphi 0, %s98
    %s101 = sphi 0, %s100
    %s115 = sphi 0, %s101
    %s123 = sphi 0, %s125
    %s126 = sphi 0, %s123
    %s127 = sphi 0, %s126
    %s143 = sphi 0, %s127
  $region4: #{upconv_bn_layer.3} parent=0 // loop_header_branch
    %13 = sbr.rel (%p11) target = $region8
  $region5: #{upconv_bn_layer.3} parent=0 // loop_body
    %s15 = ssub.s32 %s10, 1
    %s16 = ssub.s32 %s10, 2
    %s23 = sadd.s32 1, %s18
    %p24 = scmp.ge.s32.totalorder %s23, 1
    %s25 = scalar_select %p24, 0, %s23
    %s26 = sadd.s32 1, %s17
    %s27 = scalar_select %p24, %s26, %s17
    %p28 = scmp.ge.s32.totalorder %s27, 2
    %s29 = scalar_select %p28, 0, %s27
    %s30 = ssub.s32 %s17, %s29
    %p31 = scmp.eq.s32.totalorder %s30, 0
    %s33 = sadd.s32 %s32, 1
    %s34 = scalar_select %p31, %s32, %s33
    %p37 = pneg %p31
    %p38 = scmp.eq.s32.totalorder %s10, 1
    %p39 = por %p37, %p38
    %p40 = scmp.ne.s32.totalorder %s32, %s35
    %p41 = scmp.eq.s32.totalorder %s10, 0
    %p42 = por %p40, %p41
    %p43 = scmp.ne.s32.totalorder %s32, %s35
    %p44 = scmp.eq.s32.totalorder %s15, 1
    %p45 = por %p43, %p44
    %p46 = scmp.ne.s32.totalorder %s35, %s36
    %p47 = scmp.eq.s32.totalorder %s15, 0
    %p48 = por %p46, %p47
    %p49 = scmp.ne.s32.totalorder %s35, %s36
    %p50 = scmp.eq.s32.totalorder %s16, 1
    %p51 = por %p49, %p50
    %p53 = scmp.ne.s32.totalorder %s36, %s52
    %p54 = scmp.eq.s32.totalorder %s16, 0
    %p55 = por %p53, %p54
    %s57 = sadd.s32 %s56, 1
    %p60 = scmp.eq.s32.totalorder %s10, 1
    %p61 = scmp.ne.s32.totalorder %s56, %s58
    %p62 = scmp.eq.s32.totalorder %s10, 0
    %p63 = por %p61, %p62
    %p64 = scmp.ne.s32.totalorder %s56, %s58
    %p65 = scmp.eq.s32.totalorder %s15, 1
    %p66 = por %p64, %p65
    %p67 = scmp.ne.s32.totalorder %s58, %s59
    %p68 = scmp.eq.s32.totalorder %s15, 0
    %p69 = por %p67, %p68
    %p70 = scmp.ne.s32.totalorder %s58, %s59
    %p71 = scmp.eq.s32.totalorder %s16, 1
    %p72 = por %p70, %p71
    %p74 = scmp.ne.s32.totalorder %s59, %s73
    %p75 = scmp.eq.s32.totalorder %s16, 0
    %p76 = por %p74, %p75
    %s78 = sadd.s32 %s77, 1
    %p81 = scmp.eq.s32.totalorder %s10, 1
    %p82 = scmp.ne.s32.totalorder %s77, %s79
    %p83 = scmp.eq.s32.totalorder %s10, 0
    %p84 = por %p82, %p83
    %p85 = scmp.ne.s32.totalorder %s77, %s79
    %p86 = scmp.eq.s32.totalorder %s15, 1
    %p87 = por %p85, %p86
    %p88 = scmp.ne.s32.totalorder %s79, %s80
    %p89 = scmp.eq.s32.totalorder %s15, 0
    %p90 = por %p88, %p89
    %p91 = scmp.ne.s32.totalorder %s79, %s80
    %p92 = scmp.eq.s32.totalorder %s16, 1
    %p93 = por %p91, %p92
    %p95 = scmp.ne.s32.totalorder %s80, %s94
    %p96 = scmp.eq.s32.totalorder %s16, 0
    %p97 = por %p95, %p96
    %s99 = sadd.s32 %s98, 1
    %p102 = scmp.eq.s32.totalorder %s10, 1
    %p103 = scmp.ne.s32.totalorder %s98, %s100
    %p104 = scmp.eq.s32.totalorder %s10, 0
    %p105 = por %p103, %p104
    %p106 = scmp.ne.s32.totalorder %s98, %s100
    %p107 = scmp.eq.s32.totalorder %s15, 1
    %p108 = por %p106, %p107
    %p109 = scmp.ne.s32.totalorder %s100, %s101
    %p110 = scmp.eq.s32.totalorder %s15, 0
    %p111 = por %p109, %p110
    %p112 = scmp.ne.s32.totalorder %s100, %s101
    %p113 = scmp.eq.s32.totalorder %s16, 1
    %p114 = por %p112, %p113
    %p116 = scmp.ne.s32.totalorder %s101, %s115
    %p117 = scmp.eq.s32.totalorder %s16, 0
    %p118 = por %p116, %p117
    %s119 = ssub.s32 %s17, %s29
    %s120 = ssub.s32 %s18, %s25
    %s121 = sor.u32 %s119, %s120
    %p122 = scmp.eq.s32.totalorder %s121, 0
    %s124 = sadd.s32 %s123, 1
    %s125 = scalar_select %p122, %s123, %s124
    %p128 = pneg %p122
    %p129 = scmp.eq.s32.totalorder %s10, 1
    %p130 = por %p128, %p129
    %p131 = scmp.ne.s32.totalorder %s123, %s126
    %p132 = scmp.eq.s32.totalorder %s10, 0
    %p133 = por %p131, %p132
    %p134 = scmp.ne.s32.totalorder %s123, %s126
    %p135 = scmp.eq.s32.totalorder %s15, 1
    %p136 = por %p134, %p135
    %p137 = scmp.ne.s32.totalorder %s126, %s127
    %p138 = scmp.eq.s32.totalorder %s15, 0
    %p139 = por %p137, %p138
    %p140 = scmp.ne.s32.totalorder %s126, %s127
    %p141 = scmp.eq.s32.totalorder %s16, 1
    %p142 = por %p140, %p141
    %p144 = scmp.ne.s32.totalorder %s127, %s143
    %p145 = scmp.eq.s32.totalorder %s16, 0
    %p146 = por %p144, %p145
    %p147 = scmp.le.s32.totalorder 1, %s10
    %p148 = scmp.lt.s32.totalorder %s10, 3
    %p149 = pnand %p147, %p148
    %p150 = pneg %p149
    // Predicated region
    $region9: #{upconv_bn_layer.3} parent=5 // pred_check
      _
    $region10: #{upconv_bn_layer.3} parent=5 // pred_check_branch
      %152 = sbr.rel (%p149) target = $region12
    $region11: #{upconv_bn_layer.3} parent=5 // pred_region
      %s153 = ssub.s32 %s10, 1
      // Predicated region
      $region13: #{upconv_bn_layer.3} parent=11 // pred_check
        %p154 = pneg %p69
      $region14: #{upconv_bn_layer.3} parent=11 // pred_check_branch
        %156 = sbr.rel (%p154) target = $region16
      $region15: #{upconv_bn_layer.3} parent=11 // pred_region
        _
      $region16: #{upconv_bn_layer.3} parent=11 // pred_fallthru
        _
      // Predicated region
      $region17: #{upconv_bn_layer.3} parent=11 // pred_check
        %p157 = pneg %p90
      $region18: #{upconv_bn_layer.3} parent=11 // pred_check_branch
        %159 = sbr.rel (%p157) target = $region20
      $region19: #{upconv_bn_layer.3} parent=11 // pred_region
        _
      $region20: #{upconv_bn_layer.3} parent=11 // pred_fallthru
        _
      // Predicated region
      $region21: #{upconv_bn_layer.3} parent=11 // pred_check
        %p160 = pneg %p111
      $region22: #{upconv_bn_layer.3} parent=11 // pred_check_branch
        %162 = sbr.rel (%p160) target = $region24
      $region23: #{upconv_bn_layer.3} parent=11 // pred_region
        _
      $region24: #{upconv_bn_layer.3} parent=11 // pred_fallthru
        _
    $region12: #{upconv_bn_layer.3} parent=5 // pred_fallthru
      _
    %p163 = scmp.lt.s32.totalorder %s10, 2
    // Predicated region
    $region25: #{upconv_bn_layer.3} parent=5 // pred_check
      %p164 = pneg %p163
    $region26: #{upconv_bn_layer.3} parent=5 // pred_check_branch
      %166 = sbr.rel (%p164) target = $region28
    $region27: #{upconv_bn_layer.3} parent=5 // pred_region
      // Predicated region
      $region29: #{upconv_bn_layer.3} parent=27 // pred_check
        %p167 = pneg %p42
      $region30: #{upconv_bn_layer.3} parent=27 // pred_check_branch
        %169 = sbr.rel (%p167) target = $region32
      $region31: #{upconv_bn_layer.3} parent=27 // pred_region
        %p170 = scmp.lt.s32.totalorder %s17, 1
        %s171 = scalar_select %p170, %s17, 1
        %s172 = smul.addr %s171, 100
        %s173 = smul.addr %s172, 4
        %s174 = scalar_lea.vmem %s0, %s173
      $region32: #{upconv_bn_layer.3} parent=27 // pred_fallthru
        _
    $region28: #{upconv_bn_layer.3} parent=5 // pred_fallthru
      _
    %p175 = scmp.le.s32.totalorder 1, %s10
    %p176 = scmp.lt.s32.totalorder %s10, 3
    %p177 = pnand %p175, %p176
    %p178 = pneg %p177
    // Predicated region
    $region33: #{upconv_bn_layer.3} parent=5 // pred_check
      _
    $region34: #{upconv_bn_layer.3} parent=5 // pred_check_branch
      %180 = sbr.rel (%p177) target = $region36
    $region35: #{upconv_bn_layer.3} parent=5 // pred_region
      %s181 = ssub.s32 %s10, 1
      %p182 = scmp.lt.s32.totalorder %s19, 1
      %s183 = scalar_select %p182, %s19, 1
      %s184 = smul.addr %s183, 100
      %s185 = smul.addr %s184, 4
      %s186 = scalar_lea.vmem %s0, %s185
      %p187 = pneg %p48
      %p188 = pneg %p45
      %p189 = pneg %p69
      %p190 = pneg %p66
      %p191 = pneg %p90
      %p192 = pneg %p87
      %p193 = pneg %p111
      %p194 = pneg %p108
      %p195 = pneg %p139
      %p196 = pneg %p136
      %s197 = smul.u32 4, %s20
      %p198 = scmp.lt.s32.totalorder %s19, 1
      %s199 = scalar_select %p198, %s19, 1
      %p200 = scmp.lt.s32.totalorder %s197, 3
      %s201 = scalar_select %p200, %s197, 3
      %s202 = smul.addr %s199, 4
      %s203 = sadd.s32 %s201, %s202
      %s204 = smul.addr %s203, 8
      %s205 = scalar_lea.vmem %s4, %s204
      %p206 = scmp.lt.s32.totalorder %s19, 1
      %s207 = scalar_select %p206, %s19, 1
      %s208 = smul.addr %s207, 100
      %s209 = smul.addr %s208, 4
      %s210 = scalar_lea.vmem %s0, %s209
      %s211 = smul.u32 4, %s20
      %p212 = scmp.lt.s32.totalorder %s19, 1
      %s213 = scalar_select %p212, %s19, 1
      %p214 = scmp.lt.s32.totalorder %s211, 3
      %s215 = scalar_select %p214, %s211, 3
      %s216 = smul.addr %s213, 4
      %s217 = sadd.s32 %s215, %s216
      %s218 = smul.addr %s217, 8
      %s219 = scalar_lea.vmem %s4, %s218
      %s220 = smul.u32 4, %s20
      %s222 = smul.u32 %s20, 8
      %s223 = smul.u32 %s222, 10
      %s224 = smul.addr %s223, 4
      %s225 = scalar_lea.vmem %s210, %s224
      %v226 = vld [vmem:[%s225] sm:$0xf]
      %v227 = vld [vmem:[%s225 + $0x4] sm:$0xf]
      %v228 = vld [vmem:[%s225 + $0x8] sm:$0xf]
      %v229 = vld [vmem:[%s225 + $0xc] sm:$0xf]
      %v230 = vld [vmem:[%s225 + $0x10] sm:$0xf]
      %v231 = vld [vmem:[%s225 + $0x14] sm:$0xf]
      %v232 = vld [vmem:[%s225 + $0x18] sm:$0xf]
      %v233 = vld [vmem:[%s225 + $0x1c] sm:$0xf]
      %v234 = vld [vmem:[%s225 + $0x28] sm:$0xf]
      %v235 = vld [vmem:[%s225 + $0x2c] sm:$0xf]
      %v236 = vld [vmem:[%s225 + $0x30] sm:$0xf]
      %v237 = vld [vmem:[%s225 + $0x34] sm:$0xf]
      %v238 = vld [vmem:[%s225 + $0x38] sm:$0xf]
      %v239 = vld [vmem:[%s225 + $0x3c] sm:$0xf]
      %v240 = vld [vmem:[%s225 + $0x40] sm:$0xf]
      %v241 = vld [vmem:[%s225 + $0x44] sm:$0xf]
      %v242 = vld [vmem:[%s225 + $0x50] sm:$0xf]
      %v243 = vld [vmem:[%s225 + $0x54] sm:$0xf]
      %v244 = vld [vmem:[%s225 + $0x58] sm:$0xf]
      %v245 = vld [vmem:[%s225 + $0x5c] sm:$0xf]
      %v246 = vld [vmem:[%s225 + $0x60] sm:$0xf]
      %v247 = vld [vmem:[%s225 + $0x64] sm:$0xf]
      %v248 = vld [vmem:[%s225 + $0x68] sm:$0xf]
      %v249 = vld [vmem:[%s225 + $0x6c] sm:$0xf]
      %v250 = vld [vmem:[%s225 + $0x78] sm:$0xf]
      %v251 = vld [vmem:[%s225 + $0x7c] sm:$0xf]
      %v252 = vld [vmem:[%s225 + $0x80] sm:$0xf]
      %v253 = vld [vmem:[%s225 + $0x84] sm:$0xf]
      %v254 = vld [vmem:[%s225 + $0x88] sm:$0xf]
      %v255 = vld [vmem:[%s225 + $0x8c] sm:$0xf]
      %v256 = vld [vmem:[%s225 + $0x90] sm:$0xf]
      %v257 = vld [vmem:[%s225 + $0x94] sm:$0xf]
      %v258 = vld [vmem:[%s225 + $0xa0] sm:$0xf]
      %v259 = vld [vmem:[%s225 + $0xa4] sm:$0xf]
      %v260 = vld [vmem:[%s225 + $0xa8] sm:$0xf]
      %v261 = vld [vmem:[%s225 + $0xac] sm:$0xf]
      %v262 = vld [vmem:[%s225 + $0xb0] sm:$0xf]
      %v263 = vld [vmem:[%s225 + $0xb4] sm:$0xf]
      %v264 = vld [vmem:[%s225 + $0xb8] sm:$0xf]
      %v265 = vld [vmem:[%s225 + $0xbc] sm:$0xf]
      %v266 = vld [vmem:[%s225 + $0xc8] sm:$0xf]
      %v267 = vld [vmem:[%s225 + $0xcc] sm:$0xf]
      %v268 = vld [vmem:[%s225 + $0xd0] sm:$0xf]
      %v269 = vld [vmem:[%s225 + $0xd4] sm:$0xf]
      %v270 = vld [vmem:[%s225 + $0xd8] sm:$0xf]
      %v271 = vld [vmem:[%s225 + $0xdc] sm:$0xf]
      %v272 = vld [vmem:[%s225 + $0xe0] sm:$0xf]
      %v273 = vld [vmem:[%s225 + $0xe4] sm:$0xf]
      %v274 = vld [vmem:[%s225 + $0xf0] sm:$0xf]
      %v275 = vld [vmem:[%s225 + $0xf4] sm:$0xf]
      %v276 = vld [vmem:[%s225 + $0xf8] sm:$0xf]
      %v277 = vld [vmem:[%s225 + $0xfc] sm:$0xf]
      %v278 = vld [vmem:[%s225 + $0x100] sm:$0xf]
      %v279 = vld [vmem:[%s225 + $0x104] sm:$0xf]
      %v280 = vld [vmem:[%s225 + $0x108] sm:$0xf]
      %v281 = vld [vmem:[%s225 + $0x10c] sm:$0xf]
      %v282 = vld [vmem:[%s225 + $0x118] sm:$0xf]
      %v283 = vld [vmem:[%s225 + $0x11c] sm:$0xf]
      %v284 = vld [vmem:[%s225 + $0x120] sm:$0xf]
      %v285 = vld [vmem:[%s225 + $0x124] sm:$0xf]
      %v286 = vld [vmem:[%s225 + $0x128] sm:$0xf]
      %v287 = vld [vmem:[%s225 + $0x12c] sm:$0xf]
      %v288 = vld [vmem:[%s225 + $0x130] sm:$0xf]
      %v289 = vld [vmem:[%s225 + $0x134] sm:$0xf]
      %s290 = sadd.s32 1, %s223
      %s291 = smul.addr %s290, 4
      %s292 = scalar_lea.vmem %s210, %s291
      %v293 = vld [vmem:[%s292] sm:$0xf]
      %v294 = vld [vmem:[%s292 + $0x4] sm:$0xf]
      %v295 = vld [vmem:[%s292 + $0x8] sm:$0xf]
      %v296 = vld [vmem:[%s292 + $0xc] sm:$0xf]
      %v297 = vld [vmem:[%s292 + $0x10] sm:$0xf]
      %v298 = vld [vmem:[%s292 + $0x14] sm:$0xf]
      %v299 = vld [vmem:[%s292 + $0x18] sm:$0xf]
      %v300 = vld [vmem:[%s292 + $0x1c] sm:$0xf]
      %v301 = vld [vmem:[%s292 + $0x28] sm:$0xf]
      %v302 = vld [vmem:[%s292 + $0x2c] sm:$0xf]
      %v303 = vld [vmem:[%s292 + $0x30] sm:$0xf]
      %v304 = vld [vmem:[%s292 + $0x34] sm:$0xf]
      %v305 = vld [vmem:[%s292 + $0x38] sm:$0xf]
      %v306 = vld [vmem:[%s292 + $0x3c] sm:$0xf]
      %v307 = vld [vmem:[%s292 + $0x40] sm:$0xf]
      %v308 = vld [vmem:[%s292 + $0x44] sm:$0xf]
      %v309 = vld [vmem:[%s292 + $0x50] sm:$0xf]
      %v310 = vld [vmem:[%s292 + $0x54] sm:$0xf]
      %v311 = vld [vmem:[%s292 + $0x58] sm:$0xf]
      %v312 = vld [vmem:[%s292 + $0x5c] sm:$0xf]
      %v313 = vld [vmem:[%s292 + $0x60] sm:$0xf]
      %v314 = vld [vmem:[%s292 + $0x64] sm:$0xf]
      %v315 = vld [vmem:[%s292 + $0x68] sm:$0xf]
      %v316 = vld [vmem:[%s292 + $0x6c] sm:$0xf]
      %v317 = vld [vmem:[%s292 + $0x78] sm:$0xf]
      %v318 = vld [vmem:[%s292 + $0x7c] sm:$0xf]
      %v319 = vld [vmem:[%s292 + $0x80] sm:$0xf]
      %v320 = vld [vmem:[%s292 + $0x84] sm:$0xf]
      %v321 = vld [vmem:[%s292 + $0x88] sm:$0xf]
      %v322 = vld [vmem:[%s292 + $0x8c] sm:$0xf]
      %v323 = vld [vmem:[%s292 + $0x90] sm:$0xf]
      %v324 = vld [vmem:[%s292 + $0x94] sm:$0xf]
      %v325 = vld [vmem:[%s292 + $0xa0] sm:$0xf]
      %v326 = vld [vmem:[%s292 + $0xa4] sm:$0xf]
      %v327 = vld [vmem:[%s292 + $0xa8] sm:$0xf]
      %v328 = vld [vmem:[%s292 + $0xac] sm:$0xf]
      %v329 = vld [vmem:[%s292 + $0xb0] sm:$0xf]
      %v330 = vld [vmem:[%s292 + $0xb4] sm:$0xf]
      %v331 = vld [vmem:[%s292 + $0xb8] sm:$0xf]
      %v332 = vld [vmem:[%s292 + $0xbc] sm:$0xf]
      %v333 = vld [vmem:[%s292 + $0xc8] sm:$0xf]
      %v334 = vld [vmem:[%s292 + $0xcc] sm:$0xf]
      %v335 = vld [vmem:[%s292 + $0xd0] sm:$0xf]
      %v336 = vld [vmem:[%s292 + $0xd4] sm:$0xf]
      %v337 = vld [vmem:[%s292 + $0xd8] sm:$0xf]
      %v338 = vld [vmem:[%s292 + $0xdc] sm:$0xf]
      %v339 = vld [vmem:[%s292 + $0xe0] sm:$0xf]
      %v340 = vld [vmem:[%s292 + $0xe4] sm:$0xf]
      %v341 = vld [vmem:[%s292 + $0xf0] sm:$0xf]
      %v342 = vld [vmem:[%s292 + $0xf4] sm:$0xf]
      %v343 = vld [vmem:[%s292 + $0xf8] sm:$0xf]
      %v344 = vld [vmem:[%s292 + $0xfc] sm:$0xf]
      %v345 = vld [vmem:[%s292 + $0x100] sm:$0xf]
      %v346 = vld [vmem:[%s292 + $0x104] sm:$0xf]
      %v347 = vld [vmem:[%s292 + $0x108] sm:$0xf]
      %v348 = vld [vmem:[%s292 + $0x10c] sm:$0xf]
      %v349 = vld [vmem:[%s292 + $0x118] sm:$0xf]
      %v350 = vld [vmem:[%s292 + $0x11c] sm:$0xf]
      %v351 = vld [vmem:[%s292 + $0x120] sm:$0xf]
      %v352 = vld [vmem:[%s292 + $0x124] sm:$0xf]
      %v353 = vld [vmem:[%s292 + $0x128] sm:$0xf]
      %v354 = vld [vmem:[%s292 + $0x12c] sm:$0xf]
      %v355 = vld [vmem:[%s292 + $0x130] sm:$0xf]
      %v356 = vld [vmem:[%s292 + $0x134] sm:$0xf]
      %s357 = sadd.s32 2, %s223
      %s358 = smul.addr %s357, 4
      %s359 = scalar_lea.vmem %s210, %s358
      %v360 = vld [vmem:[%s359] sm:$0xf]
      %v361 = vld [vmem:[%s359 + $0x4] sm:$0xf]
      %v362 = vld [vmem:[%s359 + $0x8] sm:$0xf]
      %v363 = vld [vmem:[%s359 + $0xc] sm:$0xf]
      %v364 = vld [vmem:[%s359 + $0x10] sm:$0xf]
      %v365 = vld [vmem:[%s359 + $0x14] sm:$0xf]
      %v366 = vld [vmem:[%s359 + $0x18] sm:$0xf]
      %v367 = vld [vmem:[%s359 + $0x1c] sm:$0xf]
      %v368 = vld [vmem:[%s359 + $0x28] sm:$0xf]
      %v369 = vld [vmem:[%s359 + $0x2c] sm:$0xf]
      %v370 = vld [vmem:[%s359 + $0x30] sm:$0xf]
      %v371 = vld [vmem:[%s359 + $0x34] sm:$0xf]
      %v372 = vld [vmem:[%s359 + $0x38] sm:$0xf]
      %v373 = vld [vmem:[%s359 + $0x3c] sm:$0xf]
      %v374 = vld [vmem:[%s359 + $0x40] sm:$0xf]
      %v375 = vld [vmem:[%s359 + $0x44] sm:$0xf]
      %v376 = vld [vmem:[%s359 + $0x50] sm:$0xf]
      %v377 = vld [vmem:[%s359 + $0x54] sm:$0xf]
      %v378 = vld [vmem:[%s359 + $0x58] sm:$0xf]
      %v379 = vld [vmem:[%s359 + $0x5c] sm:$0xf]
      %v380 = vld [vmem:[%s359 + $0x60] sm:$0xf]
      %v381 = vld [vmem:[%s359 + $0x64] sm:$0xf]
      %v382 = vld [vmem:[%s359 + $0x68] sm:$0xf]
      %v383 = vld [vmem:[%s359 + $0x6c] sm:$0xf]
      %v384 = vld [vmem:[%s359 + $0x78] sm:$0xf]
      %v385 = vld [vmem:[%s359 + $0x7c] sm:$0xf]
      %v386 = vld [vmem:[%s359 + $0x80] sm:$0xf]
      %v387 = vld [vmem:[%s359 + $0x84] sm:$0xf]
      %v388 = vld [vmem:[%s359 + $0x88] sm:$0xf]
      %v389 = vld [vmem:[%s359 + $0x8c] sm:$0xf]
      %v390 = vld [vmem:[%s359 + $0x90] sm:$0xf]
      %v391 = vld [vmem:[%s359 + $0x94] sm:$0xf]
      %v392 = vld [vmem:[%s359 + $0xa0] sm:$0xf]
      %v393 = vld [vmem:[%s359 + $0xa4] sm:$0xf]
      %v394 = vld [vmem:[%s359 + $0xa8] sm:$0xf]
      %v395 = vld [vmem:[%s359 + $0xac] sm:$0xf]
      %v396 = vld [vmem:[%s359 + $0xb0] sm:$0xf]
      %v397 = vld [vmem:[%s359 + $0xb4] sm:$0xf]
      %v398 = vld [vmem:[%s359 + $0xb8] sm:$0xf]
      %v399 = vld [vmem:[%s359 + $0xbc] sm:$0xf]
      %v400 = vld [vmem:[%s359 + $0xc8] sm:$0xf]
      %v401 = vld [vmem:[%s359 + $0xcc] sm:$0xf]
      %v402 = vld [vmem:[%s359 + $0xd0] sm:$0xf]
      %v403 = vld [vmem:[%s359 + $0xd4] sm:$0xf]
      %v404 = vld [vmem:[%s359 + $0xd8] sm:$0xf]
      %v405 = vld [vmem:[%s359 + $0xdc] sm:$0xf]
      %v406 = vld [vmem:[%s359 + $0xe0] sm:$0xf]
      %v407 = vld [vmem:[%s359 + $0xe4] sm:$0xf]
      %v408 = vld [vmem:[%s359 + $0xf0] sm:$0xf]
      %v409 = vld [vmem:[%s359 + $0xf4] sm:$0xf]
      %v410 = vld [vmem:[%s359 + $0xf8] sm:$0xf]
      %v411 = vld [vmem:[%s359 + $0xfc] sm:$0xf]
      %v412 = vld [vmem:[%s359 + $0x100] sm:$0xf]
      %v413 = vld [vmem:[%s359 + $0x104] sm:$0xf]
      %v414 = vld [vmem:[%s359 + $0x108] sm:$0xf]
      %v415 = vld [vmem:[%s359 + $0x10c] sm:$0xf]
      %v416 = vld [vmem:[%s359 + $0x118] sm:$0xf]
      %v417 = vld [vmem:[%s359 + $0x11c] sm:$0xf]
      %v418 = vld [vmem:[%s359 + $0x120] sm:$0xf]
      %v419 = vld [vmem:[%s359 + $0x124] sm:$0xf]
      %v420 = vld [vmem:[%s359 + $0x128] sm:$0xf]
      %v421 = vld [vmem:[%s359 + $0x12c] sm:$0xf]
      %v422 = vld [vmem:[%s359 + $0x130] sm:$0xf]
      %v423 = vld [vmem:[%s359 + $0x134] sm:$0xf]
      %s424 = sadd.s32 %s222, 1
      %s425 = smul.u32 %s424, 10
      %s426 = smul.addr %s425, 4
      %s427 = scalar_lea.vmem %s210, %s426
      %v428 = vld [vmem:[%s427] sm:$0xf]
      %v429 = vld [vmem:[%s427 + $0x4] sm:$0xf]
      %v430 = vld [vmem:[%s427 + $0x8] sm:$0xf]
      %v431 = vld [vmem:[%s427 + $0xc] sm:$0xf]
      %v432 = vld [vmem:[%s427 + $0x10] sm:$0xf]
      %v433 = vld [vmem:[%s427 + $0x14] sm:$0xf]
      %v434 = vld [vmem:[%s427 + $0x18] sm:$0xf]
      %v435 = vld [vmem:[%s427 + $0x1c] sm:$0xf]
      %v436 = vld [vmem:[%s427 + $0x28] sm:$0xf]
      %v437 = vld [vmem:[%s427 + $0x2c] sm:$0xf]
      %v438 = vld [vmem:[%s427 + $0x30] sm:$0xf]
      %v439 = vld [vmem:[%s427 + $0x34] sm:$0xf]
      %v440 = vld [vmem:[%s427 + $0x38] sm:$0xf]
      %v441 = vld [vmem:[%s427 + $0x3c] sm:$0xf]
      %v442 = vld [vmem:[%s427 + $0x40] sm:$0xf]
      %v443 = vld [vmem:[%s427 + $0x44] sm:$0xf]
      %v444 = vld [vmem:[%s427 + $0x50] sm:$0xf]
      %v445 = vld [vmem:[%s427 + $0x54] sm:$0xf]
      %v446 = vld [vmem:[%s427 + $0x58] sm:$0xf]
      %v447 = vld [vmem:[%s427 + $0x5c] sm:$0xf]
      %v448 = vld [vmem:[%s427 + $0x60] sm:$0xf]
      %v449 = vld [vmem:[%s427 + $0x64] sm:$0xf]
      %v450 = vld [vmem:[%s427 + $0x68] sm:$0xf]
      %v451 = vld [vmem:[%s427 + $0x6c] sm:$0xf]
      %v452 = vld [vmem:[%s427 + $0x78] sm:$0xf]
      %v453 = vld [vmem:[%s427 + $0x7c] sm:$0xf]
      %v454 = vld [vmem:[%s427 + $0x80] sm:$0xf]
      %v455 = vld [vmem:[%s427 + $0x84] sm:$0xf]
      %v456 = vld [vmem:[%s427 + $0x88] sm:$0xf]
      %v457 = vld [vmem:[%s427 + $0x8c] sm:$0xf]
      %v458 = vld [vmem:[%s427 + $0x90] sm:$0xf]
      %v459 = vld [vmem:[%s427 + $0x94] sm:$0xf]
      %v460 = vld [vmem:[%s427 + $0xa0] sm:$0xf]
      %v461 = vld [vmem:[%s427 + $0xa4] sm:$0xf]
      %v462 = vld [vmem:[%s427 + $0xa8] sm:$0xf]
      %v463 = vld [vmem:[%s427 + $0xac] sm:$0xf]
      %v464 = vld [vmem:[%s427 + $0xb0] sm:$0xf]
      %v465 = vld [vmem:[%s427 + $0xb4] sm:$0xf]
      %v466 = vld [vmem:[%s427 + $0xb8] sm:$0xf]
      %v467 = vld [vmem:[%s427 + $0xbc] sm:$0xf]
      %v468 = vld [vmem:[%s427 + $0xc8] sm:$0xf]
      %v469 = vld [vmem:[%s427 + $0xcc] sm:$0xf]
      %v470 = vld [vmem:[%s427 + $0xd0] sm:$0xf]
      %v471 = vld [vmem:[%s427 + $0xd4] sm:$0xf]
      %v472 = vld [vmem:[%s427 + $0xd8] sm:$0xf]
      %v473 = vld [vmem:[%s427 + $0xdc] sm:$0xf]
      %v474 = vld [vmem:[%s427 + $0xe0] sm:$0xf]
      %v475 = vld [vmem:[%s427 + $0xe4] sm:$0xf]
      %v476 = vld [vmem:[%s427 + $0xf0] sm:$0xf]
      %v477 = vld [vmem:[%s427 + $0xf4] sm:$0xf]
      %v478 = vld [vmem:[%s427 + $0xf8] sm:$0xf]
      %v479 = vld [vmem:[%s427 + $0xfc] sm:$0xf]
      %v480 = vld [vmem:[%s427 + $0x100] sm:$0xf]
      %v481 = vld [vmem:[%s427 + $0x104] sm:$0xf]
      %v482 = vld [vmem:[%s427 + $0x108] sm:$0xf]
      %v483 = vld [vmem:[%s427 + $0x10c] sm:$0xf]
      %v484 = vld [vmem:[%s427 + $0x118] sm:$0xf]
      %v485 = vld [vmem:[%s427 + $0x11c] sm:$0xf]
      %v486 = vld [vmem:[%s427 + $0x120] sm:$0xf]
      %v487 = vld [vmem:[%s427 + $0x124] sm:$0xf]
      %v488 = vld [vmem:[%s427 + $0x128] sm:$0xf]
      %v489 = vld [vmem:[%s427 + $0x12c] sm:$0xf]
      %v490 = vld [vmem:[%s427 + $0x130] sm:$0xf]
      %v491 = vld [vmem:[%s427 + $0x134] sm:$0xf]
      %s492 = sadd.s32 1, %s425
      %s493 = smul.addr %s492, 4
      %s494 = scalar_lea.vmem %s210, %s493
      %v495 = vld [vmem:[%s494] sm:$0xf]
      %v496 = vld [vmem:[%s494 + $0x4] sm:$0xf]
      %v497 = vld [vmem:[%s494 + $0x8] sm:$0xf]
      %v498 = vld [vmem:[%s494 + $0xc] sm:$0xf]
      %v499 = vld [vmem:[%s494 + $0x10] sm:$0xf]
      %v500 = vld [vmem:[%s494 + $0x14] sm:$0xf]
      %v501 = vld [vmem:[%s494 + $0x18] sm:$0xf]
      %v502 = vld [vmem:[%s494 + $0x1c] sm:$0xf]
      %v503 = vld [vmem:[%s494 + $0x28] sm:$0xf]
      %v504 = vld [vmem:[%s494 + $0x2c] sm:$0xf]
      %v505 = vld [vmem:[%s494 + $0x30] sm:$0xf]
      %v506 = vld [vmem:[%s494 + $0x34] sm:$0xf]
      %v507 = vld [vmem:[%s494 + $0x38] sm:$0xf]
      %v508 = vld [vmem:[%s494 + $0x3c] sm:$0xf]
      %v509 = vld [vmem:[%s494 + $0x40] sm:$0xf]
      %v510 = vld [vmem:[%s494 + $0x44] sm:$0xf]
      %v511 = vld [vmem:[%s494 + $0x50] sm:$0xf]
      %v512 = vld [vmem:[%s494 + $0x54] sm:$0xf]
      %v513 = vld [vmem:[%s494 + $0x58] sm:$0xf]
      %v514 = vld [vmem:[%s494 + $0x5c] sm:$0xf]
      %v515 = vld [vmem:[%s494 + $0x60] sm:$0xf]
      %v516 = vld [vmem:[%s494 + $0x64] sm:$0xf]
      %v517 = vld [vmem:[%s494 + $0x68] sm:$0xf]
      %v518 = vld [vmem:[%s494 + $0x6c] sm:$0xf]
      %v519 = vld [vmem:[%s494 + $0x78] sm:$0xf]
      %v520 = vld [vmem:[%s494 + $0x7c] sm:$0xf]
      %v521 = vld [vmem:[%s494 + $0x80] sm:$0xf]
      %v522 = vld [vmem:[%s494 + $0x84] sm:$0xf]
      %v523 = vld [vmem:[%s494 + $0x88] sm:$0xf]
      %v524 = vld [vmem:[%s494 + $0x8c] sm:$0xf]
      %v525 = vld [vmem:[%s494 + $0x90] sm:$0xf]
      %v526 = vld [vmem:[%s494 + $0x94] sm:$0xf]
      %v527 = vld [vmem:[%s494 + $0xa0] sm:$0xf]
      %v528 = vld [vmem:[%s494 + $0xa4] sm:$0xf]
      %v529 = vld [vmem:[%s494 + $0xa8] sm:$0xf]
      %v530 = vld [vmem:[%s494 + $0xac] sm:$0xf]
      %v531 = vld [vmem:[%s494 + $0xb0] sm:$0xf]
      %v532 = vld [vmem:[%s494 + $0xb4] sm:$0xf]
      %v533 = vld [vmem:[%s494 + $0xb8] sm:$0xf]
      %v534 = vld [vmem:[%s494 + $0xbc] sm:$0xf]
      %v535 = vld [vmem:[%s494 + $0xc8] sm:$0xf]
      %v536 = vld [vmem:[%s494 + $0xcc] sm:$0xf]
      %v537 = vld [vmem:[%s494 + $0xd0] sm:$0xf]
      %v538 = vld [vmem:[%s494 + $0xd4] sm:$0xf]
      %v539 = vld [vmem:[%s494 + $0xd8] sm:$0xf]
      %v540 = vld [vmem:[%s494 + $0xdc] sm:$0xf]
      %v541 = vld [vmem:[%s494 + $0xe0] sm:$0xf]
      %v542 = vld [vmem:[%s494 + $0xe4] sm:$0xf]
      %v543 = vld [vmem:[%s494 + $0xf0] sm:$0xf]
      %v544 = vld [vmem:[%s494 + $0xf4] sm:$0xf]
      %v545 = vld [vmem:[%s494 + $0xf8] sm:$0xf]
      %v546 = vld [vmem:[%s494 + $0xfc] sm:$0xf]
      %v547 = vld [vmem:[%s494 + $0x100] sm:$0xf]
      %v548 = vld [vmem:[%s494 + $0x104] sm:$0xf]
      %v549 = vld [vmem:[%s494 + $0x108] sm:$0xf]
      %v550 = vld [vmem:[%s494 + $0x10c] sm:$0xf]
      %v551 = vld [vmem:[%s494 + $0x118] sm:$0xf]
      %v552 = vld [vmem:[%s494 + $0x11c] sm:$0xf]
      %v553 = vld [vmem:[%s494 + $0x120] sm:$0xf]
      %v554 = vld [vmem:[%s494 + $0x124] sm:$0xf]
      %v555 = vld [vmem:[%s494 + $0x128] sm:$0xf]
      %v556 = vld [vmem:[%s494 + $0x12c] sm:$0xf]
      %v557 = vld [vmem:[%s494 + $0x130] sm:$0xf]
      %v558 = vld [vmem:[%s494 + $0x134] sm:$0xf]
      %s559 = sadd.s32 2, %s425
      %s560 = smul.addr %s559, 4
      %s561 = scalar_lea.vmem %s210, %s560
      %v562 = vld [vmem:[%s561] sm:$0xf]
      %v563 = vld [vmem:[%s561 + $0x4] sm:$0xf]
      %v564 = vld [vmem:[%s561 + $0x8] sm:$0xf]
      %v565 = vld [vmem:[%s561 + $0xc] sm:$0xf]
      %v566 = vld [vmem:[%s561 + $0x10] sm:$0xf]
      %v567 = vld [vmem:[%s561 + $0x14] sm:$0xf]
      %v568 = vld [vmem:[%s561 + $0x18] sm:$0xf]
      %v569 = vld [vmem:[%s561 + $0x1c] sm:$0xf]
      %v570 = vld [vmem:[%s561 + $0x28] sm:$0xf]
      %v571 = vld [vmem:[%s561 + $0x2c] sm:$0xf]
      %v572 = vld [vmem:[%s561 + $0x30] sm:$0xf]
      %v573 = vld [vmem:[%s561 + $0x34] sm:$0xf]
      %v574 = vld [vmem:[%s561 + $0x38] sm:$0xf]
      %v575 = vld [vmem:[%s561 + $0x3c] sm:$0xf]
      %v576 = vld [vmem:[%s561 + $0x40] sm:$0xf]
      %v577 = vld [vmem:[%s561 + $0x44] sm:$0xf]
      %v578 = vld [vmem:[%s561 + $0x50] sm:$0xf]
      %v579 = vld [vmem:[%s561 + $0x54] sm:$0xf]
      %v580 = vld [vmem:[%s561 + $0x58] sm:$0xf]
      %v581 = vld [vmem:[%s561 + $0x5c] sm:$0xf]
      %v582 = vld [vmem:[%s561 + $0x60] sm:$0xf]
      %v583 = vld [vmem:[%s561 + $0x64] sm:$0xf]
      %v584 = vld [vmem:[%s561 + $0x68] sm:$0xf]
      %v585 = vld [vmem:[%s561 + $0x6c] sm:$0xf]
      %v586 = vld [vmem:[%s561 + $0x78] sm:$0xf]
      %v587 = vld [vmem:[%s561 + $0x7c] sm:$0xf]
      %v588 = vld [vmem:[%s561 + $0x80] sm:$0xf]
      %v589 = vld [vmem:[%s561 + $0x84] sm:$0xf]
      %v590 = vld [vmem:[%s561 + $0x88] sm:$0xf]
      %v591 = vld [vmem:[%s561 + $0x8c] sm:$0xf]
      %v592 = vld [vmem:[%s561 + $0x90] sm:$0xf]
      %v593 = vld [vmem:[%s561 + $0x94] sm:$0xf]
      %v594 = vld [vmem:[%s561 + $0xa0] sm:$0xf]
      %v595 = vld [vmem:[%s561 + $0xa4] sm:$0xf]
      %v596 = vld [vmem:[%s561 + $0xa8] sm:$0xf]
      %v597 = vld [vmem:[%s561 + $0xac] sm:$0xf]
      %v598 = vld [vmem:[%s561 + $0xb0] sm:$0xf]
      %v599 = vld [vmem:[%s561 + $0xb4] sm:$0xf]
      %v600 = vld [vmem:[%s561 + $0xb8] sm:$0xf]
      %v601 = vld [vmem:[%s561 + $0xbc] sm:$0xf]
      %v602 = vld [vmem:[%s561 + $0xc8] sm:$0xf]
      %v603 = vld [vmem:[%s561 + $0xcc] sm:$0xf]
      %v604 = vld [vmem:[%s561 + $0xd0] sm:$0xf]
      %v605 = vld [vmem:[%s561 + $0xd4] sm:$0xf]
      %v606 = vld [vmem:[%s561 + $0xd8] sm:$0xf]
      %v607 = vld [vmem:[%s561 + $0xdc] sm:$0xf]
      %v608 = vld [vmem:[%s561 + $0xe0] sm:$0xf]
      %v609 = vld [vmem:[%s561 + $0xe4] sm:$0xf]
      %v610 = vld [vmem:[%s561 + $0xf0] sm:$0xf]
      %v611 = vld [vmem:[%s561 + $0xf4] sm:$0xf]
      %v612 = vld [vmem:[%s561 + $0xf8] sm:$0xf]
      %v613 = vld [vmem:[%s561 + $0xfc] sm:$0xf]
      %v614 = vld [vmem:[%s561 + $0x100] sm:$0xf]
      %v615 = vld [vmem:[%s561 + $0x104] sm:$0xf]
      %v616 = vld [vmem:[%s561 + $0x108] sm:$0xf]
      %v617 = vld [vmem:[%s561 + $0x10c] sm:$0xf]
      %v618 = vld [vmem:[%s561 + $0x118] sm:$0xf]
      %v619 = vld [vmem:[%s561 + $0x11c] sm:$0xf]
      %v620 = vld [vmem:[%s561 + $0x120] sm:$0xf]
      %v621 = vld [vmem:[%s561 + $0x124] sm:$0xf]
      %v622 = vld [vmem:[%s561 + $0x128] sm:$0xf]
      %v623 = vld [vmem:[%s561 + $0x12c] sm:$0xf]
      %v624 = vld [vmem:[%s561 + $0x130] sm:$0xf]
      %v625 = vld [vmem:[%s561 + $0x134] sm:$0xf]
      %s626 = sadd.s32 %s222, 2
      %s627 = smul.u32 %s626, 10
      %s628 = smul.addr %s627, 4
      %s629 = scalar_lea.vmem %s210, %s628
      %v630 = vld [vmem:[%s629] sm:$0xf]
      %v631 = vld [vmem:[%s629 + $0x4] sm:$0xf]
      %v632 = vld [vmem:[%s629 + $0x8] sm:$0xf]
      %v633 = vld [vmem:[%s629 + $0xc] sm:$0xf]
      %v634 = vld [vmem:[%s629 + $0x10] sm:$0xf]
      %v635 = vld [vmem:[%s629 + $0x14] sm:$0xf]
      %v636 = vld [vmem:[%s629 + $0x18] sm:$0xf]
      %v637 = vld [vmem:[%s629 + $0x1c] sm:$0xf]
      %v638 = vld [vmem:[%s629 + $0x28] sm:$0xf]
      %v639 = vld [vmem:[%s629 + $0x2c] sm:$0xf]
      %v640 = vld [vmem:[%s629 + $0x30] sm:$0xf]
      %v641 = vld [vmem:[%s629 + $0x34] sm:$0xf]
      %v642 = vld [vmem:[%s629 + $0x38] sm:$0xf]
      %v643 = vld [vmem:[%s629 + $0x3c] sm:$0xf]
      %v644 = vld [vmem:[%s629 + $0x40] sm:$0xf]
      %v645 = vld [vmem:[%s629 + $0x44] sm:$0xf]
      %v646 = vld [vmem:[%s629 + $0x50] sm:$0xf]
      %v647 = vld [vmem:[%s629 + $0x54] sm:$0xf]
      %v648 = vld [vmem:[%s629 + $0x58] sm:$0xf]
      %v649 = vld [vmem:[%s629 + $0x5c] sm:$0xf]
      %v650 = vld [vmem:[%s629 + $0x60] sm:$0xf]
      %v651 = vld [vmem:[%s629 + $0x64] sm:$0xf]
      %v652 = vld [vmem:[%s629 + $0x68] sm:$0xf]
      %v653 = vld [vmem:[%s629 + $0x6c] sm:$0xf]
      %v654 = vld [vmem:[%s629 + $0x78] sm:$0xf]
      %v655 = vld [vmem:[%s629 + $0x7c] sm:$0xf]
      %v656 = vld [vmem:[%s629 + $0x80] sm:$0xf]
      %v657 = vld [vmem:[%s629 + $0x84] sm:$0xf]
      %v658 = vld [vmem:[%s629 + $0x88] sm:$0xf]
      %v659 = vld [vmem:[%s629 + $0x8c] sm:$0xf]
      %v660 = vld [vmem:[%s629 + $0x90] sm:$0xf]
      %v661 = vld [vmem:[%s629 + $0x94] sm:$0xf]
      %v662 = vld [vmem:[%s629 + $0xa0] sm:$0xf]
      %v663 = vld [vmem:[%s629 + $0xa4] sm:$0xf]
      %v664 = vld [vmem:[%s629 + $0xa8] sm:$0xf]
      %v665 = vld [vmem:[%s629 + $0xac] sm:$0xf]
      %v666 = vld [vmem:[%s629 + $0xb0] sm:$0xf]
      %v667 = vld [vmem:[%s629 + $0xb4] sm:$0xf]
      %v668 = vld [vmem:[%s629 + $0xb8] sm:$0xf]
      %v669 = vld [vmem:[%s629 + $0xbc] sm:$0xf]
      %v670 = vld [vmem:[%s629 + $0xc8] sm:$0xf]
      %v671 = vld [vmem:[%s629 + $0xcc] sm:$0xf]
      %v672 = vld [vmem:[%s629 + $0xd0] sm:$0xf]
      %v673 = vld [vmem:[%s629 + $0xd4] sm:$0xf]
      %v674 = vld [vmem:[%s629 + $0xd8] sm:$0xf]
      %v675 = vld [vmem:[%s629 + $0xdc] sm:$0xf]
      %v676 = vld [vmem:[%s629 + $0xe0] sm:$0xf]
      %v677 = vld [vmem:[%s629 + $0xe4] sm:$0xf]
      %v678 = vld [vmem:[%s629 + $0xf0] sm:$0xf]
      %v679 = vld [vmem:[%s629 + $0xf4] sm:$0xf]
      %v680 = vld [vmem:[%s629 + $0xf8] sm:$0xf]
      %v681 = vld [vmem:[%s629 + $0xfc] sm:$0xf]
      %v682 = vld [vmem:[%s629 + $0x100] sm:$0xf]
      %v683 = vld [vmem:[%s629 + $0x104] sm:$0xf]
      %v684 = vld [vmem:[%s629 + $0x108] sm:$0xf]
      %v685 = vld [vmem:[%s629 + $0x10c] sm:$0xf]
      %v686 = vld [vmem:[%s629 + $0x118] sm:$0xf]
      %v687 = vld [vmem:[%s629 + $0x11c] sm:$0xf]
      %v688 = vld [vmem:[%s629 + $0x120] sm:$0xf]
      %v689 = vld [vmem:[%s629 + $0x124] sm:$0xf]
      %v690 = vld [vmem:[%s629 + $0x128] sm:$0xf]
      %v691 = vld [vmem:[%s629 + $0x12c] sm:$0xf]
      %v692 = vld [vmem:[%s629 + $0x130] sm:$0xf]
      %v693 = vld [vmem:[%s629 + $0x134] sm:$0xf]
      %s694 = sadd.s32 1, %s627
      %s695 = smul.addr %s694, 4
      %s696 = scalar_lea.vmem %s210, %s695
      %v697 = vld [vmem:[%s696] sm:$0xf]
      %v698 = vld [vmem:[%s696 + $0x4] sm:$0xf]
      %v699 = vld [vmem:[%s696 + $0x8] sm:$0xf]
      %v700 = vld [vmem:[%s696 + $0xc] sm:$0xf]
      %v701 = vld [vmem:[%s696 + $0x10] sm:$0xf]
      %v702 = vld [vmem:[%s696 + $0x14] sm:$0xf]
      %v703 = vld [vmem:[%s696 + $0x18] sm:$0xf]
      %v704 = vld [vmem:[%s696 + $0x1c] sm:$0xf]
      %v705 = vld [vmem:[%s696 + $0x28] sm:$0xf]
      %v706 = vld [vmem:[%s696 + $0x2c] sm:$0xf]
      %v707 = vld [vmem:[%s696 + $0x30] sm:$0xf]
      %v708 = vld [vmem:[%s696 + $0x34] sm:$0xf]
      %v709 = vld [vmem:[%s696 + $0x38] sm:$0xf]
      %v710 = vld [vmem:[%s696 + $0x3c] sm:$0xf]
      %v711 = vld [vmem:[%s696 + $0x40] sm:$0xf]
      %v712 = vld [vmem:[%s696 + $0x44] sm:$0xf]
      %v713 = vld [vmem:[%s696 + $0x50] sm:$0xf]
      %v714 = vld [vmem:[%s696 + $0x54] sm:$0xf]
      %v715 = vld [vmem:[%s696 + $0x58] sm:$0xf]
      %v716 = vld [vmem:[%s696 + $0x5c] sm:$0xf]
      %v717 = vld [vmem:[%s696 + $0x60] sm:$0xf]
      %v718 = vld [vmem:[%s696 + $0x64] sm:$0xf]
      %v719 = vld [vmem:[%s696 + $0x68] sm:$0xf]
      %v720 = vld [vmem:[%s696 + $0x6c] sm:$0xf]
      %v721 = vld [vmem:[%s696 + $0x78] sm:$0xf]
      %v722 = vld [vmem:[%s696 + $0x7c] sm:$0xf]
      %v723 = vld [vmem:[%s696 + $0x80] sm:$0xf]
      %v724 = vld [vmem:[%s696 + $0x84] sm:$0xf]
      %v725 = vld [vmem:[%s696 + $0x88] sm:$0xf]
      %v726 = vld [vmem:[%s696 + $0x8c] sm:$0xf]
      %v727 = vld [vmem:[%s696 + $0x90] sm:$0xf]
      %v728 = vld [vmem:[%s696 + $0x94] sm:$0xf]
      %v729 = vld [vmem:[%s696 + $0xa0] sm:$0xf]
      %v730 = vld [vmem:[%s696 + $0xa4] sm:$0xf]
      %v731 = vld [vmem:[%s696 + $0xa8] sm:$0xf]
      %v732 = vld [vmem:[%s696 + $0xac] sm:$0xf]
      %v733 = vld [vmem:[%s696 + $0xb0] sm:$0xf]
      %v734 = vld [vmem:[%s696 + $0xb4] sm:$0xf]
      %v735 = vld [vmem:[%s696 + $0xb8] sm:$0xf]
      %v736 = vld [vmem:[%s696 + $0xbc] sm:$0xf]
      %v737 = vld [vmem:[%s696 + $0xc8] sm:$0xf]
      %v738 = vld [vmem:[%s696 + $0xcc] sm:$0xf]
      %v739 = vld [vmem:[%s696 + $0xd0] sm:$0xf]
      %v740 = vld [vmem:[%s696 + $0xd4] sm:$0xf]
      %v741 = vld [vmem:[%s696 + $0xd8] sm:$0xf]
      %v742 = vld [vmem:[%s696 + $0xdc] sm:$0xf]
      %v743 = vld [vmem:[%s696 + $0xe0] sm:$0xf]
      %v744 = vld [vmem:[%s696 + $0xe4] sm:$0xf]
      %v745 = vld [vmem:[%s696 + $0xf0] sm:$0xf]
      %v746 = vld [vmem:[%s696 + $0xf4] sm:$0xf]
      %v747 = vld [vmem:[%s696 + $0xf8] sm:$0xf]
      %v748 = vld [vmem:[%s696 + $0xfc] sm:$0xf]
      %v749 = vld [vmem:[%s696 + $0x100] sm:$0xf]
      %v750 = vld [vmem:[%s696 + $0x104] sm:$0xf]
      %v751 = vld [vmem:[%s696 + $0x108] sm:$0xf]
      %v752 = vld [vmem:[%s696 + $0x10c] sm:$0xf]
      %v753 = vld [vmem:[%s696 + $0x118] sm:$0xf]
      %v754 = vld [vmem:[%s696 + $0x11c] sm:$0xf]
      %v755 = vld [vmem:[%s696 + $0x120] sm:$0xf]
      %v756 = vld [vmem:[%s696 + $0x124] sm:$0xf]
      %v757 = vld [vmem:[%s696 + $0x128] sm:$0xf]
      %v758 = vld [vmem:[%s696 + $0x12c] sm:$0xf]
      %v759 = vld [vmem:[%s696 + $0x130] sm:$0xf]
      %v760 = vld [vmem:[%s696 + $0x134] sm:$0xf]
      %s761 = sadd.s32 2, %s627
      %s762 = smul.addr %s761, 4
      %s763 = scalar_lea.vmem %s210, %s762
      %v764 = vld [vmem:[%s763] sm:$0xf]
      %v765 = vld [vmem:[%s763 + $0x4] sm:$0xf]
      %v766 = vld [vmem:[%s763 + $0x8] sm:$0xf]
      %v767 = vld [vmem:[%s763 + $0xc] sm:$0xf]
      %v768 = vld [vmem:[%s763 + $0x10] sm:$0xf]
      %v769 = vld [vmem:[%s763 + $0x14] sm:$0xf]
      %v770 = vld [vmem:[%s763 + $0x18] sm:$0xf]
      %v771 = vld [vmem:[%s763 + $0x1c] sm:$0xf]
      %v772 = vld [vmem:[%s763 + $0x28] sm:$0xf]
      %v773 = vld [vmem:[%s763 + $0x2c] sm:$0xf]
      %v774 = vld [vmem:[%s763 + $0x30] sm:$0xf]
      %v775 = vld [vmem:[%s763 + $0x34] sm:$0xf]
      %v776 = vld [vmem:[%s763 + $0x38] sm:$0xf]
      %v777 = vld [vmem:[%s763 + $0x3c] sm:$0xf]
      %v778 = vld [vmem:[%s763 + $0x40] sm:$0xf]
      %v779 = vld [vmem:[%s763 + $0x44] sm:$0xf]
      %v780 = vld [vmem:[%s763 + $0x50] sm:$0xf]
      %v781 = vld [vmem:[%s763 + $0x54] sm:$0xf]
      %v782 = vld [vmem:[%s763 + $0x58] sm:$0xf]
      %v783 = vld [vmem:[%s763 + $0x5c] sm:$0xf]
      %v784 = vld [vmem:[%s763 + $0x60] sm:$0xf]
      %v785 = vld [vmem:[%s763 + $0x64] sm:$0xf]
      %v786 = vld [vmem:[%s763 + $0x68] sm:$0xf]
      %v787 = vld [vmem:[%s763 + $0x6c] sm:$0xf]
      %v788 = vld [vmem:[%s763 + $0x78] sm:$0xf]
      %v789 = vld [vmem:[%s763 + $0x7c] sm:$0xf]
      %v790 = vld [vmem:[%s763 + $0x80] sm:$0xf]
      %v791 = vld [vmem:[%s763 + $0x84] sm:$0xf]
      %v792 = vld [vmem:[%s763 + $0x88] sm:$0xf]
      %v793 = vld [vmem:[%s763 + $0x8c] sm:$0xf]
      %v794 = vld [vmem:[%s763 + $0x90] sm:$0xf]
      %v795 = vld [vmem:[%s763 + $0x94] sm:$0xf]
      %v796 = vld [vmem:[%s763 + $0xa0] sm:$0xf]
      %v797 = vld [vmem:[%s763 + $0xa4] sm:$0xf]
      %v798 = vld [vmem:[%s763 + $0xa8] sm:$0xf]
      %v799 = vld [vmem:[%s763 + $0xac] sm:$0xf]
      %v800 = vld [vmem:[%s763 + $0xb0] sm:$0xf]
      %v801 = vld [vmem:[%s763 + $0xb4] sm:$0xf]
      %v802 = vld [vmem:[%s763 + $0xb8] sm:$0xf]
      %v803 = vld [vmem:[%s763 + $0xbc] sm:$0xf]
      %v804 = vld [vmem:[%s763 + $0xc8] sm:$0xf]
      %v805 = vld [vmem:[%s763 + $0xcc] sm:$0xf]
      %v806 = vld [vmem:[%s763 + $0xd0] sm:$0xf]
      %v807 = vld [vmem:[%s763 + $0xd4] sm:$0xf]
      %v808 = vld [vmem:[%s763 + $0xd8] sm:$0xf]
      %v809 = vld [vmem:[%s763 + $0xdc] sm:$0xf]
      %v810 = vld [vmem:[%s763 + $0xe0] sm:$0xf]
      %v811 = vld [vmem:[%s763 + $0xe4] sm:$0xf]
      %v812 = vld [vmem:[%s763 + $0xf0] sm:$0xf]
      %v813 = vld [vmem:[%s763 + $0xf4] sm:$0xf]
      %v814 = vld [vmem:[%s763 + $0xf8] sm:$0xf]
      %v815 = vld [vmem:[%s763 + $0xfc] sm:$0xf]
      %v816 = vld [vmem:[%s763 + $0x100] sm:$0xf]
      %v817 = vld [vmem:[%s763 + $0x104] sm:$0xf]
      %v818 = vld [vmem:[%s763 + $0x108] sm:$0xf]
      %v819 = vld [vmem:[%s763 + $0x10c] sm:$0xf]
      %v820 = vld [vmem:[%s763 + $0x118] sm:$0xf]
      %v821 = vld [vmem:[%s763 + $0x11c] sm:$0xf]
      %v822 = vld [vmem:[%s763 + $0x120] sm:$0xf]
      %v823 = vld [vmem:[%s763 + $0x124] sm:$0xf]
      %v824 = vld [vmem:[%s763 + $0x128] sm:$0xf]
      %v825 = vld [vmem:[%s763 + $0x12c] sm:$0xf]
      %v826 = vld [vmem:[%s763 + $0x130] sm:$0xf]
      %v827 = vld [vmem:[%s763 + $0x134] sm:$0xf]
      %v892 = vunpack.c.l.b16 %v226
      %v893 = vunpack.c.l.b16 %v227
      %v894 = vunpack.c.l.b16 %v228
      %v895 = vunpack.c.l.b16 %v229
      %v896 = vunpack.c.l.b16 %v230
      %v897 = vunpack.c.l.b16 %v231
      %v898 = vunpack.c.l.b16 %v232
      %v899 = vunpack.c.l.b16 %v233
      %v900 = vunpack.c.l.b16 %v234
      %v901 = vunpack.c.l.b16 %v235
      %v902 = vunpack.c.l.b16 %v236
      %v903 = vunpack.c.l.b16 %v237
      %v904 = vunpack.c.l.b16 %v238
      %v905 = vunpack.c.l.b16 %v239
      %v906 = vunpack.c.l.b16 %v240
      %v907 = vunpack.c.l.b16 %v241
      %v908 = vunpack.c.l.b16 %v242
      %v909 = vunpack.c.l.b16 %v243
      %v910 = vunpack.c.l.b16 %v244
      %v911 = vunpack.c.l.b16 %v245
      %v912 = vunpack.c.l.b16 %v246
      %v913 = vunpack.c.l.b16 %v247
      %v914 = vunpack.c.l.b16 %v248
      %v915 = vunpack.c.l.b16 %v249
      %v916 = vunpack.c.l.b16 %v250
      %v917 = vunpack.c.l.b16 %v251
      %v918 = vunpack.c.l.b16 %v252
      %v919 = vunpack.c.l.b16 %v253
      %v920 = vunpack.c.l.b16 %v254
      %v921 = vunpack.c.l.b16 %v255
      %v922 = vunpack.c.l.b16 %v256
      %v923 = vunpack.c.l.b16 %v257
      %v924 = vunpack.c.l.b16 %v258
      %v925 = vunpack.c.l.b16 %v259
      %v926 = vunpack.c.l.b16 %v260
      %v927 = vunpack.c.l.b16 %v261
      %v928 = vunpack.c.l.b16 %v262
      %v929 = vunpack.c.l.b16 %v263
      %v930 = vunpack.c.l.b16 %v264
      %v931 = vunpack.c.l.b16 %v265
      %v932 = vunpack.c.l.b16 %v266
      %v933 = vunpack.c.l.b16 %v267
      %v934 = vunpack.c.l.b16 %v268
      %v935 = vunpack.c.l.b16 %v269
      %v936 = vunpack.c.l.b16 %v270
      %v937 = vunpack.c.l.b16 %v271
      %v938 = vunpack.c.l.b16 %v272
      %v939 = vunpack.c.l.b16 %v273
      %v940 = vunpack.c.l.b16 %v274
      %v941 = vunpack.c.l.b16 %v275
      %v942 = vunpack.c.l.b16 %v276
      %v943 = vunpack.c.l.b16 %v277
      %v944 = vunpack.c.l.b16 %v278
      %v945 = vunpack.c.l.b16 %v279
      %v946 = vunpack.c.l.b16 %v280
      %v947 = vunpack.c.l.b16 %v281
      %v948 = vunpack.c.l.b16 %v282
      %v949 = vunpack.c.l.b16 %v283
      %v950 = vunpack.c.l.b16 %v284
      %v951 = vunpack.c.l.b16 %v285
      %v952 = vunpack.c.l.b16 %v286
      %v953 = vunpack.c.l.b16 %v287
      %v954 = vunpack.c.l.b16 %v288
      %v955 = vunpack.c.l.b16 %v289
      %v956 = vpack.c.b16 %v893, %v892
      %v957 = vpack.c.b16 %v895, %v894
      %v958 = vpack.c.b16 %v897, %v896
      %v959 = vpack.c.b16 %v899, %v898
      %v960 = vpack.c.b16 %v901, %v900
      %v961 = vpack.c.b16 %v903, %v902
      %v962 = vpack.c.b16 %v905, %v904
      %v963 = vpack.c.b16 %v907, %v906
      %v964 = vpack.c.b16 %v909, %v908
      %v965 = vpack.c.b16 %v911, %v910
      %v966 = vpack.c.b16 %v913, %v912
      %v967 = vpack.c.b16 %v915, %v914
      %v968 = vpack.c.b16 %v917, %v916
      %v969 = vpack.c.b16 %v919, %v918
      %v970 = vpack.c.b16 %v921, %v920
      %v971 = vpack.c.b16 %v923, %v922
      %v972 = vpack.c.b16 %v925, %v924
      %v973 = vpack.c.b16 %v927, %v926
      %v974 = vpack.c.b16 %v929, %v928
      %v975 = vpack.c.b16 %v931, %v930
      %v976 = vpack.c.b16 %v933, %v932
      %v977 = vpack.c.b16 %v935, %v934
      %v978 = vpack.c.b16 %v937, %v936
      %v979 = vpack.c.b16 %v939, %v938
      %v980 = vpack.c.b16 %v941, %v940
      %v981 = vpack.c.b16 %v943, %v942
      %v982 = vpack.c.b16 %v945, %v944
      %v983 = vpack.c.b16 %v947, %v946
      %v984 = vpack.c.b16 %v949, %v948
      %v985 = vpack.c.b16 %v951, %v950
      %v986 = vpack.c.b16 %v953, %v952
      %v987 = vpack.c.b16 %v955, %v954
      %v1052 = vunpack.c.l.b16 %v293
      %v1053 = vunpack.c.l.b16 %v294
      %v1054 = vunpack.c.l.b16 %v295
      %v1055 = vunpack.c.l.b16 %v296
      %v1056 = vunpack.c.l.b16 %v297
      %v1057 = vunpack.c.l.b16 %v298
      %v1058 = vunpack.c.l.b16 %v299
      %v1059 = vunpack.c.l.b16 %v300
      %v1060 = vunpack.c.l.b16 %v301
      %v1061 = vunpack.c.l.b16 %v302
      %v1062 = vunpack.c.l.b16 %v303
      %v1063 = vunpack.c.l.b16 %v304
      %v1064 = vunpack.c.l.b16 %v305
      %v1065 = vunpack.c.l.b16 %v306
      %v1066 = vunpack.c.l.b16 %v307
      %v1067 = vunpack.c.l.b16 %v308
      %v1068 = vunpack.c.l.b16 %v309
      %v1069 = vunpack.c.l.b16 %v310
      %v1070 = vunpack.c.l.b16 %v311
      %v1071 = vunpack.c.l.b16 %v312
      %v1072 = vunpack.c.l.b16 %v313
      %v1073 = vunpack.c.l.b16 %v314
      %v1074 = vunpack.c.l.b16 %v315
      %v1075 = vunpack.c.l.b16 %v316
      %v1076 = vunpack.c.l.b16 %v317
      %v1077 = vunpack.c.l.b16 %v318
      %v1078 = vunpack.c.l.b16 %v319
      %v1079 = vunpack.c.l.b16 %v320
      %v1080 = vunpack.c.l.b16 %v321
      %v1081 = vunpack.c.l.b16 %v322
      %v1082 = vunpack.c.l.b16 %v323
      %v1083 = vunpack.c.l.b16 %v324
      %v1084 = vunpack.c.l.b16 %v325
      %v1085 = vunpack.c.l.b16 %v326
      %v1086 = vunpack.c.l.b16 %v327
      %v1087 = vunpack.c.l.b16 %v328
      %v1088 = vunpack.c.l.b16 %v329
      %v1089 = vunpack.c.l.b16 %v330
      %v1090 = vunpack.c.l.b16 %v331
      %v1091 = vunpack.c.l.b16 %v332
      %v1092 = vunpack.c.l.b16 %v333
      %v1093 = vunpack.c.l.b16 %v334
      %v1094 = vunpack.c.l.b16 %v335
      %v1095 = vunpack.c.l.b16 %v336
      %v1096 = vunpack.c.l.b16 %v337
      %v1097 = vunpack.c.l.b16 %v338
      %v1098 = vunpack.c.l.b16 %v339
      %v1099 = vunpack.c.l.b16 %v340
      %v1100 = vunpack.c.l.b16 %v341
      %v1101 = vunpack.c.l.b16 %v342
      %v1102 = vunpack.c.l.b16 %v343
      %v1103 = vunpack.c.l.b16 %v344
      %v1104 = vunpack.c.l.b16 %v345
      %v1105 = vunpack.c.l.b16 %v346
      %v1106 = vunpack.c.l.b16 %v347
      %v1107 = vunpack.c.l.b16 %v348
      %v1108 = vunpack.c.l.b16 %v349
      %v1109 = vunpack.c.l.b16 %v350
      %v1110 = vunpack.c.l.b16 %v351
      %v1111 = vunpack.c.l.b16 %v352
      %v1112 = vunpack.c.l.b16 %v353
      %v1113 = vunpack.c.l.b16 %v354
      %v1114 = vunpack.c.l.b16 %v355
      %v1115 = vunpack.c.l.b16 %v356
      %v1116 = vpack.c.b16 %v1053, %v1052
      %v1117 = vpack.c.b16 %v1055, %v1054
      %v1118 = vpack.c.b16 %v1057, %v1056
      %v1119 = vpack.c.b16 %v1059, %v1058
      %v1120 = vpack.c.b16 %v1061, %v1060
      %v1121 = vpack.c.b16 %v1063, %v1062
      %v1122 = vpack.c.b16 %v1065, %v1064
      %v1123 = vpack.c.b16 %v1067, %v1066
      %v1124 = vpack.c.b16 %v1069, %v1068
      %v1125 = vpack.c.b16 %v1071, %v1070
      %v1126 = vpack.c.b16 %v1073, %v1072
      %v1127 = vpack.c.b16 %v1075, %v1074
      %v1128 = vpack.c.b16 %v1077, %v1076
      %v1129 = vpack.c.b16 %v1079, %v1078
      %v1130 = vpack.c.b16 %v1081, %v1080
      %v1131 = vpack.c.b16 %v1083, %v1082
      %v1132 = vpack.c.b16 %v1085, %v1084
      %v1133 = vpack.c.b16 %v1087, %v1086
      %v1134 = vpack.c.b16 %v1089, %v1088
      %v1135 = vpack.c.b16 %v1091, %v1090
      %v1136 = vpack.c.b16 %v1093, %v1092
      %v1137 = vpack.c.b16 %v1095, %v1094
      %v1138 = vpack.c.b16 %v1097, %v1096
      %v1139 = vpack.c.b16 %v1099, %v1098
      %v1140 = vpack.c.b16 %v1101, %v1100
      %v1141 = vpack.c.b16 %v1103, %v1102
      %v1142 = vpack.c.b16 %v1105, %v1104
      %v1143 = vpack.c.b16 %v1107, %v1106
      %v1144 = vpack.c.b16 %v1109, %v1108
      %v1145 = vpack.c.b16 %v1111, %v1110
      %v1146 = vpack.c.b16 %v1113, %v1112
      %v1147 = vpack.c.b16 %v1115, %v1114
      %1148 = vrot.lane.b32.xlu0 %v1116, 12
      %v1149 = vpop.permute.xlu0 %1148
      %1150 = vrot.lane.b32.xlu0 %v1117, 12
      %v1151 = vpop.permute.xlu0 %1150
      %1152 = vrot.lane.b32.xlu0 %v1118, 12
      %v1153 = vpop.permute.xlu0 %1152
      %1154 = vrot.lane.b32.xlu0 %v1119, 12
      %v1155 = vpop.permute.xlu0 %1154
      %1156 = vrot.lane.b32.xlu0 %v1120, 12
      %v1157 = vpop.permute.xlu0 %1156
      %1158 = vrot.lane.b32.xlu0 %v1121, 12
      %v1159 = vpop.permute.xlu0 %1158
      %1160 = vrot.lane.b32.xlu0 %v1122, 12
      %v1161 = vpop.permute.xlu0 %1160
      %1162 = vrot.lane.b32.xlu0 %v1123, 12
      %v1163 = vpop.permute.xlu0 %1162
      %1164 = vrot.lane.b32.xlu0 %v1124, 12
      %v1165 = vpop.permute.xlu0 %1164
      %1166 = vrot.lane.b32.xlu0 %v1125, 12
      %v1167 = vpop.permute.xlu0 %1166
      %1168 = vrot.lane.b32.xlu0 %v1126, 12
      %v1169 = vpop.permute.xlu0 %1168
      %1170 = vrot.lane.b32.xlu0 %v1127, 12
      %v1171 = vpop.permute.xlu0 %1170
      %1172 = vrot.lane.b32.xlu0 %v1128, 12
      %v1173 = vpop.permute.xlu0 %1172
      %1174 = vrot.lane.b32.xlu0 %v1129, 12
      %v1175 = vpop.permute.xlu0 %1174
      %1176 = vrot.lane.b32.xlu0 %v1130, 12
      %v1177 = vpop.permute.xlu0 %1176
      %1178 = vrot.lane.b32.xlu0 %v1131, 12
      %v1179 = vpop.permute.xlu0 %1178
      %1180 = vrot.lane.b32.xlu0 %v1132, 12
      %v1181 = vpop.permute.xlu0 %1180
      %1182 = vrot.lane.b32.xlu0 %v1133, 12
      %v1183 = vpop.permute.xlu0 %1182
      %1184 = vrot.lane.b32.xlu0 %v1134, 12
      %v1185 = vpop.permute.xlu0 %1184
      %1186 = vrot.lane.b32.xlu0 %v1135, 12
      %v1187 = vpop.permute.xlu0 %1186
      %1188 = vrot.lane.b32.xlu0 %v1136, 12
      %v1189 = vpop.permute.xlu0 %1188
      %1190 = vrot.lane.b32.xlu0 %v1137, 12
      %v1191 = vpop.permute.xlu0 %1190
      %1192 = vrot.lane.b32.xlu0 %v1138, 12
      %v1193 = vpop.permute.xlu0 %1192
      %1194 = vrot.lane.b32.xlu0 %v1139, 12
      %v1195 = vpop.permute.xlu0 %1194
      %1196 = vrot.lane.b32.xlu0 %v1140, 12
      %v1197 = vpop.permute.xlu0 %1196
      %1198 = vrot.lane.b32.xlu0 %v1141, 12
      %v1199 = vpop.permute.xlu0 %1198
      %1200 = vrot.lane.b32.xlu0 %v1142, 12
      %v1201 = vpop.permute.xlu0 %1200
      %1202 = vrot.lane.b32.xlu0 %v1143, 12
      %v1203 = vpop.permute.xlu0 %1202
      %1204 = vrot.lane.b32.xlu0 %v1144, 12
      %v1205 = vpop.permute.xlu0 %1204
      %1206 = vrot.lane.b32.xlu0 %v1145, 12
      %v1207 = vpop.permute.xlu0 %1206
      %1208 = vrot.lane.b32.xlu0 %v1146, 12
      %v1209 = vpop.permute.xlu0 %1208
      %1210 = vrot.lane.b32.xlu0 %v1147, 12
      %v1211 = vpop.permute.xlu0 %1210
      %v1276 = vunpack.c.l.b16 %v360
      %v1277 = vunpack.c.l.b16 %v361
      %v1278 = vunpack.c.l.b16 %v362
      %v1279 = vunpack.c.l.b16 %v363
      %v1280 = vunpack.c.l.b16 %v364
      %v1281 = vunpack.c.l.b16 %v365
      %v1282 = vunpack.c.l.b16 %v366
      %v1283 = vunpack.c.l.b16 %v367
      %v1284 = vunpack.c.l.b16 %v368
      %v1285 = vunpack.c.l.b16 %v369
      %v1286 = vunpack.c.l.b16 %v370
      %v1287 = vunpack.c.l.b16 %v371
      %v1288 = vunpack.c.l.b16 %v372
      %v1289 = vunpack.c.l.b16 %v373
      %v1290 = vunpack.c.l.b16 %v374
      %v1291 = vunpack.c.l.b16 %v375
      %v1292 = vunpack.c.l.b16 %v376
      %v1293 = vunpack.c.l.b16 %v377
      %v1294 = vunpack.c.l.b16 %v378
      %v1295 = vunpack.c.l.b16 %v379
      %v1296 = vunpack.c.l.b16 %v380
      %v1297 = vunpack.c.l.b16 %v381
      %v1298 = vunpack.c.l.b16 %v382
      %v1299 = vunpack.c.l.b16 %v383
      %v1300 = vunpack.c.l.b16 %v384
      %v1301 = vunpack.c.l.b16 %v385
      %v1302 = vunpack.c.l.b16 %v386
      %v1303 = vunpack.c.l.b16 %v387
      %v1304 = vunpack.c.l.b16 %v388
      %v1305 = vunpack.c.l.b16 %v389
      %v1306 = vunpack.c.l.b16 %v390
      %v1307 = vunpack.c.l.b16 %v391
      %v1308 = vunpack.c.l.b16 %v392
      %v1309 = vunpack.c.l.b16 %v393
      %v1310 = vunpack.c.l.b16 %v394
      %v1311 = vunpack.c.l.b16 %v395
      %v1312 = vunpack.c.l.b16 %v396
      %v1313 = vunpack.c.l.b16 %v397
      %v1314 = vunpack.c.l.b16 %v398
      %v1315 = vunpack.c.l.b16 %v399
      %v1316 = vunpack.c.l.b16 %v400
      %v1317 = vunpack.c.l.b16 %v401
      %v1318 = vunpack.c.l.b16 %v402
      %v1319 = vunpack.c.l.b16 %v403
      %v1320 = vunpack.c.l.b16 %v404
      %v1321 = vunpack.c.l.b16 %v405
      %v1322 = vunpack.c.l.b16 %v406
      %v1323 = vunpack.c.l.b16 %v407
      %v1324 = vunpack.c.l.b16 %v408
      %v1325 = vunpack.c.l.b16 %v409
      %v1326 = vunpack.c.l.b16 %v410
      %v1327 = vunpack.c.l.b16 %v411
      %v1328 = vunpack.c.l.b16 %v412
      %v1329 = vunpack.c.l.b16 %v413
      %v1330 = vunpack.c.l.b16 %v414
      %v1331 = vunpack.c.l.b16 %v415
      %v1332 = vunpack.c.l.b16 %v416
      %v1333 = vunpack.c.l.b16 %v417
      %v1334 = vunpack.c.l.b16 %v418
      %v1335 = vunpack.c.l.b16 %v419
      %v1336 = vunpack.c.l.b16 %v420
      %v1337 = vunpack.c.l.b16 %v421
      %v1338 = vunpack.c.l.b16 %v422
      %v1339 = vunpack.c.l.b16 %v423
      %v1340 = vpack.c.b16 %v1277, %v1276
      %v1341 = vpack.c.b16 %v1279, %v1278
      %v1342 = vpack.c.b16 %v1281, %v1280
      %v1343 = vpack.c.b16 %v1283, %v1282
      %v1344 = vpack.c.b16 %v1285, %v1284
      %v1345 = vpack.c.b16 %v1287, %v1286
      %v1346 = vpack.c.b16 %v1289, %v1288
      %v1347 = vpack.c.b16 %v1291, %v1290
      %v1348 = vpack.c.b16 %v1293, %v1292
      %v1349 = vpack.c.b16 %v1295, %v1294
      %v1350 = vpack.c.b16 %v1297, %v1296
      %v1351 = vpack.c.b16 %v1299, %v1298
      %v1352 = vpack.c.b16 %v1301, %v1300
      %v1353 = vpack.c.b16 %v1303, %v1302
      %v1354 = vpack.c.b16 %v1305, %v1304
      %v1355 = vpack.c.b16 %v1307, %v1306
      %v1356 = vpack.c.b16 %v1309, %v1308
      %v1357 = vpack.c.b16 %v1311, %v1310
      %v1358 = vpack.c.b16 %v1313, %v1312
      %v1359 = vpack.c.b16 %v1315, %v1314
      %v1360 = vpack.c.b16 %v1317, %v1316
      %v1361 = vpack.c.b16 %v1319, %v1318
      %v1362 = vpack.c.b16 %v1321, %v1320
      %v1363 = vpack.c.b16 %v1323, %v1322
      %v1364 = vpack.c.b16 %v1325, %v1324
      %v1365 = vpack.c.b16 %v1327, %v1326
      %v1366 = vpack.c.b16 %v1329, %v1328
      %v1367 = vpack.c.b16 %v1331, %v1330
      %v1368 = vpack.c.b16 %v1333, %v1332
      %v1369 = vpack.c.b16 %v1335, %v1334
      %v1370 = vpack.c.b16 %v1337, %v1336
      %v1371 = vpack.c.b16 %v1339, %v1338
      %1372 = vrot.lane.b32.xlu0 %v1340, 24
      %v1373 = vpop.permute.xlu0 %1372
      %1374 = vrot.lane.b32.xlu0 %v1341, 24
      %v1375 = vpop.permute.xlu0 %1374
      %1376 = vrot.lane.b32.xlu0 %v1342, 24
      %v1377 = vpop.permute.xlu0 %1376
      %1378 = vrot.lane.b32.xlu0 %v1343, 24
      %v1379 = vpop.permute.xlu0 %1378
      %1380 = vrot.lane.b32.xlu0 %v1344, 24
      %v1381 = vpop.permute.xlu0 %1380
      %1382 = vrot.lane.b32.xlu0 %v1345, 24
      %v1383 = vpop.permute.xlu0 %1382
      %1384 = vrot.lane.b32.xlu0 %v1346, 24
      %v1385 = vpop.permute.xlu0 %1384
      %1386 = vrot.lane.b32.xlu0 %v1347, 24
      %v1387 = vpop.permute.xlu0 %1386
      %1388 = vrot.lane.b32.xlu0 %v1348, 24
      %v1389 = vpop.permute.xlu0 %1388
      %1390 = vrot.lane.b32.xlu0 %v1349, 24
      %v1391 = vpop.permute.xlu0 %1390
      %1392 = vrot.lane.b32.xlu0 %v1350, 24
      %v1393 = vpop.permute.xlu0 %1392
      %1394 = vrot.lane.b32.xlu0 %v1351, 24
      %v1395 = vpop.permute.xlu0 %1394
      %1396 = vrot.lane.b32.xlu0 %v1352, 24
      %v1397 = vpop.permute.xlu0 %1396
      %1398 = vrot.lane.b32.xlu0 %v1353, 24
      %v1399 = vpop.permute.xlu0 %1398
      %1400 = vrot.lane.b32.xlu0 %v1354, 24
      %v1401 = vpop.permute.xlu0 %1400
      %1402 = vrot.lane.b32.xlu0 %v1355, 24
      %v1403 = vpop.permute.xlu0 %1402
      %1404 = vrot.lane.b32.xlu0 %v1356, 24
      %v1405 = vpop.permute.xlu0 %1404
      %1406 = vrot.lane.b32.xlu0 %v1357, 24
      %v1407 = vpop.permute.xlu0 %1406
      %1408 = vrot.lane.b32.xlu0 %v1358, 24
      %v1409 = vpop.permute.xlu0 %1408
      %1410 = vrot.lane.b32.xlu0 %v1359, 24
      %v1411 = vpop.permute.xlu0 %1410
      %1412 = vrot.lane.b32.xlu0 %v1360, 24
      %v1413 = vpop.permute.xlu0 %1412
      %1414 = vrot.lane.b32.xlu0 %v1361, 24
      %v1415 = vpop.permute.xlu0 %1414
      %1416 = vrot.lane.b32.xlu0 %v1362, 24
      %v1417 = vpop.permute.xlu0 %1416
      %1418 = vrot.lane.b32.xlu0 %v1363, 24
      %v1419 = vpop.permute.xlu0 %1418
      %1420 = vrot.lane.b32.xlu0 %v1364, 24
      %v1421 = vpop.permute.xlu0 %1420
      %1422 = vrot.lane.b32.xlu0 %v1365, 24
      %v1423 = vpop.permute.xlu0 %1422
      %1424 = vrot.lane.b32.xlu0 %v1366, 24
      %v1425 = vpop.permute.xlu0 %1424
      %1426 = vrot.lane.b32.xlu0 %v1367, 24
      %v1427 = vpop.permute.xlu0 %1426
      %1428 = vrot.lane.b32.xlu0 %v1368, 24
      %v1429 = vpop.permute.xlu0 %1428
      %1430 = vrot.lane.b32.xlu0 %v1369, 24
      %v1431 = vpop.permute.xlu0 %1430
      %1432 = vrot.lane.b32.xlu0 %v1370, 24
      %v1433 = vpop.permute.xlu0 %1432
      %1434 = vrot.lane.b32.xlu0 %v1371, 24
      %v1435 = vpop.permute.xlu0 %1434
      %v1500 = vunpack.c.l.b16 %v428
      %v1501 = vunpack.c.l.b16 %v429
      %v1502 = vunpack.c.l.b16 %v430
      %v1503 = vunpack.c.l.b16 %v431
      %v1504 = vunpack.c.l.b16 %v432
      %v1505 = vunpack.c.l.b16 %v433
      %v1506 = vunpack.c.l.b16 %v434
      %v1507 = vunpack.c.l.b16 %v435
      %v1508 = vunpack.c.l.b16 %v436
      %v1509 = vunpack.c.l.b16 %v437
      %v1510 = vunpack.c.l.b16 %v438
      %v1511 = vunpack.c.l.b16 %v439
      %v1512 = vunpack.c.l.b16 %v440
      %v1513 = vunpack.c.l.b16 %v441
      %v1514 = vunpack.c.l.b16 %v442
      %v1515 = vunpack.c.l.b16 %v443
      %v1516 = vunpack.c.l.b16 %v444
      %v1517 = vunpack.c.l.b16 %v445
      %v1518 = vunpack.c.l.b16 %v446
      %v1519 = vunpack.c.l.b16 %v447
      %v1520 = vunpack.c.l.b16 %v448
      %v1521 = vunpack.c.l.b16 %v449
      %v1522 = vunpack.c.l.b16 %v450
      %v1523 = vunpack.c.l.b16 %v451
      %v1524 = vunpack.c.l.b16 %v452
      %v1525 = vunpack.c.l.b16 %v453
      %v1526 = vunpack.c.l.b16 %v454
      %v1527 = vunpack.c.l.b16 %v455
      %v1528 = vunpack.c.l.b16 %v456
      %v1529 = vunpack.c.l.b16 %v457
      %v1530 = vunpack.c.l.b16 %v458
      %v1531 = vunpack.c.l.b16 %v459
      %v1532 = vunpack.c.l.b16 %v460
      %v1533 = vunpack.c.l.b16 %v461
      %v1534 = vunpack.c.l.b16 %v462
      %v1535 = vunpack.c.l.b16 %v463
      %v1536 = vunpack.c.l.b16 %v464
      %v1537 = vunpack.c.l.b16 %v465
      %v1538 = vunpack.c.l.b16 %v466
      %v1539 = vunpack.c.l.b16 %v467
      %v1540 = vunpack.c.l.b16 %v468
      %v1541 = vunpack.c.l.b16 %v469
      %v1542 = vunpack.c.l.b16 %v470
      %v1543 = vunpack.c.l.b16 %v471
      %v1544 = vunpack.c.l.b16 %v472
      %v1545 = vunpack.c.l.b16 %v473
      %v1546 = vunpack.c.l.b16 %v474
      %v1547 = vunpack.c.l.b16 %v475
      %v1548 = vunpack.c.l.b16 %v476
      %v1549 = vunpack.c.l.b16 %v477
      %v1550 = vunpack.c.l.b16 %v478
      %v1551 = vunpack.c.l.b16 %v479
      %v1552 = vunpack.c.l.b16 %v480
      %v1553 = vunpack.c.l.b16 %v481
      %v1554 = vunpack.c.l.b16 %v482
      %v1555 = vunpack.c.l.b16 %v483
      %v1556 = vunpack.c.l.b16 %v484
      %v1557 = vunpack.c.l.b16 %v485
      %v1558 = vunpack.c.l.b16 %v486
      %v1559 = vunpack.c.l.b16 %v487
      %v1560 = vunpack.c.l.b16 %v488
      %v1561 = vunpack.c.l.b16 %v489
      %v1562 = vunpack.c.l.b16 %v490
      %v1563 = vunpack.c.l.b16 %v491
      %v1564 = vpack.c.b16 %v1501, %v1500
      %v1565 = vpack.c.b16 %v1503, %v1502
      %v1566 = vpack.c.b16 %v1505, %v1504
      %v1567 = vpack.c.b16 %v1507, %v1506
      %v1568 = vpack.c.b16 %v1509, %v1508
      %v1569 = vpack.c.b16 %v1511, %v1510
      %v1570 = vpack.c.b16 %v1513, %v1512
      %v1571 = vpack.c.b16 %v1515, %v1514
      %v1572 = vpack.c.b16 %v1517, %v1516
      %v1573 = vpack.c.b16 %v1519, %v1518
      %v1574 = vpack.c.b16 %v1521, %v1520
      %v1575 = vpack.c.b16 %v1523, %v1522
      %v1576 = vpack.c.b16 %v1525, %v1524
      %v1577 = vpack.c.b16 %v1527, %v1526
      %v1578 = vpack.c.b16 %v1529, %v1528
      %v1579 = vpack.c.b16 %v1531, %v1530
      %v1580 = vpack.c.b16 %v1533, %v1532
      %v1581 = vpack.c.b16 %v1535, %v1534
      %v1582 = vpack.c.b16 %v1537, %v1536
      %v1583 = vpack.c.b16 %v1539, %v1538
      %v1584 = vpack.c.b16 %v1541, %v1540
      %v1585 = vpack.c.b16 %v1543, %v1542
      %v1586 = vpack.c.b16 %v1545, %v1544
      %v1587 = vpack.c.b16 %v1547, %v1546
      %v1588 = vpack.c.b16 %v1549, %v1548
      %v1589 = vpack.c.b16 %v1551, %v1550
      %v1590 = vpack.c.b16 %v1553, %v1552
      %v1591 = vpack.c.b16 %v1555, %v1554
      %v1592 = vpack.c.b16 %v1557, %v1556
      %v1593 = vpack.c.b16 %v1559, %v1558
      %v1594 = vpack.c.b16 %v1561, %v1560
      %v1595 = vpack.c.b16 %v1563, %v1562
      %1596 = vrot.lane.b32.xlu0 %v1564, 36
      %v1597 = vpop.permute.xlu0 %1596
      %1598 = vrot.lane.b32.xlu0 %v1565, 36
      %v1599 = vpop.permute.xlu0 %1598
      %1600 = vrot.lane.b32.xlu0 %v1566, 36
      %v1601 = vpop.permute.xlu0 %1600
      %1602 = vrot.lane.b32.xlu0 %v1567, 36
      %v1603 = vpop.permute.xlu0 %1602
      %1604 = vrot.lane.b32.xlu0 %v1568, 36
      %v1605 = vpop.permute.xlu0 %1604
      %1606 = vrot.lane.b32.xlu0 %v1569, 36
      %v1607 = vpop.permute.xlu0 %1606
      %1608 = vrot.lane.b32.xlu0 %v1570, 36
      %v1609 = vpop.permute.xlu0 %1608
      %1610 = vrot.lane.b32.xlu0 %v1571, 36
      %v1611 = vpop.permute.xlu0 %1610
      %1612 = vrot.lane.b32.xlu0 %v1572, 36
      %v1613 = vpop.permute.xlu0 %1612
      %1614 = vrot.lane.b32.xlu0 %v1573, 36
      %v1615 = vpop.permute.xlu0 %1614
      %1616 = vrot.lane.b32.xlu0 %v1574, 36
      %v1617 = vpop.permute.xlu0 %1616
      %1618 = vrot.lane.b32.xlu0 %v1575, 36
      %v1619 = vpop.permute.xlu0 %1618
      %1620 = vrot.lane.b32.xlu0 %v1576, 36
      %v1621 = vpop.permute.xlu0 %1620
      %1622 = vrot.lane.b32.xlu0 %v1577, 36
      %v1623 = vpop.permute.xlu0 %1622
      %1624 = vrot.lane.b32.xlu0 %v1578, 36
      %v1625 = vpop.permute.xlu0 %1624
      %1626 = vrot.lane.b32.xlu0 %v1579, 36
      %v1627 = vpop.permute.xlu0 %1626
      %1628 = vrot.lane.b32.xlu0 %v1580, 36
      %v1629 = vpop.permute.xlu0 %1628
      %1630 = vrot.lane.b32.xlu0 %v1581, 36
      %v1631 = vpop.permute.xlu0 %1630
      %1632 = vrot.lane.b32.xlu0 %v1582, 36
      %v1633 = vpop.permute.xlu0 %1632
      %1634 = vrot.lane.b32.xlu0 %v1583, 36
      %v1635 = vpop.permute.xlu0 %1634
      %1636 = vrot.lane.b32.xlu0 %v1584, 36
      %v1637 = vpop.permute.xlu0 %1636
      %1638 = vrot.lane.b32.xlu0 %v1585, 36
      %v1639 = vpop.permute.xlu0 %1638
      %1640 = vrot.lane.b32.xlu0 %v1586, 36
      %v1641 = vpop.permute.xlu0 %1640
      %1642 = vrot.lane.b32.xlu0 %v1587, 36
      %v1643 = vpop.permute.xlu0 %1642
      %1644 = vrot.lane.b32.xlu0 %v1588, 36
      %v1645 = vpop.permute.xlu0 %1644
      %1646 = vrot.lane.b32.xlu0 %v1589, 36
      %v1647 = vpop.permute.xlu0 %1646
      %1648 = vrot.lane.b32.xlu0 %v1590, 36
      %v1649 = vpop.permute.xlu0 %1648
      %1650 = vrot.lane.b32.xlu0 %v1591, 36
      %v1651 = vpop.permute.xlu0 %1650
      %1652 = vrot.lane.b32.xlu0 %v1592, 36
      %v1653 = vpop.permute.xlu0 %1652
      %1654 = vrot.lane.b32.xlu0 %v1593, 36
      %v1655 = vpop.permute.xlu0 %1654
      %1656 = vrot.lane.b32.xlu0 %v1594, 36
      %v1657 = vpop.permute.xlu0 %1656
      %1658 = vrot.lane.b32.xlu0 %v1595, 36
      %v1659 = vpop.permute.xlu0 %1658
      %v1724 = vunpack.c.l.b16 %v495
      %v1725 = vunpack.c.l.b16 %v496
      %v1726 = vunpack.c.l.b16 %v497
      %v1727 = vunpack.c.l.b16 %v498
      %v1728 = vunpack.c.l.b16 %v499
      %v1729 = vunpack.c.l.b16 %v500
      %v1730 = vunpack.c.l.b16 %v501
      %v1731 = vunpack.c.l.b16 %v502
      %v1732 = vunpack.c.l.b16 %v503
      %v1733 = vunpack.c.l.b16 %v504
      %v1734 = vunpack.c.l.b16 %v505
      %v1735 = vunpack.c.l.b16 %v506
      %v1736 = vunpack.c.l.b16 %v507
      %v1737 = vunpack.c.l.b16 %v508
      %v1738 = vunpack.c.l.b16 %v509
      %v1739 = vunpack.c.l.b16 %v510
      %v1740 = vunpack.c.l.b16 %v511
      %v1741 = vunpack.c.l.b16 %v512
      %v1742 = vunpack.c.l.b16 %v513
      %v1743 = vunpack.c.l.b16 %v514
      %v1744 = vunpack.c.l.b16 %v515
      %v1745 = vunpack.c.l.b16 %v516
      %v1746 = vunpack.c.l.b16 %v517
      %v1747 = vunpack.c.l.b16 %v518
      %v1748 = vunpack.c.l.b16 %v519
      %v1749 = vunpack.c.l.b16 %v520
      %v1750 = vunpack.c.l.b16 %v521
      %v1751 = vunpack.c.l.b16 %v522
      %v1752 = vunpack.c.l.b16 %v523
      %v1753 = vunpack.c.l.b16 %v524
      %v1754 = vunpack.c.l.b16 %v525
      %v1755 = vunpack.c.l.b16 %v526
      %v1756 = vunpack.c.l.b16 %v527
      %v1757 = vunpack.c.l.b16 %v528
      %v1758 = vunpack.c.l.b16 %v529
      %v1759 = vunpack.c.l.b16 %v530
      %v1760 = vunpack.c.l.b16 %v531
      %v1761 = vunpack.c.l.b16 %v532
      %v1762 = vunpack.c.l.b16 %v533
      %v1763 = vunpack.c.l.b16 %v534
      %v1764 = vunpack.c.l.b16 %v535
      %v1765 = vunpack.c.l.b16 %v536
      %v1766 = vunpack.c.l.b16 %v537
      %v1767 = vunpack.c.l.b16 %v538
      %v1768 = vunpack.c.l.b16 %v539
      %v1769 = vunpack.c.l.b16 %v540
      %v1770 = vunpack.c.l.b16 %v541
      %v1771 = vunpack.c.l.b16 %v542
      %v1772 = vunpack.c.l.b16 %v543
      %v1773 = vunpack.c.l.b16 %v544
      %v1774 = vunpack.c.l.b16 %v545
      %v1775 = vunpack.c.l.b16 %v546
      %v1776 = vunpack.c.l.b16 %v547
      %v1777 = vunpack.c.l.b16 %v548
      %v1778 = vunpack.c.l.b16 %v549
      %v1779 = vunpack.c.l.b16 %v550
      %v1780 = vunpack.c.l.b16 %v551
      %v1781 = vunpack.c.l.b16 %v552
      %v1782 = vunpack.c.l.b16 %v553
      %v1783 = vunpack.c.l.b16 %v554
      %v1784 = vunpack.c.l.b16 %v555
      %v1785 = vunpack.c.l.b16 %v556
      %v1786 = vunpack.c.l.b16 %v557
      %v1787 = vunpack.c.l.b16 %v558
      %v1788 = vpack.c.b16 %v1725, %v1724
      %v1789 = vpack.c.b16 %v1727, %v1726
      %v1790 = vpack.c.b16 %v1729, %v1728
      %v1791 = vpack.c.b16 %v1731, %v1730
      %v1792 = vpack.c.b16 %v1733, %v1732
      %v1793 = vpack.c.b16 %v1735, %v1734
      %v1794 = vpack.c.b16 %v1737, %v1736
      %v1795 = vpack.c.b16 %v1739, %v1738
      %v1796 = vpack.c.b16 %v1741, %v1740
      %v1797 = vpack.c.b16 %v1743, %v1742
      %v1798 = vpack.c.b16 %v1745, %v1744
      %v1799 = vpack.c.b16 %v1747, %v1746
      %v1800 = vpack.c.b16 %v1749, %v1748
      %v1801 = vpack.c.b16 %v1751, %v1750
      %v1802 = vpack.c.b16 %v1753, %v1752
      %v1803 = vpack.c.b16 %v1755, %v1754
      %v1804 = vpack.c.b16 %v1757, %v1756
      %v1805 = vpack.c.b16 %v1759, %v1758
      %v1806 = vpack.c.b16 %v1761, %v1760
      %v1807 = vpack.c.b16 %v1763, %v1762
      %v1808 = vpack.c.b16 %v1765, %v1764
      %v1809 = vpack.c.b16 %v1767, %v1766
      %v1810 = vpack.c.b16 %v1769, %v1768
      %v1811 = vpack.c.b16 %v1771, %v1770
      %v1812 = vpack.c.b16 %v1773, %v1772
      %v1813 = vpack.c.b16 %v1775, %v1774
      %v1814 = vpack.c.b16 %v1777, %v1776
      %v1815 = vpack.c.b16 %v1779, %v1778
      %v1816 = vpack.c.b16 %v1781, %v1780
      %v1817 = vpack.c.b16 %v1783, %v1782
      %v1818 = vpack.c.b16 %v1785, %v1784
      %v1819 = vpack.c.b16 %v1787, %v1786
      %1820 = vrot.lane.b32.xlu0 %v1788, 48
      %v1821 = vpop.permute.xlu0 %1820
      %1822 = vrot.lane.b32.xlu0 %v1789, 48
      %v1823 = vpop.permute.xlu0 %1822
      %1824 = vrot.lane.b32.xlu0 %v1790, 48
      %v1825 = vpop.permute.xlu0 %1824
      %1826 = vrot.lane.b32.xlu0 %v1791, 48
      %v1827 = vpop.permute.xlu0 %1826
      %1828 = vrot.lane.b32.xlu0 %v1792, 48
      %v1829 = vpop.permute.xlu0 %1828
      %1830 = vrot.lane.b32.xlu0 %v1793, 48
      %v1831 = vpop.permute.xlu0 %1830
      %1832 = vrot.lane.b32.xlu0 %v1794, 48
      %v1833 = vpop.permute.xlu0 %1832
      %1834 = vrot.lane.b32.xlu0 %v1795, 48
      %v1835 = vpop.permute.xlu0 %1834
      %1836 = vrot.lane.b32.xlu0 %v1796, 48
      %v1837 = vpop.permute.xlu0 %1836
      %1838 = vrot.lane.b32.xlu0 %v1797, 48
      %v1839 = vpop.permute.xlu0 %1838
      %1840 = vrot.lane.b32.xlu0 %v1798, 48
      %v1841 = vpop.permute.xlu0 %1840
      %1842 = vrot.lane.b32.xlu0 %v1799, 48
      %v1843 = vpop.permute.xlu0 %1842
      %1844 = vrot.lane.b32.xlu0 %v1800, 48
      %v1845 = vpop.permute.xlu0 %1844
      %1846 = vrot.lane.b32.xlu0 %v1801, 48
      %v1847 = vpop.permute.xlu0 %1846
      %1848 = vrot.lane.b32.xlu0 %v1802, 48
      %v1849 = vpop.permute.xlu0 %1848
      %1850 = vrot.lane.b32.xlu0 %v1803, 48
      %v1851 = vpop.permute.xlu0 %1850
      %1852 = vrot.lane.b32.xlu0 %v1804, 48
      %v1853 = vpop.permute.xlu0 %1852
      %1854 = vrot.lane.b32.xlu0 %v1805, 48
      %v1855 = vpop.permute.xlu0 %1854
      %1856 = vrot.lane.b32.xlu0 %v1806, 48
      %v1857 = vpop.permute.xlu0 %1856
      %1858 = vrot.lane.b32.xlu0 %v1807, 48
      %v1859 = vpop.permute.xlu0 %1858
      %1860 = vrot.lane.b32.xlu0 %v1808, 48
      %v1861 = vpop.permute.xlu0 %1860
      %1862 = vrot.lane.b32.xlu0 %v1809, 48
      %v1863 = vpop.permute.xlu0 %1862
      %1864 = vrot.lane.b32.xlu0 %v1810, 48
      %v1865 = vpop.permute.xlu0 %1864
      %1866 = vrot.lane.b32.xlu0 %v1811, 48
      %v1867 = vpop.permute.xlu0 %1866
      %1868 = vrot.lane.b32.xlu0 %v1812, 48
      %v1869 = vpop.permute.xlu0 %1868
      %1870 = vrot.lane.b32.xlu0 %v1813, 48
      %v1871 = vpop.permute.xlu0 %1870
      %1872 = vrot.lane.b32.xlu0 %v1814, 48
      %v1873 = vpop.permute.xlu0 %1872
      %1874 = vrot.lane.b32.xlu0 %v1815, 48
      %v1875 = vpop.permute.xlu0 %1874
      %1876 = vrot.lane.b32.xlu0 %v1816, 48
      %v1877 = vpop.permute.xlu0 %1876
      %1878 = vrot.lane.b32.xlu0 %v1817, 48
      %v1879 = vpop.permute.xlu0 %1878
      %1880 = vrot.lane.b32.xlu0 %v1818, 48
      %v1881 = vpop.permute.xlu0 %1880
      %1882 = vrot.lane.b32.xlu0 %v1819, 48
      %v1883 = vpop.permute.xlu0 %1882
      %v1948 = vunpack.c.l.b16 %v562
      %v1949 = vunpack.c.l.b16 %v563
      %v1950 = vunpack.c.l.b16 %v564
      %v1951 = vunpack.c.l.b16 %v565
      %v1952 = vunpack.c.l.b16 %v566
      %v1953 = vunpack.c.l.b16 %v567
      %v1954 = vunpack.c.l.b16 %v568
      %v1955 = vunpack.c.l.b16 %v569
      %v1956 = vunpack.c.l.b16 %v570
      %v1957 = vunpack.c.l.b16 %v571
      %v1958 = vunpack.c.l.b16 %v572
      %v1959 = vunpack.c.l.b16 %v573
      %v1960 = vunpack.c.l.b16 %v574
      %v1961 = vunpack.c.l.b16 %v575
      %v1962 = vunpack.c.l.b16 %v576
      %v1963 = vunpack.c.l.b16 %v577
      %v1964 = vunpack.c.l.b16 %v578
      %v1965 = vunpack.c.l.b16 %v579
      %v1966 = vunpack.c.l.b16 %v580
      %v1967 = vunpack.c.l.b16 %v581
      %v1968 = vunpack.c.l.b16 %v582
      %v1969 = vunpack.c.l.b16 %v583
      %v1970 = vunpack.c.l.b16 %v584
      %v1971 = vunpack.c.l.b16 %v585
      %v1972 = vunpack.c.l.b16 %v586
      %v1973 = vunpack.c.l.b16 %v587
      %v1974 = vunpack.c.l.b16 %v588
      %v1975 = vunpack.c.l.b16 %v589
      %v1976 = vunpack.c.l.b16 %v590
      %v1977 = vunpack.c.l.b16 %v591
      %v1978 = vunpack.c.l.b16 %v592
      %v1979 = vunpack.c.l.b16 %v593
      %v1980 = vunpack.c.l.b16 %v594
      %v1981 = vunpack.c.l.b16 %v595
      %v1982 = vunpack.c.l.b16 %v596
      %v1983 = vunpack.c.l.b16 %v597
      %v1984 = vunpack.c.l.b16 %v598
      %v1985 = vunpack.c.l.b16 %v599
      %v1986 = vunpack.c.l.b16 %v600
      %v1987 = vunpack.c.l.b16 %v601
      %v1988 = vunpack.c.l.b16 %v602
      %v1989 = vunpack.c.l.b16 %v603
      %v1990 = vunpack.c.l.b16 %v604
      %v1991 = vunpack.c.l.b16 %v605
      %v1992 = vunpack.c.l.b16 %v606
      %v1993 = vunpack.c.l.b16 %v607
      %v1994 = vunpack.c.l.b16 %v608
      %v1995 = vunpack.c.l.b16 %v609
      %v1996 = vunpack.c.l.b16 %v610
      %v1997 = vunpack.c.l.b16 %v611
      %v1998 = vunpack.c.l.b16 %v612
      %v1999 = vunpack.c.l.b16 %v613
      %v2000 = vunpack.c.l.b16 %v614
      %v2001 = vunpack.c.l.b16 %v615
      %v2002 = vunpack.c.l.b16 %v616
      %v2003 = vunpack.c.l.b16 %v617
      %v2004 = vunpack.c.l.b16 %v618
      %v2005 = vunpack.c.l.b16 %v619
      %v2006 = vunpack.c.l.b16 %v620
      %v2007 = vunpack.c.l.b16 %v621
      %v2008 = vunpack.c.l.b16 %v622
      %v2009 = vunpack.c.l.b16 %v623
      %v2010 = vunpack.c.l.b16 %v624
      %v2011 = vunpack.c.l.b16 %v625
      %v2012 = vpack.c.b16 %v1949, %v1948
      %v2013 = vpack.c.b16 %v1951, %v1950
      %v2014 = vpack.c.b16 %v1953, %v1952
      %v2015 = vpack.c.b16 %v1955, %v1954
      %v2016 = vpack.c.b16 %v1957, %v1956
      %v2017 = vpack.c.b16 %v1959, %v1958
      %v2018 = vpack.c.b16 %v1961, %v1960
      %v2019 = vpack.c.b16 %v1963, %v1962
      %v2020 = vpack.c.b16 %v1965, %v1964
      %v2021 = vpack.c.b16 %v1967, %v1966
      %v2022 = vpack.c.b16 %v1969, %v1968
      %v2023 = vpack.c.b16 %v1971, %v1970
      %v2024 = vpack.c.b16 %v1973, %v1972
      %v2025 = vpack.c.b16 %v1975, %v1974
      %v2026 = vpack.c.b16 %v1977, %v1976
      %v2027 = vpack.c.b16 %v1979, %v1978
      %v2028 = vpack.c.b16 %v1981, %v1980
      %v2029 = vpack.c.b16 %v1983, %v1982
      %v2030 = vpack.c.b16 %v1985, %v1984
      %v2031 = vpack.c.b16 %v1987, %v1986
      %v2032 = vpack.c.b16 %v1989, %v1988
      %v2033 = vpack.c.b16 %v1991, %v1990
      %v2034 = vpack.c.b16 %v1993, %v1992
      %v2035 = vpack.c.b16 %v1995, %v1994
      %v2036 = vpack.c.b16 %v1997, %v1996
      %v2037 = vpack.c.b16 %v1999, %v1998
      %v2038 = vpack.c.b16 %v2001, %v2000
      %v2039 = vpack.c.b16 %v2003, %v2002
      %v2040 = vpack.c.b16 %v2005, %v2004
      %v2041 = vpack.c.b16 %v2007, %v2006
      %v2042 = vpack.c.b16 %v2009, %v2008
      %v2043 = vpack.c.b16 %v2011, %v2010
      %2044 = vrot.lane.b32.xlu0 %v2012, 60
      %v2045 = vpop.permute.xlu0 %2044
      %2046 = vrot.lane.b32.xlu0 %v2013, 60
      %v2047 = vpop.permute.xlu0 %2046
      %2048 = vrot.lane.b32.xlu0 %v2014, 60
      %v2049 = vpop.permute.xlu0 %2048
      %2050 = vrot.lane.b32.xlu0 %v2015, 60
      %v2051 = vpop.permute.xlu0 %2050
      %2052 = vrot.lane.b32.xlu0 %v2016, 60
      %v2053 = vpop.permute.xlu0 %2052
      %2054 = vrot.lane.b32.xlu0 %v2017, 60
      %v2055 = vpop.permute.xlu0 %2054
      %2056 = vrot.lane.b32.xlu0 %v2018, 60
      %v2057 = vpop.permute.xlu0 %2056
      %2058 = vrot.lane.b32.xlu0 %v2019, 60
      %v2059 = vpop.permute.xlu0 %2058
      %2060 = vrot.lane.b32.xlu0 %v2020, 60
      %v2061 = vpop.permute.xlu0 %2060
      %2062 = vrot.lane.b32.xlu0 %v2021, 60
      %v2063 = vpop.permute.xlu0 %2062
      %2064 = vrot.lane.b32.xlu0 %v2022, 60
      %v2065 = vpop.permute.xlu0 %2064
      %2066 = vrot.lane.b32.xlu0 %v2023, 60
      %v2067 = vpop.permute.xlu0 %2066
      %2068 = vrot.lane.b32.xlu0 %v2024, 60
      %v2069 = vpop.permute.xlu0 %2068
      %2070 = vrot.lane.b32.xlu0 %v2025, 60
      %v2071 = vpop.permute.xlu0 %2070
      %2072 = vrot.lane.b32.xlu0 %v2026, 60
      %v2073 = vpop.permute.xlu0 %2072
      %2074 = vrot.lane.b32.xlu0 %v2027, 60
      %v2075 = vpop.permute.xlu0 %2074
      %2076 = vrot.lane.b32.xlu0 %v2028, 60
      %v2077 = vpop.permute.xlu0 %2076
      %2078 = vrot.lane.b32.xlu0 %v2029, 60
      %v2079 = vpop.permute.xlu0 %2078
      %2080 = vrot.lane.b32.xlu0 %v2030, 60
      %v2081 = vpop.permute.xlu0 %2080
      %2082 = vrot.lane.b32.xlu0 %v2031, 60
      %v2083 = vpop.permute.xlu0 %2082
      %2084 = vrot.lane.b32.xlu0 %v2032, 60
      %v2085 = vpop.permute.xlu0 %2084
      %2086 = vrot.lane.b32.xlu0 %v2033, 60
      %v2087 = vpop.permute.xlu0 %2086
      %2088 = vrot.lane.b32.xlu0 %v2034, 60
      %v2089 = vpop.permute.xlu0 %2088
      %2090 = vrot.lane.b32.xlu0 %v2035, 60
      %v2091 = vpop.permute.xlu0 %2090
      %2092 = vrot.lane.b32.xlu0 %v2036, 60
      %v2093 = vpop.permute.xlu0 %2092
      %2094 = vrot.lane.b32.xlu0 %v2037, 60
      %v2095 = vpop.permute.xlu0 %2094
      %2096 = vrot.lane.b32.xlu0 %v2038, 60
      %v2097 = vpop.permute.xlu0 %2096
      %2098 = vrot.lane.b32.xlu0 %v2039, 60
      %v2099 = vpop.permute.xlu0 %2098
      %2100 = vrot.lane.b32.xlu0 %v2040, 60
      %v2101 = vpop.permute.xlu0 %2100
      %2102 = vrot.lane.b32.xlu0 %v2041, 60
      %v2103 = vpop.permute.xlu0 %2102
      %2104 = vrot.lane.b32.xlu0 %v2042, 60
      %v2105 = vpop.permute.xlu0 %2104
      %2106 = vrot.lane.b32.xlu0 %v2043, 60
      %v2107 = vpop.permute.xlu0 %2106
      %v2172 = vunpack.c.l.b16 %v630
      %v2173 = vunpack.c.l.b16 %v631
      %v2174 = vunpack.c.l.b16 %v632
      %v2175 = vunpack.c.l.b16 %v633
      %v2176 = vunpack.c.l.b16 %v634
      %v2177 = vunpack.c.l.b16 %v635
      %v2178 = vunpack.c.l.b16 %v636
      %v2179 = vunpack.c.l.b16 %v637
      %v2180 = vunpack.c.l.b16 %v638
      %v2181 = vunpack.c.l.b16 %v639
      %v2182 = vunpack.c.l.b16 %v640
      %v2183 = vunpack.c.l.b16 %v641
      %v2184 = vunpack.c.l.b16 %v642
      %v2185 = vunpack.c.l.b16 %v643
      %v2186 = vunpack.c.l.b16 %v644
      %v2187 = vunpack.c.l.b16 %v645
      %v2188 = vunpack.c.l.b16 %v646
      %v2189 = vunpack.c.l.b16 %v647
      %v2190 = vunpack.c.l.b16 %v648
      %v2191 = vunpack.c.l.b16 %v649
      %v2192 = vunpack.c.l.b16 %v650
      %v2193 = vunpack.c.l.b16 %v651
      %v2194 = vunpack.c.l.b16 %v652
      %v2195 = vunpack.c.l.b16 %v653
      %v2196 = vunpack.c.l.b16 %v654
      %v2197 = vunpack.c.l.b16 %v655
      %v2198 = vunpack.c.l.b16 %v656
      %v2199 = vunpack.c.l.b16 %v657
      %v2200 = vunpack.c.l.b16 %v658
      %v2201 = vunpack.c.l.b16 %v659
      %v2202 = vunpack.c.l.b16 %v660
      %v2203 = vunpack.c.l.b16 %v661
      %v2204 = vunpack.c.l.b16 %v662
      %v2205 = vunpack.c.l.b16 %v663
      %v2206 = vunpack.c.l.b16 %v664
      %v2207 = vunpack.c.l.b16 %v665
      %v2208 = vunpack.c.l.b16 %v666
      %v2209 = vunpack.c.l.b16 %v667
      %v2210 = vunpack.c.l.b16 %v668
      %v2211 = vunpack.c.l.b16 %v669
      %v2212 = vunpack.c.l.b16 %v670
      %v2213 = vunpack.c.l.b16 %v671
      %v2214 = vunpack.c.l.b16 %v672
      %v2215 = vunpack.c.l.b16 %v673
      %v2216 = vunpack.c.l.b16 %v674
      %v2217 = vunpack.c.l.b16 %v675
      %v2218 = vunpack.c.l.b16 %v676
      %v2219 = vunpack.c.l.b16 %v677
      %v2220 = vunpack.c.l.b16 %v678
      %v2221 = vunpack.c.l.b16 %v679
      %v2222 = vunpack.c.l.b16 %v680
      %v2223 = vunpack.c.l.b16 %v681
      %v2224 = vunpack.c.l.b16 %v682
      %v2225 = vunpack.c.l.b16 %v683
      %v2226 = vunpack.c.l.b16 %v684
      %v2227 = vunpack.c.l.b16 %v685
      %v2228 = vunpack.c.l.b16 %v686
      %v2229 = vunpack.c.l.b16 %v687
      %v2230 = vunpack.c.l.b16 %v688
      %v2231 = vunpack.c.l.b16 %v689
      %v2232 = vunpack.c.l.b16 %v690
      %v2233 = vunpack.c.l.b16 %v691
      %v2234 = vunpack.c.l.b16 %v692
      %v2235 = vunpack.c.l.b16 %v693
      %v2236 = vpack.c.b16 %v2173, %v2172
      %v2237 = vpack.c.b16 %v2175, %v2174
      %v2238 = vpack.c.b16 %v2177, %v2176
      %v2239 = vpack.c.b16 %v2179, %v2178
      %v2240 = vpack.c.b16 %v2181, %v2180
      %v2241 = vpack.c.b16 %v2183, %v2182
      %v2242 = vpack.c.b16 %v2185, %v2184
      %v2243 = vpack.c.b16 %v2187, %v2186
      %v2244 = vpack.c.b16 %v2189, %v2188
      %v2245 = vpack.c.b16 %v2191, %v2190
      %v2246 = vpack.c.b16 %v2193, %v2192
      %v2247 = vpack.c.b16 %v2195, %v2194
      %v2248 = vpack.c.b16 %v2197, %v2196
      %v2249 = vpack.c.b16 %v2199, %v2198
      %v2250 = vpack.c.b16 %v2201, %v2200
      %v2251 = vpack.c.b16 %v2203, %v2202
      %v2252 = vpack.c.b16 %v2205, %v2204
      %v2253 = vpack.c.b16 %v2207, %v2206
      %v2254 = vpack.c.b16 %v2209, %v2208
      %v2255 = vpack.c.b16 %v2211, %v2210
      %v2256 = vpack.c.b16 %v2213, %v2212
      %v2257 = vpack.c.b16 %v2215, %v2214
      %v2258 = vpack.c.b16 %v2217, %v2216
      %v2259 = vpack.c.b16 %v2219, %v2218
      %v2260 = vpack.c.b16 %v2221, %v2220
      %v2261 = vpack.c.b16 %v2223, %v2222
      %v2262 = vpack.c.b16 %v2225, %v2224
      %v2263 = vpack.c.b16 %v2227, %v2226
      %v2264 = vpack.c.b16 %v2229, %v2228
      %v2265 = vpack.c.b16 %v2231, %v2230
      %v2266 = vpack.c.b16 %v2233, %v2232
      %v2267 = vpack.c.b16 %v2235, %v2234
      %2268 = vrot.lane.b32.xlu0 %v2236, 72
      %v2269 = vpop.permute.xlu0 %2268
      %2270 = vrot.lane.b32.xlu0 %v2237, 72
      %v2271 = vpop.permute.xlu0 %2270
      %2272 = vrot.lane.b32.xlu0 %v2238, 72
      %v2273 = vpop.permute.xlu0 %2272
      %2274 = vrot.lane.b32.xlu0 %v2239, 72
      %v2275 = vpop.permute.xlu0 %2274
      %2276 = vrot.lane.b32.xlu0 %v2240, 72
      %v2277 = vpop.permute.xlu0 %2276
      %2278 = vrot.lane.b32.xlu0 %v2241, 72
      %v2279 = vpop.permute.xlu0 %2278
      %2280 = vrot.lane.b32.xlu0 %v2242, 72
      %v2281 = vpop.permute.xlu0 %2280
      %2282 = vrot.lane.b32.xlu0 %v2243, 72
      %v2283 = vpop.permute.xlu0 %2282
      %2284 = vrot.lane.b32.xlu0 %v2244, 72
      %v2285 = vpop.permute.xlu0 %2284
      %2286 = vrot.lane.b32.xlu0 %v2245, 72
      %v2287 = vpop.permute.xlu0 %2286
      %2288 = vrot.lane.b32.xlu0 %v2246, 72
      %v2289 = vpop.permute.xlu0 %2288
      %2290 = vrot.lane.b32.xlu0 %v2247, 72
      %v2291 = vpop.permute.xlu0 %2290
      %2292 = vrot.lane.b32.xlu0 %v2248, 72
      %v2293 = vpop.permute.xlu0 %2292
      %2294 = vrot.lane.b32.xlu0 %v2249, 72
      %v2295 = vpop.permute.xlu0 %2294
      %2296 = vrot.lane.b32.xlu0 %v2250, 72
      %v2297 = vpop.permute.xlu0 %2296
      %2298 = vrot.lane.b32.xlu0 %v2251, 72
      %v2299 = vpop.permute.xlu0 %2298
      %2300 = vrot.lane.b32.xlu0 %v2252, 72
      %v2301 = vpop.permute.xlu0 %2300
      %2302 = vrot.lane.b32.xlu0 %v2253, 72
      %v2303 = vpop.permute.xlu0 %2302
      %2304 = vrot.lane.b32.xlu0 %v2254, 72
      %v2305 = vpop.permute.xlu0 %2304
      %2306 = vrot.lane.b32.xlu0 %v2255, 72
      %v2307 = vpop.permute.xlu0 %2306
      %2308 = vrot.lane.b32.xlu0 %v2256, 72
      %v2309 = vpop.permute.xlu0 %2308
      %2310 = vrot.lane.b32.xlu0 %v2257, 72
      %v2311 = vpop.permute.xlu0 %2310
      %2312 = vrot.lane.b32.xlu0 %v2258, 72
      %v2313 = vpop.permute.xlu0 %2312
      %2314 = vrot.lane.b32.xlu0 %v2259, 72
      %v2315 = vpop.permute.xlu0 %2314
      %2316 = vrot.lane.b32.xlu0 %v2260, 72
      %v2317 = vpop.permute.xlu0 %2316
      %2318 = vrot.lane.b32.xlu0 %v2261, 72
      %v2319 = vpop.permute.xlu0 %2318
      %2320 = vrot.lane.b32.xlu0 %v2262, 72
      %v2321 = vpop.permute.xlu0 %2320
      %2322 = vrot.lane.b32.xlu0 %v2263, 72
      %v2323 = vpop.permute.xlu0 %2322
      %2324 = vrot.lane.b32.xlu0 %v2264, 72
      %v2325 = vpop.permute.xlu0 %2324
      %2326 = vrot.lane.b32.xlu0 %v2265, 72
      %v2327 = vpop.permute.xlu0 %2326
      %2328 = vrot.lane.b32.xlu0 %v2266, 72
      %v2329 = vpop.permute.xlu0 %2328
      %2330 = vrot.lane.b32.xlu0 %v2267, 72
      %v2331 = vpop.permute.xlu0 %2330
      %v2396 = vunpack.c.l.b16 %v697
      %v2397 = vunpack.c.l.b16 %v698
      %v2398 = vunpack.c.l.b16 %v699
      %v2399 = vunpack.c.l.b16 %v700
      %v2400 = vunpack.c.l.b16 %v701
      %v2401 = vunpack.c.l.b16 %v702
      %v2402 = vunpack.c.l.b16 %v703
      %v2403 = vunpack.c.l.b16 %v704
      %v2404 = vunpack.c.l.b16 %v705
      %v2405 = vunpack.c.l.b16 %v706
      %v2406 = vunpack.c.l.b16 %v707
      %v2407 = vunpack.c.l.b16 %v708
      %v2408 = vunpack.c.l.b16 %v709
      %v2409 = vunpack.c.l.b16 %v710
      %v2410 = vunpack.c.l.b16 %v711
      %v2411 = vunpack.c.l.b16 %v712
      %v2412 = vunpack.c.l.b16 %v713
      %v2413 = vunpack.c.l.b16 %v714
      %v2414 = vunpack.c.l.b16 %v715
      %v2415 = vunpack.c.l.b16 %v716
      %v2416 = vunpack.c.l.b16 %v717
      %v2417 = vunpack.c.l.b16 %v718
      %v2418 = vunpack.c.l.b16 %v719
      %v2419 = vunpack.c.l.b16 %v720
      %v2420 = vunpack.c.l.b16 %v721
      %v2421 = vunpack.c.l.b16 %v722
      %v2422 = vunpack.c.l.b16 %v723
      %v2423 = vunpack.c.l.b16 %v724
      %v2424 = vunpack.c.l.b16 %v725
      %v2425 = vunpack.c.l.b16 %v726
      %v2426 = vunpack.c.l.b16 %v727
      %v2427 = vunpack.c.l.b16 %v728
      %v2428 = vunpack.c.l.b16 %v729
      %v2429 = vunpack.c.l.b16 %v730
      %v2430 = vunpack.c.l.b16 %v731
      %v2431 = vunpack.c.l.b16 %v732
      %v2432 = vunpack.c.l.b16 %v733
      %v2433 = vunpack.c.l.b16 %v734
      %v2434 = vunpack.c.l.b16 %v735
      %v2435 = vunpack.c.l.b16 %v736
      %v2436 = vunpack.c.l.b16 %v737
      %v2437 = vunpack.c.l.b16 %v738
      %v2438 = vunpack.c.l.b16 %v739
      %v2439 = vunpack.c.l.b16 %v740
      %v2440 = vunpack.c.l.b16 %v741
      %v2441 = vunpack.c.l.b16 %v742
      %v2442 = vunpack.c.l.b16 %v743
      %v2443 = vunpack.c.l.b16 %v744
      %v2444 = vunpack.c.l.b16 %v745
      %v2445 = vunpack.c.l.b16 %v746
      %v2446 = vunpack.c.l.b16 %v747
      %v2447 = vunpack.c.l.b16 %v748
      %v2448 = vunpack.c.l.b16 %v749
      %v2449 = vunpack.c.l.b16 %v750
      %v2450 = vunpack.c.l.b16 %v751
      %v2451 = vunpack.c.l.b16 %v752
      %v2452 = vunpack.c.l.b16 %v753
      %v2453 = vunpack.c.l.b16 %v754
      %v2454 = vunpack.c.l.b16 %v755
      %v2455 = vunpack.c.l.b16 %v756
      %v2456 = vunpack.c.l.b16 %v757
      %v2457 = vunpack.c.l.b16 %v758
      %v2458 = vunpack.c.l.b16 %v759
      %v2459 = vunpack.c.l.b16 %v760
      %v2460 = vpack.c.b16 %v2397, %v2396
      %v2461 = vpack.c.b16 %v2399, %v2398
      %v2462 = vpack.c.b16 %v2401, %v2400
      %v2463 = vpack.c.b16 %v2403, %v2402
      %v2464 = vpack.c.b16 %v2405, %v2404
      %v2465 = vpack.c.b16 %v2407, %v2406
      %v2466 = vpack.c.b16 %v2409, %v2408
      %v2467 = vpack.c.b16 %v2411, %v2410
      %v2468 = vpack.c.b16 %v2413, %v2412
      %v2469 = vpack.c.b16 %v2415, %v2414
      %v2470 = vpack.c.b16 %v2417, %v2416
      %v2471 = vpack.c.b16 %v2419, %v2418
      %v2472 = vpack.c.b16 %v2421, %v2420
      %v2473 = vpack.c.b16 %v2423, %v2422
      %v2474 = vpack.c.b16 %v2425, %v2424
      %v2475 = vpack.c.b16 %v2427, %v2426
      %v2476 = vpack.c.b16 %v2429, %v2428
      %v2477 = vpack.c.b16 %v2431, %v2430
      %v2478 = vpack.c.b16 %v2433, %v2432
      %v2479 = vpack.c.b16 %v2435, %v2434
      %v2480 = vpack.c.b16 %v2437, %v2436
      %v2481 = vpack.c.b16 %v2439, %v2438
      %v2482 = vpack.c.b16 %v2441, %v2440
      %v2483 = vpack.c.b16 %v2443, %v2442
      %v2484 = vpack.c.b16 %v2445, %v2444
      %v2485 = vpack.c.b16 %v2447, %v2446
      %v2486 = vpack.c.b16 %v2449, %v2448
      %v2487 = vpack.c.b16 %v2451, %v2450
      %v2488 = vpack.c.b16 %v2453, %v2452
      %v2489 = vpack.c.b16 %v2455, %v2454
      %v2490 = vpack.c.b16 %v2457, %v2456
      %v2491 = vpack.c.b16 %v2459, %v2458
      %2492 = vrot.lane.b32.xlu0 %v2460, 84
      %v2493 = vpop.permute.xlu0 %2492
      %2494 = vrot.lane.b32.xlu0 %v2461, 84
      %v2495 = vpop.permute.xlu0 %2494
      %2496 = vrot.lane.b32.xlu0 %v2462, 84
      %v2497 = vpop.permute.xlu0 %2496
      %2498 = vrot.lane.b32.xlu0 %v2463, 84
      %v2499 = vpop.permute.xlu0 %2498
      %2500 = vrot.lane.b32.xlu0 %v2464, 84
      %v2501 = vpop.permute.xlu0 %2500
      %2502 = vrot.lane.b32.xlu0 %v2465, 84
      %v2503 = vpop.permute.xlu0 %2502
      %2504 = vrot.lane.b32.xlu0 %v2466, 84
      %v2505 = vpop.permute.xlu0 %2504
      %2506 = vrot.lane.b32.xlu0 %v2467, 84
      %v2507 = vpop.permute.xlu0 %2506
      %2508 = vrot.lane.b32.xlu0 %v2468, 84
      %v2509 = vpop.permute.xlu0 %2508
      %2510 = vrot.lane.b32.xlu0 %v2469, 84
      %v2511 = vpop.permute.xlu0 %2510
      %2512 = vrot.lane.b32.xlu0 %v2470, 84
      %v2513 = vpop.permute.xlu0 %2512
      %2514 = vrot.lane.b32.xlu0 %v2471, 84
      %v2515 = vpop.permute.xlu0 %2514
      %2516 = vrot.lane.b32.xlu0 %v2472, 84
      %v2517 = vpop.permute.xlu0 %2516
      %2518 = vrot.lane.b32.xlu0 %v2473, 84
      %v2519 = vpop.permute.xlu0 %2518
      %2520 = vrot.lane.b32.xlu0 %v2474, 84
      %v2521 = vpop.permute.xlu0 %2520
      %2522 = vrot.lane.b32.xlu0 %v2475, 84
      %v2523 = vpop.permute.xlu0 %2522
      %2524 = vrot.lane.b32.xlu0 %v2476, 84
      %v2525 = vpop.permute.xlu0 %2524
      %2526 = vrot.lane.b32.xlu0 %v2477, 84
      %v2527 = vpop.permute.xlu0 %2526
      %2528 = vrot.lane.b32.xlu0 %v2478, 84
      %v2529 = vpop.permute.xlu0 %2528
      %2530 = vrot.lane.b32.xlu0 %v2479, 84
      %v2531 = vpop.permute.xlu0 %2530
      %2532 = vrot.lane.b32.xlu0 %v2480, 84
      %v2533 = vpop.permute.xlu0 %2532
      %2534 = vrot.lane.b32.xlu0 %v2481, 84
      %v2535 = vpop.permute.xlu0 %2534
      %2536 = vrot.lane.b32.xlu0 %v2482, 84
      %v2537 = vpop.permute.xlu0 %2536
      %2538 = vrot.lane.b32.xlu0 %v2483, 84
      %v2539 = vpop.permute.xlu0 %2538
      %2540 = vrot.lane.b32.xlu0 %v2484, 84
      %v2541 = vpop.permute.xlu0 %2540
      %2542 = vrot.lane.b32.xlu0 %v2485, 84
      %v2543 = vpop.permute.xlu0 %2542
      %2544 = vrot.lane.b32.xlu0 %v2486, 84
      %v2545 = vpop.permute.xlu0 %2544
      %2546 = vrot.lane.b32.xlu0 %v2487, 84
      %v2547 = vpop.permute.xlu0 %2546
      %2548 = vrot.lane.b32.xlu0 %v2488, 84
      %v2549 = vpop.permute.xlu0 %2548
      %2550 = vrot.lane.b32.xlu0 %v2489, 84
      %v2551 = vpop.permute.xlu0 %2550
      %2552 = vrot.lane.b32.xlu0 %v2490, 84
      %v2553 = vpop.permute.xlu0 %2552
      %2554 = vrot.lane.b32.xlu0 %v2491, 84
      %v2555 = vpop.permute.xlu0 %2554
      %v2620 = vunpack.c.l.b16 %v764
      %v2621 = vunpack.c.l.b16 %v765
      %v2622 = vunpack.c.l.b16 %v766
      %v2623 = vunpack.c.l.b16 %v767
      %v2624 = vunpack.c.l.b16 %v768
      %v2625 = vunpack.c.l.b16 %v769
      %v2626 = vunpack.c.l.b16 %v770
      %v2627 = vunpack.c.l.b16 %v771
      %v2628 = vunpack.c.l.b16 %v772
      %v2629 = vunpack.c.l.b16 %v773
      %v2630 = vunpack.c.l.b16 %v774
      %v2631 = vunpack.c.l.b16 %v775
      %v2632 = vunpack.c.l.b16 %v776
      %v2633 = vunpack.c.l.b16 %v777
      %v2634 = vunpack.c.l.b16 %v778
      %v2635 = vunpack.c.l.b16 %v779
      %v2636 = vunpack.c.l.b16 %v780
      %v2637 = vunpack.c.l.b16 %v781
      %v2638 = vunpack.c.l.b16 %v782
      %v2639 = vunpack.c.l.b16 %v783
      %v2640 = vunpack.c.l.b16 %v784
      %v2641 = vunpack.c.l.b16 %v785
      %v2642 = vunpack.c.l.b16 %v786
      %v2643 = vunpack.c.l.b16 %v787
      %v2644 = vunpack.c.l.b16 %v788
      %v2645 = vunpack.c.l.b16 %v789
      %v2646 = vunpack.c.l.b16 %v790
      %v2647 = vunpack.c.l.b16 %v791
      %v2648 = vunpack.c.l.b16 %v792
      %v2649 = vunpack.c.l.b16 %v793
      %v2650 = vunpack.c.l.b16 %v794
      %v2651 = vunpack.c.l.b16 %v795
      %v2652 = vunpack.c.l.b16 %v796
      %v2653 = vunpack.c.l.b16 %v797
      %v2654 = vunpack.c.l.b16 %v798
      %v2655 = vunpack.c.l.b16 %v799
      %v2656 = vunpack.c.l.b16 %v800
      %v2657 = vunpack.c.l.b16 %v801
      %v2658 = vunpack.c.l.b16 %v802
      %v2659 = vunpack.c.l.b16 %v803
      %v2660 = vunpack.c.l.b16 %v804
      %v2661 = vunpack.c.l.b16 %v805
      %v2662 = vunpack.c.l.b16 %v806
      %v2663 = vunpack.c.l.b16 %v807
      %v2664 = vunpack.c.l.b16 %v808
      %v2665 = vunpack.c.l.b16 %v809
      %v2666 = vunpack.c.l.b16 %v810
      %v2667 = vunpack.c.l.b16 %v811
      %v2668 = vunpack.c.l.b16 %v812
      %v2669 = vunpack.c.l.b16 %v813
      %v2670 = vunpack.c.l.b16 %v814
      %v2671 = vunpack.c.l.b16 %v815
      %v2672 = vunpack.c.l.b16 %v816
      %v2673 = vunpack.c.l.b16 %v817
      %v2674 = vunpack.c.l.b16 %v818
      %v2675 = vunpack.c.l.b16 %v819
      %v2676 = vunpack.c.l.b16 %v820
      %v2677 = vunpack.c.l.b16 %v821
      %v2678 = vunpack.c.l.b16 %v822
      %v2679 = vunpack.c.l.b16 %v823
      %v2680 = vunpack.c.l.b16 %v824
      %v2681 = vunpack.c.l.b16 %v825
      %v2682 = vunpack.c.l.b16 %v826
      %v2683 = vunpack.c.l.b16 %v827
      %v2684 = vpack.c.b16 %v2621, %v2620
      %v2685 = vpack.c.b16 %v2623, %v2622
      %v2686 = vpack.c.b16 %v2625, %v2624
      %v2687 = vpack.c.b16 %v2627, %v2626
      %v2688 = vpack.c.b16 %v2629, %v2628
      %v2689 = vpack.c.b16 %v2631, %v2630
      %v2690 = vpack.c.b16 %v2633, %v2632
      %v2691 = vpack.c.b16 %v2635, %v2634
      %v2692 = vpack.c.b16 %v2637, %v2636
      %v2693 = vpack.c.b16 %v2639, %v2638
      %v2694 = vpack.c.b16 %v2641, %v2640
      %v2695 = vpack.c.b16 %v2643, %v2642
      %v2696 = vpack.c.b16 %v2645, %v2644
      %v2697 = vpack.c.b16 %v2647, %v2646
      %v2698 = vpack.c.b16 %v2649, %v2648
      %v2699 = vpack.c.b16 %v2651, %v2650
      %v2700 = vpack.c.b16 %v2653, %v2652
      %v2701 = vpack.c.b16 %v2655, %v2654
      %v2702 = vpack.c.b16 %v2657, %v2656
      %v2703 = vpack.c.b16 %v2659, %v2658
      %v2704 = vpack.c.b16 %v2661, %v2660
      %v2705 = vpack.c.b16 %v2663, %v2662
      %v2706 = vpack.c.b16 %v2665, %v2664
      %v2707 = vpack.c.b16 %v2667, %v2666
      %v2708 = vpack.c.b16 %v2669, %v2668
      %v2709 = vpack.c.b16 %v2671, %v2670
      %v2710 = vpack.c.b16 %v2673, %v2672
      %v2711 = vpack.c.b16 %v2675, %v2674
      %v2712 = vpack.c.b16 %v2677, %v2676
      %v2713 = vpack.c.b16 %v2679, %v2678
      %v2714 = vpack.c.b16 %v2681, %v2680
      %v2715 = vpack.c.b16 %v2683, %v2682
      %2716 = vrot.lane.b32.xlu0 %v2684, 96
      %v2717 = vpop.permute.xlu0 %2716
      %2718 = vrot.lane.b32.xlu0 %v2685, 96
      %v2719 = vpop.permute.xlu0 %2718
      %2720 = vrot.lane.b32.xlu0 %v2686, 96
      %v2721 = vpop.permute.xlu0 %2720
      %2722 = vrot.lane.b32.xlu0 %v2687, 96
      %v2723 = vpop.permute.xlu0 %2722
      %2724 = vrot.lane.b32.xlu0 %v2688, 96
      %v2725 = vpop.permute.xlu0 %2724
      %2726 = vrot.lane.b32.xlu0 %v2689, 96
      %v2727 = vpop.permute.xlu0 %2726
      %2728 = vrot.lane.b32.xlu0 %v2690, 96
      %v2729 = vpop.permute.xlu0 %2728
      %2730 = vrot.lane.b32.xlu0 %v2691, 96
      %v2731 = vpop.permute.xlu0 %2730
      %2732 = vrot.lane.b32.xlu0 %v2692, 96
      %v2733 = vpop.permute.xlu0 %2732
      %2734 = vrot.lane.b32.xlu0 %v2693, 96
      %v2735 = vpop.permute.xlu0 %2734
      %2736 = vrot.lane.b32.xlu0 %v2694, 96
      %v2737 = vpop.permute.xlu0 %2736
      %2738 = vrot.lane.b32.xlu0 %v2695, 96
      %v2739 = vpop.permute.xlu0 %2738
      %2740 = vrot.lane.b32.xlu0 %v2696, 96
      %v2741 = vpop.permute.xlu0 %2740
      %2742 = vrot.lane.b32.xlu0 %v2697, 96
      %v2743 = vpop.permute.xlu0 %2742
      %2744 = vrot.lane.b32.xlu0 %v2698, 96
      %v2745 = vpop.permute.xlu0 %2744
      %2746 = vrot.lane.b32.xlu0 %v2699, 96
      %v2747 = vpop.permute.xlu0 %2746
      %2748 = vrot.lane.b32.xlu0 %v2700, 96
      %v2749 = vpop.permute.xlu0 %2748
      %2750 = vrot.lane.b32.xlu0 %v2701, 96
      %v2751 = vpop.permute.xlu0 %2750
      %2752 = vrot.lane.b32.xlu0 %v2702, 96
      %v2753 = vpop.permute.xlu0 %2752
      %2754 = vrot.lane.b32.xlu0 %v2703, 96
      %v2755 = vpop.permute.xlu0 %2754
      %2756 = vrot.lane.b32.xlu0 %v2704, 96
      %v2757 = vpop.permute.xlu0 %2756
      %2758 = vrot.lane.b32.xlu0 %v2705, 96
      %v2759 = vpop.permute.xlu0 %2758
      %2760 = vrot.lane.b32.xlu0 %v2706, 96
      %v2761 = vpop.permute.xlu0 %2760
      %2762 = vrot.lane.b32.xlu0 %v2707, 96
      %v2763 = vpop.permute.xlu0 %2762
      %2764 = vrot.lane.b32.xlu0 %v2708, 96
      %v2765 = vpop.permute.xlu0 %2764
      %2766 = vrot.lane.b32.xlu0 %v2709, 96
      %v2767 = vpop.permute.xlu0 %2766
      %2768 = vrot.lane.b32.xlu0 %v2710, 96
      %v2769 = vpop.permute.xlu0 %2768
      %2770 = vrot.lane.b32.xlu0 %v2711, 96
      %v2771 = vpop.permute.xlu0 %2770
      %2772 = vrot.lane.b32.xlu0 %v2712, 96
      %v2773 = vpop.permute.xlu0 %2772
      %2774 = vrot.lane.b32.xlu0 %v2713, 96
      %v2775 = vpop.permute.xlu0 %2774
      %2776 = vrot.lane.b32.xlu0 %v2714, 96
      %v2777 = vpop.permute.xlu0 %2776
      %2778 = vrot.lane.b32.xlu0 %v2715, 96
      %v2779 = vpop.permute.xlu0 %2778
      %vm2780 = vcmask 97280
      %v2783 = vsel %vm2780, %v956, %v1149
      %v2786 = vsel %vm2780, %v957, %v1151
      %v2789 = vsel %vm2780, %v958, %v1153
      %v2792 = vsel %vm2780, %v959, %v1155
      %v2795 = vsel %vm2780, %v960, %v1157
      %v2798 = vsel %vm2780, %v961, %v1159
      %v2801 = vsel %vm2780, %v962, %v1161
      %v2804 = vsel %vm2780, %v963, %v1163
      %v2807 = vsel %vm2780, %v964, %v1165
      %v2810 = vsel %vm2780, %v965, %v1167
      %v2813 = vsel %vm2780, %v966, %v1169
      %v2816 = vsel %vm2780, %v967, %v1171
      %v2819 = vsel %vm2780, %v968, %v1173
      %v2822 = vsel %vm2780, %v969, %v1175
      %v2825 = vsel %vm2780, %v970, %v1177
      %v2828 = vsel %vm2780, %v971, %v1179
      %v2831 = vsel %vm2780, %v972, %v1181
      %v2834 = vsel %vm2780, %v973, %v1183
      %v2837 = vsel %vm2780, %v974, %v1185
      %v2840 = vsel %vm2780, %v975, %v1187
      %v2843 = vsel %vm2780, %v976, %v1189
      %v2846 = vsel %vm2780, %v977, %v1191
      %v2849 = vsel %vm2780, %v978, %v1193
      %v2852 = vsel %vm2780, %v979, %v1195
      %v2855 = vsel %vm2780, %v980, %v1197
      %v2858 = vsel %vm2780, %v981, %v1199
      %v2861 = vsel %vm2780, %v982, %v1201
      %v2864 = vsel %vm2780, %v983, %v1203
      %v2867 = vsel %vm2780, %v984, %v1205
      %v2870 = vsel %vm2780, %v985, %v1207
      %v2873 = vsel %vm2780, %v986, %v1209
      %v2876 = vsel %vm2780, %v987, %v1211
      %vm2877 = vcmask 195584
      %v2879 = vsel %vm2877, %v2783, %v1373
      %v2881 = vsel %vm2877, %v2786, %v1375
      %v2883 = vsel %vm2877, %v2789, %v1377
      %v2885 = vsel %vm2877, %v2792, %v1379
      %v2887 = vsel %vm2877, %v2795, %v1381
      %v2889 = vsel %vm2877, %v2798, %v1383
      %v2891 = vsel %vm2877, %v2801, %v1385
      %v2893 = vsel %vm2877, %v2804, %v1387
      %v2895 = vsel %vm2877, %v2807, %v1389
      %v2897 = vsel %vm2877, %v2810, %v1391
      %v2899 = vsel %vm2877, %v2813, %v1393
      %v2901 = vsel %vm2877, %v2816, %v1395
      %v2903 = vsel %vm2877, %v2819, %v1397
      %v2905 = vsel %vm2877, %v2822, %v1399
      %v2907 = vsel %vm2877, %v2825, %v1401
      %v2909 = vsel %vm2877, %v2828, %v1403
      %v2911 = vsel %vm2877, %v2831, %v1405
      %v2913 = vsel %vm2877, %v2834, %v1407
      %v2915 = vsel %vm2877, %v2837, %v1409
      %v2917 = vsel %vm2877, %v2840, %v1411
      %v2919 = vsel %vm2877, %v2843, %v1413
      %v2921 = vsel %vm2877, %v2846, %v1415
      %v2923 = vsel %vm2877, %v2849, %v1417
      %v2925 = vsel %vm2877, %v2852, %v1419
      %v2927 = vsel %vm2877, %v2855, %v1421
      %v2929 = vsel %vm2877, %v2858, %v1423
      %v2931 = vsel %vm2877, %v2861, %v1425
      %v2933 = vsel %vm2877, %v2864, %v1427
      %v2935 = vsel %vm2877, %v2867, %v1429
      %v2937 = vsel %vm2877, %v2870, %v1431
      %v2939 = vsel %vm2877, %v2873, %v1433
      %v2941 = vsel %vm2877, %v2876, %v1435
      %vm2942 = vcmask 293888
      %v2944 = vsel %vm2942, %v2879, %v1597
      %v2946 = vsel %vm2942, %v2881, %v1599
      %v2948 = vsel %vm2942, %v2883, %v1601
      %v2950 = vsel %vm2942, %v2885, %v1603
      %v2952 = vsel %vm2942, %v2887, %v1605
      %v2954 = vsel %vm2942, %v2889, %v1607
      %v2956 = vsel %vm2942, %v2891, %v1609
      %v2958 = vsel %vm2942, %v2893, %v1611
      %v2960 = vsel %vm2942, %v2895, %v1613
      %v2962 = vsel %vm2942, %v2897, %v1615
      %v2964 = vsel %vm2942, %v2899, %v1617
      %v2966 = vsel %vm2942, %v2901, %v1619
      %v2968 = vsel %vm2942, %v2903, %v1621
      %v2970 = vsel %vm2942, %v2905, %v1623
      %v2972 = vsel %vm2942, %v2907, %v1625
      %v2974 = vsel %vm2942, %v2909, %v1627
      %v2976 = vsel %vm2942, %v2911, %v1629
      %v2978 = vsel %vm2942, %v2913, %v1631
      %v2980 = vsel %vm2942, %v2915, %v1633
      %v2982 = vsel %vm2942, %v2917, %v1635
      %v2984 = vsel %vm2942, %v2919, %v1637
      %v2986 = vsel %vm2942, %v2921, %v1639
      %v2988 = vsel %vm2942, %v2923, %v1641
      %v2990 = vsel %vm2942, %v2925, %v1643
      %v2992 = vsel %vm2942, %v2927, %v1645
      %v2994 = vsel %vm2942, %v2929, %v1647
      %v2996 = vsel %vm2942, %v2931, %v1649
      %v2998 = vsel %vm2942, %v2933, %v1651
      %v3000 = vsel %vm2942, %v2935, %v1653
      %v3002 = vsel %vm2942, %v2937, %v1655
      %v3004 = vsel %vm2942, %v2939, %v1657
      %v3006 = vsel %vm2942, %v2941, %v1659
      %vm3007 = vcmask 392192
      %v3009 = vsel %vm3007, %v2944, %v1821
      %v3011 = vsel %vm3007, %v2946, %v1823
      %v3013 = vsel %vm3007, %v2948, %v1825
      %v3015 = vsel %vm3007, %v2950, %v1827
      %v3017 = vsel %vm3007, %v2952, %v1829
      %v3019 = vsel %vm3007, %v2954, %v1831
      %v3021 = vsel %vm3007, %v2956, %v1833
      %v3023 = vsel %vm3007, %v2958, %v1835
      %v3025 = vsel %vm3007, %v2960, %v1837
      %v3027 = vsel %vm3007, %v2962, %v1839
      %v3029 = vsel %vm3007, %v2964, %v1841
      %v3031 = vsel %vm3007, %v2966, %v1843
      %v3033 = vsel %vm3007, %v2968, %v1845
      %v3035 = vsel %vm3007, %v2970, %v1847
      %v3037 = vsel %vm3007, %v2972, %v1849
      %v3039 = vsel %vm3007, %v2974, %v1851
      %v3041 = vsel %vm3007, %v2976, %v1853
      %v3043 = vsel %vm3007, %v2978, %v1855
      %v3045 = vsel %vm3007, %v2980, %v1857
      %v3047 = vsel %vm3007, %v2982, %v1859
      %v3049 = vsel %vm3007, %v2984, %v1861
      %v3051 = vsel %vm3007, %v2986, %v1863
      %v3053 = vsel %vm3007, %v2988, %v1865
      %v3055 = vsel %vm3007, %v2990, %v1867
      %v3057 = vsel %vm3007, %v2992, %v1869
      %v3059 = vsel %vm3007, %v2994, %v1871
      %v3061 = vsel %vm3007, %v2996, %v1873
      %v3063 = vsel %vm3007, %v2998, %v1875
      %v3065 = vsel %vm3007, %v3000, %v1877
      %v3067 = vsel %vm3007, %v3002, %v1879
      %v3069 = vsel %vm3007, %v3004, %v1881
      %v3071 = vsel %vm3007, %v3006, %v1883
      %vm3072 = vcmask 490496
      %v3074 = vsel %vm3072, %v3009, %v2045
      %v3076 = vsel %vm3072, %v3011, %v2047
      %v3078 = vsel %vm3072, %v3013, %v2049
      %v3080 = vsel %vm3072, %v3015, %v2051
      %v3082 = vsel %vm3072, %v3017, %v2053
      %v3084 = vsel %vm3072, %v3019, %v2055
      %v3086 = vsel %vm3072, %v3021, %v2057
      %v3088 = vsel %vm3072, %v3023, %v2059
      %v3090 = vsel %vm3072, %v3025, %v2061
      %v3092 = vsel %vm3072, %v3027, %v2063
      %v3094 = vsel %vm3072, %v3029, %v2065
      %v3096 = vsel %vm3072, %v3031, %v2067
      %v3098 = vsel %vm3072, %v3033, %v2069
      %v3100 = vsel %vm3072, %v3035, %v2071
      %v3102 = vsel %vm3072, %v3037, %v2073
      %v3104 = vsel %vm3072, %v3039, %v2075
      %v3106 = vsel %vm3072, %v3041, %v2077
      %v3108 = vsel %vm3072, %v3043, %v2079
      %v3110 = vsel %vm3072, %v3045, %v2081
      %v3112 = vsel %vm3072, %v3047, %v2083
      %v3114 = vsel %vm3072, %v3049, %v2085
      %v3116 = vsel %vm3072, %v3051, %v2087
      %v3118 = vsel %vm3072, %v3053, %v2089
      %v3120 = vsel %vm3072, %v3055, %v2091
      %v3122 = vsel %vm3072, %v3057, %v2093
      %v3124 = vsel %vm3072, %v3059, %v2095
      %v3126 = vsel %vm3072, %v3061, %v2097
      %v3128 = vsel %vm3072, %v3063, %v2099
      %v3130 = vsel %vm3072, %v3065, %v2101
      %v3132 = vsel %vm3072, %v3067, %v2103
      %v3134 = vsel %vm3072, %v3069, %v2105
      %v3136 = vsel %vm3072, %v3071, %v2107
      %vm3137 = vcmask 588800
      %v3139 = vsel %vm3137, %v3074, %v2269
      %v3141 = vsel %vm3137, %v3076, %v2271
      %v3143 = vsel %vm3137, %v3078, %v2273
      %v3145 = vsel %vm3137, %v3080, %v2275
      %v3147 = vsel %vm3137, %v3082, %v2277
      %v3149 = vsel %vm3137, %v3084, %v2279
      %v3151 = vsel %vm3137, %v3086, %v2281
      %v3153 = vsel %vm3137, %v3088, %v2283
      %v3155 = vsel %vm3137, %v3090, %v2285
      %v3157 = vsel %vm3137, %v3092, %v2287
      %v3159 = vsel %vm3137, %v3094, %v2289
      %v3161 = vsel %vm3137, %v3096, %v2291
      %v3163 = vsel %vm3137, %v3098, %v2293
      %v3165 = vsel %vm3137, %v3100, %v2295
      %v3167 = vsel %vm3137, %v3102, %v2297
      %v3169 = vsel %vm3137, %v3104, %v2299
      %v3171 = vsel %vm3137, %v3106, %v2301
      %v3173 = vsel %vm3137, %v3108, %v2303
      %v3175 = vsel %vm3137, %v3110, %v2305
      %v3177 = vsel %vm3137, %v3112, %v2307
      %v3179 = vsel %vm3137, %v3114, %v2309
      %v3181 = vsel %vm3137, %v3116, %v2311
      %v3183 = vsel %vm3137, %v3118, %v2313
      %v3185 = vsel %vm3137, %v3120, %v2315
      %v3187 = vsel %vm3137, %v3122, %v2317
      %v3189 = vsel %vm3137, %v3124, %v2319
      %v3191 = vsel %vm3137, %v3126, %v2321
      %v3193 = vsel %vm3137, %v3128, %v2323
      %v3195 = vsel %vm3137, %v3130, %v2325
      %v3197 = vsel %vm3137, %v3132, %v2327
      %v3199 = vsel %vm3137, %v3134, %v2329
      %v3201 = vsel %vm3137, %v3136, %v2331
      %vm3202 = vcmask 687104
      %v3204 = vsel %vm3202, %v3139, %v2493
      %v3206 = vsel %vm3202, %v3141, %v2495
      %v3208 = vsel %vm3202, %v3143, %v2497
      %v3210 = vsel %vm3202, %v3145, %v2499
      %v3212 = vsel %vm3202, %v3147, %v2501
      %v3214 = vsel %vm3202, %v3149, %v2503
      %v3216 = vsel %vm3202, %v3151, %v2505
      %v3218 = vsel %vm3202, %v3153, %v2507
      %v3220 = vsel %vm3202, %v3155, %v2509
      %v3222 = vsel %vm3202, %v3157, %v2511
      %v3224 = vsel %vm3202, %v3159, %v2513
      %v3226 = vsel %vm3202, %v3161, %v2515
      %v3228 = vsel %vm3202, %v3163, %v2517
      %v3230 = vsel %vm3202, %v3165, %v2519
      %v3232 = vsel %vm3202, %v3167, %v2521
      %v3234 = vsel %vm3202, %v3169, %v2523
      %v3236 = vsel %vm3202, %v3171, %v2525
      %v3238 = vsel %vm3202, %v3173, %v2527
      %v3240 = vsel %vm3202, %v3175, %v2529
      %v3242 = vsel %vm3202, %v3177, %v2531
      %v3244 = vsel %vm3202, %v3179, %v2533
      %v3246 = vsel %vm3202, %v3181, %v2535
      %v3248 = vsel %vm3202, %v3183, %v2537
      %v3250 = vsel %vm3202, %v3185, %v2539
      %v3252 = vsel %vm3202, %v3187, %v2541
      %v3254 = vsel %vm3202, %v3189, %v2543
      %v3256 = vsel %vm3202, %v3191, %v2545
      %v3258 = vsel %vm3202, %v3193, %v2547
      %v3260 = vsel %vm3202, %v3195, %v2549
      %v3262 = vsel %vm3202, %v3197, %v2551
      %v3264 = vsel %vm3202, %v3199, %v2553
      %v3266 = vsel %vm3202, %v3201, %v2555
      %vm3267 = vcmask 785408
      %v3269 = vsel %vm3267, %v3204, %v2717
      %v3271 = vsel %vm3267, %v3206, %v2719
      %v3273 = vsel %vm3267, %v3208, %v2721
      %v3275 = vsel %vm3267, %v3210, %v2723
      %v3277 = vsel %vm3267, %v3212, %v2725
      %v3279 = vsel %vm3267, %v3214, %v2727
      %v3281 = vsel %vm3267, %v3216, %v2729
      %v3283 = vsel %vm3267, %v3218, %v2731
      %v3285 = vsel %vm3267, %v3220, %v2733
      %v3287 = vsel %vm3267, %v3222, %v2735
      %v3289 = vsel %vm3267, %v3224, %v2737
      %v3291 = vsel %vm3267, %v3226, %v2739
      %v3293 = vsel %vm3267, %v3228, %v2741
      %v3295 = vsel %vm3267, %v3230, %v2743
      %v3297 = vsel %vm3267, %v3232, %v2745
      %v3299 = vsel %vm3267, %v3234, %v2747
      %v3301 = vsel %vm3267, %v3236, %v2749
      %v3303 = vsel %vm3267, %v3238, %v2751
      %v3305 = vsel %vm3267, %v3240, %v2753
      %v3307 = vsel %vm3267, %v3242, %v2755
      %v3309 = vsel %vm3267, %v3244, %v2757
      %v3311 = vsel %vm3267, %v3246, %v2759
      %v3313 = vsel %vm3267, %v3248, %v2761
      %v3315 = vsel %vm3267, %v3250, %v2763
      %v3317 = vsel %vm3267, %v3252, %v2765
      %v3319 = vsel %vm3267, %v3254, %v2767
      %v3321 = vsel %vm3267, %v3256, %v2769
      %v3323 = vsel %vm3267, %v3258, %v2771
      %v3325 = vsel %vm3267, %v3260, %v2773
      %v3327 = vsel %vm3267, %v3262, %v2775
      %v3329 = vsel %vm3267, %v3264, %v2777
      %v3331 = vsel %vm3267, %v3266, %v2779
      %v3332 = vld [vmem:[%s1] sm:$0xf]
      %v3333 = vld [vmem:[%s1 + $0x4] sm:$0xf]
      %v3334 = vld [vmem:[%s1 + $0x8] sm:$0xf]
      %v3335 = vld [vmem:[%s1 + $0xc] sm:$0xf]
      %v3336 = vld [vmem:[%s1 + $0x10] sm:$0xf]
      %v3337 = vld [vmem:[%s1 + $0x14] sm:$0xf]
      %v3338 = vld [vmem:[%s1 + $0x18] sm:$0xf]
      %v3339 = vld [vmem:[%s1 + $0x1c] sm:$0xf]
      %v3340 = vld [vmem:[%s1 + $0x20] sm:$0xf]
      %v3341 = vld [vmem:[%s1 + $0x24] sm:$0xf]
      %v3342 = vld [vmem:[%s1 + $0x28] sm:$0xf]
      %v3343 = vld [vmem:[%s1 + $0x2c] sm:$0xf]
      %v3344 = vld [vmem:[%s1 + $0x30] sm:$0xf]
      %v3345 = vld [vmem:[%s1 + $0x34] sm:$0x3]
      %v3360 = vunpack.c.l.b16 %v3332
      %v3361 = vunpack.c.l.b16 %v3333
      %v3362 = vunpack.c.l.b16 %v3334
      %v3363 = vunpack.c.l.b16 %v3335
      %v3364 = vunpack.c.l.b16 %v3336
      %v3365 = vunpack.c.l.b16 %v3337
      %v3366 = vunpack.c.l.b16 %v3338
      %v3367 = vunpack.c.l.b16 %v3339
      %v3368 = vunpack.c.l.b16 %v3340
      %v3369 = vunpack.c.l.b16 %v3341
      %v3370 = vunpack.c.l.b16 %v3342
      %v3371 = vunpack.c.l.b16 %v3343
      %v3372 = vunpack.c.l.b16 %v3344
      %v3373 = vunpack.c.l.b16 %v3345
      %v3374 = vpack.c.b16 %v3361, %v3360
      %v3375 = vpack.c.b16 %v3363, %v3362
      %v3376 = vpack.c.b16 %v3365, %v3364
      %v3377 = vpack.c.b16 %v3367, %v3366
      %v3378 = vpack.c.b16 %v3369, %v3368
      %v3379 = vpack.c.b16 %v3371, %v3370
      %v3380 = vpack.c.b16 %v3373, %v3372
      %vm3387 = vcmask 883712
      %v3388 = vsel %vm3387, %v3269, 0
      %v3390 = vsel %vm3387, %v3271, 0
      %v3392 = vsel %vm3387, %v3273, 0
      %v3394 = vsel %vm3387, %v3275, 0
      %v3396 = vsel %vm3387, %v3277, 0
      %v3398 = vsel %vm3387, %v3279, 0
      %v3400 = vsel %vm3387, %v3281, 0
      %v3402 = vsel %vm3387, %v3283, 0
      %v3404 = vsel %vm3387, %v3285, 0
      %v3406 = vsel %vm3387, %v3287, 0
      %v3408 = vsel %vm3387, %v3289, 0
      %v3410 = vsel %vm3387, %v3291, 0
      %v3412 = vsel %vm3387, %v3293, 0
      %v3414 = vsel %vm3387, %v3295, 0
      %v3416 = vsel %vm3387, %v3297, 0
      %v3418 = vsel %vm3387, %v3299, 0
      %v3420 = vsel %vm3387, %v3301, 0
      %v3422 = vsel %vm3387, %v3303, 0
      %v3424 = vsel %vm3387, %v3305, 0
      %v3426 = vsel %vm3387, %v3307, 0
      %v3428 = vsel %vm3387, %v3309, 0
      %v3430 = vsel %vm3387, %v3311, 0
      %v3432 = vsel %vm3387, %v3313, 0
      %v3434 = vsel %vm3387, %v3315, 0
      %v3436 = vsel %vm3387, %v3317, 0
      %v3438 = vsel %vm3387, %v3319, 0
      %v3440 = vsel %vm3387, %v3321, 0
      %v3442 = vsel %vm3387, %v3323, 0
      %v3444 = vsel %vm3387, %v3325, 0
      %v3446 = vsel %vm3387, %v3327, 0
      %v3448 = vsel %vm3387, %v3329, 0
      %v3450 = vsel %vm3387, %v3331, 0
      %vm3452 = vcmask 1045504
      %v3454 = vsel %vm3452, %v3380, 0
      %3456 = vmatprep.subr.bf16.mxu0 0
      %3457 = vmatpush1.bf16.msra.mxu0 %v3374
      %3458 = vmatprep.subr.bf16.mxu0 0
      %3459 = vmatpush1.bf16.msra.mxu0 %v3375
      %3460 = vmatprep.subr.bf16.mxu0 0
      %3461 = vmatpush1.bf16.msra.mxu0 %v3376
      %3462 = vmatprep.subr.bf16.mxu0 0
      %3463 = vmatpush1.bf16.msra.mxu0 %v3377
      %3464 = vmatprep.subr.bf16.mxu0 0
      %3465 = vmatpush1.bf16.msra.mxu0 %v3378
      %3466 = vmatprep.subr.bf16.mxu0 0
      %3467 = vmatpush1.bf16.msra.mxu0 %v3379
      %3468 = vmatprep.subr.bf16.mxu0 0
      %3469 = vmatpush1.bf16.msra.mxu0 %v3454
      %3470 = vmatprep.subr.bf16.mxu0 0
      %3471 = vmatpush1.bf16.msra.mxu0 0
      %3472 = vmatprep.subr.bf16.mxu0 0
      %3473 = vmatpush1.bf16.msra.mxu0 0
      %3474 = vmatprep.subr.bf16.mxu0 0
      %3475 = vmatpush1.bf16.msra.mxu0 0
      %3476 = vmatprep.subr.bf16.mxu0 0
      %3477 = vmatpush1.bf16.msra.mxu0 0
      %3478 = vmatprep.subr.bf16.mxu0 0
      %3479 = vmatpush1.bf16.msra.mxu0 0
      %3480 = vmatprep.subr.bf16.mxu0 0
      %3481 = vmatpush1.bf16.msra.mxu0 0
      %3482 = vmatprep.subr.bf16.mxu0 0
      %3483 = vmatpush1.bf16.msra.mxu0 0
      %3484 = vmatprep.subr.bf16.mxu0 0
      %3485 = vmatpush1.bf16.msra.mxu0 0
      %3486 = vmatprep.subr.bf16.mxu0 0
      %3487 = vmatpush1.bf16.msra.mxu0 0
      %3488 = vmatprep.mubr.bf16.mxu0 0
      %3489 = vmatmul.mubr.bf16.gmra.mrb[0].mxu0 %v3388
      %v3490 = vpop.f32.mrb[0].mxu0
      %v3491 = vadd.f32 0.0, %v3490
      %v3492 = vpop.f32.mrb[0].mxu0
      %v3493 = vpop.f32.mrb[0].mxu0
      %v3494 = vadd.f32 0.0, %v3493
      %v3495 = vpop.f32.mrb[0].mxu0
      %3496 = vmatprep.mubr.bf16.mxu0 0
      %3497 = vmatmul.mubr.bf16.gmra.mrb[0].mxu0 %v3390
      %v3498 = vpop.f32.mrb[0].mxu0
      %v3499 = vadd.f32 0.0, %v3498
      %v3500 = vpop.f32.mrb[0].mxu0
      %v3501 = vpop.f32.mrb[0].mxu0
      %v3502 = vadd.f32 0.0, %v3501
      %v3503 = vpop.f32.mrb[0].mxu0
      %3504 = vmatprep.mubr.bf16.mxu0 0
      %3505 = vmatmul.mubr.bf16.gmra.mrb[0].mxu0 %v3392
      %v3506 = vpop.f32.mrb[0].mxu0
      %v3507 = vadd.f32 0.0, %v3506
      %v3508 = vpop.f32.mrb[0].mxu0
      %v3509 = vpop.f32.mrb[0].mxu0
      %v3510 = vadd.f32 0.0, %v3509
      %v3511 = vpop.f32.mrb[0].mxu0
      %3512 = vmatprep.mubr.bf16.mxu0 0
      %3513 = vmatmul.mubr.bf16.gmra.mrb[0].mxu0 %v3394
      %v3514 = vpop.f32.mrb[0].mxu0
      %v3515 = vadd.f32 0.0, %v3514
      %v3516 = vpop.f32.mrb[0].mxu0
      %v3517 = vpop.f32.mrb[0].mxu0
      %v3518 = vadd.f32 0.0, %v3517
      %v3519 = vpop.f32.mrb[0].mxu0
      %3520 = vmatprep.mubr.bf16.mxu0 0
      %3521 = vmatmul.mubr.bf16.gmra.mrb[0].mxu0 %v3396
      %v3522 = vpop.f32.mrb[0].mxu0
      %v3523 = vadd.f32 0.0, %v3522
      %v3524 = vpop.f32.mrb[0].mxu0
      %v3525 = vpop.f32.mrb[0].mxu0
      %v3526 = vadd.f32 0.0, %v3525
      %v3527 = vpop.f32.mrb[0].mxu0
      %3528 = vmatprep.mubr.bf16.mxu0 0
      %3529 = vmatmul.mubr.bf16.gmra.mrb[0].mxu0 %v3398
      %v3530 = vpop.f32.mrb[0].mxu0
      %v3531 = vadd.f32 0.0, %v3530
      %v3532 = vpop.f32.mrb[0].mxu0
      %v3533 = vpop.f32.mrb[0].mxu0
      %v3534 = vadd.f32 0.0, %v3533
      %v3535 = vpop.f32.mrb[0].mxu0
      %3536 = vmatprep.mubr.bf16.mxu0 0
      %3537 = vmatmul.mubr.bf16.gmra.mrb[0].mxu0 %v3400
      %v3538 = vpop.f32.mrb[0].mxu0
      %v3539 = vadd.f32 0.0, %v3538
      %v3540 = vpop.f32.mrb[0].mxu0
      %v3541 = vpop.f32.mrb[0].mxu0
      %v3542 = vadd.f32 0.0, %v3541
      %v3543 = vpop.f32.mrb[0].mxu0
      %3544 = vmatprep.mubr.bf16.mxu0 0
      %3545 = vmatmul.mubr.bf16.gmra.mrb[0].mxu0 %v3402
      %v3546 = vpop.f32.mrb[0].mxu0
      %v3547 = vadd.f32 0.0, %v3546
      %v3548 = vpop.f32.mrb[0].mxu0
      %v3549 = vpop.f32.mrb[0].mxu0
      %v3550 = vadd.f32 0.0, %v3549
      %v3551 = vpop.f32.mrb[0].mxu0
      %3552 = vmatprep.mubr.bf16.mxu0 0
      %3553 = vmatmul.mubr.bf16.gmra.mrb[0].mxu0 %v3404
      %v3554 = vpop.f32.mrb[0].mxu0
      %v3555 = vadd.f32 0.0, %v3554
      %v3556 = vpop.f32.mrb[0].mxu0
      %v3557 = vpop.f32.mrb[0].mxu0
      %v3558 = vadd.f32 0.0, %v3557
      %v3559 = vpop.f32.mrb[0].mxu0
      %3560 = vmatprep.mubr.bf16.mxu0 0
      %3561 = vmatmul.mubr.bf16.gmra.mrb[0].mxu0 %v3406
      %v3562 = vpop.f32.mrb[0].mxu0
      %v3563 = vadd.f32 0.0, %v3562
      %v3564 = vpop.f32.mrb[0].mxu0
      %v3565 = vpop.f32.mrb[0].mxu0
      %v3566 = vadd.f32 0.0, %v3565
      %v3567 = vpop.f32.mrb[0].mxu0
      %3568 = vmatprep.mubr.bf16.mxu0 0
      %3569 = vmatmul.mubr.bf16.gmra.mrb[0].mxu0 %v3408
      %v3570 = vpop.f32.mrb[0].mxu0
      %v3571 = vadd.f32 0.0, %v3570
      %v3572 = vpop.f32.mrb[0].mxu0
      %v3573 = vpop.f32.mrb[0].mxu0
      %v3574 = vadd.f32 0.0, %v3573
      %v3575 = vpop.f32.mrb[0].mxu0
      %3576 = vmatprep.mubr.bf16.mxu0 0
      %3577 = vmatmul.mubr.bf16.gmra.mrb[0].mxu0 %v3410
      %v3578 = vpop.f32.mrb[0].mxu0
      %v3579 = vadd.f32 0.0, %v3578
      %v3580 = vpop.f32.mrb[0].mxu0
      %v3581 = vpop.f32.mrb[0].mxu0
      %v3582 = vadd.f32 0.0, %v3581
      %v3583 = vpop.f32.mrb[0].mxu0
      %3584 = vmatprep.mubr.bf16.mxu0 0
      %3585 = vmatmul.mubr.bf16.gmra.mrb[0].mxu0 %v3412
      %v3586 = vpop.f32.mrb[0].mxu0
      %v3587 = vadd.f32 0.0, %v3586
      %v3588 = vpop.f32.mrb[0].mxu0
      %v3589 = vpop.f32.mrb[0].mxu0
      %v3590 = vadd.f32 0.0, %v3589
      %v3591 = vpop.f32.mrb[0].mxu0
      %3592 = vmatprep.mubr.bf16.mxu0 0
      %3593 = vmatmul.mubr.bf16.gmra.mrb[0].mxu0 %v3414
      %v3594 = vpop.f32.mrb[0].mxu0
      %v3595 = vadd.f32 0.0, %v3594
      %v3596 = vpop.f32.mrb[0].mxu0
      %v3597 = vpop.f32.mrb[0].mxu0
      %v3598 = vadd.f32 0.0, %v3597
      %v3599 = vpop.f32.mrb[0].mxu0
      %3600 = vmatprep.mubr.bf16.mxu0 0
      %3601 = vmatmul.mubr.bf16.gmra.mrb[0].mxu0 %v3416
      %v3602 = vpop.f32.mrb[0].mxu0
      %v3603 = vadd.f32 0.0, %v3602
      %v3604 = vpop.f32.mrb[0].mxu0
      %v3605 = vpop.f32.mrb[0].mxu0
      %v3606 = vadd.f32 0.0, %v3605
      %v3607 = vpop.f32.mrb[0].mxu0
      %3608 = vmatprep.mubr.bf16.mxu0 0
      %3609 = vmatmul.mubr.bf16.gmra.mrb[0].mxu0 %v3418
      %v3610 = vpop.f32.mrb[0].mxu0
      %v3611 = vadd.f32 0.0, %v3610
      %v3612 = vpop.f32.mrb[0].mxu0
      %v3613 = vpop.f32.mrb[0].mxu0
      %v3614 = vadd.f32 0.0, %v3613
      %v3615 = vpop.f32.mrb[0].mxu0
      %3616 = vmatprep.mubr.bf16.mxu0 0
      %3617 = vmatmul.mubr.bf16.gmra.mrb[0].mxu0 %v3420
      %v3618 = vpop.f32.mrb[0].mxu0
      %v3619 = vadd.f32 0.0, %v3618
      %v3620 = vpop.f32.mrb[0].mxu0
      %v3621 = vpop.f32.mrb[0].mxu0
      %v3622 = vadd.f32 0.0, %v3621
      %v3623 = vpop.f32.mrb[0].mxu0
      %3624 = vmatprep.mubr.bf16.mxu0 0
      %3625 = vmatmul.mubr.bf16.gmra.mrb[0].mxu0 %v3422
      %v3626 = vpop.f32.mrb[0].mxu0
      %v3627 = vadd.f32 0.0, %v3626
      %v3628 = vpop.f32.mrb[0].mxu0
      %v3629 = vpop.f32.mrb[0].mxu0
      %v3630 = vadd.f32 0.0, %v3629
      %v3631 = vpop.f32.mrb[0].mxu0
      %3632 = vmatprep.mubr.bf16.mxu0 0
      %3633 = vmatmul.mubr.bf16.gmra.mrb[0].mxu0 %v3424
      %v3634 = vpop.f32.mrb[0].mxu0
      %v3635 = vadd.f32 0.0, %v3634
      %v3636 = vpop.f32.mrb[0].mxu0
      %v3637 = vpop.f32.mrb[0].mxu0
      %v3638 = vadd.f32 0.0, %v3637
      %v3639 = vpop.f32.mrb[0].mxu0
      %3640 = vmatprep.mubr.bf16.mxu0 0
      %3641 = vmatmul.mubr.bf16.gmra.mrb[0].mxu0 %v3426
      %v3642 = vpop.f32.mrb[0].mxu0
      %v3643 = vadd.f32 0.0, %v3642
      %v3644 = vpop.f32.mrb[0].mxu0
      %v3645 = vpop.f32.mrb[0].mxu0
      %v3646 = vadd.f32 0.0, %v3645
      %v3647 = vpop.f32.mrb[0].mxu0
      %3648 = vmatprep.mubr.bf16.mxu0 0
      %3649 = vmatmul.mubr.bf16.gmra.mrb[0].mxu0 %v3428
      %v3650 = vpop.f32.mrb[0].mxu0
      %v3651 = vadd.f32 0.0, %v3650
      %v3652 = vpop.f32.mrb[0].mxu0
      %v3653 = vpop.f32.mrb[0].mxu0
      %v3654 = vadd.f32 0.0, %v3653
      %v3655 = vpop.f32.mrb[0].mxu0
      %3656 = vmatprep.mubr.bf16.mxu0 0
      %3657 = vmatmul.mubr.bf16.gmra.mrb[0].mxu0 %v3430
      %v3658 = vpop.f32.mrb[0].mxu0
      %v3659 = vadd.f32 0.0, %v3658
      %v3660 = vpop.f32.mrb[0].mxu0
      %v3661 = vpop.f32.mrb[0].mxu0
      %v3662 = vadd.f32 0.0, %v3661
      %v3663 = vpop.f32.mrb[0].mxu0
      %3664 = vmatprep.mubr.bf16.mxu0 0
      %3665 = vmatmul.mubr.bf16.gmra.mrb[0].mxu0 %v3432
      %v3666 = vpop.f32.mrb[0].mxu0
      %v3667 = vadd.f32 0.0, %v3666
      %v3668 = vpop.f32.mrb[0].mxu0
      %v3669 = vpop.f32.mrb[0].mxu0
      %v3670 = vadd.f32 0.0, %v3669
      %v3671 = vpop.f32.mrb[0].mxu0
      %3672 = vmatprep.mubr.bf16.mxu0 0
      %3673 = vmatmul.mubr.bf16.gmra.mrb[0].mxu0 %v3434
      %v3674 = vpop.f32.mrb[0].mxu0
      %v3675 = vadd.f32 0.0, %v3674
      %v3676 = vpop.f32.mrb[0].mxu0
      %v3677 = vpop.f32.mrb[0].mxu0
      %v3678 = vadd.f32 0.0, %v3677
      %v3679 = vpop.f32.mrb[0].mxu0
      %3680 = vmatprep.mubr.bf16.mxu0 0
      %3681 = vmatmul.mubr.bf16.gmra.mrb[0].mxu0 %v3436
      %v3682 = vpop.f32.mrb[0].mxu0
      %v3683 = vadd.f32 0.0, %v3682
      %v3684 = vpop.f32.mrb[0].mxu0
      %v3685 = vpop.f32.mrb[0].mxu0
      %v3686 = vadd.f32 0.0, %v3685
      %v3687 = vpop.f32.mrb[0].mxu0
      %3688 = vmatprep.mubr.bf16.mxu0 0
      %3689 = vmatmul.mubr.bf16.gmra.mrb[0].mxu0 %v3438
      %v3690 = vpop.f32.mrb[0].mxu0
      %v3691 = vadd.f32 0.0, %v3690
      %v3692 = vpop.f32.mrb[0].mxu0
      %v3693 = vpop.f32.mrb[0].mxu0
      %v3694 = vadd.f32 0.0, %v3693
      %v3695 = vpop.f32.mrb[0].mxu0
      %3696 = vmatprep.mubr.bf16.mxu0 0
      %3697 = vmatmul.mubr.bf16.gmra.mrb[0].mxu0 %v3440
      %v3698 = vpop.f32.mrb[0].mxu0
      %v3699 = vadd.f32 0.0, %v3698
      %v3700 = vpop.f32.mrb[0].mxu0
      %v3701 = vpop.f32.mrb[0].mxu0
      %v3702 = vadd.f32 0.0, %v3701
      %v3703 = vpop.f32.mrb[0].mxu0
      %3704 = vmatprep.mubr.bf16.mxu0 0
      %3705 = vmatmul.mubr.bf16.gmra.mrb[0].mxu0 %v3442
      %v3706 = vpop.f32.mrb[0].mxu0
      %v3707 = vadd.f32 0.0, %v3706
      %v3708 = vpop.f32.mrb[0].mxu0
      %v3709 = vpop.f32.mrb[0].mxu0
      %v3710 = vadd.f32 0.0, %v3709
      %v3711 = vpop.f32.mrb[0].mxu0
      %3712 = vmatprep.mubr.bf16.mxu0 0
      %3713 = vmatmul.mubr.bf16.gmra.mrb[0].mxu0 %v3444
      %v3714 = vpop.f32.mrb[0].mxu0
      %v3715 = vadd.f32 0.0, %v3714
      %v3716 = vpop.f32.mrb[0].mxu0
      %v3717 = vpop.f32.mrb[0].mxu0
      %v3718 = vadd.f32 0.0, %v3717
      %v3719 = vpop.f32.mrb[0].mxu0
      %3720 = vmatprep.mubr.bf16.mxu0 0
      %3721 = vmatmul.mubr.bf16.gmra.mrb[0].mxu0 %v3446
      %v3722 = vpop.f32.mrb[0].mxu0
      %v3723 = vadd.f32 0.0, %v3722
      %v3724 = vpop.f32.mrb[0].mxu0
      %v3725 = vpop.f32.mrb[0].mxu0
      %v3726 = vadd.f32 0.0, %v3725
      %v3727 = vpop.f32.mrb[0].mxu0
      %3728 = vmatprep.mubr.bf16.mxu0 0
      %3729 = vmatmul.mubr.bf16.gmra.mrb[0].mxu0 %v3448
      %v3730 = vpop.f32.mrb[0].mxu0
      %v3731 = vadd.f32 0.0, %v3730
      %v3732 = vpop.f32.mrb[0].mxu0
      %v3733 = vpop.f32.mrb[0].mxu0
      %v3734 = vadd.f32 0.0, %v3733
      %v3735 = vpop.f32.mrb[0].mxu0
      %3736 = vmatprep.mubr.bf16.mxu0 0
      %3737 = vmatmul.mubr.bf16.gmra.mrb[0].mxu0 %v3450
      %v3738 = vpop.f32.mrb[0].mxu0
      %v3739 = vadd.f32 0.0, %v3738
      %v3740 = vpop.f32.mrb[0].mxu0
      %v3741 = vpop.f32.mrb[0].mxu0
      %v3742 = vadd.f32 0.0, %v3741
      %v3743 = vpop.f32.mrb[0].mxu0
      %3744 = vdwg.mxu0
      %v3745 = vld [vmem:[%s2] sm:$0x1]
      %v3747 = vlaneseq
      %v3748 = vshrl.u32 %v3747, 7
      %v3749 = vsub.s32 0, %v3748
      %v3750 = vrot.slane %v3745, %v3749
      %v3752 = vmul.f32 %v3491, %v3750
      %v3753 = vmul.f32 %v3494, %v3750
      %v3754 = vmul.f32 %v3499, %v3750
      %v3755 = vmul.f32 %v3502, %v3750
      %v3756 = vmul.f32 %v3507, %v3750
      %v3757 = vmul.f32 %v3510, %v3750
      %v3758 = vmul.f32 %v3515, %v3750
      %v3759 = vmul.f32 %v3518, %v3750
      %v3760 = vmul.f32 %v3523, %v3750
      %v3761 = vmul.f32 %v3526, %v3750
      %v3762 = vmul.f32 %v3531, %v3750
      %v3763 = vmul.f32 %v3534, %v3750
      %v3764 = vmul.f32 %v3539, %v3750
      %v3765 = vmul.f32 %v3542, %v3750
      %v3766 = vmul.f32 %v3547, %v3750
      %v3767 = vmul.f32 %v3550, %v3750
      %v3768 = vmul.f32 %v3555, %v3750
      %v3769 = vmul.f32 %v3558, %v3750
      %v3770 = vmul.f32 %v3563, %v3750
      %v3771 = vmul.f32 %v3566, %v3750
      %v3772 = vmul.f32 %v3571, %v3750
      %v3773 = vmul.f32 %v3574, %v3750
      %v3774 = vmul.f32 %v3579, %v3750
      %v3775 = vmul.f32 %v3582, %v3750
      %v3776 = vmul.f32 %v3587, %v3750
      %v3777 = vmul.f32 %v3590, %v3750
      %v3778 = vmul.f32 %v3595, %v3750
      %v3779 = vmul.f32 %v3598, %v3750
      %v3780 = vmul.f32 %v3603, %v3750
      %v3781 = vmul.f32 %v3606, %v3750
      %v3782 = vmul.f32 %v3611, %v3750
      %v3783 = vmul.f32 %v3614, %v3750
      %v3784 = vmul.f32 %v3619, %v3750
      %v3785 = vmul.f32 %v3622, %v3750
      %v3786 = vmul.f32 %v3627, %v3750
      %v3787 = vmul.f32 %v3630, %v3750
      %v3788 = vmul.f32 %v3635, %v3750
      %v3789 = vmul.f32 %v3638, %v3750
      %v3790 = vmul.f32 %v3643, %v3750
      %v3791 = vmul.f32 %v3646, %v3750
      %v3792 = vmul.f32 %v3651, %v3750
      %v3793 = vmul.f32 %v3654, %v3750
      %v3794 = vmul.f32 %v3659, %v3750
      %v3795 = vmul.f32 %v3662, %v3750
      %v3796 = vmul.f32 %v3667, %v3750
      %v3797 = vmul.f32 %v3670, %v3750
      %v3798 = vmul.f32 %v3675, %v3750
      %v3799 = vmul.f32 %v3678, %v3750
      %v3800 = vmul.f32 %v3683, %v3750
      %v3801 = vmul.f32 %v3686, %v3750
      %v3802 = vmul.f32 %v3691, %v3750
      %v3803 = vmul.f32 %v3694, %v3750
      %v3804 = vmul.f32 %v3699, %v3750
      %v3805 = vmul.f32 %v3702, %v3750
      %v3806 = vmul.f32 %v3707, %v3750
      %v3807 = vmul.f32 %v3710, %v3750
      %v3808 = vmul.f32 %v3715, %v3750
      %v3809 = vmul.f32 %v3718, %v3750
      %v3810 = vmul.f32 %v3723, %v3750
      %v3811 = vmul.f32 %v3726, %v3750
      %v3812 = vmul.f32 %v3731, %v3750
      %v3813 = vmul.f32 %v3734, %v3750
      %v3814 = vmul.f32 %v3739, %v3750
      %v3815 = vmul.f32 %v3742, %v3750
      %v3816 = vld [vmem:[%s3] sm:$0x1]
      %v3818 = vlaneseq
      %v3819 = vshrl.u32 %v3818, 7
      %v3820 = vsub.s32 0, %v3819
      %v3821 = vrot.slane %v3816, %v3820
      %v3823 = vadd.f32 %v3752, %v3821
      %v3824 = vadd.f32 %v3753, %v3821
      %v3825 = vadd.f32 %v3754, %v3821
      %v3826 = vadd.f32 %v3755, %v3821
      %v3827 = vadd.f32 %v3756, %v3821
      %v3828 = vadd.f32 %v3757, %v3821
      %v3829 = vadd.f32 %v3758, %v3821
      %v3830 = vadd.f32 %v3759, %v3821
      %v3831 = vadd.f32 %v3760, %v3821
      %v3832 = vadd.f32 %v3761, %v3821
      %v3833 = vadd.f32 %v3762, %v3821
      %v3834 = vadd.f32 %v3763, %v3821
      %v3835 = vadd.f32 %v3764, %v3821
      %v3836 = vadd.f32 %v3765, %v3821
      %v3837 = vadd.f32 %v3766, %v3821
      %v3838 = vadd.f32 %v3767, %v3821
      %v3839 = vadd.f32 %v3768, %v3821
      %v3840 = vadd.f32 %v3769, %v3821
      %v3841 = vadd.f32 %v3770, %v3821
      %v3842 = vadd.f32 %v3771, %v3821
      %v3843 = vadd.f32 %v3772, %v3821
      %v3844 = vadd.f32 %v3773, %v3821
      %v3845 = vadd.f32 %v3774, %v3821
      %v3846 = vadd.f32 %v3775, %v3821
      %v3847 = vadd.f32 %v3776, %v3821
      %v3848 = vadd.f32 %v3777, %v3821
      %v3849 = vadd.f32 %v3778, %v3821
      %v3850 = vadd.f32 %v3779, %v3821
      %v3851 = vadd.f32 %v3780, %v3821
      %v3852 = vadd.f32 %v3781, %v3821
      %v3853 = vadd.f32 %v3782, %v3821
      %v3854 = vadd.f32 %v3783, %v3821
      %v3855 = vadd.f32 %v3784, %v3821
      %v3856 = vadd.f32 %v3785, %v3821
      %v3857 = vadd.f32 %v3786, %v3821
      %v3858 = vadd.f32 %v3787, %v3821
      %v3859 = vadd.f32 %v3788, %v3821
      %v3860 = vadd.f32 %v3789, %v3821
      %v3861 = vadd.f32 %v3790, %v3821
      %v3862 = vadd.f32 %v3791, %v3821
      %v3863 = vadd.f32 %v3792, %v3821
      %v3864 = vadd.f32 %v3793, %v3821
      %v3865 = vadd.f32 %v3794, %v3821
      %v3866 = vadd.f32 %v3795, %v3821
      %v3867 = vadd.f32 %v3796, %v3821
      %v3868 = vadd.f32 %v3797, %v3821
      %v3869 = vadd.f32 %v3798, %v3821
      %v3870 = vadd.f32 %v3799, %v3821
      %v3871 = vadd.f32 %v3800, %v3821
      %v3872 = vadd.f32 %v3801, %v3821
      %v3873 = vadd.f32 %v3802, %v3821
      %v3874 = vadd.f32 %v3803, %v3821
      %v3875 = vadd.f32 %v3804, %v3821
      %v3876 = vadd.f32 %v3805, %v3821
      %v3877 = vadd.f32 %v3806, %v3821
      %v3878 = vadd.f32 %v3807, %v3821
      %v3879 = vadd.f32 %v3808, %v3821
      %v3880 = vadd.f32 %v3809, %v3821
      %v3881 = vadd.f32 %v3810, %v3821
      %v3882 = vadd.f32 %v3811, %v3821
      %v3883 = vadd.f32 %v3812, %v3821
      %v3884 = vadd.f32 %v3813, %v3821
      %v3885 = vadd.f32 %v3814, %v3821
      %v3886 = vadd.f32 %v3815, %v3821
      %v3887 = vmax.f32 %v3823, 0.0
      %v3888 = vmax.f32 %v3824, 0.0
      %v3889 = vmax.f32 %v3825, 0.0
      %v3890 = vmax.f32 %v3826, 0.0
      %v3891 = vmax.f32 %v3827, 0.0
      %v3892 = vmax.f32 %v3828, 0.0
      %v3893 = vmax.f32 %v3829, 0.0
      %v3894 = vmax.f32 %v3830, 0.0
      %v3895 = vmax.f32 %v3831, 0.0
      %v3896 = vmax.f32 %v3832, 0.0
      %v3897 = vmax.f32 %v3833, 0.0
      %v3898 = vmax.f32 %v3834, 0.0
      %v3899 = vmax.f32 %v3835, 0.0
      %v3900 = vmax.f32 %v3836, 0.0
      %v3901 = vmax.f32 %v3837, 0.0
      %v3902 = vmax.f32 %v3838, 0.0
      %v3903 = vmax.f32 %v3839, 0.0
      %v3904 = vmax.f32 %v3840, 0.0
      %v3905 = vmax.f32 %v3841, 0.0
      %v3906 = vmax.f32 %v3842, 0.0
      %v3907 = vmax.f32 %v3843, 0.0
      %v3908 = vmax.f32 %v3844, 0.0
      %v3909 = vmax.f32 %v3845, 0.0
      %v3910 = vmax.f32 %v3846, 0.0
      %v3911 = vmax.f32 %v3847, 0.0
      %v3912 = vmax.f32 %v3848, 0.0
      %v3913 = vmax.f32 %v3849, 0.0
      %v3914 = vmax.f32 %v3850, 0.0
      %v3915 = vmax.f32 %v3851, 0.0
      %v3916 = vmax.f32 %v3852, 0.0
      %v3917 = vmax.f32 %v3853, 0.0
      %v3918 = vmax.f32 %v3854, 0.0
      %v3919 = vmax.f32 %v3855, 0.0
      %v3920 = vmax.f32 %v3856, 0.0
      %v3921 = vmax.f32 %v3857, 0.0
      %v3922 = vmax.f32 %v3858, 0.0
      %v3923 = vmax.f32 %v3859, 0.0
      %v3924 = vmax.f32 %v3860, 0.0
      %v3925 = vmax.f32 %v3861, 0.0
      %v3926 = vmax.f32 %v3862, 0.0
      %v3927 = vmax.f32 %v3863, 0.0
      %v3928 = vmax.f32 %v3864, 0.0
      %v3929 = vmax.f32 %v3865, 0.0
      %v3930 = vmax.f32 %v3866, 0.0
      %v3931 = vmax.f32 %v3867, 0.0
      %v3932 = vmax.f32 %v3868, 0.0
      %v3933 = vmax.f32 %v3869, 0.0
      %v3934 = vmax.f32 %v3870, 0.0
      %v3935 = vmax.f32 %v3871, 0.0
      %v3936 = vmax.f32 %v3872, 0.0
      %v3937 = vmax.f32 %v3873, 0.0
      %v3938 = vmax.f32 %v3874, 0.0
      %v3939 = vmax.f32 %v3875, 0.0
      %v3940 = vmax.f32 %v3876, 0.0
      %v3941 = vmax.f32 %v3877, 0.0
      %v3942 = vmax.f32 %v3878, 0.0
      %v3943 = vmax.f32 %v3879, 0.0
      %v3944 = vmax.f32 %v3880, 0.0
      %v3945 = vmax.f32 %v3881, 0.0
      %v3946 = vmax.f32 %v3882, 0.0
      %v3947 = vmax.f32 %v3883, 0.0
      %v3948 = vmax.f32 %v3884, 0.0
      %v3949 = vmax.f32 %v3885, 0.0
      %v3950 = vmax.f32 %v3886, 0.0
      %3951 = vxpose.xlu0.b32.start [1/16] %v3887, 128
      %3952 = vxpose.xlu0.b32.cont [2/16] %v3888, 128
      %3953 = vxpose.xlu0.b32.cont [3/16] %v3889, 128
      %3954 = vxpose.xlu0.b32.cont [4/16] %v3890, 128
      %3955 = vxpose.xlu0.b32.cont [5/16] %v3891, 128
      %3956 = vxpose.xlu0.b32.cont [6/16] %v3892, 128
      %3957 = vxpose.xlu0.b32.cont [7/16] %v3893, 128
      %3958 = vxpose.xlu0.b32.cont [8/16] %v3894, 128
      %3959 = vxpose.xlu0.b32.cont [9/16] %v3895, 128
      %3960 = vxpose.xlu0.b32.cont [10/16] %v3896, 128
      %3961 = vxpose.xlu0.b32.cont [11/16] %v3897, 128
      %3962 = vxpose.xlu0.b32.cont [12/16] %v3898, 128
      %3963 = vxpose.xlu0.b32.cont [13/16] %v3899, 128
      %3964 = vxpose.xlu0.b32.cont [14/16] %v3900, 128
      %3965 = vxpose.xlu0.b32.cont [15/16] %v3901, 128
      %3966 = vxpose.xlu0.b32.end [16/16] %v3902, 128
      %v3967 = vpop.trf.xlu0
      %v3968 = vpop.trf.xlu0
      %v3969 = vpop.trf.xlu0
      %v3970 = vpop.trf.xlu0
      %v3971 = vpop.trf.xlu0
      %v3972 = vpop.trf.xlu0
      %v3973 = vpop.trf.xlu0
      %v3974 = vpop.trf.xlu0
      %v3975 = vpop.trf.xlu0
      %v3976 = vpop.trf.xlu0
      %v3977 = vpop.trf.xlu0
      %v3978 = vpop.trf.xlu0
      %v3979 = vpop.trf.xlu0
      %v3980 = vpop.trf.xlu0
      %v3981 = vpop.trf.xlu0
      %v3982 = vpop.trf.xlu0
      %3983 = vxpose.xlu0.b32.start [1/16] %v3903, 128
      %3984 = vxpose.xlu0.b32.cont [2/16] %v3904, 128
      %3985 = vxpose.xlu0.b32.cont [3/16] %v3905, 128
      %3986 = vxpose.xlu0.b32.cont [4/16] %v3906, 128
      %3987 = vxpose.xlu0.b32.cont [5/16] %v3907, 128
      %3988 = vxpose.xlu0.b32.cont [6/16] %v3908, 128
      %3989 = vxpose.xlu0.b32.cont [7/16] %v3909, 128
      %3990 = vxpose.xlu0.b32.cont [8/16] %v3910, 128
      %3991 = vxpose.xlu0.b32.cont [9/16] %v3911, 128
      %3992 = vxpose.xlu0.b32.cont [10/16] %v3912, 128
      %3993 = vxpose.xlu0.b32.cont [11/16] %v3913, 128
      %3994 = vxpose.xlu0.b32.cont [12/16] %v3914, 128
      %3995 = vxpose.xlu0.b32.cont [13/16] %v3915, 128
      %3996 = vxpose.xlu0.b32.cont [14/16] %v3916, 128
      %3997 = vxpose.xlu0.b32.cont [15/16] %v3917, 128
      %3998 = vxpose.xlu0.b32.end [16/16] %v3918, 128
      %v3999 = vpop.trf.xlu0
      %v4000 = vpop.trf.xlu0
      %v4001 = vpop.trf.xlu0
      %v4002 = vpop.trf.xlu0
      %v4003 = vpop.trf.xlu0
      %v4004 = vpop.trf.xlu0
      %v4005 = vpop.trf.xlu0
      %v4006 = vpop.trf.xlu0
      %v4007 = vpop.trf.xlu0
      %v4008 = vpop.trf.xlu0
      %v4009 = vpop.trf.xlu0
      %v4010 = vpop.trf.xlu0
      %v4011 = vpop.trf.xlu0
      %v4012 = vpop.trf.xlu0
      %v4013 = vpop.trf.xlu0
      %v4014 = vpop.trf.xlu0
      %4015 = vxpose.xlu0.b32.start [1/16] %v3919, 128
      %4016 = vxpose.xlu0.b32.cont [2/16] %v3920, 128
      %4017 = vxpose.xlu0.b32.cont [3/16] %v3921, 128
      %4018 = vxpose.xlu0.b32.cont [4/16] %v3922, 128
      %4019 = vxpose.xlu0.b32.cont [5/16] %v3923, 128
      %4020 = vxpose.xlu0.b32.cont [6/16] %v3924, 128
      %4021 = vxpose.xlu0.b32.cont [7/16] %v3925, 128
      %4022 = vxpose.xlu0.b32.cont [8/16] %v3926, 128
      %4023 = vxpose.xlu0.b32.cont [9/16] %v3927, 128
      %4024 = vxpose.xlu0.b32.cont [10/16] %v3928, 128
      %4025 = vxpose.xlu0.b32.cont [11/16] %v3929, 128
      %4026 = vxpose.xlu0.b32.cont [12/16] %v3930, 128
      %4027 = vxpose.xlu0.b32.cont [13/16] %v3931, 128
      %4028 = vxpose.xlu0.b32.cont [14/16] %v3932, 128
      %4029 = vxpose.xlu0.b32.cont [15/16] %v3933, 128
      %4030 = vxpose.xlu0.b32.end [16/16] %v3934, 128
      %v4031 = vpop.trf.xlu0
      %v4032 = vpop.trf.xlu0
      %v4033 = vpop.trf.xlu0
      %v4034 = vpop.trf.xlu0
      %v4035 = vpop.trf.xlu0
      %v4036 = vpop.trf.xlu0
      %v4037 = vpop.trf.xlu0
      %v4038 = vpop.trf.xlu0
      %v4039 = vpop.trf.xlu0
      %v4040 = vpop.trf.xlu0
      %v4041 = vpop.trf.xlu0
      %v4042 = vpop.trf.xlu0
      %v4043 = vpop.trf.xlu0
      %v4044 = vpop.trf.xlu0
      %v4045 = vpop.trf.xlu0
      %v4046 = vpop.trf.xlu0
      %4047 = vxpose.xlu0.b32.start [1/16] %v3935, 128
      %4048 = vxpose.xlu0.b32.cont [2/16] %v3936, 128
      %4049 = vxpose.xlu0.b32.cont [3/16] %v3937, 128
      %4050 = vxpose.xlu0.b32.cont [4/16] %v3938, 128
      %4051 = vxpose.xlu0.b32.cont [5/16] %v3939, 128
      %4052 = vxpose.xlu0.b32.cont [6/16] %v3940, 128
      %4053 = vxpose.xlu0.b32.cont [7/16] %v3941, 128
      %4054 = vxpose.xlu0.b32.cont [8/16] %v3942, 128
      %4055 = vxpose.xlu0.b32.cont [9/16] %v3943, 128
      %4056 = vxpose.xlu0.b32.cont [10/16] %v3944, 128
      %4057 = vxpose.xlu0.b32.cont [11/16] %v3945, 128
      %4058 = vxpose.xlu0.b32.cont [12/16] %v3946, 128
      %4059 = vxpose.xlu0.b32.cont [13/16] %v3947, 128
      %4060 = vxpose.xlu0.b32.cont [14/16] %v3948, 128
      %4061 = vxpose.xlu0.b32.cont [15/16] %v3949, 128
      %4062 = vxpose.xlu0.b32.end [16/16] %v3950, 128
      %v4063 = vpop.trf.xlu0
      %v4064 = vpop.trf.xlu0
      %v4065 = vpop.trf.xlu0
      %v4066 = vpop.trf.xlu0
      %v4067 = vpop.trf.xlu0
      %v4068 = vpop.trf.xlu0
      %v4069 = vpop.trf.xlu0
      %v4070 = vpop.trf.xlu0
      %v4071 = vpop.trf.xlu0
      %v4072 = vpop.trf.xlu0
      %v4073 = vpop.trf.xlu0
      %v4074 = vpop.trf.xlu0
      %v4075 = vpop.trf.xlu0
      %v4076 = vpop.trf.xlu0
      %v4077 = vpop.trf.xlu0
      %v4078 = vpop.trf.xlu0
      %4079 = vst [vmem:[%s219] sm:$0xff] %v3967
      %4080 = vst [vmem:[%s219 + $0x8] sm:$0xff] %v3999
      %4081 = vst [vmem:[%s219 + $0x10] sm:$0xff] %v4031
      %4082 = vst [vmem:[%s219 + $0x18] sm:$0xff] %v4063
      %s4083 = smul.u32 4, %s20
      %p4084 = scmp.lt.s32.totalorder %s19, 1
      %s4085 = scalar_select %p4084, %s19, 1
      %p4086 = scmp.lt.s32.totalorder %s4083, 3
      %s4087 = scalar_select %p4086, %s4083, 3
      %s4088 = smul.addr %s4085, 4
      %s4089 = sadd.s32 %s4087, %s4088
      %s4090 = smul.addr %s4089, 8
      %s4091 = scalar_lea.vmem %s4, %s4090
      // Predicated region
      $region37: #{upconv_bn_layer.3} parent=35 // pred_check
        %p4092 = pneg %p136
      $region38: #{upconv_bn_layer.3} parent=35 // pred_check_branch
        %4094 = sbr.rel (%p4092) target = $region40
      $region39: #{upconv_bn_layer.3} parent=35 // pred_region
        %s4095 = smul.u32 4, %s20
      $region40: #{upconv_bn_layer.3} parent=35 // pred_fallthru
        _
    $region36: #{upconv_bn_layer.3} parent=5 // pred_fallthru
      _
    %p4096 = scmp.le.s32.totalorder 2, %s10
    // Predicated region
    $region41: #{upconv_bn_layer.3} parent=5 // pred_check
      %p4097 = pneg %p4096
    $region42: #{upconv_bn_layer.3} parent=5 // pred_check_branch
      %4099 = sbr.rel (%p4097) target = $region44
    $region43: #{upconv_bn_layer.3} parent=5 // pred_region
      %s4100 = ssub.s32 %s10, 2
      // Predicated region
      $region45: #{upconv_bn_layer.3} parent=43 // pred_check
        %p4101 = pneg %p142
      $region46: #{upconv_bn_layer.3} parent=43 // pred_check_branch
        %4103 = sbr.rel (%p4101) target = $region48
      $region47: #{upconv_bn_layer.3} parent=43 // pred_region
        %s4104 = smul.u32 4, %s22
        %p4105 = scmp.lt.s32.totalorder %s21, 1
        %s4106 = scalar_select %p4105, %s21, 1
        %p4107 = scmp.lt.s32.totalorder %s4104, 3
        %s4108 = scalar_select %p4107, %s4104, 3
        %s4109 = smul.addr %s4106, 4
        %s4110 = sadd.s32 %s4108, %s4109
        %s4111 = smul.addr %s4110, 8
        %s4112 = scalar_lea.vmem %s4, %s4111
      $region48: #{upconv_bn_layer.3} parent=43 // pred_fallthru
        _
    $region44: #{upconv_bn_layer.3} parent=5 // pred_fallthru
      _
  $region6: #{upconv_bn_layer.3} parent=0 // loop_footer
    %s14 = sadd.s32 1, %s10
  $region7: #{upconv_bn_layer.3} parent=0 // loop_footer_branch
    %9 = sbr.rel target = $region3
  $region8: #{upconv_bn_layer.3} parent=0 // loop_exit
    _

</llo_original>
